<compile_context>
chip_gen: v7x
topology: tpu7x:2x2x1
jax: 0.10.0
libtpu: 0.0.40
codegen_flags: <defaults>
</compile_context>

<pallas_src>
import functools

import jax
import jax.numpy as jnp
from jax import lax
from jax.experimental import pallas as pl
from jax.experimental.pallas import tpu as pltpu

EPS = 1e-5
LANE = 128
WPAD = 8   # in-kernel zero columns per side; 8 keeps every f32 concat piece sublane-aligned


def _vmem_limit_bytes():
    """Scoped-VMEM cap: half the physical VMEM (v5e/v6e 128MiB -> 64MiB, v7x 64 -> 32)."""
    try:
        cap = int(pltpu.get_tpu_info().vmem_capacity_bytes)
        return max(32 * 1024 * 1024, min(cap // 2, 96 * 1024 * 1024))
    except Exception:
        return 32 * 1024 * 1024


_COMPILER_PARAMS = pltpu.CompilerParams(
    dimension_semantics=("parallel", "parallel"),
    vmem_limit_bytes=_vmem_limit_bytes(),
)


# ---------------------------------------------------------------------------
# Kernels
# ---------------------------------------------------------------------------
def _conv_bn_stats_kernel(pre_norm, *refs):
    """3x3/stride-1 conv (+bias) on one row tile, emitting per-tile BN partial stats.

    Halo handling: top_ref/bot_ref hold the row above/below the tile (clamped index
    maps); they are zeroed when the tile touches the image border, and WPAD zero
    columns are concatenated on each side in VMEM, so no spatially pre-padded HBM
    copy of the input is ever materialized.

    If `pre_norm`, the raw rows are first mapped through y*scale + shift and ReLU'd
    (fusing the previous stage's BatchNorm + ReLU into this conv's load); the zero
    padding is added afterwards so it stays exactly zero.
    """
    if pre_norm:
        (x_ref, top_ref, bot_ref, w_ref, b_ref,
         scale_ref, shift_ref, y_ref, stats_ref) = refs
    else:
        x_ref, top_ref, bot_ref, w_ref, b_ref, y_ref, stats_ref = refs

    th, w, cp = y_ref.shape
    ri = pl.program_id(1)
    nr = pl.num_programs(1)

    top, main, bot = top_ref[...], x_ref[...], bot_ref[...]

    if pre_norm:
        scale = scale_ref[...].reshape(1, 1, cp)
        shift = shift_ref[...].reshape(1, 1, cp)
        top = jnp.maximum(top * scale + shift, 0.0)
        main = jnp.maximum(main * scale + shift, 0.0)
        bot = jnp.maximum(bot * scale + shift, 0.0)

    # Rows outside the image (conv zero padding): zero the clamped halo rows.
    top = top * jnp.where(ri == 0, 0.0, 1.0)
    bot = bot * jnp.where(ri == nr - 1, 0.0, 1.0)

    tile = jnp.concatenate([top, main, bot], axis=0)            # (TH+2, W, Cp)
    zcol = jnp.zeros((th + 2, WPAD, cp), jnp.float32)
    tile = jnp.concatenate([zcol, tile, zcol], axis=1)          # (TH+2, W+2*WPAD, Cp)

    # dy-grouped tap accumulation: 3 accumulating (M, 3*Cp) x (3*Cp, Cp) bf16 MXU
    # matmuls with f32 accumulation (instead of one 9*Cp-wide im2col patch).
    acc = jnp.zeros((th * w, cp), jnp.float32)
    for dy in range(3):
        patch = jnp.concatenate(
            [tile[dy:dy + th, WPAD - 1 + dx: WPAD - 1 + dx + w, :]
             for dx in range(3)],
            axis=-1).reshape(th * w, 3 * cp)
        acc = acc + jnp.dot(patch.astype(jnp.bfloat16), w_ref[dy],
                            preferred_element_type=jnp.float32)

    y = acc + b_ref[...]                                        # bias (1, Cp)
    y_ref[...] = y.reshape(th, w, cp)

    # Per-tile per-channel partial statistics for the two-pass BatchNorm.
    # TODO(synk): E[x^2]-E[x]^2 may cancel for huge N*H*W; use centered partial sums then.
    s = jnp.sum(y, axis=0, keepdims=True)
    ss = jnp.sum(y * y, axis=0, keepdims=True)
    stats_ref[...] = jnp.concatenate(
        [s, ss, jnp.zeros((6, cp), jnp.float32)], axis=0).reshape(1, 8, cp)


def _bn_residual_kernel(y_ref, x_ref, scale_ref, shift_ref, out_ref):
    """out = identity + (y_raw * scale + shift)   (BN2 affine + residual add)."""
    cp = out_ref.shape[-1]
    scale = scale_ref[...].reshape(1, 1, cp)
    shift = shift_ref[...].reshape(1, 1, cp)
    out_ref[...] = x_ref[...] + y_ref[...] * scale + shift


# ---------------------------------------------------------------------------
# pallas_call wrappers
# ---------------------------------------------------------------------------
def _conv_bn_stage(x, w_folded, bias, *, tile_h, scale=None, shift=None):
    """One conv3x3 stage on unpadded NHWC input.

    Returns (conv output + bias, per-tile BN partial stats)."""
    n, h, w, cp = x.shape
    r = h // tile_h
    pre_norm = scale is not None

    def top_map(ni, ri):   # row above the tile, clamped at the top border
        return (ni, jnp.maximum(ri * tile_h - 1, 0), 0, 0)

    def bot_map(ni, ri):   # row below the tile, clamped at the bottom border
        return (ni, jnp.minimum(ri * tile_h + tile_h, h - 1), 0, 0)

    in_specs = [
        pl.BlockSpec((None, tile_h, w, cp), lambda ni, ri: (ni, ri, 0, 0)),
        pl.BlockSpec((None, 1, w, cp), top_map),
        pl.BlockSpec((None, 1, w, cp), bot_map),
        pl.BlockSpec((3, 3 * cp, cp), lambda ni, ri: (0, 0, 0)),   # bf16 folded weight
        pl.BlockSpec((1, cp), lambda ni, ri: (0, 0)),              # bias
    ]
    args = [x, x, x, w_folded, bias]
    if pre_norm:
        in_specs += [pl.BlockSpec((1, cp), lambda ni, ri: (0, 0)),
                     pl.BlockSpec((1, cp), lambda ni, ri: (0, 0))]
        args += [scale, shift]

    out_shape = (jax.ShapeDtypeStruct((n, h, w, cp), jnp.float32),
                 jax.ShapeDtypeStruct((n, r, 8, cp), jnp.float32))
    out_specs = (
        pl.BlockSpec((None, tile_h, w, cp), lambda ni, ri: (ni, ri, 0, 0)),
        pl.BlockSpec((None, 1, 8, cp), lambda ni, ri: (ni, ri, 0, 0)),
    )

    return pl.pallas_call(
        functools.partial(_conv_bn_stats_kernel, pre_norm),
        grid=(n, r),
        in_specs=in_specs,
        out_specs=out_specs,
        out_shape=out_shape,
        compiler_params=_COMPILER_PARAMS,
    )(*args)


def _bn_residual(y_raw, x_id, scale, shift, *, tile_h):
    n, h, w, cp = y_raw.shape
    r = h // tile_h
    blk = pl.BlockSpec((None, tile_h, w, cp), lambda ni, ri: (ni, ri, 0, 0))
    vec = pl.BlockSpec((1, cp), lambda ni, ri: (0, 0))
    return pl.pallas_call(
        _bn_residual_kernel,
        grid=(n, r),
        in_specs=[blk, blk, vec, vec],
        out_specs=blk,
        out_shape=jax.ShapeDtypeStruct((n, h, w, cp), jnp.float32),
        input_output_aliases={0: 0},     # reuse the y2 buffer for the output
        compiler_params=_COMPILER_PARAMS,
    )(y_raw, x_id, scale, shift)


# ---------------------------------------------------------------------------
# Host-side glue
# ---------------------------------------------------------------------------
def _pick_tile_h(h, w, cp):
    """Largest divisor of H whose f32 row block stays under ~2 MiB (keeps the whole
    double-buffered working set well inside scoped VMEM on every generation)."""
    budget = 2 * 1024 * 1024
    best = 1
    for d in range(1, h + 1):
        if h % d == 0 and d * w * cp * 4 <= budget:
            best = d
    return best


def _pad_vec(v, cp):
    return jnp.pad(v, (0, cp - v.shape[0]))


def _fold_weight(w_oihw, cp):
    """OIHW -> HWIO, pad Cin/Cout to cp, fold (kx, cin) per ky; store as bf16."""
    w_hwio = jnp.transpose(w_oihw, (2, 3, 1, 0))
    kh, kw, cin, cout = w_hwio.shape
    w_p = jnp.pad(w_hwio, ((0, 0), (0, 0), (0, cp - cin), (0, cp - cout)))
    return w_p.reshape(kh, kw * cp, cp).astype(jnp.bfloat16)


def _bn_scale_shift(stats, gamma, beta, count):
    """Finalize per-channel BN scale/shift from per-tile partial sums (tiny JAX op)."""
    total = jnp.sum(stats[:, :, 0, :], axis=(0, 1))
    total_sq = jnp.sum(stats[:, :, 1, :], axis=(0, 1))
    mean = total / count
    var = jnp.maximum(total_sq / count - mean * mean, 0.0)   # biased variance
    scale = gamma * lax.rsqrt(var + EPS)
    shift = beta - mean * scale
    return scale.reshape(1, -1), shift.reshape(1, -1)


@functools.partial(jax.jit, static_argnames=("tile_h",))
def res_conv_block(x_nchw, params, *, tile_h=None):
    """Pallas TPU implementation of ResConvBlock.forward (PyTorch NCHW in/out)."""
    w1, b1, g1, be1, w2, b2, g2, be2 = params
    n, c, h, w = x_nchw.shape
    assert w % 8 == 0, "width must be a multiple of 8 (sublane tiling)"

    cp = pl.cdiv(c, LANE) * LANE          # lane-dense channel padding
    if tile_h is None:
        tile_h = _pick_tile_h(h, w, cp)
    assert h % tile_h == 0
    count = float(n * h * w)

    # NCHW -> NHWC with channels zero-padded to a multiple of 128 lanes.
    # This is the only materialized copy of x; there is no spatial jnp.pad anywhere.
    x = jnp.pad(jnp.transpose(x_nchw, (0, 2, 3, 1)),
                ((0, 0), (0, 0), (0, 0), (0, cp - c)))

    w1f, w2f = _fold_weight(w1, cp), _fold_weight(w2, cp)
    b1p = _pad_vec(b1, cp).reshape(1, cp)
    b2p = _pad_vec(b2, cp).reshape(1, cp)
    g1p, be1p = _pad_vec(g1, cp), _pad_vec(be1, cp)
    g2p, be2p = _pad_vec(g2, cp), _pad_vec(be2, cp)

    # Stage 1: conv1 + bias, emitting per-tile BN1 partial stats.
    y1, stats1 = _conv_bn_stage(x, w1f, b1p, tile_h=tile_h)
    scale1, shift1 = _bn_scale_shift(stats1, g1p, be1p, count)

    # Stage 2: BN1 + ReLU fused into conv2's input transform; conv2 + bias + stats.
    y2, stats2 = _conv_bn_stage(y1, w2f, b2p, tile_h=tile_h,
                                scale=scale1, shift=shift1)
    scale2, shift2 = _bn_scale_shift(stats2, g2p, be2p, count)

    # Stage 3: BN2 affine + residual add (lane-dense, aliased onto the y2 buffer).
    out = _bn_residual(y2, x, scale2, shift2, tile_h=tile_h)

    # Drop channel padding, NHWC -> NCHW.
    return jnp.transpose(out[..., :c], (0, 3, 1, 2))


# ---------------------------------------------------------------------------
# Pure-JAX reference (mirrors PyTorch training-mode semantics) for self-check.
# ---------------------------------------------------------------------------
def _ref_conv_bn(x_nchw, w_oihw, b, gamma, beta, relu):
    y = lax.conv_general_dilated(
        x_nchw, w_oihw, window_strides=(1, 1), padding=((1, 1), (1, 1)),
        dimension_numbers=("NCHW", "OIHW", "NCHW"),
    ) + b.reshape(1, -1, 1, 1)
    mean = jnp.mean(y, axis=(0, 2, 3), keepdims=True)
    var = jnp.mean((y - mean) ** 2, axis=(0, 2, 3), keepdims=True)
    y = (y - mean) * lax.rsqrt(var + EPS)
    y = y * gamma.reshape(1, -1, 1, 1) + beta.reshape(1, -1, 1, 1)
    if relu:
        y = jnp.maximum(y, 0.0)
    return y


def res_conv_block_ref(x_nchw, params):
    w1, b1, g1, be1, w2, b2, g2, be2 = params
    h1 = _ref_conv_bn(x_nchw, w1, b1, g1, be1, relu=True)
    y = _ref_conv_bn(h1, w2, b2, g2, be2, relu=False)
    return x_nchw + y


if __name__ == "__main__":
    # Small shapes consistent with the module (residual add requires
    # in_channels == out_channels and stride == 1).
    N, C, H, W = 2, 4, 16, 16
    K = 3

    key = jax.random.PRNGKey(0)
    keys = jax.random.split(key, 9)

    x = jax.random.normal(keys[0], (N, C, H, W), jnp.float32)

    w1 = 0.1 * jax.random.normal(keys[1], (C, C, K, K), jnp.float32)
    b1 = 0.1 * jax.random.normal(keys[2], (C,), jnp.float32)
    g1 = 1.0 + 0.1 * jax.random.normal(keys[3], (C,), jnp.float32)
    be1 = 0.1 * jax.random.normal(keys[4], (C,), jnp.float32)
    w2 = 0.1 * jax.random.normal(keys[5], (C, C, K, K), jnp.float32)
    b2 = 0.1 * jax.random.normal(keys[6], (C,), jnp.float32)
    g2 = 1.0 + 0.1 * jax.random.normal(keys[7], (C,), jnp.float32)
    be2 = 0.1 * jax.random.normal(keys[8], (C,), jnp.float32)

    params = (w1, b1, g1, be1, w2, b2, g2, be2)

    out = jax.block_until_ready(res_conv_block(x, params))
    ref = jax.block_until_ready(res_conv_block_ref(x, params))

    assert out.shape == (N, C, H, W)
    err = float(jnp.max(jnp.abs(out - ref)))
    # bf16 MXU operands (f32 accumulation) + two BatchNorm normalizations ->
    # looser tolerance than a pure-f32 bit-match.
    assert jnp.allclose(out, ref, atol=1e-1, rtol=1e-1), f"max abs err {err}"

    print("KERNEL_OK")
</pallas_src>

<mosaic_0001>
module attributes {stable_mosaic.version = 11 : i64} {
  func.func @_conv_bn_stats_kernel(%arg0: i32, %arg1: i32, %arg2: memref<1x16x16x128xf32, #tpu.memory_space<vmem>>, %arg3: memref<1x1x16x128xf32, #tpu.memory_space<vmem>>, %arg4: memref<1x1x16x128xf32, #tpu.memory_space<vmem>>, %arg5: memref<3x384x128xbf16, #tpu.memory_space<vmem>>, %arg6: memref<1x128xf32, #tpu.memory_space<vmem>>, %arg7: memref<1x16x16x128xf32, #tpu.memory_space<vmem>>, %arg8: memref<1x1x8x128xf32, #tpu.memory_space<vmem>>) attributes {dimension_semantics = [#tpu.dimension_semantics<parallel>, #tpu.dimension_semantics<parallel>], iteration_bounds = array<i64: 2, 1>, scalar_prefetch = 0 : i64, scratch_operands = 0 : i64, tpu.core_type = #tpu.core_type<tc>, window_params = [{transform_indices = @transform_0, window_bounds = array<i64: 1, 16, 16, 128>}, {transform_indices = @transform_1, window_bounds = array<i64: 1, 1, 16, 128>}, {transform_indices = @transform_2, window_bounds = array<i64: 1, 1, 16, 128>}, {pipeline_mode = #tpu.pipeline_mode<synchronous>, transform_indices = @transform_3, window_bounds = array<i64: 3, 384, 128>}, {pipeline_mode = #tpu.pipeline_mode<synchronous>, transform_indices = @transform_4, window_bounds = array<i64: 1, 128>}, {transform_indices = @transform_5, window_bounds = array<i64: 1, 16, 16, 128>}, {transform_indices = @transform_6, window_bounds = array<i64: 1, 1, 8, 128>}]} {
    %c0 = arith.constant 0 : index
    %c0_0 = arith.constant 0 : index
    %c0_1 = arith.constant 0 : index
    %c0_2 = arith.constant 0 : index
    %0 = vector.load %arg3[%c0, %c0_0, %c0_1, %c0_2] : memref<1x1x16x128xf32, #tpu.memory_space<vmem>>, vector<1x1x16x128xf32>
    %1 = vector.shape_cast %0 : vector<1x1x16x128xf32> to vector<1x16x128xf32>
    %c0_3 = arith.constant 0 : index
    %c0_4 = arith.constant 0 : index
    %c0_5 = arith.constant 0 : index
    %c0_6 = arith.constant 0 : index
    %2 = vector.load %arg2[%c0_3, %c0_4, %c0_5, %c0_6] : memref<1x16x16x128xf32, #tpu.memory_space<vmem>>, vector<1x16x16x128xf32>
    %3 = vector.shape_cast %2 : vector<1x16x16x128xf32> to vector<16x16x128xf32>
    %c0_7 = arith.constant 0 : index
    %c0_8 = arith.constant 0 : index
    %c0_9 = arith.constant 0 : index
    %c0_10 = arith.constant 0 : index
    %4 = vector.load %arg4[%c0_7, %c0_8, %c0_9, %c0_10] : memref<1x1x16x128xf32, #tpu.memory_space<vmem>>, vector<1x1x16x128xf32>
    %5 = vector.shape_cast %4 : vector<1x1x16x128xf32> to vector<1x16x128xf32>
    %c0_i32 = arith.constant 0 : i32
    %6 = arith.cmpi eq, %arg1, %c0_i32 : i32
    %cst = arith.constant 0.000000e+00 : f32
    %cst_11 = arith.constant 1.000000e+00 : f32
    %7 = arith.select %6, %cst, %cst_11 : f32
    %8 = vector.broadcast %7 : f32 to vector<1x16x128xf32>
    %9 = arith.mulf %1, %8 : vector<1x16x128xf32>
    %c0_i32_12 = arith.constant 0 : i32
    %10 = arith.cmpi eq, %arg1, %c0_i32_12 : i32
    %cst_13 = arith.constant 0.000000e+00 : f32
    %cst_14 = arith.constant 1.000000e+00 : f32
    %11 = arith.select %10, %cst_13, %cst_14 : f32
    %12 = vector.broadcast %11 : f32 to vector<1x16x128xf32>
    %13 = arith.mulf %5, %12 : vector<1x16x128xf32>
    %14 = tpu.concatenate %9, %3, %13 in 0 : vector<1x16x128xf32>, vector<16x16x128xf32>, vector<1x16x128xf32> -> vector<18x16x128xf32>
    %cst_15 = arith.constant 0.000000e+00 : f32
    %15 = vector.broadcast %cst_15 : f32 to vector<18x8x128xf32>
    %16 = tpu.concatenate %15, %14, %15 in 1 : vector<18x8x128xf32>, vector<18x16x128xf32>, vector<18x8x128xf32> -> vector<18x32x128xf32>
    %cst_16 = arith.constant 0.000000e+00 : f32
    %17 = vector.broadcast %cst_16 : f32 to vector<256x128xf32>
    %18 = vector.extract_strided_slice %16 {offsets = [0, 7, 0], sizes = [16, 16, 128], strides = [1, 1, 1]} : vector<18x32x128xf32> to vector<16x16x128xf32>
    %19 = vector.extract_strided_slice %16 {offsets = [0, 8, 0], sizes = [16, 16, 128], strides = [1, 1, 1]} : vector<18x32x128xf32> to vector<16x16x128xf32>
    %20 = vector.extract_strided_slice %16 {offsets = [0, 9, 0], sizes = [16, 16, 128], strides = [1, 1, 1]} : vector<18x32x128xf32> to vector<16x16x128xf32>
    %21 = tpu.concatenate %18, %19, %20 in 2 : vector<16x16x128xf32>, vector<16x16x128xf32>, vector<16x16x128xf32> -> vector<16x16x384xf32>
    %22 = vector.shape_cast %21 : vector<16x16x384xf32> to vector<256x384xf32>
    %23 = arith.truncf %22 : vector<256x384xf32> to vector<256x384xbf16>
    %c0_17 = arith.constant 0 : index
    %c0_18 = arith.constant 0 : index
    %c0_19 = arith.constant 0 : index
    %24 = vector.load %arg5[%c0_17, %c0_18, %c0_19] : memref<3x384x128xbf16, #tpu.memory_space<vmem>>, vector<1x384x128xbf16>
    %25 = vector.shape_cast %24 : vector<1x384x128xbf16> to vector<384x128xbf16>
    %cst_20 = arith.constant dense<0.000000e+00> : vector<256x128xf32>
    %26 = tpu.matmul %23, %25, %cst_20 {dimension_numbers = #tpu.dot_dimension_numbers<[1], [0], [0], [1], [0, 0, 1, 1], [], []>} : vector<256x384xbf16>, vector<384x128xbf16>, vector<256x128xf32> -> vector<256x128xf32>
    %27 = arith.addf %17, %26 : vector<256x128xf32>
    %28 = vector.extract_strided_slice %16 {offsets = [1, 7, 0], sizes = [16, 16, 128], strides = [1, 1, 1]} : vector<18x32x128xf32> to vector<16x16x128xf32>
    %29 = vector.extract_strided_slice %16 {offsets = [1, 8, 0], sizes = [16, 16, 128], strides = [1, 1, 1]} : vector<18x32x128xf32> to vector<16x16x128xf32>
    %30 = vector.extract_strided_slice %16 {offsets = [1, 9, 0], sizes = [16, 16, 128], strides = [1, 1, 1]} : vector<18x32x128xf32> to vector<16x16x128xf32>
    %31 = tpu.concatenate %28, %29, %30 in 2 : vector<16x16x128xf32>, vector<16x16x128xf32>, vector<16x16x128xf32> -> vector<16x16x384xf32>
    %32 = vector.shape_cast %31 : vector<16x16x384xf32> to vector<256x384xf32>
    %33 = arith.truncf %32 : vector<256x384xf32> to vector<256x384xbf16>
    %c1 = arith.constant 1 : index
    %c0_21 = arith.constant 0 : index
    %c0_22 = arith.constant 0 : index
    %34 = vector.load %arg5[%c1, %c0_21, %c0_22] : memref<3x384x128xbf16, #tpu.memory_space<vmem>>, vector<1x384x128xbf16>
    %35 = vector.shape_cast %34 : vector<1x384x128xbf16> to vector<384x128xbf16>
    %cst_23 = arith.constant dense<0.000000e+00> : vector<256x128xf32>
    %36 = tpu.matmul %33, %35, %cst_23 {dimension_numbers = #tpu.dot_dimension_numbers<[1], [0], [0], [1], [0, 0, 1, 1], [], []>} : vector<256x384xbf16>, vector<384x128xbf16>, vector<256x128xf32> -> vector<256x128xf32>
    %37 = arith.addf %27, %36 : vector<256x128xf32>
    %38 = vector.extract_strided_slice %16 {offsets = [2, 7, 0], sizes = [16, 16, 128], strides = [1, 1, 1]} : vector<18x32x128xf32> to vector<16x16x128xf32>
    %39 = vector.extract_strided_slice %16 {offsets = [2, 8, 0], sizes = [16, 16, 128], strides = [1, 1, 1]} : vector<18x32x128xf32> to vector<16x16x128xf32>
    %40 = vector.extract_strided_slice %16 {offsets = [2, 9, 0], sizes = [16, 16, 128], strides = [1, 1, 1]} : vector<18x32x128xf32> to vector<16x16x128xf32>
    %41 = tpu.concatenate %38, %39, %40 in 2 : vector<16x16x128xf32>, vector<16x16x128xf32>, vector<16x16x128xf32> -> vector<16x16x384xf32>
    %42 = vector.shape_cast %41 : vector<16x16x384xf32> to vector<256x384xf32>
    %43 = arith.truncf %42 : vector<256x384xf32> to vector<256x384xbf16>
    %c2 = arith.constant 2 : index
    %c0_24 = arith.constant 0 : index
    %c0_25 = arith.constant 0 : index
    %44 = vector.load %arg5[%c2, %c0_24, %c0_25] : memref<3x384x128xbf16, #tpu.memory_space<vmem>>, vector<1x384x128xbf16>
    %45 = vector.shape_cast %44 : vector<1x384x128xbf16> to vector<384x128xbf16>
    %cst_26 = arith.constant dense<0.000000e+00> : vector<256x128xf32>
    %46 = tpu.matmul %43, %45, %cst_26 {dimension_numbers = #tpu.dot_dimension_numbers<[1], [0], [0], [1], [0, 0, 1, 1], [], []>} : vector<256x384xbf16>, vector<384x128xbf16>, vector<256x128xf32> -> vector<256x128xf32>
    %47 = arith.addf %37, %46 : vector<256x128xf32>
    %c0_27 = arith.constant 0 : index
    %c0_28 = arith.constant 0 : index
    %48 = vector.load %arg6[%c0_27, %c0_28] : memref<1x128xf32, #tpu.memory_space<vmem>>, vector<1x128xf32>
    %49 = vector.broadcast %48 : vector<1x128xf32> to vector<256x128xf32>
    %50 = arith.addf %47, %49 : vector<256x128xf32>
    %51 = vector.shape_cast %50 : vector<256x128xf32> to vector<16x16x128xf32>
    %c0_29 = arith.constant 0 : index
    %c0_30 = arith.constant 0 : index
    %c0_31 = arith.constant 0 : index
    %c0_32 = arith.constant 0 : index
    %52 = vector.load %arg7[%c0_29, %c0_30, %c0_31, %c0_32] : memref<1x16x16x128xf32, #tpu.memory_space<vmem>>, vector<1x16x16x128xf32>
    %53 = vector.shape_cast %52 : vector<1x16x16x128xf32> to vector<16x16x128xf32>
    %54 = vector.shape_cast %51 : vector<16x16x128xf32> to vector<1x16x16x128xf32>
    tpu.vector_store %arg7[%c0_29, %c0_30, %c0_31, %c0_32], %54 {strides = array<i32>} : memref<1x16x16x128xf32, #tpu.memory_space<vmem>>, vector<1x16x16x128xf32>,
    %cst_33 = arith.constant dense<0.000000e+00> : vector<128xf32>
    %55 = vector.multi_reduction <add>, %50, %cst_33 [0] : vector<256x128xf32> to vector<128xf32>
    %56 = vector.shape_cast %55 : vector<128xf32> to vector<1x128xf32>
    %57 = arith.mulf %50, %50 : vector<256x128xf32>
    %cst_34 = arith.constant dense<0.000000e+00> : vector<128xf32>
    %58 = vector.multi_reduction <add>, %57, %cst_34 [0] : vector<256x128xf32> to vector<128xf32>
    %59 = vector.shape_cast %58 : vector<128xf32> to vector<1x128xf32>
    %cst_35 = arith.constant 0.000000e+00 : f32
    %60 = vector.broadcast %cst_35 : f32 to vector<6x128xf32>
    %61 = tpu.concatenate %56, %59, %60 in 0 : vector<1x128xf32>, vector<1x128xf32>, vector<6x128xf32> -> vector<8x128xf32>
    %62 = vector.shape_cast %61 : vector<8x128xf32> to vector<1x8x128xf32>
    %c0_36 = arith.constant 0 : index
    %c0_37 = arith.constant 0 : index
    %c0_38 = arith.constant 0 : index
    %c0_39 = arith.constant 0 : index
    %63 = vector.load %arg8[%c0_36, %c0_37, %c0_38, %c0_39] : memref<1x1x8x128xf32, #tpu.memory_space<vmem>>, vector<1x1x8x128xf32>
    %64 = vector.shape_cast %63 : vector<1x1x8x128xf32> to vector<1x8x128xf32>
    %65 = vector.shape_cast %62 : vector<1x8x128xf32> to vector<1x1x8x128xf32>
    tpu.vector_store %arg8[%c0_36, %c0_37, %c0_38, %c0_39], %65 {strides = array<i32>} : memref<1x1x8x128xf32, #tpu.memory_space<vmem>>, vector<1x1x8x128xf32>,
    return
  }
  func.func @transform_0(%arg0: i32, %arg1: i32) -> (i32, i32, i32, i32) {
    %c0_i32 = arith.constant 0 : i32
    %c0_i32_0 = arith.constant 0 : i32
    %c0_i32_1 = arith.constant 0 : i32
    return %arg0, %arg1, %c0_i32, %c0_i32_0 : i32, i32, i32, i32
  }
  func.func @transform_1(%arg0: i32, %arg1: i32) -> (i32, i32, i32, i32) {
    %c16_i32 = arith.constant 16 : i32
    %0 = arith.muli %arg1, %c16_i32 : i32
    %c1_i32 = arith.constant 1 : i32
    %1 = arith.subi %0, %c1_i32 : i32
    %c0_i32 = arith.constant 0 : i32
    %2 = arith.maxsi %1, %c0_i32 : i32
    %c0_i32_0 = arith.constant 0 : i32
    %c0_i32_1 = arith.constant 0 : i32
    %c0_i32_2 = arith.constant 0 : i32
    return %arg0, %2, %c0_i32_0, %c0_i32_1 : i32, i32, i32, i32
  }
  func.func @transform_2(%arg0: i32, %arg1: i32) -> (i32, i32, i32, i32) {
    %c16_i32 = arith.constant 16 : i32
    %0 = arith.muli %arg1, %c16_i32 : i32
    %c16_i32_0 = arith.constant 16 : i32
    %1 = arith.addi %0, %c16_i32_0 : i32
    %c15_i32 = arith.constant 15 : i32
    %2 = arith.minsi %1, %c15_i32 : i32
    %c0_i32 = arith.constant 0 : i32
    %c0_i32_1 = arith.constant 0 : i32
    %c0_i32_2 = arith.constant 0 : i32
    return %arg0, %2, %c0_i32, %c0_i32_1 : i32, i32, i32, i32
  }
  func.func @transform_3(%arg0: i32, %arg1: i32) -> (i32, i32, i32) {
    %c0_i32 = arith.constant 0 : i32
    %c0_i32_0 = arith.constant 0 : i32
    %c0_i32_1 = arith.constant 0 : i32
    %c0_i32_2 = arith.constant 0 : i32
    return %c0_i32, %c0_i32_0, %c0_i32_1 : i32, i32, i32
  }
  func.func @transform_4(%arg0: i32, %arg1: i32) -> (i32, i32) {
    %c0_i32 = arith.constant 0 : i32
    %c0_i32_0 = arith.constant 0 : i32
    %c0_i32_1 = arith.constant 0 : i32
    return %c0_i32, %c0_i32_0 : i32, i32
  }
  func.func @transform_5(%arg0: i32, %arg1: i32) -> (i32, i32, i32, i32) {
    %c0_i32 = arith.constant 0 : i32
    %c0_i32_0 = arith.constant 0 : i32
    %c0_i32_1 = arith.constant 0 : i32
    return %arg0, %arg1, %c0_i32, %c0_i32_0 : i32, i32, i32, i32
  }
  func.func @transform_6(%arg0: i32, %arg1: i32) -> (i32, i32, i32, i32) {
    %c0_i32 = arith.constant 0 : i32
    %c0_i32_0 = arith.constant 0 : i32
    %c0_i32_1 = arith.constant 0 : i32
    return %arg0, %arg1, %c0_i32, %c0_i32_0 : i32, i32, i32, i32
  }
}

module attributes {stable_mosaic.version = 11 : i64} {
  func.func @_bn_residual_kernel(%arg0: i32, %arg1: i32, %arg2: memref<1x16x16x128xf32, #tpu.memory_space<vmem>>, %arg3: memref<1x16x16x128xf32, #tpu.memory_space<vmem>>, %arg4: memref<1x128xf32, #tpu.memory_space<vmem>>, %arg5: memref<1x128xf32, #tpu.memory_space<vmem>>, %arg6: memref<1x16x16x128xf32, #tpu.memory_space<vmem>>) attributes {dimension_semantics = [#tpu.dimension_semantics<parallel>, #tpu.dimension_semantics<parallel>], iteration_bounds = array<i64: 2, 1>, scalar_prefetch = 0 : i64, scratch_operands = 0 : i64, tpu.core_type = #tpu.core_type<tc>, window_params = [{transform_indices = @transform_0, window_bounds = array<i64: 1, 16, 16, 128>}, {transform_indices = @transform_1, window_bounds = array<i64: 1, 16, 16, 128>}, {pipeline_mode = #tpu.pipeline_mode<synchronous>, transform_indices = @transform_2, window_bounds = array<i64: 1, 128>}, {pipeline_mode = #tpu.pipeline_mode<synchronous>, transform_indices = @transform_3, window_bounds = array<i64: 1, 128>}, {transform_indices = @transform_4, window_bounds = array<i64: 1, 16, 16, 128>}]} {
    %c0 = arith.constant 0 : index
    %c0_0 = arith.constant 0 : index
    %0 = vector.load %arg4[%c0, %c0_0] : memref<1x128xf32, #tpu.memory_space<vmem>>, vector<1x128xf32>
    %1 = vector.shape_cast %0 : vector<1x128xf32> to vector<1x1x128xf32>
    %c0_1 = arith.constant 0 : index
    %c0_2 = arith.constant 0 : index
    %2 = vector.load %arg5[%c0_1, %c0_2] : memref<1x128xf32, #tpu.memory_space<vmem>>, vector<1x128xf32>
    %3 = vector.shape_cast %2 : vector<1x128xf32> to vector<1x1x128xf32>
    %c0_3 = arith.constant 0 : index
    %c0_4 = arith.constant 0 : index
    %c0_5 = arith.constant 0 : index
    %c0_6 = arith.constant 0 : index
    %4 = vector.load %arg3[%c0_3, %c0_4, %c0_5, %c0_6] : memref<1x16x16x128xf32, #tpu.memory_space<vmem>>, vector<1x16x16x128xf32>
    %5 = vector.shape_cast %4 : vector<1x16x16x128xf32> to vector<16x16x128xf32>
    %c0_7 = arith.constant 0 : index
    %c0_8 = arith.constant 0 : index
    %c0_9 = arith.constant 0 : index
    %c0_10 = arith.constant 0 : index
    %6 = vector.load %arg2[%c0_7, %c0_8, %c0_9, %c0_10] : memref<1x16x16x128xf32, #tpu.memory_space<vmem>>, vector<1x16x16x128xf32>
    %7 = vector.shape_cast %6 : vector<1x16x16x128xf32> to vector<16x16x128xf32>
    %8 = vector.broadcast %1 : vector<1x1x128xf32> to vector<16x16x128xf32>
    %9 = arith.mulf %7, %8 : vector<16x16x128xf32>
    %10 = arith.addf %5, %9 : vector<16x16x128xf32>
    %11 = vector.broadcast %3 : vector<1x1x128xf32> to vector<16x16x128xf32>
    %12 = arith.addf %10, %11 : vector<16x16x128xf32>
    %c0_11 = arith.constant 0 : index
    %c0_12 = arith.constant 0 : index
    %c0_13 = arith.constant 0 : index
    %c0_14 = arith.constant 0 : index
    %13 = vector.load %arg6[%c0_11, %c0_12, %c0_13, %c0_14] : memref<1x16x16x128xf32, #tpu.memory_space<vmem>>, vector<1x16x16x128xf32>
    %14 = vector.shape_cast %13 : vector<1x16x16x128xf32> to vector<16x16x128xf32>
    %15 = vector.shape_cast %12 : vector<16x16x128xf32> to vector<1x16x16x128xf32>
    tpu.vector_store %arg6[%c0_11, %c0_12, %c0_13, %c0_14], %15 {strides = array<i32>} : memref<1x16x16x128xf32, #tpu.memory_space<vmem>>, vector<1x16x16x128xf32>,
    return
  }
  func.func @transform_0(%arg0: i32, %arg1: i32) -> (i32, i32, i32, i32) {
    %c0_i32 = arith.constant 0 : i32
    %c0_i32_0 = arith.constant 0 : i32
    %c0_i32_1 = arith.constant 0 : i32
    return %arg0, %arg1, %c0_i32, %c0_i32_0 : i32, i32, i32, i32
  }
  func.func @transform_1(%arg0: i32, %arg1: i32) -> (i32, i32, i32, i32) {
    %c0_i32 = arith.constant 0 : i32
    %c0_i32_0 = arith.constant 0 : i32
    %c0_i32_1 = arith.constant 0 : i32
    return %arg0, %arg1, %c0_i32, %c0_i32_0 : i32, i32, i32, i32
  }
  func.func @transform_2(%arg0: i32, %arg1: i32) -> (i32, i32) {
    %c0_i32 = arith.constant 0 : i32
    %c0_i32_0 = arith.constant 0 : i32
    %c0_i32_1 = arith.constant 0 : i32
    return %c0_i32, %c0_i32_0 : i32, i32
  }
  func.func @transform_3(%arg0: i32, %arg1: i32) -> (i32, i32) {
    %c0_i32 = arith.constant 0 : i32
    %c0_i32_0 = arith.constant 0 : i32
    %c0_i32_1 = arith.constant 0 : i32
    return %c0_i32, %c0_i32_0 : i32, i32
  }
  func.func @transform_4(%arg0: i32, %arg1: i32) -> (i32, i32, i32, i32) {
    %c0_i32 = arith.constant 0 : i32
    %c0_i32_0 = arith.constant 0 : i32
    %c0_i32_1 = arith.constant 0 : i32
    return %arg0, %arg1, %c0_i32, %c0_i32_0 : i32, i32, i32, i32
  }
}

module attributes {stable_mosaic.version = 11 : i64} {
  func.func @_conv_bn_stats_kernel(%arg0: i32, %arg1: i32, %arg2: memref<1x16x16x128xf32, #tpu.memory_space<vmem>>, %arg3: memref<1x1x16x128xf32, #tpu.memory_space<vmem>>, %arg4: memref<1x1x16x128xf32, #tpu.memory_space<vmem>>, %arg5: memref<3x384x128xbf16, #tpu.memory_space<vmem>>, %arg6: memref<1x128xf32, #tpu.memory_space<vmem>>, %arg7: memref<1x128xf32, #tpu.memory_space<vmem>>, %arg8: memref<1x128xf32, #tpu.memory_space<vmem>>, %arg9: memref<1x16x16x128xf32, #tpu.memory_space<vmem>>, %arg10: memref<1x1x8x128xf32, #tpu.memory_space<vmem>>) attributes {dimension_semantics = [#tpu.dimension_semantics<parallel>, #tpu.dimension_semantics<parallel>], iteration_bounds = array<i64: 2, 1>, scalar_prefetch = 0 : i64, scratch_operands = 0 : i64, tpu.core_type = #tpu.core_type<tc>, window_params = [{transform_indices = @transform_0, window_bounds = array<i64: 1, 16, 16, 128>}, {transform_indices = @transform_1, window_bounds = array<i64: 1, 1, 16, 128>}, {transform_indices = @transform_2, window_bounds = array<i64: 1, 1, 16, 128>}, {pipeline_mode = #tpu.pipeline_mode<synchronous>, transform_indices = @transform_3, window_bounds = array<i64: 3, 384, 128>}, {pipeline_mode = #tpu.pipeline_mode<synchronous>, transform_indices = @transform_4, window_bounds = array<i64: 1, 128>}, {pipeline_mode = #tpu.pipeline_mode<synchronous>, transform_indices = @transform_5, window_bounds = array<i64: 1, 128>}, {pipeline_mode = #tpu.pipeline_mode<synchronous>, transform_indices = @transform_6, window_bounds = array<i64: 1, 128>}, {transform_indices = @transform_7, window_bounds = array<i64: 1, 16, 16, 128>}, {transform_indices = @transform_8, window_bounds = array<i64: 1, 1, 8, 128>}]} {
    %c0 = arith.constant 0 : index
    %c0_0 = arith.constant 0 : index
    %c0_1 = arith.constant 0 : index
    %c0_2 = arith.constant 0 : index
    %0 = vector.load %arg3[%c0, %c0_0, %c0_1, %c0_2] : memref<1x1x16x128xf32, #tpu.memory_space<vmem>>, vector<1x1x16x128xf32>
    %1 = vector.shape_cast %0 : vector<1x1x16x128xf32> to vector<1x16x128xf32>
    %c0_3 = arith.constant 0 : index
    %c0_4 = arith.constant 0 : index
    %c0_5 = arith.constant 0 : index
    %c0_6 = arith.constant 0 : index
    %2 = vector.load %arg2[%c0_3, %c0_4, %c0_5, %c0_6] : memref<1x16x16x128xf32, #tpu.memory_space<vmem>>, vector<1x16x16x128xf32>
    %3 = vector.shape_cast %2 : vector<1x16x16x128xf32> to vector<16x16x128xf32>
    %c0_7 = arith.constant 0 : index
    %c0_8 = arith.constant 0 : index
    %c0_9 = arith.constant 0 : index
    %c0_10 = arith.constant 0 : index
    %4 = vector.load %arg4[%c0_7, %c0_8, %c0_9, %c0_10] : memref<1x1x16x128xf32, #tpu.memory_space<vmem>>, vector<1x1x16x128xf32>
    %5 = vector.shape_cast %4 : vector<1x1x16x128xf32> to vector<1x16x128xf32>
    %c0_11 = arith.constant 0 : index
    %c0_12 = arith.constant 0 : index
    %6 = vector.load %arg7[%c0_11, %c0_12] : memref<1x128xf32, #tpu.memory_space<vmem>>, vector<1x128xf32>
    %7 = vector.shape_cast %6 : vector<1x128xf32> to vector<1x1x128xf32>
    %c0_13 = arith.constant 0 : index
    %c0_14 = arith.constant 0 : index
    %8 = vector.load %arg8[%c0_13, %c0_14] : memref<1x128xf32, #tpu.memory_space<vmem>>, vector<1x128xf32>
    %9 = vector.shape_cast %8 : vector<1x128xf32> to vector<1x1x128xf32>
    %10 = vector.broadcast %7 : vector<1x1x128xf32> to vector<1x16x128xf32>
    %11 = arith.mulf %1, %10 : vector<1x16x128xf32>
    %12 = vector.broadcast %9 : vector<1x1x128xf32> to vector<1x16x128xf32>
    %13 = arith.addf %11, %12 : vector<1x16x128xf32>
    %cst = arith.constant 0.000000e+00 : f32
    %14 = vector.broadcast %cst : f32 to vector<1x16x128xf32>
    %15 = arith.maximumf %13, %14 : vector<1x16x128xf32>
    %16 = vector.broadcast %7 : vector<1x1x128xf32> to vector<16x16x128xf32>
    %17 = arith.mulf %3, %16 : vector<16x16x128xf32>
    %18 = vector.broadcast %9 : vector<1x1x128xf32> to vector<16x16x128xf32>
    %19 = arith.addf %17, %18 : vector<16x16x128xf32>
    %cst_15 = arith.constant 0.000000e+00 : f32
    %20 = vector.broadcast %cst_15 : f32 to vector<16x16x128xf32>
    %21 = arith.maximumf %19, %20 : vector<16x16x128xf32>
    %22 = vector.broadcast %7 : vector<1x1x128xf32> to vector<1x16x128xf32>
    %23 = arith.mulf %5, %22 : vector<1x16x128xf32>
    %24 = vector.broadcast %9 : vector<1x1x128xf32> to vector<1x16x128xf32>
    %25 = arith.addf %23, %24 : vector<1x16x128xf32>
    %cst_16 = arith.constant 0.000000e+00 : f32
    %26 = vector.broadcast %cst_16 : f32 to vector<1x16x128xf32>
    %27 = arith.maximumf %25, %26 : vector<1x16x128xf32>
    %c0_i32 = arith.constant 0 : i32
    %28 = arith.cmpi eq, %arg1, %c0_i32 : i32
    %cst_17 = arith.constant 0.000000e+00 : f32
    %cst_18 = arith.constant 1.000000e+00 : f32
    %29 = arith.select %28, %cst_17, %cst_18 : f32
    %30 = vector.broadcast %29 : f32 to vector<1x16x128xf32>
    %31 = arith.mulf %15, %30 : vector<1x16x128xf32>
    %c0_i32_19 = arith.constant 0 : i32
    %32 = arith.cmpi eq, %arg1, %c0_i32_19 : i32
    %cst_20 = arith.constant 0.000000e+00 : f32
    %cst_21 = arith.constant 1.000000e+00 : f32
    %33 = arith.select %32, %cst_20, %cst_21 : f32
    %34 = vector.broadcast %33 : f32 to vector<1x16x128xf32>
    %35 = arith.mulf %27, %34 : vector<1x16x128xf32>
    %36 = tpu.concatenate %31, %21, %35 in 0 : vector<1x16x128xf32>, vector<16x16x128xf32>, vector<1x16x128xf32> -> vector<18x16x128xf32>
    %cst_22 = arith.constant 0.000000e+00 : f32
    %37 = vector.broadcast %cst_22 : f32 to vector<18x8x128xf32>
    %38 = tpu.concatenate %37, %36, %37 in 1 : vector<18x8x128xf32>, vector<18x16x128xf32>, vector<18x8x128xf32> -> vector<18x32x128xf32>
    %cst_23 = arith.constant 0.000000e+00 : f32
    %39 = vector.broadcast %cst_23 : f32 to vector<256x128xf32>
    %40 = vector.extract_strided_slice %38 {offsets = [0, 7, 0], sizes = [16, 16, 128], strides = [1, 1, 1]} : vector<18x32x128xf32> to vector<16x16x128xf32>
    %41 = vector.extract_strided_slice %38 {offsets = [0, 8, 0], sizes = [16, 16, 128], strides = [1, 1, 1]} : vector<18x32x128xf32> to vector<16x16x128xf32>
    %42 = vector.extract_strided_slice %38 {offsets = [0, 9, 0], sizes = [16, 16, 128], strides = [1, 1, 1]} : vector<18x32x128xf32> to vector<16x16x128xf32>
    %43 = tpu.concatenate %40, %41, %42 in 2 : vector<16x16x128xf32>, vector<16x16x128xf32>, vector<16x16x128xf32> -> vector<16x16x384xf32>
    %44 = vector.shape_cast %43 : vector<16x16x384xf32> to vector<256x384xf32>
    %45 = arith.truncf %44 : vector<256x384xf32> to vector<256x384xbf16>
    %c0_24 = arith.constant 0 : index
    %c0_25 = arith.constant 0 : index
    %c0_26 = arith.constant 0 : index
    %46 = vector.load %arg5[%c0_24, %c0_25, %c0_26] : memref<3x384x128xbf16, #tpu.memory_space<vmem>>, vector<1x384x128xbf16>
    %47 = vector.shape_cast %46 : vector<1x384x128xbf16> to vector<384x128xbf16>
    %cst_27 = arith.constant dense<0.000000e+00> : vector<256x128xf32>
    %48 = tpu.matmul %45, %47, %cst_27 {dimension_numbers = #tpu.dot_dimension_numbers<[1], [0], [0], [1], [0, 0, 1, 1], [], []>} : vector<256x384xbf16>, vector<384x128xbf16>, vector<256x128xf32> -> vector<256x128xf32>
    %49 = arith.addf %39, %48 : vector<256x128xf32>
    %50 = vector.extract_strided_slice %38 {offsets = [1, 7, 0], sizes = [16, 16, 128], strides = [1, 1, 1]} : vector<18x32x128xf32> to vector<16x16x128xf32>
    %51 = vector.extract_strided_slice %38 {offsets = [1, 8, 0], sizes = [16, 16, 128], strides = [1, 1, 1]} : vector<18x32x128xf32> to vector<16x16x128xf32>
    %52 = vector.extract_strided_slice %38 {offsets = [1, 9, 0], sizes = [16, 16, 128], strides = [1, 1, 1]} : vector<18x32x128xf32> to vector<16x16x128xf32>
    %53 = tpu.concatenate %50, %51, %52 in 2 : vector<16x16x128xf32>, vector<16x16x128xf32>, vector<16x16x128xf32> -> vector<16x16x384xf32>
    %54 = vector.shape_cast %53 : vector<16x16x384xf32> to vector<256x384xf32>
    %55 = arith.truncf %54 : vector<256x384xf32> to vector<256x384xbf16>
    %c1 = arith.constant 1 : index
    %c0_28 = arith.constant 0 : index
    %c0_29 = arith.constant 0 : index
    %56 = vector.load %arg5[%c1, %c0_28, %c0_29] : memref<3x384x128xbf16, #tpu.memory_space<vmem>>, vector<1x384x128xbf16>
    %57 = vector.shape_cast %56 : vector<1x384x128xbf16> to vector<384x128xbf16>
    %cst_30 = arith.constant dense<0.000000e+00> : vector<256x128xf32>
    %58 = tpu.matmul %55, %57, %cst_30 {dimension_numbers = #tpu.dot_dimension_numbers<[1], [0], [0], [1], [0, 0, 1, 1], [], []>} : vector<256x384xbf16>, vector<384x128xbf16>, vector<256x128xf32> -> vector<256x128xf32>
    %59 = arith.addf %49, %58 : vector<256x128xf32>
    %60 = vector.extract_strided_slice %38 {offsets = [2, 7, 0], sizes = [16, 16, 128], strides = [1, 1, 1]} : vector<18x32x128xf32> to vector<16x16x128xf32>
    %61 = vector.extract_strided_slice %38 {offsets = [2, 8, 0], sizes = [16, 16, 128], strides = [1, 1, 1]} : vector<18x32x128xf32> to vector<16x16x128xf32>
    %62 = vector.extract_strided_slice %38 {offsets = [2, 9, 0], sizes = [16, 16, 128], strides = [1, 1, 1]} : vector<18x32x128xf32> to vector<16x16x128xf32>
    %63 = tpu.concatenate %60, %61, %62 in 2 : vector<16x16x128xf32>, vector<16x16x128xf32>, vector<16x16x128xf32> -> vector<16x16x384xf32>
    %64 = vector.shape_cast %63 : vector<16x16x384xf32> to vector<256x384xf32>
    %65 = arith.truncf %64 : vector<256x384xf32> to vector<256x384xbf16>
    %c2 = arith.constant 2 : index
    %c0_31 = arith.constant 0 : index
    %c0_32 = arith.constant 0 : index
    %66 = vector.load %arg5[%c2, %c0_31, %c0_32] : memref<3x384x128xbf16, #tpu.memory_space<vmem>>, vector<1x384x128xbf16>
    %67 = vector.shape_cast %66 : vector<1x384x128xbf16> to vector<384x128xbf16>
    %cst_33 = arith.constant dense<0.000000e+00> : vector<256x128xf32>
    %68 = tpu.matmul %65, %67, %cst_33 {dimension_numbers = #tpu.dot_dimension_numbers<[1], [0], [0], [1], [0, 0, 1, 1], [], []>} : vector<256x384xbf16>, vector<384x128xbf16>, vector<256x128xf32> -> vector<256x128xf32>
    %69 = arith.addf %59, %68 : vector<256x128xf32>
    %c0_34 = arith.constant 0 : index
    %c0_35 = arith.constant 0 : index
    %70 = vector.load %arg6[%c0_34, %c0_35] : memref<1x128xf32, #tpu.memory_space<vmem>>, vector<1x128xf32>
    %71 = vector.broadcast %70 : vector<1x128xf32> to vector<256x128xf32>
    %72 = arith.addf %69, %71 : vector<256x128xf32>
    %73 = vector.shape_cast %72 : vector<256x128xf32> to vector<16x16x128xf32>
    %c0_36 = arith.constant 0 : index
    %c0_37 = arith.constant 0 : index
    %c0_38 = arith.constant 0 : index
    %c0_39 = arith.constant 0 : index
    %74 = vector.load %arg9[%c0_36, %c0_37, %c0_38, %c0_39] : memref<1x16x16x128xf32, #tpu.memory_space<vmem>>, vector<1x16x16x128xf32>
    %75 = vector.shape_cast %74 : vector<1x16x16x128xf32> to vector<16x16x128xf32>
    %76 = vector.shape_cast %73 : vector<16x16x128xf32> to vector<1x16x16x128xf32>
    tpu.vector_store %arg9[%c0_36, %c0_37, %c0_38, %c0_39], %76 {strides = array<i32>} : memref<1x16x16x128xf32, #tpu.memory_space<vmem>>, vector<1x16x16x128xf32>,
    %cst_40 = arith.constant dense<0.000000e+00> : vector<128xf32>
    %77 = vector.multi_reduction <add>, %72, %cst_40 [0] : vector<256x128xf32> to vector<128xf32>
    %78 = vector.shape_cast %77 : vector<128xf32> to vector<1x128xf32>
    %79 = arith.mulf %72, %72 : vector<256x128xf32>
    %cst_41 = arith.constant dense<0.000000e+00> : vector<128xf32>
    %80 = vector.multi_reduction <add>, %79, %cst_41 [0] : vector<256x128xf32> to vector<128xf32>
    %81 = vector.shape_cast %80 : vector<128xf32> to vector<1x128xf32>
    %cst_42 = arith.constant 0.000000e+00 : f32
    %82 = vector.broadcast %cst_42 : f32 to vector<6x128xf32>
    %83 = tpu.concatenate %78, %81, %82 in 0 : vector<1x128xf32>, vector<1x128xf32>, vector<6x128xf32> -> vector<8x128xf32>
    %84 = vector.shape_cast %83 : vector<8x128xf32> to vector<1x8x128xf32>
    %c0_43 = arith.constant 0 : index
    %c0_44 = arith.constant 0 : index
    %c0_45 = arith.constant 0 : index
    %c0_46 = arith.constant 0 : index
    %85 = vector.load %arg10[%c0_43, %c0_44, %c0_45, %c0_46] : memref<1x1x8x128xf32, #tpu.memory_space<vmem>>, vector<1x1x8x128xf32>
    %86 = vector.shape_cast %85 : vector<1x1x8x128xf32> to vector<1x8x128xf32>
    %87 = vector.shape_cast %84 : vector<1x8x128xf32> to vector<1x1x8x128xf32>
    tpu.vector_store %arg10[%c0_43, %c0_44, %c0_45, %c0_46], %87 {strides = array<i32>} : memref<1x1x8x128xf32, #tpu.memory_space<vmem>>, vector<1x1x8x128xf32>,
    return
  }
  func.func @transform_0(%arg0: i32, %arg1: i32) -> (i32, i32, i32, i32) {
    %c0_i32 = arith.constant 0 : i32
    %c0_i32_0 = arith.constant 0 : i32
    %c0_i32_1 = arith.constant 0 : i32
    return %arg0, %arg1, %c0_i32, %c0_i32_0 : i32, i32, i32, i32
  }
  func.func @transform_1(%arg0: i32, %arg1: i32) -> (i32, i32, i32, i32) {
    %c16_i32 = arith.constant 16 : i32
    %0 = arith.muli %arg1, %c16_i32 : i32
    %c1_i32 = arith.constant 1 : i32
    %1 = arith.subi %0, %c1_i32 : i32
    %c0_i32 = arith.constant 0 : i32
    %2 = arith.maxsi %1, %c0_i32 : i32
    %c0_i32_0 = arith.constant 0 : i32
    %c0_i32_1 = arith.constant 0 : i32
    %c0_i32_2 = arith.constant 0 : i32
    return %arg0, %2, %c0_i32_0, %c0_i32_1 : i32, i32, i32, i32
  }
  func.func @transform_2(%arg0: i32, %arg1: i32) -> (i32, i32, i32, i32) {
    %c16_i32 = arith.constant 16 : i32
    %0 = arith.muli %arg1, %c16_i32 : i32
    %c16_i32_0 = arith.constant 16 : i32
    %1 = arith.addi %0, %c16_i32_0 : i32
    %c15_i32 = arith.constant 15 : i32
    %2 = arith.minsi %1, %c15_i32 : i32
    %c0_i32 = arith.constant 0 : i32
    %c0_i32_1 = arith.constant 0 : i32
    %c0_i32_2 = arith.constant 0 : i32
    return %arg0, %2, %c0_i32, %c0_i32_1 : i32, i32, i32, i32
  }
  func.func @transform_3(%arg0: i32, %arg1: i32) -> (i32, i32, i32) {
    %c0_i32 = arith.constant 0 : i32
    %c0_i32_0 = arith.constant 0 : i32
    %c0_i32_1 = arith.constant 0 : i32
    %c0_i32_2 = arith.constant 0 : i32
    return %c0_i32, %c0_i32_0, %c0_i32_1 : i32, i32, i32
  }
  func.func @transform_4(%arg0: i32, %arg1: i32) -> (i32, i32) {
    %c0_i32 = arith.constant 0 : i32
    %c0_i32_0 = arith.constant 0 : i32
    %c0_i32_1 = arith.constant 0 : i32
    return %c0_i32, %c0_i32_0 : i32, i32
  }
  func.func @transform_5(%arg0: i32, %arg1: i32) -> (i32, i32) {
    %c0_i32 = arith.constant 0 : i32
    %c0_i32_0 = arith.constant 0 : i32
    %c0_i32_1 = arith.constant 0 : i32
    return %c0_i32, %c0_i32_0 : i32, i32
  }
  func.func @transform_6(%arg0: i32, %arg1: i32) -> (i32, i32) {
    %c0_i32 = arith.constant 0 : i32
    %c0_i32_0 = arith.constant 0 : i32
    %c0_i32_1 = arith.constant 0 : i32
    return %c0_i32, %c0_i32_0 : i32, i32
  }
  func.func @transform_7(%arg0: i32, %arg1: i32) -> (i32, i32, i32, i32) {
    %c0_i32 = arith.constant 0 : i32
    %c0_i32_0 = arith.constant 0 : i32
    %c0_i32_1 = arith.constant 0 : i32
    return %arg0, %arg1, %c0_i32, %c0_i32_0 : i32, i32, i32, i32
  }
  func.func @transform_8(%arg0: i32, %arg1: i32) -> (i32, i32, i32, i32) {
    %c0_i32 = arith.constant 0 : i32
    %c0_i32_0 = arith.constant 0 : i32
    %c0_i32_1 = arith.constant 0 : i32
    return %arg0, %arg1, %c0_i32, %c0_i32_0 : i32, i32, i32, i32
  }
}

</mosaic_0001>

<llo_original>
// kernel: res_conv_block.5
$region0: #{res_conv_block.5}
  #allocation0 [shape = 'u32[]', space=smem, size = 0x4, offset = 0x4, fixed_abs, tag = 'smem constant byte address 0x4 - core index']
  #allocation1 [shape = 'u32[144,128]{1,0:T(1,128)}', space=vmem, size = 0x12000, scoped, tag = 'internal scratch']
  %s0 = inlined_call_operand.vmem [shape: f32[2,16,16,128], index: 0, kind: input, shape index: {}, may-alias: {0,4}]
  %s1 = inlined_call_operand.vmem [shape: f32[2,16,16,128], index: 1, kind: input, shape index: {}]
  %s2 = inlined_call_operand.vmem [shape: f32[1,128], index: 2, kind: input, shape index: {}]
  %s3 = inlined_call_operand.vmem [shape: f32[1,128], index: 3, kind: input, shape index: {}]
  %s4 = inlined_call_operand.vmem [shape: f32[2,16,16,128], index: 4, kind: output, shape index: {}, may-alias: {0,4}]
  %s5 = sld [smem:[#allocation0]]
  $region49: #{res_conv_block.5} parent=0
    _
  %s7 = ssub.s32 1, %s5
  %s8 = scalar_select 0, %s7, %s5
  loop: start=0, step=1, limit=4
  $region2: #{res_conv_block.5} parent=0 // loop_pre_header
    _
  $region3: #{res_conv_block.5} parent=0 // loop_header
    %s10 = sphi 0, %s14
    %p11 = scmp.ge.s32.totalorder %s10, 4
    %s17 = sphi 0, %s29
    %s18 = sphi 0, %s25
    %s19 = sphi 0, %s17
    %s20 = sphi 0, %s18
    %s21 = sphi 0, %s19
    %s22 = sphi 0, %s20
    %s34 = sphi 0, %s36
    %s37 = sphi 0, %s34
    %s38 = sphi 0, %s37
    %s54 = sphi 0, %s38
    %s62 = sphi 0, %s64
    %s65 = sphi 0, %s62
    %s66 = sphi 0, %s65
    %s82 = sphi 0, %s66
    %s86 = sphi 0, %s86
    %s88 = sphi 0, %s86
    %s89 = sphi 0, %s88
    %s103 = sphi 0, %s89
    %s107 = sphi 0, %s107
    %s109 = sphi 0, %s107
    %s110 = sphi 0, %s109
    %s124 = sphi 0, %s110
    %s132 = sphi 0, %s134
    %s135 = sphi 0, %s132
    %s136 = sphi 0, %s135
    %s152 = sphi 0, %s136
  $region4: #{res_conv_block.5} parent=0 // loop_header_branch
    %13 = sbr.rel (%p11) target = $region8
  $region5: #{res_conv_block.5} parent=0 // loop_body
    %s15 = ssub.s32 %s10, 1
    %s16 = ssub.s32 %s10, 2
    %s23 = sadd.s32 1, %s18
    %p24 = scmp.ge.s32.totalorder %s23, 1
    %s25 = scalar_select %p24, 0, %s23
    %s26 = sadd.s32 1, %s17
    %s27 = scalar_select %p24, %s26, %s17
    %p28 = scmp.ge.s32.totalorder %s27, 2
    %s29 = scalar_select %p28, 0, %s27
    %s30 = ssub.s32 %s17, %s29
    %s31 = ssub.s32 %s18, %s25
    %s32 = sor.u32 %s30, %s31
    %p33 = scmp.eq.s32.totalorder %s32, 0
    %s35 = sadd.s32 %s34, 1
    %s36 = scalar_select %p33, %s34, %s35
    %p39 = pneg %p33
    %p40 = scmp.eq.s32.totalorder %s10, 1
    %p41 = por %p39, %p40
    %p42 = scmp.ne.s32.totalorder %s34, %s37
    %p43 = scmp.eq.s32.totalorder %s10, 0
    %p44 = por %p42, %p43
    %p45 = scmp.ne.s32.totalorder %s34, %s37
    %p46 = scmp.eq.s32.totalorder %s15, 1
    %p47 = por %p45, %p46
    %p48 = scmp.ne.s32.totalorder %s37, %s38
    %p49 = scmp.eq.s32.totalorder %s15, 0
    %p50 = por %p48, %p49
    %p51 = scmp.ne.s32.totalorder %s37, %s38
    %p52 = scmp.eq.s32.totalorder %s16, 1
    %p53 = por %p51, %p52
    %p55 = scmp.ne.s32.totalorder %s38, %s54
    %p56 = scmp.eq.s32.totalorder %s16, 0
    %p57 = por %p55, %p56
    %s58 = ssub.s32 %s17, %s29
    %s59 = ssub.s32 %s18, %s25
    %s60 = sor.u32 %s58, %s59
    %p61 = scmp.eq.s32.totalorder %s60, 0
    %s63 = sadd.s32 %s62, 1
    %s64 = scalar_select %p61, %s62, %s63
    %p67 = pneg %p61
    %p68 = scmp.eq.s32.totalorder %s10, 1
    %p69 = por %p67, %p68
    %p70 = scmp.ne.s32.totalorder %s62, %s65
    %p71 = scmp.eq.s32.totalorder %s10, 0
    %p72 = por %p70, %p71
    %p73 = scmp.ne.s32.totalorder %s62, %s65
    %p74 = scmp.eq.s32.totalorder %s15, 1
    %p75 = por %p73, %p74
    %p76 = scmp.ne.s32.totalorder %s65, %s66
    %p77 = scmp.eq.s32.totalorder %s15, 0
    %p78 = por %p76, %p77
    %p79 = scmp.ne.s32.totalorder %s65, %s66
    %p80 = scmp.eq.s32.totalorder %s16, 1
    %p81 = por %p79, %p80
    %p83 = scmp.ne.s32.totalorder %s66, %s82
    %p84 = scmp.eq.s32.totalorder %s16, 0
    %p85 = por %p83, %p84
    %s87 = sadd.s32 %s86, 1
    %p90 = scmp.eq.s32.totalorder %s10, 1
    %p91 = scmp.ne.s32.totalorder %s86, %s88
    %p92 = scmp.eq.s32.totalorder %s10, 0
    %p93 = por %p91, %p92
    %p94 = scmp.ne.s32.totalorder %s86, %s88
    %p95 = scmp.eq.s32.totalorder %s15, 1
    %p96 = por %p94, %p95
    %p97 = scmp.ne.s32.totalorder %s88, %s89
    %p98 = scmp.eq.s32.totalorder %s15, 0
    %p99 = por %p97, %p98
    %p100 = scmp.ne.s32.totalorder %s88, %s89
    %p101 = scmp.eq.s32.totalorder %s16, 1
    %p102 = por %p100, %p101
    %p104 = scmp.ne.s32.totalorder %s89, %s103
    %p105 = scmp.eq.s32.totalorder %s16, 0
    %p106 = por %p104, %p105
    %s108 = sadd.s32 %s107, 1
    %p111 = scmp.eq.s32.totalorder %s10, 1
    %p112 = scmp.ne.s32.totalorder %s107, %s109
    %p113 = scmp.eq.s32.totalorder %s10, 0
    %p114 = por %p112, %p113
    %p115 = scmp.ne.s32.totalorder %s107, %s109
    %p116 = scmp.eq.s32.totalorder %s15, 1
    %p117 = por %p115, %p116
    %p118 = scmp.ne.s32.totalorder %s109, %s110
    %p119 = scmp.eq.s32.totalorder %s15, 0
    %p120 = por %p118, %p119
    %p121 = scmp.ne.s32.totalorder %s109, %s110
    %p122 = scmp.eq.s32.totalorder %s16, 1
    %p123 = por %p121, %p122
    %p125 = scmp.ne.s32.totalorder %s110, %s124
    %p126 = scmp.eq.s32.totalorder %s16, 0
    %p127 = por %p125, %p126
    %s128 = ssub.s32 %s17, %s29
    %s129 = ssub.s32 %s18, %s25
    %s130 = sor.u32 %s128, %s129
    %p131 = scmp.eq.s32.totalorder %s130, 0
    %s133 = sadd.s32 %s132, 1
    %s134 = scalar_select %p131, %s132, %s133
    %p137 = pneg %p131
    %p138 = scmp.eq.s32.totalorder %s10, 1
    %p139 = por %p137, %p138
    %p140 = scmp.ne.s32.totalorder %s132, %s135
    %p141 = scmp.eq.s32.totalorder %s10, 0
    %p142 = por %p140, %p141
    %p143 = scmp.ne.s32.totalorder %s132, %s135
    %p144 = scmp.eq.s32.totalorder %s15, 1
    %p145 = por %p143, %p144
    %p146 = scmp.ne.s32.totalorder %s135, %s136
    %p147 = scmp.eq.s32.totalorder %s15, 0
    %p148 = por %p146, %p147
    %p149 = scmp.ne.s32.totalorder %s135, %s136
    %p150 = scmp.eq.s32.totalorder %s16, 1
    %p151 = por %p149, %p150
    %p153 = scmp.ne.s32.totalorder %s136, %s152
    %p154 = scmp.eq.s32.totalorder %s16, 0
    %p155 = por %p153, %p154
    %p156 = scmp.le.s32.totalorder 1, %s10
    %p157 = scmp.lt.s32.totalorder %s10, 3
    %p158 = pnand %p156, %p157
    %p159 = pneg %p158
    // Predicated region
    $region9: #{res_conv_block.5} parent=5 // pred_check
      _
    $region10: #{res_conv_block.5} parent=5 // pred_check_branch
      %161 = sbr.rel (%p158) target = $region12
    $region11: #{res_conv_block.5} parent=5 // pred_region
      %s162 = ssub.s32 %s10, 1
      // Predicated region
      $region13: #{res_conv_block.5} parent=11 // pred_check
        %p163 = pneg %p99
      $region14: #{res_conv_block.5} parent=11 // pred_check_branch
        %165 = sbr.rel (%p163) target = $region16
      $region15: #{res_conv_block.5} parent=11 // pred_region
        _
      $region16: #{res_conv_block.5} parent=11 // pred_fallthru
        _
      // Predicated region
      $region17: #{res_conv_block.5} parent=11 // pred_check
        %p166 = pneg %p120
      $region18: #{res_conv_block.5} parent=11 // pred_check_branch
        %168 = sbr.rel (%p166) target = $region20
      $region19: #{res_conv_block.5} parent=11 // pred_region
        _
      $region20: #{res_conv_block.5} parent=11 // pred_fallthru
        _
    $region12: #{res_conv_block.5} parent=5 // pred_fallthru
      _
    %p169 = scmp.lt.s32.totalorder %s10, 2
    // Predicated region
    $region21: #{res_conv_block.5} parent=5 // pred_check
      %p170 = pneg %p169
    $region22: #{res_conv_block.5} parent=5 // pred_check_branch
      %172 = sbr.rel (%p170) target = $region24
    $region23: #{res_conv_block.5} parent=5 // pred_region
      // Predicated region
      $region25: #{res_conv_block.5} parent=23 // pred_check
        %p173 = pneg %p44
      $region26: #{res_conv_block.5} parent=23 // pred_check_branch
        %175 = sbr.rel (%p173) target = $region28
      $region27: #{res_conv_block.5} parent=23 // pred_region
        %s176 = smul.u32 16, %s18
        %p177 = scmp.lt.s32.totalorder %s17, 1
        %s178 = scalar_select %p177, %s17, 1
        %p179 = scmp.lt.s32.totalorder %s176, 15
        %s180 = scalar_select %p179, %s176, 15
        %s181 = smul.addr %s180, 2
        %s182 = smul.addr %s178, 32
        %s183 = sadd.s32 %s181, %s182
        %s184 = smul.addr %s183, 8
        %s185 = scalar_lea.vmem %s0, %s184
        %s186 = smul.u32 16, %s18
      $region28: #{res_conv_block.5} parent=23 // pred_fallthru
        _
      // Predicated region
      $region29: #{res_conv_block.5} parent=23 // pred_check
        %p187 = pneg %p72
      $region30: #{res_conv_block.5} parent=23 // pred_check_branch
        %189 = sbr.rel (%p187) target = $region32
      $region31: #{res_conv_block.5} parent=23 // pred_region
        %s190 = smul.u32 16, %s18
        %p191 = scmp.lt.s32.totalorder %s17, 1
        %s192 = scalar_select %p191, %s17, 1
        %p193 = scmp.lt.s32.totalorder %s190, 15
        %s194 = scalar_select %p193, %s190, 15
        %s195 = smul.addr %s194, 2
        %s196 = smul.addr %s192, 32
        %s197 = sadd.s32 %s195, %s196
        %s198 = smul.addr %s197, 8
        %s199 = scalar_lea.vmem %s1, %s198
        %s200 = smul.u32 16, %s18
      $region32: #{res_conv_block.5} parent=23 // pred_fallthru
        _
    $region24: #{res_conv_block.5} parent=5 // pred_fallthru
      _
    %p201 = scmp.le.s32.totalorder 1, %s10
    %p202 = scmp.lt.s32.totalorder %s10, 3
    %p203 = pnand %p201, %p202
    %p204 = pneg %p203
    // Predicated region
    $region33: #{res_conv_block.5} parent=5 // pred_check
      _
    $region34: #{res_conv_block.5} parent=5 // pred_check_branch
      %206 = sbr.rel (%p203) target = $region36
    $region35: #{res_conv_block.5} parent=5 // pred_region
      %s207 = ssub.s32 %s10, 1
      %s208 = smul.u32 16, %s20
      %p209 = scmp.lt.s32.totalorder %s19, 1
      %s210 = scalar_select %p209, %s19, 1
      %p211 = scmp.lt.s32.totalorder %s208, 15
      %s212 = scalar_select %p211, %s208, 15
      %s213 = smul.addr %s212, 2
      %s214 = smul.addr %s210, 32
      %s215 = sadd.s32 %s213, %s214
      %s216 = smul.addr %s215, 8
      %s217 = scalar_lea.vmem %s0, %s216
      %p218 = pneg %p50
      %p219 = pneg %p47
      %s220 = smul.u32 16, %s20
      %p221 = scmp.lt.s32.totalorder %s19, 1
      %s222 = scalar_select %p221, %s19, 1
      %p223 = scmp.lt.s32.totalorder %s220, 15
      %s224 = scalar_select %p223, %s220, 15
      %s225 = smul.addr %s224, 2
      %s226 = smul.addr %s222, 32
      %s227 = sadd.s32 %s225, %s226
      %s228 = smul.addr %s227, 8
      %s229 = scalar_lea.vmem %s1, %s228
      %p230 = pneg %p78
      %p231 = pneg %p75
      %p232 = pneg %p99
      %p233 = pneg %p96
      %p234 = pneg %p120
      %p235 = pneg %p117
      %p236 = pneg %p148
      %p237 = pneg %p145
      %s238 = smul.u32 16, %s20
      %p239 = scmp.lt.s32.totalorder %s19, 1
      %s240 = scalar_select %p239, %s19, 1
      %p241 = scmp.lt.s32.totalorder %s238, 15
      %s242 = scalar_select %p241, %s238, 15
      %s243 = smul.addr %s242, 2
      %s244 = smul.addr %s240, 32
      %s245 = sadd.s32 %s243, %s244
      %s246 = smul.addr %s245, 8
      %s247 = scalar_lea.vmem %s4, %s246
      %s248 = smul.u32 16, %s20
      %p249 = scmp.lt.s32.totalorder %s19, 1
      %s250 = scalar_select %p249, %s19, 1
      %p251 = scmp.lt.s32.totalorder %s248, 15
      %s252 = scalar_select %p251, %s248, 15
      %s253 = smul.addr %s252, 2
      %s254 = smul.addr %s250, 32
      %s255 = sadd.s32 %s253, %s254
      %s256 = smul.addr %s255, 8
      %s257 = scalar_lea.vmem %s0, %s256
      %s258 = smul.u32 16, %s20
      %s259 = smul.u32 16, %s20
      %p260 = scmp.lt.s32.totalorder %s19, 1
      %s261 = scalar_select %p260, %s19, 1
      %p262 = scmp.lt.s32.totalorder %s259, 15
      %s263 = scalar_select %p262, %s259, 15
      %s264 = smul.addr %s263, 2
      %s265 = smul.addr %s261, 32
      %s266 = sadd.s32 %s264, %s265
      %s267 = smul.addr %s266, 8
      %s268 = scalar_lea.vmem %s1, %s267
      %s269 = smul.u32 16, %s20
      %s270 = smul.u32 16, %s20
      %p271 = scmp.lt.s32.totalorder %s19, 1
      %s272 = scalar_select %p271, %s19, 1
      %p273 = scmp.lt.s32.totalorder %s270, 15
      %s274 = scalar_select %p273, %s270, 15
      %s275 = smul.addr %s274, 2
      %s276 = smul.addr %s272, 32
      %s277 = sadd.s32 %s275, %s276
      %s278 = smul.addr %s277, 8
      %s279 = scalar_lea.vmem %s4, %s278
      %s280 = smul.u32 16, %s20
      %v281 = vld [vmem:[%s2] sm:$0x1]
      %v282 = vld [vmem:[%s3] sm:$0x1]
      %v283 = vld [vmem:[%s268] sm:$0xff]
      %v284 = vld [vmem:[%s268 + $0x8] sm:$0xff]
      %v285 = vld [vmem:[%s268 + $0x10] sm:$0xff]
      %v286 = vld [vmem:[%s268 + $0x18] sm:$0xff]
      %v287 = vld [vmem:[%s268 + $0x20] sm:$0xff]
      %v288 = vld [vmem:[%s268 + $0x28] sm:$0xff]
      %v289 = vld [vmem:[%s268 + $0x30] sm:$0xff]
      %v290 = vld [vmem:[%s268 + $0x38] sm:$0xff]
      %v291 = vld [vmem:[%s268 + $0x40] sm:$0xff]
      %v292 = vld [vmem:[%s268 + $0x48] sm:$0xff]
      %v293 = vld [vmem:[%s268 + $0x50] sm:$0xff]
      %v294 = vld [vmem:[%s268 + $0x58] sm:$0xff]
      %v295 = vld [vmem:[%s268 + $0x60] sm:$0xff]
      %v296 = vld [vmem:[%s268 + $0x68] sm:$0xff]
      %v297 = vld [vmem:[%s268 + $0x70] sm:$0xff]
      %v298 = vld [vmem:[%s268 + $0x78] sm:$0xff]
      %v299 = vld [vmem:[%s268 + $0x80] sm:$0xff]
      %v300 = vld [vmem:[%s268 + $0x88] sm:$0xff]
      %v301 = vld [vmem:[%s268 + $0x90] sm:$0xff]
      %v302 = vld [vmem:[%s268 + $0x98] sm:$0xff]
      %v303 = vld [vmem:[%s268 + $0xa0] sm:$0xff]
      %v304 = vld [vmem:[%s268 + $0xa8] sm:$0xff]
      %v305 = vld [vmem:[%s268 + $0xb0] sm:$0xff]
      %v306 = vld [vmem:[%s268 + $0xb8] sm:$0xff]
      %v307 = vld [vmem:[%s268 + $0xc0] sm:$0xff]
      %v308 = vld [vmem:[%s268 + $0xc8] sm:$0xff]
      %v309 = vld [vmem:[%s268 + $0xd0] sm:$0xff]
      %v310 = vld [vmem:[%s268 + $0xd8] sm:$0xff]
      %v311 = vld [vmem:[%s268 + $0xe0] sm:$0xff]
      %v312 = vld [vmem:[%s268 + $0xe8] sm:$0xff]
      %v313 = vld [vmem:[%s268 + $0xf0] sm:$0xff]
      %v314 = vld [vmem:[%s268 + $0xf8] sm:$0xff]
      %v315 = vld [vmem:[%s257] sm:$0xff]
      %v316 = vld [vmem:[%s257 + $0x8] sm:$0xff]
      %v317 = vld [vmem:[%s257 + $0x10] sm:$0xff]
      %v318 = vld [vmem:[%s257 + $0x18] sm:$0xff]
      %v319 = vld [vmem:[%s257 + $0x20] sm:$0xff]
      %v320 = vld [vmem:[%s257 + $0x28] sm:$0xff]
      %v321 = vld [vmem:[%s257 + $0x30] sm:$0xff]
      %v322 = vld [vmem:[%s257 + $0x38] sm:$0xff]
      %v323 = vld [vmem:[%s257 + $0x40] sm:$0xff]
      %v324 = vld [vmem:[%s257 + $0x48] sm:$0xff]
      %v325 = vld [vmem:[%s257 + $0x50] sm:$0xff]
      %v326 = vld [vmem:[%s257 + $0x58] sm:$0xff]
      %v327 = vld [vmem:[%s257 + $0x60] sm:$0xff]
      %v328 = vld [vmem:[%s257 + $0x68] sm:$0xff]
      %v329 = vld [vmem:[%s257 + $0x70] sm:$0xff]
      %v330 = vld [vmem:[%s257 + $0x78] sm:$0xff]
      %v331 = vld [vmem:[%s257 + $0x80] sm:$0xff]
      %v332 = vld [vmem:[%s257 + $0x88] sm:$0xff]
      %v333 = vld [vmem:[%s257 + $0x90] sm:$0xff]
      %v334 = vld [vmem:[%s257 + $0x98] sm:$0xff]
      %v335 = vld [vmem:[%s257 + $0xa0] sm:$0xff]
      %v336 = vld [vmem:[%s257 + $0xa8] sm:$0xff]
      %v337 = vld [vmem:[%s257 + $0xb0] sm:$0xff]
      %v338 = vld [vmem:[%s257 + $0xb8] sm:$0xff]
      %v339 = vld [vmem:[%s257 + $0xc0] sm:$0xff]
      %v340 = vld [vmem:[%s257 + $0xc8] sm:$0xff]
      %v341 = vld [vmem:[%s257 + $0xd0] sm:$0xff]
      %v342 = vld [vmem:[%s257 + $0xd8] sm:$0xff]
      %v343 = vld [vmem:[%s257 + $0xe0] sm:$0xff]
      %v344 = vld [vmem:[%s257 + $0xe8] sm:$0xff]
      %v345 = vld [vmem:[%s257 + $0xf0] sm:$0xff]
      %v346 = vld [vmem:[%s257 + $0xf8] sm:$0xff]
      %v348 = vlaneseq
      %v349 = vshrl.u32 %v348, 7
      %v350 = vsub.s32 0, %v349
      %v351 = vrot.slane %v281, %v350
      %v353 = vmul.f32 %v315, %v351
      %v354 = vmul.f32 %v316, %v351
      %v355 = vmul.f32 %v317, %v351
      %v356 = vmul.f32 %v318, %v351
      %v357 = vmul.f32 %v319, %v351
      %v358 = vmul.f32 %v320, %v351
      %v359 = vmul.f32 %v321, %v351
      %v360 = vmul.f32 %v322, %v351
      %v361 = vmul.f32 %v323, %v351
      %v362 = vmul.f32 %v324, %v351
      %v363 = vmul.f32 %v325, %v351
      %v364 = vmul.f32 %v326, %v351
      %v365 = vmul.f32 %v327, %v351
      %v366 = vmul.f32 %v328, %v351
      %v367 = vmul.f32 %v329, %v351
      %v368 = vmul.f32 %v330, %v351
      %v369 = vmul.f32 %v331, %v351
      %v370 = vmul.f32 %v332, %v351
      %v371 = vmul.f32 %v333, %v351
      %v372 = vmul.f32 %v334, %v351
      %v373 = vmul.f32 %v335, %v351
      %v374 = vmul.f32 %v336, %v351
      %v375 = vmul.f32 %v337, %v351
      %v376 = vmul.f32 %v338, %v351
      %v377 = vmul.f32 %v339, %v351
      %v378 = vmul.f32 %v340, %v351
      %v379 = vmul.f32 %v341, %v351
      %v380 = vmul.f32 %v342, %v351
      %v381 = vmul.f32 %v343, %v351
      %v382 = vmul.f32 %v344, %v351
      %v383 = vmul.f32 %v345, %v351
      %v384 = vmul.f32 %v346, %v351
      %v385 = vadd.f32 %v283, %v353
      %v386 = vadd.f32 %v284, %v354
      %v387 = vadd.f32 %v285, %v355
      %v388 = vadd.f32 %v286, %v356
      %v389 = vadd.f32 %v287, %v357
      %v390 = vadd.f32 %v288, %v358
      %v391 = vadd.f32 %v289, %v359
      %v392 = vadd.f32 %v290, %v360
      %v393 = vadd.f32 %v291, %v361
      %v394 = vadd.f32 %v292, %v362
      %v395 = vadd.f32 %v293, %v363
      %v396 = vadd.f32 %v294, %v364
      %v397 = vadd.f32 %v295, %v365
      %v398 = vadd.f32 %v296, %v366
      %v399 = vadd.f32 %v297, %v367
      %v400 = vadd.f32 %v298, %v368
      %v401 = vadd.f32 %v299, %v369
      %v402 = vadd.f32 %v300, %v370
      %v403 = vadd.f32 %v301, %v371
      %v404 = vadd.f32 %v302, %v372
      %v405 = vadd.f32 %v303, %v373
      %v406 = vadd.f32 %v304, %v374
      %v407 = vadd.f32 %v305, %v375
      %v408 = vadd.f32 %v306, %v376
      %v409 = vadd.f32 %v307, %v377
      %v410 = vadd.f32 %v308, %v378
      %v411 = vadd.f32 %v309, %v379
      %v412 = vadd.f32 %v310, %v380
      %v413 = vadd.f32 %v311, %v381
      %v414 = vadd.f32 %v312, %v382
      %v415 = vadd.f32 %v313, %v383
      %v416 = vadd.f32 %v314, %v384
      %v418 = vlaneseq
      %v419 = vshrl.u32 %v418, 7
      %v420 = vsub.s32 0, %v419
      %v421 = vrot.slane %v282, %v420
      %v423 = vadd.f32 %v385, %v421
      %v424 = vadd.f32 %v386, %v421
      %v425 = vadd.f32 %v387, %v421
      %v426 = vadd.f32 %v388, %v421
      %v427 = vadd.f32 %v389, %v421
      %v428 = vadd.f32 %v390, %v421
      %v429 = vadd.f32 %v391, %v421
      %v430 = vadd.f32 %v392, %v421
      %v431 = vadd.f32 %v393, %v421
      %v432 = vadd.f32 %v394, %v421
      %v433 = vadd.f32 %v395, %v421
      %v434 = vadd.f32 %v396, %v421
      %v435 = vadd.f32 %v397, %v421
      %v436 = vadd.f32 %v398, %v421
      %v437 = vadd.f32 %v399, %v421
      %v438 = vadd.f32 %v400, %v421
      %v439 = vadd.f32 %v401, %v421
      %v440 = vadd.f32 %v402, %v421
      %v441 = vadd.f32 %v403, %v421
      %v442 = vadd.f32 %v404, %v421
      %v443 = vadd.f32 %v405, %v421
      %v444 = vadd.f32 %v406, %v421
      %v445 = vadd.f32 %v407, %v421
      %v446 = vadd.f32 %v408, %v421
      %v447 = vadd.f32 %v409, %v421
      %v448 = vadd.f32 %v410, %v421
      %v449 = vadd.f32 %v411, %v421
      %v450 = vadd.f32 %v412, %v421
      %v451 = vadd.f32 %v413, %v421
      %v452 = vadd.f32 %v414, %v421
      %v453 = vadd.f32 %v415, %v421
      %v454 = vadd.f32 %v416, %v421
      %455 = vst [vmem:[%s279] sm:$0xff] %v423
      %456 = vst [vmem:[%s279 + $0x8] sm:$0xff] %v424
      %457 = vst [vmem:[%s279 + $0x10] sm:$0xff] %v425
      %458 = vst [vmem:[%s279 + $0x18] sm:$0xff] %v426
      %459 = vst [vmem:[%s279 + $0x20] sm:$0xff] %v427
      %460 = vst [vmem:[%s279 + $0x28] sm:$0xff] %v428
      %461 = vst [vmem:[%s279 + $0x30] sm:$0xff] %v429
      %462 = vst [vmem:[%s279 + $0x38] sm:$0xff] %v430
      %463 = vst [vmem:[%s279 + $0x40] sm:$0xff] %v431
      %464 = vst [vmem:[%s279 + $0x48] sm:$0xff] %v432
      %465 = vst [vmem:[%s279 + $0x50] sm:$0xff] %v433
      %466 = vst [vmem:[%s279 + $0x58] sm:$0xff] %v434
      %467 = vst [vmem:[%s279 + $0x60] sm:$0xff] %v435
      %468 = vst [vmem:[%s279 + $0x68] sm:$0xff] %v436
      %469 = vst [vmem:[%s279 + $0x70] sm:$0xff] %v437
      %470 = vst [vmem:[%s279 + $0x78] sm:$0xff] %v438
      %471 = vst [vmem:[%s279 + $0x80] sm:$0xff] %v439
      %472 = vst [vmem:[%s279 + $0x88] sm:$0xff] %v440
      %473 = vst [vmem:[%s279 + $0x90] sm:$0xff] %v441
      %474 = vst [vmem:[%s279 + $0x98] sm:$0xff] %v442
      %475 = vst [vmem:[%s279 + $0xa0] sm:$0xff] %v443
      %476 = vst [vmem:[%s279 + $0xa8] sm:$0xff] %v444
      %477 = vst [vmem:[%s279 + $0xb0] sm:$0xff] %v445
      %478 = vst [vmem:[%s279 + $0xb8] sm:$0xff] %v446
      %479 = vst [vmem:[%s279 + $0xc0] sm:$0xff] %v447
      %480 = vst [vmem:[%s279 + $0xc8] sm:$0xff] %v448
      %481 = vst [vmem:[%s279 + $0xd0] sm:$0xff] %v449
      %482 = vst [vmem:[%s279 + $0xd8] sm:$0xff] %v450
      %483 = vst [vmem:[%s279 + $0xe0] sm:$0xff] %v451
      %484 = vst [vmem:[%s279 + $0xe8] sm:$0xff] %v452
      %485 = vst [vmem:[%s279 + $0xf0] sm:$0xff] %v453
      %486 = vst [vmem:[%s279 + $0xf8] sm:$0xff] %v454
      %s487 = smul.u32 16, %s20
      %p488 = scmp.lt.s32.totalorder %s19, 1
      %s489 = scalar_select %p488, %s19, 1
      %p490 = scmp.lt.s32.totalorder %s487, 15
      %s491 = scalar_select %p490, %s487, 15
      %s492 = smul.addr %s491, 2
      %s493 = smul.addr %s489, 32
      %s494 = sadd.s32 %s492, %s493
      %s495 = smul.addr %s494, 8
      %s496 = scalar_lea.vmem %s4, %s495
      // Predicated region
      $region37: #{res_conv_block.5} parent=35 // pred_check
        %p497 = pneg %p145
      $region38: #{res_conv_block.5} parent=35 // pred_check_branch
        %499 = sbr.rel (%p497) target = $region40
      $region39: #{res_conv_block.5} parent=35 // pred_region
        %s500 = smul.u32 16, %s20
      $region40: #{res_conv_block.5} parent=35 // pred_fallthru
        _
    $region36: #{res_conv_block.5} parent=5 // pred_fallthru
      _
    %p501 = scmp.le.s32.totalorder 2, %s10
    // Predicated region
    $region41: #{res_conv_block.5} parent=5 // pred_check
      %p502 = pneg %p501
    $region42: #{res_conv_block.5} parent=5 // pred_check_branch
      %504 = sbr.rel (%p502) target = $region44
    $region43: #{res_conv_block.5} parent=5 // pred_region
      %s505 = ssub.s32 %s10, 2
      // Predicated region
      $region45: #{res_conv_block.5} parent=43 // pred_check
        %p506 = pneg %p151
      $region46: #{res_conv_block.5} parent=43 // pred_check_branch
        %508 = sbr.rel (%p506) target = $region48
      $region47: #{res_conv_block.5} parent=43 // pred_region
        %s509 = smul.u32 16, %s22
        %p510 = scmp.lt.s32.totalorder %s21, 1
        %s511 = scalar_select %p510, %s21, 1
        %p512 = scmp.lt.s32.totalorder %s509, 15
        %s513 = scalar_select %p512, %s509, 15
        %s514 = smul.addr %s513, 2
        %s515 = smul.addr %s511, 32
        %s516 = sadd.s32 %s514, %s515
        %s517 = smul.addr %s516, 8
        %s518 = scalar_lea.vmem %s4, %s517
      $region48: #{res_conv_block.5} parent=43 // pred_fallthru
        _
    $region44: #{res_conv_block.5} parent=5 // pred_fallthru
      _
  $region6: #{res_conv_block.5} parent=0 // loop_footer
    %s14 = sadd.s32 1, %s10
  $region7: #{res_conv_block.5} parent=0 // loop_footer_branch
    %9 = sbr.rel target = $region3
  $region8: #{res_conv_block.5} parent=0 // loop_exit
    _

// kernel: res_conv_block.3
$region0: #{res_conv_block.3}
  #allocation0 [shape = 'u32[]', space=smem, size = 0x4, offset = 0x4, fixed_abs, tag = 'smem constant byte address 0x4 - core index']
  #allocation1 [shape = 'u32[144,128]{1,0:T(1,128)}', space=vmem, size = 0x12000, scoped, tag = 'internal scratch']
  %s0 = inlined_call_operand.vmem [shape: f32[2,16,16,128], index: 0, kind: input, shape index: {}, may-alias: {0,1,2}]
  %s1 = inlined_call_operand.vmem [shape: f32[2,16,16,128], index: 1, kind: input, shape index: {}, may-alias: {0,1,2}]
  %s2 = inlined_call_operand.vmem [shape: f32[2,16,16,128], index: 2, kind: input, shape index: {}, may-alias: {0,1,2}]
  %s3 = inlined_call_operand.vmem [shape: bf16[3,384,128], index: 3, kind: input, shape index: {}]
  %s4 = inlined_call_operand.vmem [shape: f32[1,128], index: 4, kind: input, shape index: {}]
  %s5 = inlined_call_operand.vmem [shape: f32[2,16,16,128], index: 5, kind: output, shape index: {0}]
  %s6 = inlined_call_operand.vmem [shape: f32[2,1,8,128], index: 6, kind: output, shape index: {1}]
  %7 = xla_tuple %s5, %s6
  %s8 = sld [smem:[#allocation0]]
  $region61: #{res_conv_block.3} parent=0
    _
  %s10 = ssub.s32 1, %s8
  %s11 = scalar_select 0, %s10, %s8
  loop: start=0, step=1, limit=4
  $region2: #{res_conv_block.3} parent=0 // loop_pre_header
    _
  $region3: #{res_conv_block.3} parent=0 // loop_header
    %s13 = sphi 0, %s17
    %p14 = scmp.ge.s32.totalorder %s13, 4
    %s20 = sphi 0, %s32
    %s21 = sphi 0, %s28
    %s22 = sphi 0, %s20
    %s23 = sphi 0, %s21
    %s24 = sphi 0, %s22
    %s25 = sphi 0, %s23
    %s37 = sphi 0, %s39
    %s40 = sphi 0, %s37
    %s41 = sphi 0, %s40
    %s57 = sphi 0, %s41
    %s73 = sphi 0, %s75
    %s76 = sphi 0, %s73
    %s77 = sphi 0, %s76
    %s93 = sphi 0, %s77
    %s109 = sphi 0, %s111
    %s112 = sphi 0, %s109
    %s113 = sphi 0, %s112
    %s129 = sphi 0, %s113
    %s133 = sphi 0, %s133
    %s135 = sphi 0, %s133
    %s136 = sphi 0, %s135
    %s150 = sphi 0, %s136
    %s154 = sphi 0, %s154
    %s156 = sphi 0, %s154
    %s157 = sphi 0, %s156
    %s171 = sphi 0, %s157
    %s179 = sphi 0, %s181
    %s182 = sphi 0, %s179
    %s183 = sphi 0, %s182
    %s199 = sphi 0, %s183
    %s207 = sphi 0, %s209
    %s210 = sphi 0, %s207
    %s211 = sphi 0, %s210
    %s227 = sphi 0, %s211
  $region4: #{res_conv_block.3} parent=0 // loop_header_branch
    %16 = sbr.rel (%p14) target = $region8
  $region5: #{res_conv_block.3} parent=0 // loop_body
    %s18 = ssub.s32 %s13, 1
    %s19 = ssub.s32 %s13, 2
    %s26 = sadd.s32 1, %s21
    %p27 = scmp.ge.s32.totalorder %s26, 1
    %s28 = scalar_select %p27, 0, %s26
    %s29 = sadd.s32 1, %s20
    %s30 = scalar_select %p27, %s29, %s20
    %p31 = scmp.ge.s32.totalorder %s30, 2
    %s32 = scalar_select %p31, 0, %s30
    %s33 = ssub.s32 %s20, %s32
    %s34 = ssub.s32 %s21, %s28
    %s35 = sor.u32 %s33, %s34
    %p36 = scmp.eq.s32.totalorder %s35, 0
    %s38 = sadd.s32 %s37, 1
    %s39 = scalar_select %p36, %s37, %s38
    %p42 = pneg %p36
    %p43 = scmp.eq.s32.totalorder %s13, 1
    %p44 = por %p42, %p43
    %p45 = scmp.ne.s32.totalorder %s37, %s40
    %p46 = scmp.eq.s32.totalorder %s13, 0
    %p47 = por %p45, %p46
    %p48 = scmp.ne.s32.totalorder %s37, %s40
    %p49 = scmp.eq.s32.totalorder %s18, 1
    %p50 = por %p48, %p49
    %p51 = scmp.ne.s32.totalorder %s40, %s41
    %p52 = scmp.eq.s32.totalorder %s18, 0
    %p53 = por %p51, %p52
    %p54 = scmp.ne.s32.totalorder %s40, %s41
    %p55 = scmp.eq.s32.totalorder %s19, 1
    %p56 = por %p54, %p55
    %p58 = scmp.ne.s32.totalorder %s41, %s57
    %p59 = scmp.eq.s32.totalorder %s19, 0
    %p60 = por %p58, %p59
    %s61 = smul.u32 %s21, 16
    %s62 = ssub.s32 %s61, 1
    %p63 = scmp.gt.s32.totalorder %s62, 0
    %s64 = scalar_select %p63, %s62, 0
    %s65 = smul.u32 %s28, 16
    %s66 = ssub.s32 %s65, 1
    %p67 = scmp.gt.s32.totalorder %s66, 0
    %s68 = scalar_select %p67, %s66, 0
    %s69 = ssub.s32 %s20, %s32
    %s70 = ssub.s32 %s64, %s68
    %s71 = sor.u32 %s69, %s70
    %p72 = scmp.eq.s32.totalorder %s71, 0
    %s74 = sadd.s32 %s73, 1
    %s75 = scalar_select %p72, %s73, %s74
    %p78 = pneg %p72
    %p79 = scmp.eq.s32.totalorder %s13, 1
    %p80 = por %p78, %p79
    %p81 = scmp.ne.s32.totalorder %s73, %s76
    %p82 = scmp.eq.s32.totalorder %s13, 0
    %p83 = por %p81, %p82
    %p84 = scmp.ne.s32.totalorder %s73, %s76
    %p85 = scmp.eq.s32.totalorder %s18, 1
    %p86 = por %p84, %p85
    %p87 = scmp.ne.s32.totalorder %s76, %s77
    %p88 = scmp.eq.s32.totalorder %s18, 0
    %p89 = por %p87, %p88
    %p90 = scmp.ne.s32.totalorder %s76, %s77
    %p91 = scmp.eq.s32.totalorder %s19, 1
    %p92 = por %p90, %p91
    %p94 = scmp.ne.s32.totalorder %s77, %s93
    %p95 = scmp.eq.s32.totalorder %s19, 0
    %p96 = por %p94, %p95
    %s97 = smul.u32 %s21, 16
    %s98 = sadd.s32 %s97, 16
    %p99 = scmp.lt.s32.totalorder %s98, 15
    %s100 = scalar_select %p99, %s98, 15
    %s101 = smul.u32 %s28, 16
    %s102 = sadd.s32 %s101, 16
    %p103 = scmp.lt.s32.totalorder %s102, 15
    %s104 = scalar_select %p103, %s102, 15
    %s105 = ssub.s32 %s20, %s32
    %s106 = ssub.s32 %s100, %s104
    %s107 = sor.u32 %s105, %s106
    %p108 = scmp.eq.s32.totalorder %s107, 0
    %s110 = sadd.s32 %s109, 1
    %s111 = scalar_select %p108, %s109, %s110
    %p114 = pneg %p108
    %p115 = scmp.eq.s32.totalorder %s13, 1
    %p116 = por %p114, %p115
    %p117 = scmp.ne.s32.totalorder %s109, %s112
    %p118 = scmp.eq.s32.totalorder %s13, 0
    %p119 = por %p117, %p118
    %p120 = scmp.ne.s32.totalorder %s109, %s112
    %p121 = scmp.eq.s32.totalorder %s18, 1
    %p122 = por %p120, %p121
    %p123 = scmp.ne.s32.totalorder %s112, %s113
    %p124 = scmp.eq.s32.totalorder %s18, 0
    %p125 = por %p123, %p124
    %p126 = scmp.ne.s32.totalorder %s112, %s113
    %p127 = scmp.eq.s32.totalorder %s19, 1
    %p128 = por %p126, %p127
    %p130 = scmp.ne.s32.totalorder %s113, %s129
    %p131 = scmp.eq.s32.totalorder %s19, 0
    %p132 = por %p130, %p131
    %s134 = sadd.s32 %s133, 1
    %p137 = scmp.eq.s32.totalorder %s13, 1
    %p138 = scmp.ne.s32.totalorder %s133, %s135
    %p139 = scmp.eq.s32.totalorder %s13, 0
    %p140 = por %p138, %p139
    %p141 = scmp.ne.s32.totalorder %s133, %s135
    %p142 = scmp.eq.s32.totalorder %s18, 1
    %p143 = por %p141, %p142
    %p144 = scmp.ne.s32.totalorder %s135, %s136
    %p145 = scmp.eq.s32.totalorder %s18, 0
    %p146 = por %p144, %p145
    %p147 = scmp.ne.s32.totalorder %s135, %s136
    %p148 = scmp.eq.s32.totalorder %s19, 1
    %p149 = por %p147, %p148
    %p151 = scmp.ne.s32.totalorder %s136, %s150
    %p152 = scmp.eq.s32.totalorder %s19, 0
    %p153 = por %p151, %p152
    %s155 = sadd.s32 %s154, 1
    %p158 = scmp.eq.s32.totalorder %s13, 1
    %p159 = scmp.ne.s32.totalorder %s154, %s156
    %p160 = scmp.eq.s32.totalorder %s13, 0
    %p161 = por %p159, %p160
    %p162 = scmp.ne.s32.totalorder %s154, %s156
    %p163 = scmp.eq.s32.totalorder %s18, 1
    %p164 = por %p162, %p163
    %p165 = scmp.ne.s32.totalorder %s156, %s157
    %p166 = scmp.eq.s32.totalorder %s18, 0
    %p167 = por %p165, %p166
    %p168 = scmp.ne.s32.totalorder %s156, %s157
    %p169 = scmp.eq.s32.totalorder %s19, 1
    %p170 = por %p168, %p169
    %p172 = scmp.ne.s32.totalorder %s157, %s171
    %p173 = scmp.eq.s32.totalorder %s19, 0
    %p174 = por %p172, %p173
    %s175 = ssub.s32 %s20, %s32
    %s176 = ssub.s32 %s21, %s28
    %s177 = sor.u32 %s175, %s176
    %p178 = scmp.eq.s32.totalorder %s177, 0
    %s180 = sadd.s32 %s179, 1
    %s181 = scalar_select %p178, %s179, %s180
    %p184 = pneg %p178
    %p185 = scmp.eq.s32.totalorder %s13, 1
    %p186 = por %p184, %p185
    %p187 = scmp.ne.s32.totalorder %s179, %s182
    %p188 = scmp.eq.s32.totalorder %s13, 0
    %p189 = por %p187, %p188
    %p190 = scmp.ne.s32.totalorder %s179, %s182
    %p191 = scmp.eq.s32.totalorder %s18, 1
    %p192 = por %p190, %p191
    %p193 = scmp.ne.s32.totalorder %s182, %s183
    %p194 = scmp.eq.s32.totalorder %s18, 0
    %p195 = por %p193, %p194
    %p196 = scmp.ne.s32.totalorder %s182, %s183
    %p197 = scmp.eq.s32.totalorder %s19, 1
    %p198 = por %p196, %p197
    %p200 = scmp.ne.s32.totalorder %s183, %s199
    %p201 = scmp.eq.s32.totalorder %s19, 0
    %p202 = por %p200, %p201
    %s203 = ssub.s32 %s20, %s32
    %s204 = ssub.s32 %s21, %s28
    %s205 = sor.u32 %s203, %s204
    %p206 = scmp.eq.s32.totalorder %s205, 0
    %s208 = sadd.s32 %s207, 1
    %s209 = scalar_select %p206, %s207, %s208
    %p212 = pneg %p206
    %p213 = scmp.eq.s32.totalorder %s13, 1
    %p214 = por %p212, %p213
    %p215 = scmp.ne.s32.totalorder %s207, %s210
    %p216 = scmp.eq.s32.totalorder %s13, 0
    %p217 = por %p215, %p216
    %p218 = scmp.ne.s32.totalorder %s207, %s210
    %p219 = scmp.eq.s32.totalorder %s18, 1
    %p220 = por %p218, %p219
    %p221 = scmp.ne.s32.totalorder %s210, %s211
    %p222 = scmp.eq.s32.totalorder %s18, 0
    %p223 = por %p221, %p222
    %p224 = scmp.ne.s32.totalorder %s210, %s211
    %p225 = scmp.eq.s32.totalorder %s19, 1
    %p226 = por %p224, %p225
    %p228 = scmp.ne.s32.totalorder %s211, %s227
    %p229 = scmp.eq.s32.totalorder %s19, 0
    %p230 = por %p228, %p229
    %p231 = scmp.le.s32.totalorder 1, %s13
    %p232 = scmp.lt.s32.totalorder %s13, 3
    %p233 = pnand %p231, %p232
    %p234 = pneg %p233
    // Predicated region
    $region9: #{res_conv_block.3} parent=5 // pred_check
      _
    $region10: #{res_conv_block.3} parent=5 // pred_check_branch
      %236 = sbr.rel (%p233) target = $region12
    $region11: #{res_conv_block.3} parent=5 // pred_region
      %s237 = ssub.s32 %s13, 1
      // Predicated region
      $region13: #{res_conv_block.3} parent=11 // pred_check
        %p238 = pneg %p146
      $region14: #{res_conv_block.3} parent=11 // pred_check_branch
        %240 = sbr.rel (%p238) target = $region16
      $region15: #{res_conv_block.3} parent=11 // pred_region
        _
      $region16: #{res_conv_block.3} parent=11 // pred_fallthru
        _
      // Predicated region
      $region17: #{res_conv_block.3} parent=11 // pred_check
        %p241 = pneg %p167
      $region18: #{res_conv_block.3} parent=11 // pred_check_branch
        %243 = sbr.rel (%p241) target = $region20
      $region19: #{res_conv_block.3} parent=11 // pred_region
        _
      $region20: #{res_conv_block.3} parent=11 // pred_fallthru
        _
    $region12: #{res_conv_block.3} parent=5 // pred_fallthru
      _
    %p244 = scmp.lt.s32.totalorder %s13, 2
    // Predicated region
    $region21: #{res_conv_block.3} parent=5 // pred_check
      %p245 = pneg %p244
    $region22: #{res_conv_block.3} parent=5 // pred_check_branch
      %247 = sbr.rel (%p245) target = $region24
    $region23: #{res_conv_block.3} parent=5 // pred_region
      // Predicated region
      $region25: #{res_conv_block.3} parent=23 // pred_check
        %p248 = pneg %p47
      $region26: #{res_conv_block.3} parent=23 // pred_check_branch
        %250 = sbr.rel (%p248) target = $region28
      $region27: #{res_conv_block.3} parent=23 // pred_region
        %s251 = smul.u32 16, %s21
        %p252 = scmp.lt.s32.totalorder %s20, 1
        %s253 = scalar_select %p252, %s20, 1
        %p254 = scmp.lt.s32.totalorder %s251, 15
        %s255 = scalar_select %p254, %s251, 15
        %s256 = smul.addr %s255, 2
        %s257 = smul.addr %s253, 32
        %s258 = sadd.s32 %s256, %s257
        %s259 = smul.addr %s258, 8
        %s260 = scalar_lea.vmem %s0, %s259
        %s261 = smul.u32 16, %s21
      $region28: #{res_conv_block.3} parent=23 // pred_fallthru
        _
      // Predicated region
      $region29: #{res_conv_block.3} parent=23 // pred_check
        %p262 = pneg %p83
      $region30: #{res_conv_block.3} parent=23 // pred_check_branch
        %264 = sbr.rel (%p262) target = $region32
      $region31: #{res_conv_block.3} parent=23 // pred_region
        %s265 = smul.u32 %s21, 16
        %s266 = ssub.s32 %s265, 1
        %p267 = scmp.gt.s32.totalorder %s266, 0
        %s268 = scalar_select %p267, %s266, 0
        %p269 = scmp.lt.s32.totalorder %s20, 1
        %s270 = scalar_select %p269, %s20, 1
        %p271 = scmp.lt.s32.totalorder %s268, 15
        %s272 = scalar_select %p271, %s268, 15
        %s273 = smul.addr %s272, 2
        %s274 = smul.addr %s270, 32
        %s275 = sadd.s32 %s273, %s274
        %s276 = smul.addr %s275, 8
        %s277 = scalar_lea.vmem %s1, %s276
        %s278 = smul.u32 %s21, 16
        %s279 = ssub.s32 %s278, 1
        %p280 = scmp.gt.s32.totalorder %s279, 0
        %s281 = scalar_select %p280, %s279, 0
      $region32: #{res_conv_block.3} parent=23 // pred_fallthru
        _
      // Predicated region
      $region33: #{res_conv_block.3} parent=23 // pred_check
        %p282 = pneg %p119
      $region34: #{res_conv_block.3} parent=23 // pred_check_branch
        %284 = sbr.rel (%p282) target = $region36
      $region35: #{res_conv_block.3} parent=23 // pred_region
        %s285 = smul.u32 %s21, 16
        %s286 = sadd.s32 %s285, 16
        %p287 = scmp.lt.s32.totalorder %s286, 15
        %s288 = scalar_select %p287, %s286, 15
        %p289 = scmp.lt.s32.totalorder %s20, 1
        %s290 = scalar_select %p289, %s20, 1
        %p291 = scmp.lt.s32.totalorder %s288, 15
        %s292 = scalar_select %p291, %s288, 15
        %s293 = smul.addr %s292, 2
        %s294 = smul.addr %s290, 32
        %s295 = sadd.s32 %s293, %s294
        %s296 = smul.addr %s295, 8
        %s297 = scalar_lea.vmem %s2, %s296
        %s298 = smul.u32 %s21, 16
        %s299 = sadd.s32 %s298, 16
        %p300 = scmp.lt.s32.totalorder %s299, 15
        %s301 = scalar_select %p300, %s299, 15
      $region36: #{res_conv_block.3} parent=23 // pred_fallthru
        _
    $region24: #{res_conv_block.3} parent=5 // pred_fallthru
      _
    %p302 = scmp.le.s32.totalorder 1, %s13
    %p303 = scmp.lt.s32.totalorder %s13, 3
    %p304 = pnand %p302, %p303
    %p305 = pneg %p304
    // Predicated region
    $region37: #{res_conv_block.3} parent=5 // pred_check
      _
    $region38: #{res_conv_block.3} parent=5 // pred_check_branch
      %307 = sbr.rel (%p304) target = $region40
    $region39: #{res_conv_block.3} parent=5 // pred_region
      %s308 = ssub.s32 %s13, 1
      %s309 = smul.u32 16, %s23
      %p310 = scmp.lt.s32.totalorder %s22, 1
      %s311 = scalar_select %p310, %s22, 1
      %p312 = scmp.lt.s32.totalorder %s309, 15
      %s313 = scalar_select %p312, %s309, 15
      %s314 = smul.addr %s313, 2
      %s315 = smul.addr %s311, 32
      %s316 = sadd.s32 %s314, %s315
      %s317 = smul.addr %s316, 8
      %s318 = scalar_lea.vmem %s0, %s317
      %p319 = pneg %p53
      %p320 = pneg %p50
      %s321 = smul.u32 %s23, 16
      %s322 = ssub.s32 %s321, 1
      %p323 = scmp.gt.s32.totalorder %s322, 0
      %s324 = scalar_select %p323, %s322, 0
      %p325 = scmp.lt.s32.totalorder %s22, 1
      %s326 = scalar_select %p325, %s22, 1
      %p327 = scmp.lt.s32.totalorder %s324, 15
      %s328 = scalar_select %p327, %s324, 15
      %s329 = smul.addr %s328, 2
      %s330 = smul.addr %s326, 32
      %s331 = sadd.s32 %s329, %s330
      %s332 = smul.addr %s331, 8
      %s333 = scalar_lea.vmem %s1, %s332
      %p334 = pneg %p89
      %p335 = pneg %p86
      %s336 = smul.u32 %s23, 16
      %s337 = sadd.s32 %s336, 16
      %p338 = scmp.lt.s32.totalorder %s337, 15
      %s339 = scalar_select %p338, %s337, 15
      %p340 = scmp.lt.s32.totalorder %s22, 1
      %s341 = scalar_select %p340, %s22, 1
      %p342 = scmp.lt.s32.totalorder %s339, 15
      %s343 = scalar_select %p342, %s339, 15
      %s344 = smul.addr %s343, 2
      %s345 = smul.addr %s341, 32
      %s346 = sadd.s32 %s344, %s345
      %s347 = smul.addr %s346, 8
      %s348 = scalar_lea.vmem %s2, %s347
      %p349 = pneg %p125
      %p350 = pneg %p122
      %p351 = pneg %p146
      %p352 = pneg %p143
      %p353 = pneg %p167
      %p354 = pneg %p164
      %p355 = pneg %p195
      %p356 = pneg %p192
      %s357 = smul.u32 16, %s23
      %p358 = scmp.lt.s32.totalorder %s22, 1
      %s359 = scalar_select %p358, %s22, 1
      %p360 = scmp.lt.s32.totalorder %s357, 15
      %s361 = scalar_select %p360, %s357, 15
      %s362 = smul.addr %s361, 2
      %s363 = smul.addr %s359, 32
      %s364 = sadd.s32 %s362, %s363
      %s365 = smul.addr %s364, 8
      %s366 = scalar_lea.vmem %s5, %s365
      %p367 = pneg %p223
      %p368 = pneg %p220
      %p369 = scmp.lt.s32.totalorder %s22, 1
      %s370 = scalar_select %p369, %s22, 1
      %p371 = scmp.lt.s32.totalorder %s23, 0
      %s372 = scalar_select %p371, %s23, 0
      %s373 = sadd.s32 %s372, %s370
      %s374 = smul.addr %s373, 8
      %s375 = scalar_lea.vmem %s6, %s374
      %s376 = smul.u32 16, %s23
      %p377 = scmp.lt.s32.totalorder %s22, 1
      %s378 = scalar_select %p377, %s22, 1
      %p379 = scmp.lt.s32.totalorder %s376, 15
      %s380 = scalar_select %p379, %s376, 15
      %s381 = smul.addr %s380, 2
      %s382 = smul.addr %s378, 32
      %s383 = sadd.s32 %s381, %s382
      %s384 = smul.addr %s383, 8
      %s385 = scalar_lea.vmem %s0, %s384
      %s386 = smul.u32 16, %s23
      %s387 = smul.u32 %s23, 16
      %s388 = ssub.s32 %s387, 1
      %p389 = scmp.gt.s32.totalorder %s388, 0
      %s390 = scalar_select %p389, %s388, 0
      %p391 = scmp.lt.s32.totalorder %s22, 1
      %s392 = scalar_select %p391, %s22, 1
      %p393 = scmp.lt.s32.totalorder %s390, 15
      %s394 = scalar_select %p393, %s390, 15
      %s395 = smul.addr %s394, 2
      %s396 = smul.addr %s392, 32
      %s397 = sadd.s32 %s395, %s396
      %s398 = smul.addr %s397, 8
      %s399 = scalar_lea.vmem %s1, %s398
      %s400 = smul.u32 %s23, 16
      %s401 = ssub.s32 %s400, 1
      %p402 = scmp.gt.s32.totalorder %s401, 0
      %s403 = scalar_select %p402, %s401, 0
      %s404 = smul.u32 %s23, 16
      %s405 = sadd.s32 %s404, 16
      %p406 = scmp.lt.s32.totalorder %s405, 15
      %s407 = scalar_select %p406, %s405, 15
      %p408 = scmp.lt.s32.totalorder %s22, 1
      %s409 = scalar_select %p408, %s22, 1
      %p410 = scmp.lt.s32.totalorder %s407, 15
      %s411 = scalar_select %p410, %s407, 15
      %s412 = smul.addr %s411, 2
      %s413 = smul.addr %s409, 32
      %s414 = sadd.s32 %s412, %s413
      %s415 = smul.addr %s414, 8
      %s416 = scalar_lea.vmem %s2, %s415
      %s417 = smul.u32 %s23, 16
      %s418 = sadd.s32 %s417, 16
      %p419 = scmp.lt.s32.totalorder %s418, 15
      %s420 = scalar_select %p419, %s418, 15
      %s421 = smul.u32 16, %s23
      %p422 = scmp.lt.s32.totalorder %s22, 1
      %s423 = scalar_select %p422, %s22, 1
      %p424 = scmp.lt.s32.totalorder %s421, 15
      %s425 = scalar_select %p424, %s421, 15
      %s426 = smul.addr %s425, 2
      %s427 = smul.addr %s423, 32
      %s428 = sadd.s32 %s426, %s427
      %s429 = smul.addr %s428, 8
      %s430 = scalar_lea.vmem %s5, %s429
      %s431 = smul.u32 16, %s23
      %p432 = scmp.lt.s32.totalorder %s22, 1
      %s433 = scalar_select %p432, %s22, 1
      %p434 = scmp.lt.s32.totalorder %s23, 0
      %s435 = scalar_select %p434, %s23, 0
      %s436 = sadd.s32 %s435, %s433
      %s437 = smul.addr %s436, 8
      %s438 = scalar_lea.vmem %s6, %s437
      %v440 = vld [vmem:[%s399] sm:$0xff]
      %v441 = vld [vmem:[%s399 + $0x8] sm:$0xff]
      %v442 = vld [vmem:[%s385] sm:$0xff]
      %v443 = vld [vmem:[%s385 + $0x8] sm:$0xff]
      %v444 = vld [vmem:[%s385 + $0x10] sm:$0xff]
      %v445 = vld [vmem:[%s385 + $0x18] sm:$0xff]
      %v446 = vld [vmem:[%s385 + $0x20] sm:$0xff]
      %v447 = vld [vmem:[%s385 + $0x28] sm:$0xff]
      %v448 = vld [vmem:[%s385 + $0x30] sm:$0xff]
      %v449 = vld [vmem:[%s385 + $0x38] sm:$0xff]
      %v450 = vld [vmem:[%s385 + $0x40] sm:$0xff]
      %v451 = vld [vmem:[%s385 + $0x48] sm:$0xff]
      %v452 = vld [vmem:[%s385 + $0x50] sm:$0xff]
      %v453 = vld [vmem:[%s385 + $0x58] sm:$0xff]
      %v454 = vld [vmem:[%s385 + $0x60] sm:$0xff]
      %v455 = vld [vmem:[%s385 + $0x68] sm:$0xff]
      %v456 = vld [vmem:[%s385 + $0x70] sm:$0xff]
      %v457 = vld [vmem:[%s385 + $0x78] sm:$0xff]
      %v458 = vld [vmem:[%s385 + $0x80] sm:$0xff]
      %v459 = vld [vmem:[%s385 + $0x88] sm:$0xff]
      %v460 = vld [vmem:[%s385 + $0x90] sm:$0xff]
      %v461 = vld [vmem:[%s385 + $0x98] sm:$0xff]
      %v462 = vld [vmem:[%s385 + $0xa0] sm:$0xff]
      %v463 = vld [vmem:[%s385 + $0xa8] sm:$0xff]
      %v464 = vld [vmem:[%s385 + $0xb0] sm:$0xff]
      %v465 = vld [vmem:[%s385 + $0xb8] sm:$0xff]
      %v466 = vld [vmem:[%s385 + $0xc0] sm:$0xff]
      %v467 = vld [vmem:[%s385 + $0xc8] sm:$0xff]
      %v468 = vld [vmem:[%s385 + $0xd0] sm:$0xff]
      %v469 = vld [vmem:[%s385 + $0xd8] sm:$0xff]
      %v470 = vld [vmem:[%s385 + $0xe0] sm:$0xff]
      %v471 = vld [vmem:[%s385 + $0xe8] sm:$0xff]
      %v472 = vld [vmem:[%s385 + $0xf0] sm:$0xff]
      %v473 = vld [vmem:[%s385 + $0xf8] sm:$0xff]
      %v474 = vld [vmem:[%s416] sm:$0xff]
      %v475 = vld [vmem:[%s416 + $0x8] sm:$0xff]
      %p476 = scmp.eq.s32.totalorder %s23, 0
      %s477 = scalar_select %p476, 0.0, 1.0
      %v478 = vstv %s477
      %v479 = vmul.f32 %v440, %v478
      %v480 = vmul.f32 %v441, %v478
      %v481 = vmul.f32 %v474, %v478
      %v482 = vmul.f32 %v475, %v478
      %vm515 = vcmask 1046528
      %v516 = vrot.slane %v479, 1
      %v517 = vrot.slane %v480, 1
      %v518 = vsel %vm515, %v516, %v517
      %v519 = vrot.slane %v442, 1
      %v520 = vrot.slane %v443, 1
      %v521 = vsel %vm515, %v519, %v520
      %v522 = vrot.slane %v444, 1
      %v523 = vrot.slane %v445, 1
      %v524 = vsel %vm515, %v522, %v523
      %v525 = vrot.slane %v446, 1
      %v526 = vrot.slane %v447, 1
      %v527 = vsel %vm515, %v525, %v526
      %v528 = vrot.slane %v448, 1
      %v529 = vrot.slane %v449, 1
      %v530 = vsel %vm515, %v528, %v529
      %v531 = vrot.slane %v450, 1
      %v532 = vrot.slane %v451, 1
      %v533 = vsel %vm515, %v531, %v532
      %v534 = vrot.slane %v452, 1
      %v535 = vrot.slane %v453, 1
      %v536 = vsel %vm515, %v534, %v535
      %v537 = vrot.slane %v454, 1
      %v538 = vrot.slane %v455, 1
      %v539 = vsel %vm515, %v537, %v538
      %v540 = vrot.slane %v456, 1
      %v541 = vrot.slane %v457, 1
      %v542 = vsel %vm515, %v540, %v541
      %v543 = vrot.slane %v458, 1
      %v544 = vrot.slane %v459, 1
      %v545 = vsel %vm515, %v543, %v544
      %v546 = vrot.slane %v460, 1
      %v547 = vrot.slane %v461, 1
      %v548 = vsel %vm515, %v546, %v547
      %v549 = vrot.slane %v462, 1
      %v550 = vrot.slane %v463, 1
      %v551 = vsel %vm515, %v549, %v550
      %v552 = vrot.slane %v464, 1
      %v553 = vrot.slane %v465, 1
      %v554 = vsel %vm515, %v552, %v553
      %v555 = vrot.slane %v466, 1
      %v556 = vrot.slane %v467, 1
      %v557 = vsel %vm515, %v555, %v556
      %v558 = vrot.slane %v468, 1
      %v559 = vrot.slane %v469, 1
      %v560 = vsel %vm515, %v558, %v559
      %v561 = vrot.slane %v470, 1
      %v562 = vrot.slane %v471, 1
      %v563 = vsel %vm515, %v561, %v562
      %vm565 = vcmask 1045504
      %v566 = vrot.slane %v479, 2
      %v567 = vrot.slane %v480, 2
      %v568 = vsel %vm565, %v566, %v567
      %v569 = vrot.slane 0.0, 2
      %v570 = vsel %vm565, %v567, %v569
      %v571 = vrot.slane %v442, 2
      %v572 = vrot.slane %v443, 2
      %v573 = vsel %vm565, %v571, %v572
      %v574 = vsel %vm565, %v572, %v569
      %v575 = vrot.slane %v444, 2
      %v576 = vrot.slane %v445, 2
      %v577 = vsel %vm565, %v575, %v576
      %v578 = vsel %vm565, %v576, %v569
      %v579 = vrot.slane %v446, 2
      %v580 = vrot.slane %v447, 2
      %v581 = vsel %vm565, %v579, %v580
      %v582 = vsel %vm565, %v580, %v569
      %v583 = vrot.slane %v448, 2
      %v584 = vrot.slane %v449, 2
      %v585 = vsel %vm565, %v583, %v584
      %v586 = vsel %vm565, %v584, %v569
      %v587 = vrot.slane %v450, 2
      %v588 = vrot.slane %v451, 2
      %v589 = vsel %vm565, %v587, %v588
      %v590 = vsel %vm565, %v588, %v569
      %v591 = vrot.slane %v452, 2
      %v592 = vrot.slane %v453, 2
      %v593 = vsel %vm565, %v591, %v592
      %v594 = vsel %vm565, %v592, %v569
      %v595 = vrot.slane %v454, 2
      %v596 = vrot.slane %v455, 2
      %v597 = vsel %vm565, %v595, %v596
      %v598 = vsel %vm565, %v596, %v569
      %v599 = vrot.slane %v456, 2
      %v600 = vrot.slane %v457, 2
      %v601 = vsel %vm565, %v599, %v600
      %v602 = vsel %vm565, %v600, %v569
      %v603 = vrot.slane %v458, 2
      %v604 = vrot.slane %v459, 2
      %v605 = vsel %vm565, %v603, %v604
      %v606 = vsel %vm565, %v604, %v569
      %v607 = vrot.slane %v460, 2
      %v608 = vrot.slane %v461, 2
      %v609 = vsel %vm565, %v607, %v608
      %v610 = vsel %vm565, %v608, %v569
      %v611 = vrot.slane %v462, 2
      %v612 = vrot.slane %v463, 2
      %v613 = vsel %vm565, %v611, %v612
      %v614 = vsel %vm565, %v612, %v569
      %v615 = vrot.slane %v464, 2
      %v616 = vrot.slane %v465, 2
      %v617 = vsel %vm565, %v615, %v616
      %v618 = vsel %vm565, %v616, %v569
      %v619 = vrot.slane %v466, 2
      %v620 = vrot.slane %v467, 2
      %v621 = vsel %vm565, %v619, %v620
      %v622 = vsel %vm565, %v620, %v569
      %v623 = vrot.slane %v468, 2
      %v624 = vrot.slane %v469, 2
      %v625 = vsel %vm565, %v623, %v624
      %v626 = vsel %vm565, %v624, %v569
      %v627 = vrot.slane %v470, 2
      %v628 = vrot.slane %v471, 2
      %v629 = vsel %vm565, %v627, %v628
      %v630 = vsel %vm565, %v628, %v569
      %vm631 = vcmask 1040384
      %v632 = vrot.slane 0.0, 7
      %v633 = vrot.slane %v479, 7
      %v634 = vsel %vm631, %v632, %v633
      %v635 = vrot.slane %v516, 7
      %v636 = vrot.slane %v518, 7
      %v637 = vsel %vm631, %v635, %v636
      %v638 = vrot.slane %v566, 7
      %v639 = vrot.slane %v568, 7
      %v640 = vsel %vm631, %v638, %v639
      %v641 = vrot.slane %v480, 7
      %v642 = vsel %vm631, %v633, %v641
      %v643 = vrot.slane %v517, 7
      %v644 = vsel %vm631, %v636, %v643
      %v645 = vrot.slane %v570, 7
      %v646 = vsel %vm631, %v639, %v645
      %v647 = vrot.slane %v442, 7
      %v648 = vsel %vm631, %v632, %v647
      %v649 = vrot.slane %v519, 7
      %v650 = vrot.slane %v521, 7
      %v651 = vsel %vm631, %v649, %v650
      %v652 = vrot.slane %v571, 7
      %v653 = vrot.slane %v573, 7
      %v654 = vsel %vm631, %v652, %v653
      %v655 = vrot.slane %v443, 7
      %v656 = vsel %vm631, %v647, %v655
      %v657 = vrot.slane %v520, 7
      %v658 = vsel %vm631, %v650, %v657
      %v659 = vrot.slane %v574, 7
      %v660 = vsel %vm631, %v653, %v659
      %v661 = vrot.slane %v444, 7
      %v662 = vsel %vm631, %v632, %v661
      %v663 = vrot.slane %v522, 7
      %v664 = vrot.slane %v524, 7
      %v665 = vsel %vm631, %v663, %v664
      %v666 = vrot.slane %v575, 7
      %v667 = vrot.slane %v577, 7
      %v668 = vsel %vm631, %v666, %v667
      %v669 = vrot.slane %v445, 7
      %v670 = vsel %vm631, %v661, %v669
      %v671 = vrot.slane %v523, 7
      %v672 = vsel %vm631, %v664, %v671
      %v673 = vrot.slane %v578, 7
      %v674 = vsel %vm631, %v667, %v673
      %v675 = vrot.slane %v446, 7
      %v676 = vsel %vm631, %v632, %v675
      %v677 = vrot.slane %v525, 7
      %v678 = vrot.slane %v527, 7
      %v679 = vsel %vm631, %v677, %v678
      %v680 = vrot.slane %v579, 7
      %v681 = vrot.slane %v581, 7
      %v682 = vsel %vm631, %v680, %v681
      %v683 = vrot.slane %v447, 7
      %v684 = vsel %vm631, %v675, %v683
      %v685 = vrot.slane %v526, 7
      %v686 = vsel %vm631, %v678, %v685
      %v687 = vrot.slane %v582, 7
      %v688 = vsel %vm631, %v681, %v687
      %v689 = vrot.slane %v448, 7
      %v690 = vsel %vm631, %v632, %v689
      %v691 = vrot.slane %v528, 7
      %v692 = vrot.slane %v530, 7
      %v693 = vsel %vm631, %v691, %v692
      %v694 = vrot.slane %v583, 7
      %v695 = vrot.slane %v585, 7
      %v696 = vsel %vm631, %v694, %v695
      %v697 = vrot.slane %v449, 7
      %v698 = vsel %vm631, %v689, %v697
      %v699 = vrot.slane %v529, 7
      %v700 = vsel %vm631, %v692, %v699
      %v701 = vrot.slane %v586, 7
      %v702 = vsel %vm631, %v695, %v701
      %v703 = vrot.slane %v450, 7
      %v704 = vsel %vm631, %v632, %v703
      %v705 = vrot.slane %v531, 7
      %v706 = vrot.slane %v533, 7
      %v707 = vsel %vm631, %v705, %v706
      %v708 = vrot.slane %v587, 7
      %v709 = vrot.slane %v589, 7
      %v710 = vsel %vm631, %v708, %v709
      %v711 = vrot.slane %v451, 7
      %v712 = vsel %vm631, %v703, %v711
      %v713 = vrot.slane %v532, 7
      %v714 = vsel %vm631, %v706, %v713
      %v715 = vrot.slane %v590, 7
      %v716 = vsel %vm631, %v709, %v715
      %v717 = vrot.slane %v452, 7
      %v718 = vsel %vm631, %v632, %v717
      %v719 = vrot.slane %v534, 7
      %v720 = vrot.slane %v536, 7
      %v721 = vsel %vm631, %v719, %v720
      %v722 = vrot.slane %v591, 7
      %v723 = vrot.slane %v593, 7
      %v724 = vsel %vm631, %v722, %v723
      %v725 = vrot.slane %v453, 7
      %v726 = vsel %vm631, %v717, %v725
      %v727 = vrot.slane %v535, 7
      %v728 = vsel %vm631, %v720, %v727
      %v729 = vrot.slane %v594, 7
      %v730 = vsel %vm631, %v723, %v729
      %v731 = vrot.slane %v454, 7
      %v732 = vsel %vm631, %v632, %v731
      %v733 = vrot.slane %v537, 7
      %v734 = vrot.slane %v539, 7
      %v735 = vsel %vm631, %v733, %v734
      %v736 = vrot.slane %v595, 7
      %v737 = vrot.slane %v597, 7
      %v738 = vsel %vm631, %v736, %v737
      %v739 = vrot.slane %v455, 7
      %v740 = vsel %vm631, %v731, %v739
      %v741 = vrot.slane %v538, 7
      %v742 = vsel %vm631, %v734, %v741
      %v743 = vrot.slane %v598, 7
      %v744 = vsel %vm631, %v737, %v743
      %v745 = vrot.slane %v456, 7
      %v746 = vsel %vm631, %v632, %v745
      %v747 = vrot.slane %v540, 7
      %v748 = vrot.slane %v542, 7
      %v749 = vsel %vm631, %v747, %v748
      %v750 = vrot.slane %v599, 7
      %v751 = vrot.slane %v601, 7
      %v752 = vsel %vm631, %v750, %v751
      %v753 = vrot.slane %v457, 7
      %v754 = vsel %vm631, %v745, %v753
      %v755 = vrot.slane %v541, 7
      %v756 = vsel %vm631, %v748, %v755
      %v757 = vrot.slane %v602, 7
      %v758 = vsel %vm631, %v751, %v757
      %v759 = vrot.slane %v458, 7
      %v760 = vsel %vm631, %v632, %v759
      %v761 = vrot.slane %v543, 7
      %v762 = vrot.slane %v545, 7
      %v763 = vsel %vm631, %v761, %v762
      %v764 = vrot.slane %v603, 7
      %v765 = vrot.slane %v605, 7
      %v766 = vsel %vm631, %v764, %v765
      %v767 = vrot.slane %v459, 7
      %v768 = vsel %vm631, %v759, %v767
      %v769 = vrot.slane %v544, 7
      %v770 = vsel %vm631, %v762, %v769
      %v771 = vrot.slane %v606, 7
      %v772 = vsel %vm631, %v765, %v771
      %v773 = vrot.slane %v460, 7
      %v774 = vsel %vm631, %v632, %v773
      %v775 = vrot.slane %v546, 7
      %v776 = vrot.slane %v548, 7
      %v777 = vsel %vm631, %v775, %v776
      %v778 = vrot.slane %v607, 7
      %v779 = vrot.slane %v609, 7
      %v780 = vsel %vm631, %v778, %v779
      %v781 = vrot.slane %v461, 7
      %v782 = vsel %vm631, %v773, %v781
      %v783 = vrot.slane %v547, 7
      %v784 = vsel %vm631, %v776, %v783
      %v785 = vrot.slane %v610, 7
      %v786 = vsel %vm631, %v779, %v785
      %v787 = vrot.slane %v462, 7
      %v788 = vsel %vm631, %v632, %v787
      %v789 = vrot.slane %v549, 7
      %v790 = vrot.slane %v551, 7
      %v791 = vsel %vm631, %v789, %v790
      %v792 = vrot.slane %v611, 7
      %v793 = vrot.slane %v613, 7
      %v794 = vsel %vm631, %v792, %v793
      %v795 = vrot.slane %v463, 7
      %v796 = vsel %vm631, %v787, %v795
      %v797 = vrot.slane %v550, 7
      %v798 = vsel %vm631, %v790, %v797
      %v799 = vrot.slane %v614, 7
      %v800 = vsel %vm631, %v793, %v799
      %v801 = vrot.slane %v464, 7
      %v802 = vsel %vm631, %v632, %v801
      %v803 = vrot.slane %v552, 7
      %v804 = vrot.slane %v554, 7
      %v805 = vsel %vm631, %v803, %v804
      %v806 = vrot.slane %v615, 7
      %v807 = vrot.slane %v617, 7
      %v808 = vsel %vm631, %v806, %v807
      %v809 = vrot.slane %v465, 7
      %v810 = vsel %vm631, %v801, %v809
      %v811 = vrot.slane %v553, 7
      %v812 = vsel %vm631, %v804, %v811
      %v813 = vrot.slane %v618, 7
      %v814 = vsel %vm631, %v807, %v813
      %v815 = vrot.slane %v466, 7
      %v816 = vsel %vm631, %v632, %v815
      %v817 = vrot.slane %v555, 7
      %v818 = vrot.slane %v557, 7
      %v819 = vsel %vm631, %v817, %v818
      %v820 = vrot.slane %v619, 7
      %v821 = vrot.slane %v621, 7
      %v822 = vsel %vm631, %v820, %v821
      %v823 = vrot.slane %v467, 7
      %v824 = vsel %vm631, %v815, %v823
      %v825 = vrot.slane %v556, 7
      %v826 = vsel %vm631, %v818, %v825
      %v827 = vrot.slane %v622, 7
      %v828 = vsel %vm631, %v821, %v827
      %v829 = vrot.slane %v468, 7
      %v830 = vsel %vm631, %v632, %v829
      %v831 = vrot.slane %v558, 7
      %v832 = vrot.slane %v560, 7
      %v833 = vsel %vm631, %v831, %v832
      %v834 = vrot.slane %v623, 7
      %v835 = vrot.slane %v625, 7
      %v836 = vsel %vm631, %v834, %v835
      %v837 = vrot.slane %v469, 7
      %v838 = vsel %vm631, %v829, %v837
      %v839 = vrot.slane %v559, 7
      %v840 = vsel %vm631, %v832, %v839
      %v841 = vrot.slane %v626, 7
      %v842 = vsel %vm631, %v835, %v841
      %v843 = vrot.slane %v470, 7
      %v844 = vsel %vm631, %v632, %v843
      %v845 = vrot.slane %v561, 7
      %v846 = vrot.slane %v563, 7
      %v847 = vsel %vm631, %v845, %v846
      %v848 = vrot.slane %v627, 7
      %v849 = vrot.slane %v629, 7
      %v850 = vsel %vm631, %v848, %v849
      %v851 = vrot.slane %v471, 7
      %v852 = vsel %vm631, %v843, %v851
      %v853 = vrot.slane %v562, 7
      %v854 = vsel %vm631, %v846, %v853
      %v855 = vrot.slane %v630, 7
      %v856 = vsel %vm631, %v849, %v855
      %v953 = vpack.c.bf16 %v642, %v634
      %v954 = vpack.c.bf16 %v644, %v637
      %v955 = vpack.c.bf16 %v646, %v640
      %v956 = vpack.c.bf16 %v656, %v648
      %v957 = vpack.c.bf16 %v658, %v651
      %v958 = vpack.c.bf16 %v660, %v654
      %v959 = vpack.c.bf16 %v670, %v662
      %v960 = vpack.c.bf16 %v672, %v665
      %v961 = vpack.c.bf16 %v674, %v668
      %v962 = vpack.c.bf16 %v684, %v676
      %v963 = vpack.c.bf16 %v686, %v679
      %v964 = vpack.c.bf16 %v688, %v682
      %v965 = vpack.c.bf16 %v698, %v690
      %v966 = vpack.c.bf16 %v700, %v693
      %v967 = vpack.c.bf16 %v702, %v696
      %v968 = vpack.c.bf16 %v712, %v704
      %v969 = vpack.c.bf16 %v714, %v707
      %v970 = vpack.c.bf16 %v716, %v710
      %v971 = vpack.c.bf16 %v726, %v718
      %v972 = vpack.c.bf16 %v728, %v721
      %v973 = vpack.c.bf16 %v730, %v724
      %v974 = vpack.c.bf16 %v740, %v732
      %v975 = vpack.c.bf16 %v742, %v735
      %v976 = vpack.c.bf16 %v744, %v738
      %v977 = vpack.c.bf16 %v754, %v746
      %v978 = vpack.c.bf16 %v756, %v749
      %v979 = vpack.c.bf16 %v758, %v752
      %v980 = vpack.c.bf16 %v768, %v760
      %v981 = vpack.c.bf16 %v770, %v763
      %v982 = vpack.c.bf16 %v772, %v766
      %v983 = vpack.c.bf16 %v782, %v774
      %v984 = vpack.c.bf16 %v784, %v777
      %v985 = vpack.c.bf16 %v786, %v780
      %v986 = vpack.c.bf16 %v796, %v788
      %v987 = vpack.c.bf16 %v798, %v791
      %v988 = vpack.c.bf16 %v800, %v794
      %v989 = vpack.c.bf16 %v810, %v802
      %v990 = vpack.c.bf16 %v812, %v805
      %v991 = vpack.c.bf16 %v814, %v808
      %v992 = vpack.c.bf16 %v824, %v816
      %v993 = vpack.c.bf16 %v826, %v819
      %v994 = vpack.c.bf16 %v828, %v822
      %v995 = vpack.c.bf16 %v838, %v830
      %v996 = vpack.c.bf16 %v840, %v833
      %v997 = vpack.c.bf16 %v842, %v836
      %v998 = vpack.c.bf16 %v852, %v844
      %v999 = vpack.c.bf16 %v854, %v847
      %v1000 = vpack.c.bf16 %v856, %v850
      %v1001 = vld [vmem:[%s3] sm:$0xf]
      %v1002 = vld [vmem:[%s3 + $0x4] sm:$0xf]
      %v1003 = vld [vmem:[%s3 + $0x8] sm:$0xf]
      %v1004 = vld [vmem:[%s3 + $0xc] sm:$0xf]
      %v1005 = vld [vmem:[%s3 + $0x10] sm:$0xf]
      %v1006 = vld [vmem:[%s3 + $0x14] sm:$0xf]
      %v1007 = vld [vmem:[%s3 + $0x18] sm:$0xf]
      %v1008 = vld [vmem:[%s3 + $0x1c] sm:$0xf]
      %v1009 = vld [vmem:[%s3 + $0x20] sm:$0xf]
      %v1010 = vld [vmem:[%s3 + $0x24] sm:$0xf]
      %v1011 = vld [vmem:[%s3 + $0x28] sm:$0xf]
      %v1012 = vld [vmem:[%s3 + $0x2c] sm:$0xf]
      %v1013 = vld [vmem:[%s3 + $0x30] sm:$0xf]
      %v1014 = vld [vmem:[%s3 + $0x34] sm:$0xf]
      %v1015 = vld [vmem:[%s3 + $0x38] sm:$0xf]
      %v1016 = vld [vmem:[%s3 + $0x3c] sm:$0xf]
      %v1017 = vld [vmem:[%s3 + $0x40] sm:$0xf]
      %v1018 = vld [vmem:[%s3 + $0x44] sm:$0xf]
      %v1019 = vld [vmem:[%s3 + $0x48] sm:$0xf]
      %v1020 = vld [vmem:[%s3 + $0x4c] sm:$0xf]
      %v1021 = vld [vmem:[%s3 + $0x50] sm:$0xf]
      %v1022 = vld [vmem:[%s3 + $0x54] sm:$0xf]
      %v1023 = vld [vmem:[%s3 + $0x58] sm:$0xf]
      %v1024 = vld [vmem:[%s3 + $0x5c] sm:$0xf]
      %v1025 = vld [vmem:[%s3 + $0x60] sm:$0xf]
      %v1026 = vld [vmem:[%s3 + $0x64] sm:$0xf]
      %v1027 = vld [vmem:[%s3 + $0x68] sm:$0xf]
      %v1028 = vld [vmem:[%s3 + $0x6c] sm:$0xf]
      %v1029 = vld [vmem:[%s3 + $0x70] sm:$0xf]
      %v1030 = vld [vmem:[%s3 + $0x74] sm:$0xf]
      %v1031 = vld [vmem:[%s3 + $0x78] sm:$0xf]
      %v1032 = vld [vmem:[%s3 + $0x7c] sm:$0xf]
      %v1033 = vld [vmem:[%s3 + $0x80] sm:$0xf]
      %v1034 = vld [vmem:[%s3 + $0x84] sm:$0xf]
      %v1035 = vld [vmem:[%s3 + $0x88] sm:$0xf]
      %v1036 = vld [vmem:[%s3 + $0x8c] sm:$0xf]
      %v1037 = vld [vmem:[%s3 + $0x90] sm:$0xf]
      %v1038 = vld [vmem:[%s3 + $0x94] sm:$0xf]
      %v1039 = vld [vmem:[%s3 + $0x98] sm:$0xf]
      %v1040 = vld [vmem:[%s3 + $0x9c] sm:$0xf]
      %v1041 = vld [vmem:[%s3 + $0xa0] sm:$0xf]
      %v1042 = vld [vmem:[%s3 + $0xa4] sm:$0xf]
      %v1043 = vld [vmem:[%s3 + $0xa8] sm:$0xf]
      %v1044 = vld [vmem:[%s3 + $0xac] sm:$0xf]
      %v1045 = vld [vmem:[%s3 + $0xb0] sm:$0xf]
      %v1046 = vld [vmem:[%s3 + $0xb4] sm:$0xf]
      %v1047 = vld [vmem:[%s3 + $0xb8] sm:$0xf]
      %v1048 = vld [vmem:[%s3 + $0xbc] sm:$0xf]
      %v1051 = vrot.slane %v472, 1
      %v1052 = vrot.slane %v473, 1
      %v1053 = vsel %vm515, %v1051, %v1052
      %v1054 = vrot.slane %v472, 2
      %v1055 = vrot.slane %v473, 2
      %v1056 = vsel %vm565, %v1054, %v1055
      %v1057 = vsel %vm565, %v1055, %v569
      %v1058 = vrot.slane %v472, 7
      %v1059 = vsel %vm631, %v632, %v1058
      %v1060 = vrot.slane %v1051, 7
      %v1061 = vrot.slane %v1053, 7
      %v1062 = vsel %vm631, %v1060, %v1061
      %v1063 = vrot.slane %v1054, 7
      %v1064 = vrot.slane %v1056, 7
      %v1065 = vsel %vm631, %v1063, %v1064
      %v1066 = vrot.slane %v473, 7
      %v1067 = vsel %vm631, %v1058, %v1066
      %v1068 = vrot.slane %v1052, 7
      %v1069 = vsel %vm631, %v1061, %v1068
      %v1070 = vrot.slane %v1057, 7
      %v1071 = vsel %vm631, %v1064, %v1070
      %v1078 = vpack.c.bf16 %v1067, %v1059
      %v1079 = vpack.c.bf16 %v1069, %v1062
      %v1080 = vpack.c.bf16 %v1071, %v1065
      %s1081 = scalar_lea.vmem %s3, 192
      %v1082 = vld [vmem:[%s1081] sm:$0xf]
      %v1083 = vld [vmem:[%s1081 + $0x4] sm:$0xf]
      %v1084 = vld [vmem:[%s1081 + $0x8] sm:$0xf]
      %v1085 = vld [vmem:[%s1081 + $0xc] sm:$0xf]
      %v1086 = vld [vmem:[%s1081 + $0x10] sm:$0xf]
      %v1087 = vld [vmem:[%s1081 + $0x14] sm:$0xf]
      %v1088 = vld [vmem:[%s1081 + $0x18] sm:$0xf]
      %v1089 = vld [vmem:[%s1081 + $0x1c] sm:$0xf]
      %v1090 = vld [vmem:[%s1081 + $0x20] sm:$0xf]
      %v1091 = vld [vmem:[%s1081 + $0x24] sm:$0xf]
      %v1092 = vld [vmem:[%s1081 + $0x28] sm:$0xf]
      %v1093 = vld [vmem:[%s1081 + $0x2c] sm:$0xf]
      %v1094 = vld [vmem:[%s1081 + $0x30] sm:$0xf]
      %v1095 = vld [vmem:[%s1081 + $0x34] sm:$0xf]
      %v1096 = vld [vmem:[%s1081 + $0x38] sm:$0xf]
      %v1097 = vld [vmem:[%s1081 + $0x3c] sm:$0xf]
      %v1098 = vld [vmem:[%s1081 + $0x40] sm:$0xf]
      %v1099 = vld [vmem:[%s1081 + $0x44] sm:$0xf]
      %v1100 = vld [vmem:[%s1081 + $0x48] sm:$0xf]
      %v1101 = vld [vmem:[%s1081 + $0x4c] sm:$0xf]
      %v1102 = vld [vmem:[%s1081 + $0x50] sm:$0xf]
      %v1103 = vld [vmem:[%s1081 + $0x54] sm:$0xf]
      %v1104 = vld [vmem:[%s1081 + $0x58] sm:$0xf]
      %v1105 = vld [vmem:[%s1081 + $0x5c] sm:$0xf]
      %v1106 = vld [vmem:[%s1081 + $0x60] sm:$0xf]
      %v1107 = vld [vmem:[%s1081 + $0x64] sm:$0xf]
      %v1108 = vld [vmem:[%s1081 + $0x68] sm:$0xf]
      %v1109 = vld [vmem:[%s1081 + $0x6c] sm:$0xf]
      %v1110 = vld [vmem:[%s1081 + $0x70] sm:$0xf]
      %v1111 = vld [vmem:[%s1081 + $0x74] sm:$0xf]
      %v1112 = vld [vmem:[%s1081 + $0x78] sm:$0xf]
      %v1113 = vld [vmem:[%s1081 + $0x7c] sm:$0xf]
      %v1114 = vld [vmem:[%s1081 + $0x80] sm:$0xf]
      %v1115 = vld [vmem:[%s1081 + $0x84] sm:$0xf]
      %v1116 = vld [vmem:[%s1081 + $0x88] sm:$0xf]
      %v1117 = vld [vmem:[%s1081 + $0x8c] sm:$0xf]
      %v1118 = vld [vmem:[%s1081 + $0x90] sm:$0xf]
      %v1119 = vld [vmem:[%s1081 + $0x94] sm:$0xf]
      %v1120 = vld [vmem:[%s1081 + $0x98] sm:$0xf]
      %v1121 = vld [vmem:[%s1081 + $0x9c] sm:$0xf]
      %v1122 = vld [vmem:[%s1081 + $0xa0] sm:$0xf]
      %v1123 = vld [vmem:[%s1081 + $0xa4] sm:$0xf]
      %v1124 = vld [vmem:[%s1081 + $0xa8] sm:$0xf]
      %v1125 = vld [vmem:[%s1081 + $0xac] sm:$0xf]
      %v1126 = vld [vmem:[%s1081 + $0xb0] sm:$0xf]
      %v1127 = vld [vmem:[%s1081 + $0xb4] sm:$0xf]
      %v1128 = vld [vmem:[%s1081 + $0xb8] sm:$0xf]
      %v1129 = vld [vmem:[%s1081 + $0xbc] sm:$0xf]
      %v1178 = vunpack.c.l.b16 %v1082
      %v1179 = vunpack.c.l.b16 %v1083
      %v1180 = vunpack.c.l.b16 %v1084
      %v1181 = vunpack.c.l.b16 %v1085
      %v1182 = vunpack.c.l.b16 %v1086
      %v1183 = vunpack.c.l.b16 %v1087
      %v1184 = vunpack.c.l.b16 %v1088
      %v1185 = vunpack.c.l.b16 %v1089
      %v1186 = vunpack.c.l.b16 %v1090
      %v1187 = vunpack.c.l.b16 %v1091
      %v1188 = vunpack.c.l.b16 %v1092
      %v1189 = vunpack.c.l.b16 %v1093
      %v1190 = vunpack.c.l.b16 %v1094
      %v1191 = vunpack.c.l.b16 %v1095
      %v1192 = vunpack.c.l.b16 %v1096
      %v1193 = vunpack.c.l.b16 %v1097
      %v1194 = vunpack.c.l.b16 %v1098
      %v1195 = vunpack.c.l.b16 %v1099
      %v1196 = vunpack.c.l.b16 %v1100
      %v1197 = vunpack.c.l.b16 %v1101
      %v1198 = vunpack.c.l.b16 %v1102
      %v1199 = vunpack.c.l.b16 %v1103
      %v1200 = vunpack.c.l.b16 %v1104
      %v1201 = vunpack.c.l.b16 %v1105
      %v1202 = vunpack.c.l.b16 %v1106
      %v1203 = vunpack.c.l.b16 %v1107
      %v1204 = vunpack.c.l.b16 %v1108
      %v1205 = vunpack.c.l.b16 %v1109
      %v1206 = vunpack.c.l.b16 %v1110
      %v1207 = vunpack.c.l.b16 %v1111
      %v1208 = vunpack.c.l.b16 %v1112
      %v1209 = vunpack.c.l.b16 %v1113
      %v1210 = vunpack.c.l.b16 %v1114
      %v1211 = vunpack.c.l.b16 %v1115
      %v1212 = vunpack.c.l.b16 %v1116
      %v1213 = vunpack.c.l.b16 %v1117
      %v1214 = vunpack.c.l.b16 %v1118
      %v1215 = vunpack.c.l.b16 %v1119
      %v1216 = vunpack.c.l.b16 %v1120
      %v1217 = vunpack.c.l.b16 %v1121
      %v1218 = vunpack.c.l.b16 %v1122
      %v1219 = vunpack.c.l.b16 %v1123
      %v1220 = vunpack.c.l.b16 %v1124
      %v1221 = vunpack.c.l.b16 %v1125
      %v1222 = vunpack.c.l.b16 %v1126
      %v1223 = vunpack.c.l.b16 %v1127
      %v1224 = vunpack.c.l.b16 %v1128
      %v1225 = vunpack.c.l.b16 %v1129
      %v1226 = vpack.c.b16 %v1179, %v1178
      %v1227 = vpack.c.b16 %v1181, %v1180
      %v1228 = vpack.c.b16 %v1183, %v1182
      %v1229 = vpack.c.b16 %v1185, %v1184
      %v1230 = vpack.c.b16 %v1187, %v1186
      %v1231 = vpack.c.b16 %v1189, %v1188
      %v1232 = vpack.c.b16 %v1191, %v1190
      %v1233 = vpack.c.b16 %v1193, %v1192
      %v1234 = vpack.c.b16 %v1195, %v1194
      %v1235 = vpack.c.b16 %v1197, %v1196
      %v1236 = vpack.c.b16 %v1199, %v1198
      %v1237 = vpack.c.b16 %v1201, %v1200
      %v1238 = vpack.c.b16 %v1203, %v1202
      %v1239 = vpack.c.b16 %v1205, %v1204
      %v1240 = vpack.c.b16 %v1207, %v1206
      %v1241 = vpack.c.b16 %v1209, %v1208
      %v1242 = vpack.c.b16 %v1211, %v1210
      %v1243 = vpack.c.b16 %v1213, %v1212
      %v1244 = vpack.c.b16 %v1215, %v1214
      %v1245 = vpack.c.b16 %v1217, %v1216
      %v1246 = vpack.c.b16 %v1219, %v1218
      %v1247 = vpack.c.b16 %v1221, %v1220
      %v1248 = vpack.c.b16 %v1223, %v1222
      %v1249 = vpack.c.b16 %v1225, %v1224
      %1274 = vmatprep.subr.bf16.mxu0 0
      %1275 = vmatpush1.bf16.msra.mxu0 %v1226
      %1276 = vmatprep.subr.bf16.mxu0 0
      %1277 = vmatpush1.bf16.msra.mxu0 %v1227
      %1278 = vmatprep.subr.bf16.mxu0 0
      %1279 = vmatpush1.bf16.msra.mxu0 %v1228
      %1280 = vmatprep.subr.bf16.mxu0 0
      %1281 = vmatpush1.bf16.msra.mxu0 %v1229
      %1282 = vmatprep.subr.bf16.mxu0 0
      %1283 = vmatpush1.bf16.msra.mxu0 %v1230
      %1284 = vmatprep.subr.bf16.mxu0 0
      %1285 = vmatpush1.bf16.msra.mxu0 %v1231
      %1286 = vmatprep.subr.bf16.mxu0 0
      %1287 = vmatpush1.bf16.msra.mxu0 %v1232
      %1288 = vmatprep.subr.bf16.mxu0 0
      %1289 = vmatpush1.bf16.msra.mxu0 %v1233
      %1290 = vmatprep.subr.bf16.mxu0 0
      %1291 = vmatpush1.bf16.msra.mxu0 %v1234
      %1292 = vmatprep.subr.bf16.mxu0 0
      %1293 = vmatpush1.bf16.msra.mxu0 %v1235
      %1294 = vmatprep.subr.bf16.mxu0 0
      %1295 = vmatpush1.bf16.msra.mxu0 %v1236
      %1296 = vmatprep.subr.bf16.mxu0 0
      %1297 = vmatpush1.bf16.msra.mxu0 %v1237
      %1298 = vmatprep.subr.bf16.mxu0 0
      %1299 = vmatpush1.bf16.msra.mxu0 %v1238
      %1300 = vmatprep.subr.bf16.mxu0 0
      %1301 = vmatpush1.bf16.msra.mxu0 %v1239
      %1302 = vmatprep.subr.bf16.mxu0 0
      %1303 = vmatpush1.bf16.msra.mxu0 %v1240
      %1304 = vmatprep.subr.bf16.mxu0 0
      %1305 = vmatpush1.bf16.msra.mxu0 %v1241
      %1306 = vmatprep.mubr.bf16.mxu0 %v957
      %1307 = vmatmul.mubr.bf16.gmra.mrb[0].mxu0 %v956
      %v1308 = vpop.f32.mrb[0].mxu0
      %v1309 = vadd.f32 0.0, %v1308
      %v1310 = vpop.f32.mrb[0].mxu0
      %v1311 = vpop.f32.mrb[0].mxu0
      %v1312 = vadd.f32 0.0, %v1311
      %v1313 = vpop.f32.mrb[0].mxu0
      %1314 = vmatprep.mubr.bf16.mxu0 %v960
      %1315 = vmatmul.mubr.bf16.gmra.mrb[0].mxu0 %v959
      %v1316 = vpop.f32.mrb[0].mxu0
      %v1317 = vadd.f32 0.0, %v1316
      %v1318 = vpop.f32.mrb[0].mxu0
      %v1319 = vpop.f32.mrb[0].mxu0
      %v1320 = vadd.f32 0.0, %v1319
      %v1321 = vpop.f32.mrb[0].mxu0
      %1322 = vmatprep.mubr.bf16.mxu0 %v963
      %1323 = vmatmul.mubr.bf16.gmra.mrb[0].mxu0 %v962
      %v1324 = vpop.f32.mrb[0].mxu0
      %v1325 = vadd.f32 0.0, %v1324
      %v1326 = vpop.f32.mrb[0].mxu0
      %v1327 = vpop.f32.mrb[0].mxu0
      %v1328 = vadd.f32 0.0, %v1327
      %v1329 = vpop.f32.mrb[0].mxu0
      %1330 = vmatprep.mubr.bf16.mxu0 %v966
      %1331 = vmatmul.mubr.bf16.gmra.mrb[0].mxu0 %v965
      %v1332 = vpop.f32.mrb[0].mxu0
      %v1333 = vadd.f32 0.0, %v1332
      %v1334 = vpop.f32.mrb[0].mxu0
      %v1335 = vpop.f32.mrb[0].mxu0
      %v1336 = vadd.f32 0.0, %v1335
      %v1337 = vpop.f32.mrb[0].mxu0
      %1338 = vmatprep.mubr.bf16.mxu0 %v969
      %1339 = vmatmul.mubr.bf16.gmra.mrb[0].mxu0 %v968
      %v1340 = vpop.f32.mrb[0].mxu0
      %v1341 = vadd.f32 0.0, %v1340
      %v1342 = vpop.f32.mrb[0].mxu0
      %v1343 = vpop.f32.mrb[0].mxu0
      %v1344 = vadd.f32 0.0, %v1343
      %v1345 = vpop.f32.mrb[0].mxu0
      %1346 = vmatprep.mubr.bf16.mxu0 %v972
      %1347 = vmatmul.mubr.bf16.gmra.mrb[0].mxu0 %v971
      %v1348 = vpop.f32.mrb[0].mxu0
      %v1349 = vadd.f32 0.0, %v1348
      %v1350 = vpop.f32.mrb[0].mxu0
      %v1351 = vpop.f32.mrb[0].mxu0
      %v1352 = vadd.f32 0.0, %v1351
      %v1353 = vpop.f32.mrb[0].mxu0
      %1354 = vmatprep.mubr.bf16.mxu0 %v975
      %1355 = vmatmul.mubr.bf16.gmra.mrb[0].mxu0 %v974
      %v1356 = vpop.f32.mrb[0].mxu0
      %v1357 = vadd.f32 0.0, %v1356
      %v1358 = vpop.f32.mrb[0].mxu0
      %v1359 = vpop.f32.mrb[0].mxu0
      %v1360 = vadd.f32 0.0, %v1359
      %v1361 = vpop.f32.mrb[0].mxu0
      %1362 = vmatprep.mubr.bf16.mxu0 %v978
      %1363 = vmatmul.mubr.bf16.gmra.mrb[0].mxu0 %v977
      %v1364 = vpop.f32.mrb[0].mxu0
      %v1365 = vadd.f32 0.0, %v1364
      %v1366 = vpop.f32.mrb[0].mxu0
      %v1367 = vpop.f32.mrb[0].mxu0
      %v1368 = vadd.f32 0.0, %v1367
      %v1369 = vpop.f32.mrb[0].mxu0
      %1370 = vmatprep.mubr.bf16.mxu0 %v981
      %1371 = vmatmul.mubr.bf16.gmra.mrb[0].mxu0 %v980
      %v1372 = vpop.f32.mrb[0].mxu0
      %v1373 = vadd.f32 0.0, %v1372
      %v1374 = vpop.f32.mrb[0].mxu0
      %v1375 = vpop.f32.mrb[0].mxu0
      %v1376 = vadd.f32 0.0, %v1375
      %v1377 = vpop.f32.mrb[0].mxu0
      %1378 = vmatprep.mubr.bf16.mxu0 %v984
      %1379 = vmatmul.mubr.bf16.gmra.mrb[0].mxu0 %v983
      %v1380 = vpop.f32.mrb[0].mxu0
      %v1381 = vadd.f32 0.0, %v1380
      %v1382 = vpop.f32.mrb[0].mxu0
      %v1383 = vpop.f32.mrb[0].mxu0
      %v1384 = vadd.f32 0.0, %v1383
      %v1385 = vpop.f32.mrb[0].mxu0
      %1386 = vmatprep.mubr.bf16.mxu0 %v987
      %1387 = vmatmul.mubr.bf16.gmra.mrb[0].mxu0 %v986
      %v1388 = vpop.f32.mrb[0].mxu0
      %v1389 = vadd.f32 0.0, %v1388
      %v1390 = vpop.f32.mrb[0].mxu0
      %v1391 = vpop.f32.mrb[0].mxu0
      %v1392 = vadd.f32 0.0, %v1391
      %v1393 = vpop.f32.mrb[0].mxu0
      %1394 = vmatprep.mubr.bf16.mxu0 %v990
      %1395 = vmatmul.mubr.bf16.gmra.mrb[0].mxu0 %v989
      %v1396 = vpop.f32.mrb[0].mxu0
      %v1397 = vadd.f32 0.0, %v1396
      %v1398 = vpop.f32.mrb[0].mxu0
      %v1399 = vpop.f32.mrb[0].mxu0
      %v1400 = vadd.f32 0.0, %v1399
      %v1401 = vpop.f32.mrb[0].mxu0
      %1402 = vmatprep.mubr.bf16.mxu0 %v993
      %1403 = vmatmul.mubr.bf16.gmra.mrb[0].mxu0 %v992
      %v1404 = vpop.f32.mrb[0].mxu0
      %v1405 = vadd.f32 0.0, %v1404
      %v1406 = vpop.f32.mrb[0].mxu0
      %v1407 = vpop.f32.mrb[0].mxu0
      %v1408 = vadd.f32 0.0, %v1407
      %v1409 = vpop.f32.mrb[0].mxu0
      %1410 = vmatprep.mubr.bf16.mxu0 %v996
      %1411 = vmatmul.mubr.bf16.gmra.mrb[0].mxu0 %v995
      %v1412 = vpop.f32.mrb[0].mxu0
      %v1413 = vadd.f32 0.0, %v1412
      %v1414 = vpop.f32.mrb[0].mxu0
      %v1415 = vpop.f32.mrb[0].mxu0
      %v1416 = vadd.f32 0.0, %v1415
      %v1417 = vpop.f32.mrb[0].mxu0
      %1418 = vmatprep.mubr.bf16.mxu0 %v999
      %1419 = vmatmul.mubr.bf16.gmra.mrb[0].mxu0 %v998
      %v1420 = vpop.f32.mrb[0].mxu0
      %v1421 = vadd.f32 0.0, %v1420
      %v1422 = vpop.f32.mrb[0].mxu0
      %v1423 = vpop.f32.mrb[0].mxu0
      %v1424 = vadd.f32 0.0, %v1423
      %v1425 = vpop.f32.mrb[0].mxu0
      %1426 = vmatprep.mubr.bf16.mxu0 %v1079
      %1427 = vmatmul.mubr.bf16.gmra.mrb[0].mxu0 %v1078
      %v1428 = vpop.f32.mrb[0].mxu0
      %v1429 = vadd.f32 0.0, %v1428
      %v1430 = vpop.f32.mrb[0].mxu0
      %v1431 = vpop.f32.mrb[0].mxu0
      %v1432 = vadd.f32 0.0, %v1431
      %v1433 = vpop.f32.mrb[0].mxu0
      %1434 = vdwg.mxu0
      %1435 = vmatprep.subr.bf16.mxu0 0
      %1436 = vmatpush1.bf16.msra.mxu0 %v1242
      %1437 = vmatprep.subr.bf16.mxu0 0
      %1438 = vmatpush1.bf16.msra.mxu0 %v1243
      %1439 = vmatprep.subr.bf16.mxu0 0
      %1440 = vmatpush1.bf16.msra.mxu0 %v1244
      %1441 = vmatprep.subr.bf16.mxu0 0
      %1442 = vmatpush1.bf16.msra.mxu0 %v1245
      %1443 = vmatprep.subr.bf16.mxu0 0
      %1444 = vmatpush1.bf16.msra.mxu0 %v1246
      %1445 = vmatprep.subr.bf16.mxu0 0
      %1446 = vmatpush1.bf16.msra.mxu0 %v1247
      %1447 = vmatprep.subr.bf16.mxu0 0
      %1448 = vmatpush1.bf16.msra.mxu0 %v1248
      %1449 = vmatprep.subr.bf16.mxu0 0
      %1450 = vmatpush1.bf16.msra.mxu0 %v1249
      %1451 = vmatprep.subr.bf16.mxu0 0
      %1452 = vmatpush1.bf16.msra.mxu0 0
      %1453 = vmatprep.subr.bf16.mxu0 0
      %1454 = vmatpush1.bf16.msra.mxu0 0
      %1455 = vmatprep.subr.bf16.mxu0 0
      %1456 = vmatpush1.bf16.msra.mxu0 0
      %1457 = vmatprep.subr.bf16.mxu0 0
      %1458 = vmatpush1.bf16.msra.mxu0 0
      %1459 = vmatprep.subr.bf16.mxu0 0
      %1460 = vmatpush1.bf16.msra.mxu0 0
      %1461 = vmatprep.subr.bf16.mxu0 0
      %1462 = vmatpush1.bf16.msra.mxu0 0
      %1463 = vmatprep.subr.bf16.mxu0 0
      %1464 = vmatpush1.bf16.msra.mxu0 0
      %1465 = vmatprep.subr.bf16.mxu0 0
      %1466 = vmatpush1.bf16.msra.mxu0 0
      %1467 = vmatprep.mubr.bf16.mxu0 0
      %1468 = vmatmul.mubr.bf16.gmra.mrb[0].mxu0 %v958
      %v1469 = vpop.f32.mrb[0].mxu0
      %v1470 = vadd.f32 %v1309, %v1469
      %v1471 = vpop.f32.mrb[0].mxu0
      %v1472 = vpop.f32.mrb[0].mxu0
      %v1473 = vadd.f32 %v1312, %v1472
      %v1474 = vpop.f32.mrb[0].mxu0
      %1475 = vmatprep.mubr.bf16.mxu0 0
      %1476 = vmatmul.mubr.bf16.gmra.mrb[0].mxu0 %v961
      %v1477 = vpop.f32.mrb[0].mxu0
      %v1478 = vadd.f32 %v1317, %v1477
      %v1479 = vpop.f32.mrb[0].mxu0
      %v1480 = vpop.f32.mrb[0].mxu0
      %v1481 = vadd.f32 %v1320, %v1480
      %v1482 = vpop.f32.mrb[0].mxu0
      %1483 = vmatprep.mubr.bf16.mxu0 0
      %1484 = vmatmul.mubr.bf16.gmra.mrb[0].mxu0 %v964
      %v1485 = vpop.f32.mrb[0].mxu0
      %v1486 = vadd.f32 %v1325, %v1485
      %v1487 = vpop.f32.mrb[0].mxu0
      %v1488 = vpop.f32.mrb[0].mxu0
      %v1489 = vadd.f32 %v1328, %v1488
      %v1490 = vpop.f32.mrb[0].mxu0
      %1491 = vmatprep.mubr.bf16.mxu0 0
      %1492 = vmatmul.mubr.bf16.gmra.mrb[0].mxu0 %v967
      %v1493 = vpop.f32.mrb[0].mxu0
      %v1494 = vadd.f32 %v1333, %v1493
      %v1495 = vpop.f32.mrb[0].mxu0
      %v1496 = vpop.f32.mrb[0].mxu0
      %v1497 = vadd.f32 %v1336, %v1496
      %v1498 = vpop.f32.mrb[0].mxu0
      %1499 = vmatprep.mubr.bf16.mxu0 0
      %1500 = vmatmul.mubr.bf16.gmra.mrb[0].mxu0 %v970
      %v1501 = vpop.f32.mrb[0].mxu0
      %v1502 = vadd.f32 %v1341, %v1501
      %v1503 = vpop.f32.mrb[0].mxu0
      %v1504 = vpop.f32.mrb[0].mxu0
      %v1505 = vadd.f32 %v1344, %v1504
      %v1506 = vpop.f32.mrb[0].mxu0
      %1507 = vmatprep.mubr.bf16.mxu0 0
      %1508 = vmatmul.mubr.bf16.gmra.mrb[0].mxu0 %v973
      %v1509 = vpop.f32.mrb[0].mxu0
      %v1510 = vadd.f32 %v1349, %v1509
      %v1511 = vpop.f32.mrb[0].mxu0
      %v1512 = vpop.f32.mrb[0].mxu0
      %v1513 = vadd.f32 %v1352, %v1512
      %v1514 = vpop.f32.mrb[0].mxu0
      %1515 = vmatprep.mubr.bf16.mxu0 0
      %1516 = vmatmul.mubr.bf16.gmra.mrb[0].mxu0 %v976
      %v1517 = vpop.f32.mrb[0].mxu0
      %v1518 = vadd.f32 %v1357, %v1517
      %v1519 = vpop.f32.mrb[0].mxu0
      %v1520 = vpop.f32.mrb[0].mxu0
      %v1521 = vadd.f32 %v1360, %v1520
      %v1522 = vpop.f32.mrb[0].mxu0
      %1523 = vmatprep.mubr.bf16.mxu0 0
      %1524 = vmatmul.mubr.bf16.gmra.mrb[0].mxu0 %v979
      %v1525 = vpop.f32.mrb[0].mxu0
      %v1526 = vadd.f32 %v1365, %v1525
      %v1527 = vpop.f32.mrb[0].mxu0
      %v1528 = vpop.f32.mrb[0].mxu0
      %v1529 = vadd.f32 %v1368, %v1528
      %v1530 = vpop.f32.mrb[0].mxu0
      %1531 = vmatprep.mubr.bf16.mxu0 0
      %1532 = vmatmul.mubr.bf16.gmra.mrb[0].mxu0 %v982
      %v1533 = vpop.f32.mrb[0].mxu0
      %v1534 = vadd.f32 %v1373, %v1533
      %v1535 = vpop.f32.mrb[0].mxu0
      %v1536 = vpop.f32.mrb[0].mxu0
      %v1537 = vadd.f32 %v1376, %v1536
      %v1538 = vpop.f32.mrb[0].mxu0
      %1539 = vmatprep.mubr.bf16.mxu0 0
      %1540 = vmatmul.mubr.bf16.gmra.mrb[0].mxu0 %v985
      %v1541 = vpop.f32.mrb[0].mxu0
      %v1542 = vadd.f32 %v1381, %v1541
      %v1543 = vpop.f32.mrb[0].mxu0
      %v1544 = vpop.f32.mrb[0].mxu0
      %v1545 = vadd.f32 %v1384, %v1544
      %v1546 = vpop.f32.mrb[0].mxu0
      %1547 = vmatprep.mubr.bf16.mxu0 0
      %1548 = vmatmul.mubr.bf16.gmra.mrb[0].mxu0 %v988
      %v1549 = vpop.f32.mrb[0].mxu0
      %v1550 = vadd.f32 %v1389, %v1549
      %v1551 = vpop.f32.mrb[0].mxu0
      %v1552 = vpop.f32.mrb[0].mxu0
      %v1553 = vadd.f32 %v1392, %v1552
      %v1554 = vpop.f32.mrb[0].mxu0
      %1555 = vmatprep.mubr.bf16.mxu0 0
      %1556 = vmatmul.mubr.bf16.gmra.mrb[0].mxu0 %v991
      %v1557 = vpop.f32.mrb[0].mxu0
      %v1558 = vadd.f32 %v1397, %v1557
      %v1559 = vpop.f32.mrb[0].mxu0
      %v1560 = vpop.f32.mrb[0].mxu0
      %v1561 = vadd.f32 %v1400, %v1560
      %v1562 = vpop.f32.mrb[0].mxu0
      %1563 = vmatprep.mubr.bf16.mxu0 0
      %1564 = vmatmul.mubr.bf16.gmra.mrb[0].mxu0 %v994
      %v1565 = vpop.f32.mrb[0].mxu0
      %v1566 = vadd.f32 %v1405, %v1565
      %v1567 = vpop.f32.mrb[0].mxu0
      %v1568 = vpop.f32.mrb[0].mxu0
      %v1569 = vadd.f32 %v1408, %v1568
      %v1570 = vpop.f32.mrb[0].mxu0
      %1571 = vmatprep.mubr.bf16.mxu0 0
      %1572 = vmatmul.mubr.bf16.gmra.mrb[0].mxu0 %v997
      %v1573 = vpop.f32.mrb[0].mxu0
      %v1574 = vadd.f32 %v1413, %v1573
      %v1575 = vpop.f32.mrb[0].mxu0
      %v1576 = vpop.f32.mrb[0].mxu0
      %v1577 = vadd.f32 %v1416, %v1576
      %v1578 = vpop.f32.mrb[0].mxu0
      %1579 = vmatprep.mubr.bf16.mxu0 0
      %1580 = vmatmul.mubr.bf16.gmra.mrb[0].mxu0 %v1000
      %v1581 = vpop.f32.mrb[0].mxu0
      %v1582 = vadd.f32 %v1421, %v1581
      %v1583 = vpop.f32.mrb[0].mxu0
      %v1584 = vpop.f32.mrb[0].mxu0
      %v1585 = vadd.f32 %v1424, %v1584
      %v1586 = vpop.f32.mrb[0].mxu0
      %1587 = vmatprep.mubr.bf16.mxu0 0
      %1588 = vmatmul.mubr.bf16.gmra.mrb[0].mxu0 %v1080
      %v1589 = vpop.f32.mrb[0].mxu0
      %v1590 = vadd.f32 %v1429, %v1589
      %v1591 = vpop.f32.mrb[0].mxu0
      %v1592 = vpop.f32.mrb[0].mxu0
      %v1593 = vadd.f32 %v1432, %v1592
      %v1594 = vpop.f32.mrb[0].mxu0
      %1595 = vdwg.mxu0
      %v1644 = vunpack.c.l.b16 %v1001
      %v1645 = vunpack.c.l.b16 %v1002
      %v1646 = vunpack.c.l.b16 %v1003
      %v1647 = vunpack.c.l.b16 %v1004
      %v1648 = vunpack.c.l.b16 %v1005
      %v1649 = vunpack.c.l.b16 %v1006
      %v1650 = vunpack.c.l.b16 %v1007
      %v1651 = vunpack.c.l.b16 %v1008
      %v1652 = vunpack.c.l.b16 %v1009
      %v1653 = vunpack.c.l.b16 %v1010
      %v1654 = vunpack.c.l.b16 %v1011
      %v1655 = vunpack.c.l.b16 %v1012
      %v1656 = vunpack.c.l.b16 %v1013
      %v1657 = vunpack.c.l.b16 %v1014
      %v1658 = vunpack.c.l.b16 %v1015
      %v1659 = vunpack.c.l.b16 %v1016
      %v1660 = vunpack.c.l.b16 %v1017
      %v1661 = vunpack.c.l.b16 %v1018
      %v1662 = vunpack.c.l.b16 %v1019
      %v1663 = vunpack.c.l.b16 %v1020
      %v1664 = vunpack.c.l.b16 %v1021
      %v1665 = vunpack.c.l.b16 %v1022
      %v1666 = vunpack.c.l.b16 %v1023
      %v1667 = vunpack.c.l.b16 %v1024
      %v1668 = vunpack.c.l.b16 %v1025
      %v1669 = vunpack.c.l.b16 %v1026
      %v1670 = vunpack.c.l.b16 %v1027
      %v1671 = vunpack.c.l.b16 %v1028
      %v1672 = vunpack.c.l.b16 %v1029
      %v1673 = vunpack.c.l.b16 %v1030
      %v1674 = vunpack.c.l.b16 %v1031
      %v1675 = vunpack.c.l.b16 %v1032
      %v1676 = vunpack.c.l.b16 %v1033
      %v1677 = vunpack.c.l.b16 %v1034
      %v1678 = vunpack.c.l.b16 %v1035
      %v1679 = vunpack.c.l.b16 %v1036
      %v1680 = vunpack.c.l.b16 %v1037
      %v1681 = vunpack.c.l.b16 %v1038
      %v1682 = vunpack.c.l.b16 %v1039
      %v1683 = vunpack.c.l.b16 %v1040
      %v1684 = vunpack.c.l.b16 %v1041
      %v1685 = vunpack.c.l.b16 %v1042
      %v1686 = vunpack.c.l.b16 %v1043
      %v1687 = vunpack.c.l.b16 %v1044
      %v1688 = vunpack.c.l.b16 %v1045
      %v1689 = vunpack.c.l.b16 %v1046
      %v1690 = vunpack.c.l.b16 %v1047
      %v1691 = vunpack.c.l.b16 %v1048
      %v1692 = vpack.c.b16 %v1645, %v1644
      %v1693 = vpack.c.b16 %v1647, %v1646
      %v1694 = vpack.c.b16 %v1649, %v1648
      %v1695 = vpack.c.b16 %v1651, %v1650
      %v1696 = vpack.c.b16 %v1653, %v1652
      %v1697 = vpack.c.b16 %v1655, %v1654
      %v1698 = vpack.c.b16 %v1657, %v1656
      %v1699 = vpack.c.b16 %v1659, %v1658
      %v1700 = vpack.c.b16 %v1661, %v1660
      %v1701 = vpack.c.b16 %v1663, %v1662
      %v1702 = vpack.c.b16 %v1665, %v1664
      %v1703 = vpack.c.b16 %v1667, %v1666
      %v1704 = vpack.c.b16 %v1669, %v1668
      %v1705 = vpack.c.b16 %v1671, %v1670
      %v1706 = vpack.c.b16 %v1673, %v1672
      %v1707 = vpack.c.b16 %v1675, %v1674
      %v1708 = vpack.c.b16 %v1677, %v1676
      %v1709 = vpack.c.b16 %v1679, %v1678
      %v1710 = vpack.c.b16 %v1681, %v1680
      %v1711 = vpack.c.b16 %v1683, %v1682
      %v1712 = vpack.c.b16 %v1685, %v1684
      %v1713 = vpack.c.b16 %v1687, %v1686
      %v1714 = vpack.c.b16 %v1689, %v1688
      %v1715 = vpack.c.b16 %v1691, %v1690
      %1740 = vmatprep.subr.bf16.mxu0 0
      %1741 = vmatpush1.bf16.msra.mxu0 %v1692
      %1742 = vmatprep.subr.bf16.mxu0 0
      %1743 = vmatpush1.bf16.msra.mxu0 %v1693
      %1744 = vmatprep.subr.bf16.mxu0 0
      %1745 = vmatpush1.bf16.msra.mxu0 %v1694
      %1746 = vmatprep.subr.bf16.mxu0 0
      %1747 = vmatpush1.bf16.msra.mxu0 %v1695
      %1748 = vmatprep.subr.bf16.mxu0 0
      %1749 = vmatpush1.bf16.msra.mxu0 %v1696
      %1750 = vmatprep.subr.bf16.mxu0 0
      %1751 = vmatpush1.bf16.msra.mxu0 %v1697
      %1752 = vmatprep.subr.bf16.mxu0 0
      %1753 = vmatpush1.bf16.msra.mxu0 %v1698
      %1754 = vmatprep.subr.bf16.mxu0 0
      %1755 = vmatpush1.bf16.msra.mxu0 %v1699
      %1756 = vmatprep.subr.bf16.mxu0 0
      %1757 = vmatpush1.bf16.msra.mxu0 %v1700
      %1758 = vmatprep.subr.bf16.mxu0 0
      %1759 = vmatpush1.bf16.msra.mxu0 %v1701
      %1760 = vmatprep.subr.bf16.mxu0 0
      %1761 = vmatpush1.bf16.msra.mxu0 %v1702
      %1762 = vmatprep.subr.bf16.mxu0 0
      %1763 = vmatpush1.bf16.msra.mxu0 %v1703
      %1764 = vmatprep.subr.bf16.mxu0 0
      %1765 = vmatpush1.bf16.msra.mxu0 %v1704
      %1766 = vmatprep.subr.bf16.mxu0 0
      %1767 = vmatpush1.bf16.msra.mxu0 %v1705
      %1768 = vmatprep.subr.bf16.mxu0 0
      %1769 = vmatpush1.bf16.msra.mxu0 %v1706
      %1770 = vmatprep.subr.bf16.mxu0 0
      %1771 = vmatpush1.bf16.msra.mxu0 %v1707
      %1772 = vmatprep.mubr.bf16.mxu0 %v954
      %1773 = vmatmul.mubr.bf16.gmra.mrb[0].mxu0 %v953
      %v1774 = vpop.f32.mrb[0].mxu0
      %v1775 = vadd.f32 %v1470, %v1774
      %v1776 = vpop.f32.mrb[0].mxu0
      %v1777 = vpop.f32.mrb[0].mxu0
      %v1778 = vadd.f32 %v1473, %v1777
      %v1779 = vpop.f32.mrb[0].mxu0
      %1780 = vmatprep.mubr.bf16.mxu0 %v957
      %1781 = vmatmul.mubr.bf16.gmra.mrb[0].mxu0 %v956
      %v1782 = vpop.f32.mrb[0].mxu0
      %v1783 = vadd.f32 %v1478, %v1782
      %v1784 = vpop.f32.mrb[0].mxu0
      %v1785 = vpop.f32.mrb[0].mxu0
      %v1786 = vadd.f32 %v1481, %v1785
      %v1787 = vpop.f32.mrb[0].mxu0
      %1788 = vmatprep.mubr.bf16.mxu0 %v960
      %1789 = vmatmul.mubr.bf16.gmra.mrb[0].mxu0 %v959
      %v1790 = vpop.f32.mrb[0].mxu0
      %v1791 = vadd.f32 %v1486, %v1790
      %v1792 = vpop.f32.mrb[0].mxu0
      %v1793 = vpop.f32.mrb[0].mxu0
      %v1794 = vadd.f32 %v1489, %v1793
      %v1795 = vpop.f32.mrb[0].mxu0
      %1796 = vmatprep.mubr.bf16.mxu0 %v963
      %1797 = vmatmul.mubr.bf16.gmra.mrb[0].mxu0 %v962
      %v1798 = vpop.f32.mrb[0].mxu0
      %v1799 = vadd.f32 %v1494, %v1798
      %v1800 = vpop.f32.mrb[0].mxu0
      %v1801 = vpop.f32.mrb[0].mxu0
      %v1802 = vadd.f32 %v1497, %v1801
      %v1803 = vpop.f32.mrb[0].mxu0
      %1804 = vmatprep.mubr.bf16.mxu0 %v966
      %1805 = vmatmul.mubr.bf16.gmra.mrb[0].mxu0 %v965
      %v1806 = vpop.f32.mrb[0].mxu0
      %v1807 = vadd.f32 %v1502, %v1806
      %v1808 = vpop.f32.mrb[0].mxu0
      %v1809 = vpop.f32.mrb[0].mxu0
      %v1810 = vadd.f32 %v1505, %v1809
      %v1811 = vpop.f32.mrb[0].mxu0
      %1812 = vmatprep.mubr.bf16.mxu0 %v969
      %1813 = vmatmul.mubr.bf16.gmra.mrb[0].mxu0 %v968
      %v1814 = vpop.f32.mrb[0].mxu0
      %v1815 = vadd.f32 %v1510, %v1814
      %v1816 = vpop.f32.mrb[0].mxu0
      %v1817 = vpop.f32.mrb[0].mxu0
      %v1818 = vadd.f32 %v1513, %v1817
      %v1819 = vpop.f32.mrb[0].mxu0
      %1820 = vmatprep.mubr.bf16.mxu0 %v972
      %1821 = vmatmul.mubr.bf16.gmra.mrb[0].mxu0 %v971
      %v1822 = vpop.f32.mrb[0].mxu0
      %v1823 = vadd.f32 %v1518, %v1822
      %v1824 = vpop.f32.mrb[0].mxu0
      %v1825 = vpop.f32.mrb[0].mxu0
      %v1826 = vadd.f32 %v1521, %v1825
      %v1827 = vpop.f32.mrb[0].mxu0
      %1828 = vmatprep.mubr.bf16.mxu0 %v975
      %1829 = vmatmul.mubr.bf16.gmra.mrb[0].mxu0 %v974
      %v1830 = vpop.f32.mrb[0].mxu0
      %v1831 = vadd.f32 %v1526, %v1830
      %v1832 = vpop.f32.mrb[0].mxu0
      %v1833 = vpop.f32.mrb[0].mxu0
      %v1834 = vadd.f32 %v1529, %v1833
      %v1835 = vpop.f32.mrb[0].mxu0
      %1836 = vmatprep.mubr.bf16.mxu0 %v978
      %1837 = vmatmul.mubr.bf16.gmra.mrb[0].mxu0 %v977
      %v1838 = vpop.f32.mrb[0].mxu0
      %v1839 = vadd.f32 %v1534, %v1838
      %v1840 = vpop.f32.mrb[0].mxu0
      %v1841 = vpop.f32.mrb[0].mxu0
      %v1842 = vadd.f32 %v1537, %v1841
      %v1843 = vpop.f32.mrb[0].mxu0
      %1844 = vmatprep.mubr.bf16.mxu0 %v981
      %1845 = vmatmul.mubr.bf16.gmra.mrb[0].mxu0 %v980
      %v1846 = vpop.f32.mrb[0].mxu0
      %v1847 = vadd.f32 %v1542, %v1846
      %v1848 = vpop.f32.mrb[0].mxu0
      %v1849 = vpop.f32.mrb[0].mxu0
      %v1850 = vadd.f32 %v1545, %v1849
      %v1851 = vpop.f32.mrb[0].mxu0
      %1852 = vmatprep.mubr.bf16.mxu0 %v984
      %1853 = vmatmul.mubr.bf16.gmra.mrb[0].mxu0 %v983
      %v1854 = vpop.f32.mrb[0].mxu0
      %v1855 = vadd.f32 %v1550, %v1854
      %v1856 = vpop.f32.mrb[0].mxu0
      %v1857 = vpop.f32.mrb[0].mxu0
      %v1858 = vadd.f32 %v1553, %v1857
      %v1859 = vpop.f32.mrb[0].mxu0
      %1860 = vmatprep.mubr.bf16.mxu0 %v987
      %1861 = vmatmul.mubr.bf16.gmra.mrb[0].mxu0 %v986
      %v1862 = vpop.f32.mrb[0].mxu0
      %v1863 = vadd.f32 %v1558, %v1862
      %v1864 = vpop.f32.mrb[0].mxu0
      %v1865 = vpop.f32.mrb[0].mxu0
      %v1866 = vadd.f32 %v1561, %v1865
      %v1867 = vpop.f32.mrb[0].mxu0
      %1868 = vmatprep.mubr.bf16.mxu0 %v990
      %1869 = vmatmul.mubr.bf16.gmra.mrb[0].mxu0 %v989
      %v1870 = vpop.f32.mrb[0].mxu0
      %v1871 = vadd.f32 %v1566, %v1870
      %v1872 = vpop.f32.mrb[0].mxu0
      %v1873 = vpop.f32.mrb[0].mxu0
      %v1874 = vadd.f32 %v1569, %v1873
      %v1875 = vpop.f32.mrb[0].mxu0
      %1876 = vmatprep.mubr.bf16.mxu0 %v993
      %1877 = vmatmul.mubr.bf16.gmra.mrb[0].mxu0 %v992
      %v1878 = vpop.f32.mrb[0].mxu0
      %v1879 = vadd.f32 %v1574, %v1878
      %v1880 = vpop.f32.mrb[0].mxu0
      %v1881 = vpop.f32.mrb[0].mxu0
      %v1882 = vadd.f32 %v1577, %v1881
      %v1883 = vpop.f32.mrb[0].mxu0
      %1884 = vmatprep.mubr.bf16.mxu0 %v996
      %1885 = vmatmul.mubr.bf16.gmra.mrb[0].mxu0 %v995
      %v1886 = vpop.f32.mrb[0].mxu0
      %v1887 = vadd.f32 %v1582, %v1886
      %v1888 = vpop.f32.mrb[0].mxu0
      %v1889 = vpop.f32.mrb[0].mxu0
      %v1890 = vadd.f32 %v1585, %v1889
      %v1891 = vpop.f32.mrb[0].mxu0
      %1892 = vmatprep.mubr.bf16.mxu0 %v999
      %1893 = vmatmul.mubr.bf16.gmra.mrb[0].mxu0 %v998
      %v1894 = vpop.f32.mrb[0].mxu0
      %v1895 = vadd.f32 %v1590, %v1894
      %v1896 = vpop.f32.mrb[0].mxu0
      %v1897 = vpop.f32.mrb[0].mxu0
      %v1898 = vadd.f32 %v1593, %v1897
      %v1899 = vpop.f32.mrb[0].mxu0
      %1900 = vdwg.mxu0
      %1901 = vmatprep.subr.bf16.mxu0 0
      %1902 = vmatpush1.bf16.msra.mxu0 %v1708
      %1903 = vmatprep.subr.bf16.mxu0 0
      %1904 = vmatpush1.bf16.msra.mxu0 %v1709
      %1905 = vmatprep.subr.bf16.mxu0 0
      %1906 = vmatpush1.bf16.msra.mxu0 %v1710
      %1907 = vmatprep.subr.bf16.mxu0 0
      %1908 = vmatpush1.bf16.msra.mxu0 %v1711
      %1909 = vmatprep.subr.bf16.mxu0 0
      %1910 = vmatpush1.bf16.msra.mxu0 %v1712
      %1911 = vmatprep.subr.bf16.mxu0 0
      %1912 = vmatpush1.bf16.msra.mxu0 %v1713
      %1913 = vmatprep.subr.bf16.mxu0 0
      %1914 = vmatpush1.bf16.msra.mxu0 %v1714
      %1915 = vmatprep.subr.bf16.mxu0 0
      %1916 = vmatpush1.bf16.msra.mxu0 %v1715
      %1917 = vmatprep.subr.bf16.mxu0 0
      %1918 = vmatpush1.bf16.msra.mxu0 0
      %1919 = vmatprep.subr.bf16.mxu0 0
      %1920 = vmatpush1.bf16.msra.mxu0 0
      %1921 = vmatprep.subr.bf16.mxu0 0
      %1922 = vmatpush1.bf16.msra.mxu0 0
      %1923 = vmatprep.subr.bf16.mxu0 0
      %1924 = vmatpush1.bf16.msra.mxu0 0
      %1925 = vmatprep.subr.bf16.mxu0 0
      %1926 = vmatpush1.bf16.msra.mxu0 0
      %1927 = vmatprep.subr.bf16.mxu0 0
      %1928 = vmatpush1.bf16.msra.mxu0 0
      %1929 = vmatprep.subr.bf16.mxu0 0
      %1930 = vmatpush1.bf16.msra.mxu0 0
      %1931 = vmatprep.subr.bf16.mxu0 0
      %1932 = vmatpush1.bf16.msra.mxu0 0
      %1933 = vmatprep.mubr.bf16.mxu0 0
      %1934 = vmatmul.mubr.bf16.gmra.mrb[0].mxu0 %v955
      %v1935 = vpop.f32.mrb[0].mxu0
      %v1936 = vadd.f32 %v1775, %v1935
      %v1937 = vpop.f32.mrb[0].mxu0
      %v1938 = vpop.f32.mrb[0].mxu0
      %v1939 = vadd.f32 %v1778, %v1938
      %v1940 = vpop.f32.mrb[0].mxu0
      %1941 = vmatprep.mubr.bf16.mxu0 0
      %1942 = vmatmul.mubr.bf16.gmra.mrb[0].mxu0 %v958
      %v1943 = vpop.f32.mrb[0].mxu0
      %v1944 = vadd.f32 %v1783, %v1943
      %v1945 = vpop.f32.mrb[0].mxu0
      %v1946 = vpop.f32.mrb[0].mxu0
      %v1947 = vadd.f32 %v1786, %v1946
      %v1948 = vpop.f32.mrb[0].mxu0
      %1949 = vmatprep.mubr.bf16.mxu0 0
      %1950 = vmatmul.mubr.bf16.gmra.mrb[0].mxu0 %v961
      %v1951 = vpop.f32.mrb[0].mxu0
      %v1952 = vadd.f32 %v1791, %v1951
      %v1953 = vpop.f32.mrb[0].mxu0
      %v1954 = vpop.f32.mrb[0].mxu0
      %v1955 = vadd.f32 %v1794, %v1954
      %v1956 = vpop.f32.mrb[0].mxu0
      %1957 = vmatprep.mubr.bf16.mxu0 0
      %1958 = vmatmul.mubr.bf16.gmra.mrb[0].mxu0 %v964
      %v1959 = vpop.f32.mrb[0].mxu0
      %v1960 = vadd.f32 %v1799, %v1959
      %v1961 = vpop.f32.mrb[0].mxu0
      %v1962 = vpop.f32.mrb[0].mxu0
      %v1963 = vadd.f32 %v1802, %v1962
      %v1964 = vpop.f32.mrb[0].mxu0
      %1965 = vmatprep.mubr.bf16.mxu0 0
      %1966 = vmatmul.mubr.bf16.gmra.mrb[0].mxu0 %v967
      %v1967 = vpop.f32.mrb[0].mxu0
      %v1968 = vadd.f32 %v1807, %v1967
      %v1969 = vpop.f32.mrb[0].mxu0
      %v1970 = vpop.f32.mrb[0].mxu0
      %v1971 = vadd.f32 %v1810, %v1970
      %v1972 = vpop.f32.mrb[0].mxu0
      %1973 = vmatprep.mubr.bf16.mxu0 0
      %1974 = vmatmul.mubr.bf16.gmra.mrb[0].mxu0 %v970
      %v1975 = vpop.f32.mrb[0].mxu0
      %v1976 = vadd.f32 %v1815, %v1975
      %v1977 = vpop.f32.mrb[0].mxu0
      %v1978 = vpop.f32.mrb[0].mxu0
      %v1979 = vadd.f32 %v1818, %v1978
      %v1980 = vpop.f32.mrb[0].mxu0
      %1981 = vmatprep.mubr.bf16.mxu0 0
      %1982 = vmatmul.mubr.bf16.gmra.mrb[0].mxu0 %v973
      %v1983 = vpop.f32.mrb[0].mxu0
      %v1984 = vadd.f32 %v1823, %v1983
      %v1985 = vpop.f32.mrb[0].mxu0
      %v1986 = vpop.f32.mrb[0].mxu0
      %v1987 = vadd.f32 %v1826, %v1986
      %v1988 = vpop.f32.mrb[0].mxu0
      %1989 = vmatprep.mubr.bf16.mxu0 0
      %1990 = vmatmul.mubr.bf16.gmra.mrb[0].mxu0 %v976
      %v1991 = vpop.f32.mrb[0].mxu0
      %v1992 = vadd.f32 %v1831, %v1991
      %v1993 = vpop.f32.mrb[0].mxu0
      %v1994 = vpop.f32.mrb[0].mxu0
      %v1995 = vadd.f32 %v1834, %v1994
      %v1996 = vpop.f32.mrb[0].mxu0
      %1997 = vmatprep.mubr.bf16.mxu0 0
      %1998 = vmatmul.mubr.bf16.gmra.mrb[0].mxu0 %v979
      %v1999 = vpop.f32.mrb[0].mxu0
      %v2000 = vadd.f32 %v1839, %v1999
      %v2001 = vpop.f32.mrb[0].mxu0
      %v2002 = vpop.f32.mrb[0].mxu0
      %v2003 = vadd.f32 %v1842, %v2002
      %v2004 = vpop.f32.mrb[0].mxu0
      %2005 = vmatprep.mubr.bf16.mxu0 0
      %2006 = vmatmul.mubr.bf16.gmra.mrb[0].mxu0 %v982
      %v2007 = vpop.f32.mrb[0].mxu0
      %v2008 = vadd.f32 %v1847, %v2007
      %v2009 = vpop.f32.mrb[0].mxu0
      %v2010 = vpop.f32.mrb[0].mxu0
      %v2011 = vadd.f32 %v1850, %v2010
      %v2012 = vpop.f32.mrb[0].mxu0
      %2013 = vmatprep.mubr.bf16.mxu0 0
      %2014 = vmatmul.mubr.bf16.gmra.mrb[0].mxu0 %v985
      %v2015 = vpop.f32.mrb[0].mxu0
      %v2016 = vadd.f32 %v1855, %v2015
      %v2017 = vpop.f32.mrb[0].mxu0
      %v2018 = vpop.f32.mrb[0].mxu0
      %v2019 = vadd.f32 %v1858, %v2018
      %v2020 = vpop.f32.mrb[0].mxu0
      %2021 = vmatprep.mubr.bf16.mxu0 0
      %2022 = vmatmul.mubr.bf16.gmra.mrb[0].mxu0 %v988
      %v2023 = vpop.f32.mrb[0].mxu0
      %v2024 = vadd.f32 %v1863, %v2023
      %v2025 = vpop.f32.mrb[0].mxu0
      %v2026 = vpop.f32.mrb[0].mxu0
      %v2027 = vadd.f32 %v1866, %v2026
      %v2028 = vpop.f32.mrb[0].mxu0
      %2029 = vmatprep.mubr.bf16.mxu0 0
      %2030 = vmatmul.mubr.bf16.gmra.mrb[0].mxu0 %v991
      %v2031 = vpop.f32.mrb[0].mxu0
      %v2032 = vadd.f32 %v1871, %v2031
      %v2033 = vpop.f32.mrb[0].mxu0
      %v2034 = vpop.f32.mrb[0].mxu0
      %v2035 = vadd.f32 %v1874, %v2034
      %v2036 = vpop.f32.mrb[0].mxu0
      %2037 = vmatprep.mubr.bf16.mxu0 0
      %2038 = vmatmul.mubr.bf16.gmra.mrb[0].mxu0 %v994
      %v2039 = vpop.f32.mrb[0].mxu0
      %v2040 = vadd.f32 %v1879, %v2039
      %v2041 = vpop.f32.mrb[0].mxu0
      %v2042 = vpop.f32.mrb[0].mxu0
      %v2043 = vadd.f32 %v1882, %v2042
      %v2044 = vpop.f32.mrb[0].mxu0
      %2045 = vmatprep.mubr.bf16.mxu0 0
      %2046 = vmatmul.mubr.bf16.gmra.mrb[0].mxu0 %v997
      %v2047 = vpop.f32.mrb[0].mxu0
      %v2048 = vadd.f32 %v1887, %v2047
      %v2049 = vpop.f32.mrb[0].mxu0
      %v2050 = vpop.f32.mrb[0].mxu0
      %v2051 = vadd.f32 %v1890, %v2050
      %v2052 = vpop.f32.mrb[0].mxu0
      %2053 = vmatprep.mubr.bf16.mxu0 0
      %2054 = vmatmul.mubr.bf16.gmra.mrb[0].mxu0 %v1000
      %v2055 = vpop.f32.mrb[0].mxu0
      %v2056 = vadd.f32 %v1895, %v2055
      %v2057 = vpop.f32.mrb[0].mxu0
      %v2058 = vpop.f32.mrb[0].mxu0
      %v2059 = vadd.f32 %v1898, %v2058
      %v2060 = vpop.f32.mrb[0].mxu0
      %2061 = vdwg.mxu0
      %v2064 = vrot.slane %v481, 1
      %v2065 = vrot.slane %v482, 1
      %v2066 = vsel %vm515, %v2064, %v2065
      %v2067 = vrot.slane %v481, 2
      %v2068 = vrot.slane %v482, 2
      %v2069 = vsel %vm565, %v2067, %v2068
      %v2070 = vsel %vm565, %v2068, %v569
      %v2071 = vrot.slane %v481, 7
      %v2072 = vsel %vm631, %v632, %v2071
      %v2073 = vrot.slane %v2064, 7
      %v2074 = vrot.slane %v2066, 7
      %v2075 = vsel %vm631, %v2073, %v2074
      %v2076 = vrot.slane %v2067, 7
      %v2077 = vrot.slane %v2069, 7
      %v2078 = vsel %vm631, %v2076, %v2077
      %v2079 = vrot.slane %v482, 7
      %v2080 = vsel %vm631, %v2071, %v2079
      %v2081 = vrot.slane %v2065, 7
      %v2082 = vsel %vm631, %v2074, %v2081
      %v2083 = vrot.slane %v2070, 7
      %v2084 = vsel %vm631, %v2077, %v2083
      %v2091 = vpack.c.bf16 %v2080, %v2072
      %v2092 = vpack.c.bf16 %v2082, %v2075
      %v2093 = vpack.c.bf16 %v2084, %v2078
      %s2094 = scalar_lea.vmem %s3, 384
      %v2095 = vld [vmem:[%s2094] sm:$0xf]
      %v2096 = vld [vmem:[%s2094 + $0x4] sm:$0xf]
      %v2097 = vld [vmem:[%s2094 + $0x8] sm:$0xf]
      %v2098 = vld [vmem:[%s2094 + $0xc] sm:$0xf]
      %v2099 = vld [vmem:[%s2094 + $0x10] sm:$0xf]
      %v2100 = vld [vmem:[%s2094 + $0x14] sm:$0xf]
      %v2101 = vld [vmem:[%s2094 + $0x18] sm:$0xf]
      %v2102 = vld [vmem:[%s2094 + $0x1c] sm:$0xf]
      %v2103 = vld [vmem:[%s2094 + $0x20] sm:$0xf]
      %v2104 = vld [vmem:[%s2094 + $0x24] sm:$0xf]
      %v2105 = vld [vmem:[%s2094 + $0x28] sm:$0xf]
      %v2106 = vld [vmem:[%s2094 + $0x2c] sm:$0xf]
      %v2107 = vld [vmem:[%s2094 + $0x30] sm:$0xf]
      %v2108 = vld [vmem:[%s2094 + $0x34] sm:$0xf]
      %v2109 = vld [vmem:[%s2094 + $0x38] sm:$0xf]
      %v2110 = vld [vmem:[%s2094 + $0x3c] sm:$0xf]
      %v2111 = vld [vmem:[%s2094 + $0x40] sm:$0xf]
      %v2112 = vld [vmem:[%s2094 + $0x44] sm:$0xf]
      %v2113 = vld [vmem:[%s2094 + $0x48] sm:$0xf]
      %v2114 = vld [vmem:[%s2094 + $0x4c] sm:$0xf]
      %v2115 = vld [vmem:[%s2094 + $0x50] sm:$0xf]
      %v2116 = vld [vmem:[%s2094 + $0x54] sm:$0xf]
      %v2117 = vld [vmem:[%s2094 + $0x58] sm:$0xf]
      %v2118 = vld [vmem:[%s2094 + $0x5c] sm:$0xf]
      %v2119 = vld [vmem:[%s2094 + $0x60] sm:$0xf]
      %v2120 = vld [vmem:[%s2094 + $0x64] sm:$0xf]
      %v2121 = vld [vmem:[%s2094 + $0x68] sm:$0xf]
      %v2122 = vld [vmem:[%s2094 + $0x6c] sm:$0xf]
      %v2123 = vld [vmem:[%s2094 + $0x70] sm:$0xf]
      %v2124 = vld [vmem:[%s2094 + $0x74] sm:$0xf]
      %v2125 = vld [vmem:[%s2094 + $0x78] sm:$0xf]
      %v2126 = vld [vmem:[%s2094 + $0x7c] sm:$0xf]
      %v2127 = vld [vmem:[%s2094 + $0x80] sm:$0xf]
      %v2128 = vld [vmem:[%s2094 + $0x84] sm:$0xf]
      %v2129 = vld [vmem:[%s2094 + $0x88] sm:$0xf]
      %v2130 = vld [vmem:[%s2094 + $0x8c] sm:$0xf]
      %v2131 = vld [vmem:[%s2094 + $0x90] sm:$0xf]
      %v2132 = vld [vmem:[%s2094 + $0x94] sm:$0xf]
      %v2133 = vld [vmem:[%s2094 + $0x98] sm:$0xf]
      %v2134 = vld [vmem:[%s2094 + $0x9c] sm:$0xf]
      %v2135 = vld [vmem:[%s2094 + $0xa0] sm:$0xf]
      %v2136 = vld [vmem:[%s2094 + $0xa4] sm:$0xf]
      %v2137 = vld [vmem:[%s2094 + $0xa8] sm:$0xf]
      %v2138 = vld [vmem:[%s2094 + $0xac] sm:$0xf]
      %v2139 = vld [vmem:[%s2094 + $0xb0] sm:$0xf]
      %v2140 = vld [vmem:[%s2094 + $0xb4] sm:$0xf]
      %v2141 = vld [vmem:[%s2094 + $0xb8] sm:$0xf]
      %v2142 = vld [vmem:[%s2094 + $0xbc] sm:$0xf]
      %v2191 = vunpack.c.l.b16 %v2095
      %v2192 = vunpack.c.l.b16 %v2096
      %v2193 = vunpack.c.l.b16 %v2097
      %v2194 = vunpack.c.l.b16 %v2098
      %v2195 = vunpack.c.l.b16 %v2099
      %v2196 = vunpack.c.l.b16 %v2100
      %v2197 = vunpack.c.l.b16 %v2101
      %v2198 = vunpack.c.l.b16 %v2102
      %v2199 = vunpack.c.l.b16 %v2103
      %v2200 = vunpack.c.l.b16 %v2104
      %v2201 = vunpack.c.l.b16 %v2105
      %v2202 = vunpack.c.l.b16 %v2106
      %v2203 = vunpack.c.l.b16 %v2107
      %v2204 = vunpack.c.l.b16 %v2108
      %v2205 = vunpack.c.l.b16 %v2109
      %v2206 = vunpack.c.l.b16 %v2110
      %v2207 = vunpack.c.l.b16 %v2111
      %v2208 = vunpack.c.l.b16 %v2112
      %v2209 = vunpack.c.l.b16 %v2113
      %v2210 = vunpack.c.l.b16 %v2114
      %v2211 = vunpack.c.l.b16 %v2115
      %v2212 = vunpack.c.l.b16 %v2116
      %v2213 = vunpack.c.l.b16 %v2117
      %v2214 = vunpack.c.l.b16 %v2118
      %v2215 = vunpack.c.l.b16 %v2119
      %v2216 = vunpack.c.l.b16 %v2120
      %v2217 = vunpack.c.l.b16 %v2121
      %v2218 = vunpack.c.l.b16 %v2122
      %v2219 = vunpack.c.l.b16 %v2123
      %v2220 = vunpack.c.l.b16 %v2124
      %v2221 = vunpack.c.l.b16 %v2125
      %v2222 = vunpack.c.l.b16 %v2126
      %v2223 = vunpack.c.l.b16 %v2127
      %v2224 = vunpack.c.l.b16 %v2128
      %v2225 = vunpack.c.l.b16 %v2129
      %v2226 = vunpack.c.l.b16 %v2130
      %v2227 = vunpack.c.l.b16 %v2131
      %v2228 = vunpack.c.l.b16 %v2132
      %v2229 = vunpack.c.l.b16 %v2133
      %v2230 = vunpack.c.l.b16 %v2134
      %v2231 = vunpack.c.l.b16 %v2135
      %v2232 = vunpack.c.l.b16 %v2136
      %v2233 = vunpack.c.l.b16 %v2137
      %v2234 = vunpack.c.l.b16 %v2138
      %v2235 = vunpack.c.l.b16 %v2139
      %v2236 = vunpack.c.l.b16 %v2140
      %v2237 = vunpack.c.l.b16 %v2141
      %v2238 = vunpack.c.l.b16 %v2142
      %v2239 = vpack.c.b16 %v2192, %v2191
      %v2240 = vpack.c.b16 %v2194, %v2193
      %v2241 = vpack.c.b16 %v2196, %v2195
      %v2242 = vpack.c.b16 %v2198, %v2197
      %v2243 = vpack.c.b16 %v2200, %v2199
      %v2244 = vpack.c.b16 %v2202, %v2201
      %v2245 = vpack.c.b16 %v2204, %v2203
      %v2246 = vpack.c.b16 %v2206, %v2205
      %v2247 = vpack.c.b16 %v2208, %v2207
      %v2248 = vpack.c.b16 %v2210, %v2209
      %v2249 = vpack.c.b16 %v2212, %v2211
      %v2250 = vpack.c.b16 %v2214, %v2213
      %v2251 = vpack.c.b16 %v2216, %v2215
      %v2252 = vpack.c.b16 %v2218, %v2217
      %v2253 = vpack.c.b16 %v2220, %v2219
      %v2254 = vpack.c.b16 %v2222, %v2221
      %v2255 = vpack.c.b16 %v2224, %v2223
      %v2256 = vpack.c.b16 %v2226, %v2225
      %v2257 = vpack.c.b16 %v2228, %v2227
      %v2258 = vpack.c.b16 %v2230, %v2229
      %v2259 = vpack.c.b16 %v2232, %v2231
      %v2260 = vpack.c.b16 %v2234, %v2233
      %v2261 = vpack.c.b16 %v2236, %v2235
      %v2262 = vpack.c.b16 %v2238, %v2237
      %2287 = vmatprep.subr.bf16.mxu0 0
      %2288 = vmatpush1.bf16.msra.mxu0 %v2239
      %2289 = vmatprep.subr.bf16.mxu0 0
      %2290 = vmatpush1.bf16.msra.mxu0 %v2240
      %2291 = vmatprep.subr.bf16.mxu0 0
      %2292 = vmatpush1.bf16.msra.mxu0 %v2241
      %2293 = vmatprep.subr.bf16.mxu0 0
      %2294 = vmatpush1.bf16.msra.mxu0 %v2242
      %2295 = vmatprep.subr.bf16.mxu0 0
      %2296 = vmatpush1.bf16.msra.mxu0 %v2243
      %2297 = vmatprep.subr.bf16.mxu0 0
      %2298 = vmatpush1.bf16.msra.mxu0 %v2244
      %2299 = vmatprep.subr.bf16.mxu0 0
      %2300 = vmatpush1.bf16.msra.mxu0 %v2245
      %2301 = vmatprep.subr.bf16.mxu0 0
      %2302 = vmatpush1.bf16.msra.mxu0 %v2246
      %2303 = vmatprep.subr.bf16.mxu0 0
      %2304 = vmatpush1.bf16.msra.mxu0 %v2247
      %2305 = vmatprep.subr.bf16.mxu0 0
      %2306 = vmatpush1.bf16.msra.mxu0 %v2248
      %2307 = vmatprep.subr.bf16.mxu0 0
      %2308 = vmatpush1.bf16.msra.mxu0 %v2249
      %2309 = vmatprep.subr.bf16.mxu0 0
      %2310 = vmatpush1.bf16.msra.mxu0 %v2250
      %2311 = vmatprep.subr.bf16.mxu0 0
      %2312 = vmatpush1.bf16.msra.mxu0 %v2251
      %2313 = vmatprep.subr.bf16.mxu0 0
      %2314 = vmatpush1.bf16.msra.mxu0 %v2252
      %2315 = vmatprep.subr.bf16.mxu0 0
      %2316 = vmatpush1.bf16.msra.mxu0 %v2253
      %2317 = vmatprep.subr.bf16.mxu0 0
      %2318 = vmatpush1.bf16.msra.mxu0 %v2254
      %2319 = vmatprep.mubr.bf16.mxu0 %v960
      %2320 = vmatmul.mubr.bf16.gmra.mrb[0].mxu0 %v959
      %v2321 = vpop.f32.mrb[0].mxu0
      %v2322 = vadd.f32 0.0, %v2321
      %v2323 = vpop.f32.mrb[0].mxu0
      %v2324 = vpop.f32.mrb[0].mxu0
      %v2325 = vadd.f32 0.0, %v2324
      %v2326 = vpop.f32.mrb[0].mxu0
      %2327 = vmatprep.mubr.bf16.mxu0 %v963
      %2328 = vmatmul.mubr.bf16.gmra.mrb[0].mxu0 %v962
      %v2329 = vpop.f32.mrb[0].mxu0
      %v2330 = vadd.f32 0.0, %v2329
      %v2331 = vpop.f32.mrb[0].mxu0
      %v2332 = vpop.f32.mrb[0].mxu0
      %v2333 = vadd.f32 0.0, %v2332
      %v2334 = vpop.f32.mrb[0].mxu0
      %2335 = vmatprep.mubr.bf16.mxu0 %v966
      %2336 = vmatmul.mubr.bf16.gmra.mrb[0].mxu0 %v965
      %v2337 = vpop.f32.mrb[0].mxu0
      %v2338 = vadd.f32 0.0, %v2337
      %v2339 = vpop.f32.mrb[0].mxu0
      %v2340 = vpop.f32.mrb[0].mxu0
      %v2341 = vadd.f32 0.0, %v2340
      %v2342 = vpop.f32.mrb[0].mxu0
      %2343 = vmatprep.mubr.bf16.mxu0 %v969
      %2344 = vmatmul.mubr.bf16.gmra.mrb[0].mxu0 %v968
      %v2345 = vpop.f32.mrb[0].mxu0
      %v2346 = vadd.f32 0.0, %v2345
      %v2347 = vpop.f32.mrb[0].mxu0
      %v2348 = vpop.f32.mrb[0].mxu0
      %v2349 = vadd.f32 0.0, %v2348
      %v2350 = vpop.f32.mrb[0].mxu0
      %2351 = vmatprep.mubr.bf16.mxu0 %v972
      %2352 = vmatmul.mubr.bf16.gmra.mrb[0].mxu0 %v971
      %v2353 = vpop.f32.mrb[0].mxu0
      %v2354 = vadd.f32 0.0, %v2353
      %v2355 = vpop.f32.mrb[0].mxu0
      %v2356 = vpop.f32.mrb[0].mxu0
      %v2357 = vadd.f32 0.0, %v2356
      %v2358 = vpop.f32.mrb[0].mxu0
      %2359 = vmatprep.mubr.bf16.mxu0 %v975
      %2360 = vmatmul.mubr.bf16.gmra.mrb[0].mxu0 %v974
      %v2361 = vpop.f32.mrb[0].mxu0
      %v2362 = vadd.f32 0.0, %v2361
      %v2363 = vpop.f32.mrb[0].mxu0
      %v2364 = vpop.f32.mrb[0].mxu0
      %v2365 = vadd.f32 0.0, %v2364
      %v2366 = vpop.f32.mrb[0].mxu0
      %2367 = vmatprep.mubr.bf16.mxu0 %v978
      %2368 = vmatmul.mubr.bf16.gmra.mrb[0].mxu0 %v977
      %v2369 = vpop.f32.mrb[0].mxu0
      %v2370 = vadd.f32 0.0, %v2369
      %v2371 = vpop.f32.mrb[0].mxu0
      %v2372 = vpop.f32.mrb[0].mxu0
      %v2373 = vadd.f32 0.0, %v2372
      %v2374 = vpop.f32.mrb[0].mxu0
      %2375 = vmatprep.mubr.bf16.mxu0 %v981
      %2376 = vmatmul.mubr.bf16.gmra.mrb[0].mxu0 %v980
      %v2377 = vpop.f32.mrb[0].mxu0
      %v2378 = vadd.f32 0.0, %v2377
      %v2379 = vpop.f32.mrb[0].mxu0
      %v2380 = vpop.f32.mrb[0].mxu0
      %v2381 = vadd.f32 0.0, %v2380
      %v2382 = vpop.f32.mrb[0].mxu0
      %2383 = vmatprep.mubr.bf16.mxu0 %v984
      %2384 = vmatmul.mubr.bf16.gmra.mrb[0].mxu0 %v983
      %v2385 = vpop.f32.mrb[0].mxu0
      %v2386 = vadd.f32 0.0, %v2385
      %v2387 = vpop.f32.mrb[0].mxu0
      %v2388 = vpop.f32.mrb[0].mxu0
      %v2389 = vadd.f32 0.0, %v2388
      %v2390 = vpop.f32.mrb[0].mxu0
      %2391 = vmatprep.mubr.bf16.mxu0 %v987
      %2392 = vmatmul.mubr.bf16.gmra.mrb[0].mxu0 %v986
      %v2393 = vpop.f32.mrb[0].mxu0
      %v2394 = vadd.f32 0.0, %v2393
      %v2395 = vpop.f32.mrb[0].mxu0
      %v2396 = vpop.f32.mrb[0].mxu0
      %v2397 = vadd.f32 0.0, %v2396
      %v2398 = vpop.f32.mrb[0].mxu0
      %2399 = vmatprep.mubr.bf16.mxu0 %v990
      %2400 = vmatmul.mubr.bf16.gmra.mrb[0].mxu0 %v989
      %v2401 = vpop.f32.mrb[0].mxu0
      %v2402 = vadd.f32 0.0, %v2401
      %v2403 = vpop.f32.mrb[0].mxu0
      %v2404 = vpop.f32.mrb[0].mxu0
      %v2405 = vadd.f32 0.0, %v2404
      %v2406 = vpop.f32.mrb[0].mxu0
      %2407 = vmatprep.mubr.bf16.mxu0 %v993
      %2408 = vmatmul.mubr.bf16.gmra.mrb[0].mxu0 %v992
      %v2409 = vpop.f32.mrb[0].mxu0
      %v2410 = vadd.f32 0.0, %v2409
      %v2411 = vpop.f32.mrb[0].mxu0
      %v2412 = vpop.f32.mrb[0].mxu0
      %v2413 = vadd.f32 0.0, %v2412
      %v2414 = vpop.f32.mrb[0].mxu0
      %2415 = vmatprep.mubr.bf16.mxu0 %v996
      %2416 = vmatmul.mubr.bf16.gmra.mrb[0].mxu0 %v995
      %v2417 = vpop.f32.mrb[0].mxu0
      %v2418 = vadd.f32 0.0, %v2417
      %v2419 = vpop.f32.mrb[0].mxu0
      %v2420 = vpop.f32.mrb[0].mxu0
      %v2421 = vadd.f32 0.0, %v2420
      %v2422 = vpop.f32.mrb[0].mxu0
      %2423 = vmatprep.mubr.bf16.mxu0 %v999
      %2424 = vmatmul.mubr.bf16.gmra.mrb[0].mxu0 %v998
      %v2425 = vpop.f32.mrb[0].mxu0
      %v2426 = vadd.f32 0.0, %v2425
      %v2427 = vpop.f32.mrb[0].mxu0
      %v2428 = vpop.f32.mrb[0].mxu0
      %v2429 = vadd.f32 0.0, %v2428
      %v2430 = vpop.f32.mrb[0].mxu0
      %2431 = vmatprep.mubr.bf16.mxu0 %v1079
      %2432 = vmatmul.mubr.bf16.gmra.mrb[0].mxu0 %v1078
      %v2433 = vpop.f32.mrb[0].mxu0
      %v2434 = vadd.f32 0.0, %v2433
      %v2435 = vpop.f32.mrb[0].mxu0
      %v2436 = vpop.f32.mrb[0].mxu0
      %v2437 = vadd.f32 0.0, %v2436
      %v2438 = vpop.f32.mrb[0].mxu0
      %2439 = vmatprep.mubr.bf16.mxu0 %v2092
      %2440 = vmatmul.mubr.bf16.gmra.mrb[0].mxu0 %v2091
      %v2441 = vpop.f32.mrb[0].mxu0
      %v2442 = vadd.f32 0.0, %v2441
      %v2443 = vpop.f32.mrb[0].mxu0
      %v2444 = vpop.f32.mrb[0].mxu0
      %v2445 = vadd.f32 0.0, %v2444
      %v2446 = vpop.f32.mrb[0].mxu0
      %2447 = vdwg.mxu0
      %2448 = vmatprep.subr.bf16.mxu0 0
      %2449 = vmatpush1.bf16.msra.mxu0 %v2255
      %2450 = vmatprep.subr.bf16.mxu0 0
      %2451 = vmatpush1.bf16.msra.mxu0 %v2256
      %2452 = vmatprep.subr.bf16.mxu0 0
      %2453 = vmatpush1.bf16.msra.mxu0 %v2257
      %2454 = vmatprep.subr.bf16.mxu0 0
      %2455 = vmatpush1.bf16.msra.mxu0 %v2258
      %2456 = vmatprep.subr.bf16.mxu0 0
      %2457 = vmatpush1.bf16.msra.mxu0 %v2259
      %2458 = vmatprep.subr.bf16.mxu0 0
      %2459 = vmatpush1.bf16.msra.mxu0 %v2260
      %2460 = vmatprep.subr.bf16.mxu0 0
      %2461 = vmatpush1.bf16.msra.mxu0 %v2261
      %2462 = vmatprep.subr.bf16.mxu0 0
      %2463 = vmatpush1.bf16.msra.mxu0 %v2262
      %2464 = vmatprep.subr.bf16.mxu0 0
      %2465 = vmatpush1.bf16.msra.mxu0 0
      %2466 = vmatprep.subr.bf16.mxu0 0
      %2467 = vmatpush1.bf16.msra.mxu0 0
      %2468 = vmatprep.subr.bf16.mxu0 0
      %2469 = vmatpush1.bf16.msra.mxu0 0
      %2470 = vmatprep.subr.bf16.mxu0 0
      %2471 = vmatpush1.bf16.msra.mxu0 0
      %2472 = vmatprep.subr.bf16.mxu0 0
      %2473 = vmatpush1.bf16.msra.mxu0 0
      %2474 = vmatprep.subr.bf16.mxu0 0
      %2475 = vmatpush1.bf16.msra.mxu0 0
      %2476 = vmatprep.subr.bf16.mxu0 0
      %2477 = vmatpush1.bf16.msra.mxu0 0
      %2478 = vmatprep.subr.bf16.mxu0 0
      %2479 = vmatpush1.bf16.msra.mxu0 0
      %2480 = vmatprep.mubr.bf16.mxu0 0
      %2481 = vmatmul.mubr.bf16.gmra.mrb[0].mxu0 %v961
      %v2482 = vpop.f32.mrb[0].mxu0
      %v2483 = vadd.f32 %v2322, %v2482
      %v2484 = vpop.f32.mrb[0].mxu0
      %v2485 = vpop.f32.mrb[0].mxu0
      %v2486 = vadd.f32 %v2325, %v2485
      %v2487 = vpop.f32.mrb[0].mxu0
      %2488 = vmatprep.mubr.bf16.mxu0 0
      %2489 = vmatmul.mubr.bf16.gmra.mrb[0].mxu0 %v964
      %v2490 = vpop.f32.mrb[0].mxu0
      %v2491 = vadd.f32 %v2330, %v2490
      %v2492 = vpop.f32.mrb[0].mxu0
      %v2493 = vpop.f32.mrb[0].mxu0
      %v2494 = vadd.f32 %v2333, %v2493
      %v2495 = vpop.f32.mrb[0].mxu0
      %2496 = vmatprep.mubr.bf16.mxu0 0
      %2497 = vmatmul.mubr.bf16.gmra.mrb[0].mxu0 %v967
      %v2498 = vpop.f32.mrb[0].mxu0
      %v2499 = vadd.f32 %v2338, %v2498
      %v2500 = vpop.f32.mrb[0].mxu0
      %v2501 = vpop.f32.mrb[0].mxu0
      %v2502 = vadd.f32 %v2341, %v2501
      %v2503 = vpop.f32.mrb[0].mxu0
      %2504 = vmatprep.mubr.bf16.mxu0 0
      %2505 = vmatmul.mubr.bf16.gmra.mrb[0].mxu0 %v970
      %v2506 = vpop.f32.mrb[0].mxu0
      %v2507 = vadd.f32 %v2346, %v2506
      %v2508 = vpop.f32.mrb[0].mxu0
      %v2509 = vpop.f32.mrb[0].mxu0
      %v2510 = vadd.f32 %v2349, %v2509
      %v2511 = vpop.f32.mrb[0].mxu0
      %2512 = vmatprep.mubr.bf16.mxu0 0
      %2513 = vmatmul.mubr.bf16.gmra.mrb[0].mxu0 %v973
      %v2514 = vpop.f32.mrb[0].mxu0
      %v2515 = vadd.f32 %v2354, %v2514
      %v2516 = vpop.f32.mrb[0].mxu0
      %v2517 = vpop.f32.mrb[0].mxu0
      %v2518 = vadd.f32 %v2357, %v2517
      %v2519 = vpop.f32.mrb[0].mxu0
      %2520 = vmatprep.mubr.bf16.mxu0 0
      %2521 = vmatmul.mubr.bf16.gmra.mrb[0].mxu0 %v976
      %v2522 = vpop.f32.mrb[0].mxu0
      %v2523 = vadd.f32 %v2362, %v2522
      %v2524 = vpop.f32.mrb[0].mxu0
      %v2525 = vpop.f32.mrb[0].mxu0
      %v2526 = vadd.f32 %v2365, %v2525
      %v2527 = vpop.f32.mrb[0].mxu0
      %2528 = vmatprep.mubr.bf16.mxu0 0
      %2529 = vmatmul.mubr.bf16.gmra.mrb[0].mxu0 %v979
      %v2530 = vpop.f32.mrb[0].mxu0
      %v2531 = vadd.f32 %v2370, %v2530
      %v2532 = vpop.f32.mrb[0].mxu0
      %v2533 = vpop.f32.mrb[0].mxu0
      %v2534 = vadd.f32 %v2373, %v2533
      %v2535 = vpop.f32.mrb[0].mxu0
      %2536 = vmatprep.mubr.bf16.mxu0 0
      %2537 = vmatmul.mubr.bf16.gmra.mrb[0].mxu0 %v982
      %v2538 = vpop.f32.mrb[0].mxu0
      %v2539 = vadd.f32 %v2378, %v2538
      %v2540 = vpop.f32.mrb[0].mxu0
      %v2541 = vpop.f32.mrb[0].mxu0
      %v2542 = vadd.f32 %v2381, %v2541
      %v2543 = vpop.f32.mrb[0].mxu0
      %2544 = vmatprep.mubr.bf16.mxu0 0
      %2545 = vmatmul.mubr.bf16.gmra.mrb[0].mxu0 %v985
      %v2546 = vpop.f32.mrb[0].mxu0
      %v2547 = vadd.f32 %v2386, %v2546
      %v2548 = vpop.f32.mrb[0].mxu0
      %v2549 = vpop.f32.mrb[0].mxu0
      %v2550 = vadd.f32 %v2389, %v2549
      %v2551 = vpop.f32.mrb[0].mxu0
      %2552 = vmatprep.mubr.bf16.mxu0 0
      %2553 = vmatmul.mubr.bf16.gmra.mrb[0].mxu0 %v988
      %v2554 = vpop.f32.mrb[0].mxu0
      %v2555 = vadd.f32 %v2394, %v2554
      %v2556 = vpop.f32.mrb[0].mxu0
      %v2557 = vpop.f32.mrb[0].mxu0
      %v2558 = vadd.f32 %v2397, %v2557
      %v2559 = vpop.f32.mrb[0].mxu0
      %2560 = vmatprep.mubr.bf16.mxu0 0
      %2561 = vmatmul.mubr.bf16.gmra.mrb[0].mxu0 %v991
      %v2562 = vpop.f32.mrb[0].mxu0
      %v2563 = vadd.f32 %v2402, %v2562
      %v2564 = vpop.f32.mrb[0].mxu0
      %v2565 = vpop.f32.mrb[0].mxu0
      %v2566 = vadd.f32 %v2405, %v2565
      %v2567 = vpop.f32.mrb[0].mxu0
      %2568 = vmatprep.mubr.bf16.mxu0 0
      %2569 = vmatmul.mubr.bf16.gmra.mrb[0].mxu0 %v994
      %v2570 = vpop.f32.mrb[0].mxu0
      %v2571 = vadd.f32 %v2410, %v2570
      %v2572 = vpop.f32.mrb[0].mxu0
      %v2573 = vpop.f32.mrb[0].mxu0
      %v2574 = vadd.f32 %v2413, %v2573
      %v2575 = vpop.f32.mrb[0].mxu0
      %2576 = vmatprep.mubr.bf16.mxu0 0
      %2577 = vmatmul.mubr.bf16.gmra.mrb[0].mxu0 %v997
      %v2578 = vpop.f32.mrb[0].mxu0
      %v2579 = vadd.f32 %v2418, %v2578
      %v2580 = vpop.f32.mrb[0].mxu0
      %v2581 = vpop.f32.mrb[0].mxu0
      %v2582 = vadd.f32 %v2421, %v2581
      %v2583 = vpop.f32.mrb[0].mxu0
      %2584 = vmatprep.mubr.bf16.mxu0 0
      %2585 = vmatmul.mubr.bf16.gmra.mrb[0].mxu0 %v1000
      %v2586 = vpop.f32.mrb[0].mxu0
      %v2587 = vadd.f32 %v2426, %v2586
      %v2588 = vpop.f32.mrb[0].mxu0
      %v2589 = vpop.f32.mrb[0].mxu0
      %v2590 = vadd.f32 %v2429, %v2589
      %v2591 = vpop.f32.mrb[0].mxu0
      %2592 = vmatprep.mubr.bf16.mxu0 0
      %2593 = vmatmul.mubr.bf16.gmra.mrb[0].mxu0 %v1080
      %v2594 = vpop.f32.mrb[0].mxu0
      %v2595 = vadd.f32 %v2434, %v2594
      %v2596 = vpop.f32.mrb[0].mxu0
      %v2597 = vpop.f32.mrb[0].mxu0
      %v2598 = vadd.f32 %v2437, %v2597
      %v2599 = vpop.f32.mrb[0].mxu0
      %2600 = vmatprep.mubr.bf16.mxu0 0
      %2601 = vmatmul.mubr.bf16.gmra.mrb[0].mxu0 %v2093
      %v2602 = vpop.f32.mrb[0].mxu0
      %v2603 = vadd.f32 %v2442, %v2602
      %v2604 = vpop.f32.mrb[0].mxu0
      %v2605 = vpop.f32.mrb[0].mxu0
      %v2606 = vadd.f32 %v2445, %v2605
      %v2607 = vpop.f32.mrb[0].mxu0
      %2608 = vdwg.mxu0
      %v2609 = vadd.f32 %v1936, %v2483
      %v2610 = vadd.f32 %v1939, %v2486
      %v2611 = vadd.f32 %v1944, %v2491
      %v2612 = vadd.f32 %v1947, %v2494
      %v2613 = vadd.f32 %v1952, %v2499
      %v2614 = vadd.f32 %v1955, %v2502
      %v2615 = vadd.f32 %v1960, %v2507
      %v2616 = vadd.f32 %v1963, %v2510
      %v2617 = vadd.f32 %v1968, %v2515
      %v2618 = vadd.f32 %v1971, %v2518
      %v2619 = vadd.f32 %v1976, %v2523
      %v2620 = vadd.f32 %v1979, %v2526
      %v2621 = vadd.f32 %v1984, %v2531
      %v2622 = vadd.f32 %v1987, %v2534
      %v2623 = vadd.f32 %v1992, %v2539
      %v2624 = vadd.f32 %v1995, %v2542
      %v2625 = vadd.f32 %v2000, %v2547
      %v2626 = vadd.f32 %v2003, %v2550
      %v2627 = vadd.f32 %v2008, %v2555
      %v2628 = vadd.f32 %v2011, %v2558
      %v2629 = vadd.f32 %v2016, %v2563
      %v2630 = vadd.f32 %v2019, %v2566
      %v2631 = vadd.f32 %v2024, %v2571
      %v2632 = vadd.f32 %v2027, %v2574
      %v2633 = vadd.f32 %v2032, %v2579
      %v2634 = vadd.f32 %v2035, %v2582
      %v2635 = vadd.f32 %v2040, %v2587
      %v2636 = vadd.f32 %v2043, %v2590
      %v2637 = vadd.f32 %v2048, %v2595
      %v2638 = vadd.f32 %v2051, %v2598
      %v2639 = vadd.f32 %v2056, %v2603
      %v2640 = vadd.f32 %v2059, %v2606
      %v2641 = vld [vmem:[%s4] sm:$0x1]
      %v2643 = vlaneseq
      %v2644 = vshrl.u32 %v2643, 7
      %v2645 = vsub.s32 0, %v2644
      %v2646 = vrot.slane %v2641, %v2645
      %v2648 = vadd.f32 %v2609, %v2646
      %v2649 = vadd.f32 %v2610, %v2646
      %v2650 = vadd.f32 %v2611, %v2646
      %v2651 = vadd.f32 %v2612, %v2646
      %v2652 = vadd.f32 %v2613, %v2646
      %v2653 = vadd.f32 %v2614, %v2646
      %v2654 = vadd.f32 %v2615, %v2646
      %v2655 = vadd.f32 %v2616, %v2646
      %v2656 = vadd.f32 %v2617, %v2646
      %v2657 = vadd.f32 %v2618, %v2646
      %v2658 = vadd.f32 %v2619, %v2646
      %v2659 = vadd.f32 %v2620, %v2646
      %v2660 = vadd.f32 %v2621, %v2646
      %v2661 = vadd.f32 %v2622, %v2646
      %v2662 = vadd.f32 %v2623, %v2646
      %v2663 = vadd.f32 %v2624, %v2646
      %v2664 = vadd.f32 %v2625, %v2646
      %v2665 = vadd.f32 %v2626, %v2646
      %v2666 = vadd.f32 %v2627, %v2646
      %v2667 = vadd.f32 %v2628, %v2646
      %v2668 = vadd.f32 %v2629, %v2646
      %v2669 = vadd.f32 %v2630, %v2646
      %v2670 = vadd.f32 %v2631, %v2646
      %v2671 = vadd.f32 %v2632, %v2646
      %v2672 = vadd.f32 %v2633, %v2646
      %v2673 = vadd.f32 %v2634, %v2646
      %v2674 = vadd.f32 %v2635, %v2646
      %v2675 = vadd.f32 %v2636, %v2646
      %v2676 = vadd.f32 %v2637, %v2646
      %v2677 = vadd.f32 %v2638, %v2646
      %v2678 = vadd.f32 %v2639, %v2646
      %v2679 = vadd.f32 %v2640, %v2646
      %2680 = vst [vmem:[%s430] sm:$0xff] %v2648
      %2681 = vst [vmem:[%s430 + $0x8] sm:$0xff] %v2649
      %2682 = vst [vmem:[%s430 + $0x10] sm:$0xff] %v2650
      %2683 = vst [vmem:[%s430 + $0x18] sm:$0xff] %v2651
      %2684 = vst [vmem:[%s430 + $0x20] sm:$0xff] %v2652
      %2685 = vst [vmem:[%s430 + $0x28] sm:$0xff] %v2653
      %2686 = vst [vmem:[%s430 + $0x30] sm:$0xff] %v2654
      %2687 = vst [vmem:[%s430 + $0x38] sm:$0xff] %v2655
      %2688 = vst [vmem:[%s430 + $0x40] sm:$0xff] %v2656
      %2689 = vst [vmem:[%s430 + $0x48] sm:$0xff] %v2657
      %2690 = vst [vmem:[%s430 + $0x50] sm:$0xff] %v2658
      %2691 = vst [vmem:[%s430 + $0x58] sm:$0xff] %v2659
      %2692 = vst [vmem:[%s430 + $0x60] sm:$0xff] %v2660
      %2693 = vst [vmem:[%s430 + $0x68] sm:$0xff] %v2661
      %2694 = vst [vmem:[%s430 + $0x70] sm:$0xff] %v2662
      %2695 = vst [vmem:[%s430 + $0x78] sm:$0xff] %v2663
      %2696 = vst [vmem:[%s430 + $0x80] sm:$0xff] %v2664
      %2697 = vst [vmem:[%s430 + $0x88] sm:$0xff] %v2665
      %2698 = vst [vmem:[%s430 + $0x90] sm:$0xff] %v2666
      %2699 = vst [vmem:[%s430 + $0x98] sm:$0xff] %v2667
      %2700 = vst [vmem:[%s430 + $0xa0] sm:$0xff] %v2668
      %2701 = vst [vmem:[%s430 + $0xa8] sm:$0xff] %v2669
      %2702 = vst [vmem:[%s430 + $0xb0] sm:$0xff] %v2670
      %2703 = vst [vmem:[%s430 + $0xb8] sm:$0xff] %v2671
      %2704 = vst [vmem:[%s430 + $0xc0] sm:$0xff] %v2672
      %2705 = vst [vmem:[%s430 + $0xc8] sm:$0xff] %v2673
      %2706 = vst [vmem:[%s430 + $0xd0] sm:$0xff] %v2674
      %2707 = vst [vmem:[%s430 + $0xd8] sm:$0xff] %v2675
      %2708 = vst [vmem:[%s430 + $0xe0] sm:$0xff] %v2676
      %2709 = vst [vmem:[%s430 + $0xe8] sm:$0xff] %v2677
      %2710 = vst [vmem:[%s430 + $0xf0] sm:$0xff] %v2678
      %2711 = vst [vmem:[%s430 + $0xf8] sm:$0xff] %v2679
      %v2712 = vadd.f32 %v2648, %v2649
      %v2713 = vadd.f32 %v2712, %v2650
      %v2714 = vadd.f32 %v2713, %v2651
      %v2715 = vadd.f32 %v2714, %v2652
      %v2716 = vadd.f32 %v2715, %v2653
      %v2717 = vadd.f32 %v2716, %v2654
      %v2718 = vadd.f32 %v2717, %v2655
      %v2719 = vadd.f32 %v2718, %v2656
      %v2720 = vadd.f32 %v2719, %v2657
      %v2721 = vadd.f32 %v2720, %v2658
      %v2722 = vadd.f32 %v2721, %v2659
      %v2723 = vadd.f32 %v2722, %v2660
      %v2724 = vadd.f32 %v2723, %v2661
      %v2725 = vadd.f32 %v2724, %v2662
      %v2726 = vadd.f32 %v2725, %v2663
      %v2727 = vadd.f32 %v2726, %v2664
      %v2728 = vadd.f32 %v2727, %v2665
      %v2729 = vadd.f32 %v2728, %v2666
      %v2730 = vadd.f32 %v2729, %v2667
      %v2731 = vadd.f32 %v2730, %v2668
      %v2732 = vadd.f32 %v2731, %v2669
      %v2733 = vadd.f32 %v2732, %v2670
      %v2734 = vadd.f32 %v2733, %v2671
      %v2735 = vadd.f32 %v2734, %v2672
      %v2736 = vadd.f32 %v2735, %v2673
      %v2737 = vadd.f32 %v2736, %v2674
      %v2738 = vadd.f32 %v2737, %v2675
      %v2739 = vadd.f32 %v2738, %v2676
      %v2740 = vadd.f32 %v2739, %v2677
      %v2741 = vadd.f32 %v2740, %v2678
      %v2742 = vadd.f32 %v2741, %v2679
      %v2743 = vrot.slane %v2742, 4
      %v2744 = vadd.f32 %v2742, %v2743
      %v2745 = vrot.slane %v2744, 2
      %v2746 = vadd.f32 %v2744, %v2745
      %v2747 = vrot.slane %v2746, 1
      %v2748 = vadd.f32 %v2746, %v2747
      %v2749 = vmul.f32 %v2648, %v2648
      %v2750 = vmul.f32 %v2649, %v2649
      %v2751 = vmul.f32 %v2650, %v2650
      %v2752 = vmul.f32 %v2651, %v2651
      %v2753 = vmul.f32 %v2652, %v2652
      %v2754 = vmul.f32 %v2653, %v2653
      %v2755 = vmul.f32 %v2654, %v2654
      %v2756 = vmul.f32 %v2655, %v2655
      %v2757 = vmul.f32 %v2656, %v2656
      %v2758 = vmul.f32 %v2657, %v2657
      %v2759 = vmul.f32 %v2658, %v2658
      %v2760 = vmul.f32 %v2659, %v2659
      %v2761 = vmul.f32 %v2660, %v2660
      %v2762 = vmul.f32 %v2661, %v2661
      %v2763 = vmul.f32 %v2662, %v2662
      %v2764 = vmul.f32 %v2663, %v2663
      %v2765 = vmul.f32 %v2664, %v2664
      %v2766 = vmul.f32 %v2665, %v2665
      %v2767 = vmul.f32 %v2666, %v2666
      %v2768 = vmul.f32 %v2667, %v2667
      %v2769 = vmul.f32 %v2668, %v2668
      %v2770 = vmul.f32 %v2669, %v2669
      %v2771 = vmul.f32 %v2670, %v2670
      %v2772 = vmul.f32 %v2671, %v2671
      %v2773 = vmul.f32 %v2672, %v2672
      %v2774 = vmul.f32 %v2673, %v2673
      %v2775 = vmul.f32 %v2674, %v2674
      %v2776 = vmul.f32 %v2675, %v2675
      %v2777 = vmul.f32 %v2676, %v2676
      %v2778 = vmul.f32 %v2677, %v2677
      %v2779 = vmul.f32 %v2678, %v2678
      %v2780 = vmul.f32 %v2679, %v2679
      %v2781 = vadd.f32 %v2749, %v2750
      %v2782 = vadd.f32 %v2781, %v2751
      %v2783 = vadd.f32 %v2782, %v2752
      %v2784 = vadd.f32 %v2783, %v2753
      %v2785 = vadd.f32 %v2784, %v2754
      %v2786 = vadd.f32 %v2785, %v2755
      %v2787 = vadd.f32 %v2786, %v2756
      %v2788 = vadd.f32 %v2787, %v2757
      %v2789 = vadd.f32 %v2788, %v2758
      %v2790 = vadd.f32 %v2789, %v2759
      %v2791 = vadd.f32 %v2790, %v2760
      %v2792 = vadd.f32 %v2791, %v2761
      %v2793 = vadd.f32 %v2792, %v2762
      %v2794 = vadd.f32 %v2793, %v2763
      %v2795 = vadd.f32 %v2794, %v2764
      %v2796 = vadd.f32 %v2795, %v2765
      %v2797 = vadd.f32 %v2796, %v2766
      %v2798 = vadd.f32 %v2797, %v2767
      %v2799 = vadd.f32 %v2798, %v2768
      %v2800 = vadd.f32 %v2799, %v2769
      %v2801 = vadd.f32 %v2800, %v2770
      %v2802 = vadd.f32 %v2801, %v2771
      %v2803 = vadd.f32 %v2802, %v2772
      %v2804 = vadd.f32 %v2803, %v2773
      %v2805 = vadd.f32 %v2804, %v2774
      %v2806 = vadd.f32 %v2805, %v2775
      %v2807 = vadd.f32 %v2806, %v2776
      %v2808 = vadd.f32 %v2807, %v2777
      %v2809 = vadd.f32 %v2808, %v2778
      %v2810 = vadd.f32 %v2809, %v2779
      %v2811 = vadd.f32 %v2810, %v2780
      %v2812 = vrot.slane %v2811, 4
      %v2813 = vadd.f32 %v2811, %v2812
      %v2814 = vrot.slane %v2813, 2
      %v2815 = vadd.f32 %v2813, %v2814
      %v2816 = vrot.slane %v2815, 1
      %v2817 = vadd.f32 %v2815, %v2816
      %v2818 = vsel %vm631, %v2748, %v2817
      %vm2819 = vcmask 1041408
      %v2820 = vsel %vm2819, %v2818, 0.0
      %2821 = vst [vmem:[%s438] sm:$0xff] %v2820
      %s2822 = smul.u32 16, %s23
      %p2823 = scmp.lt.s32.totalorder %s22, 1
      %s2824 = scalar_select %p2823, %s22, 1
      %p2825 = scmp.lt.s32.totalorder %s2822, 15
      %s2826 = scalar_select %p2825, %s2822, 15
      %s2827 = smul.addr %s2826, 2
      %s2828 = smul.addr %s2824, 32
      %s2829 = sadd.s32 %s2827, %s2828
      %s2830 = smul.addr %s2829, 8
      %s2831 = scalar_lea.vmem %s5, %s2830
      %p2832 = scmp.lt.s32.totalorder %s22, 1
      %s2833 = scalar_select %p2832, %s22, 1
      %p2834 = scmp.lt.s32.totalorder %s23, 0
      %s2835 = scalar_select %p2834, %s23, 0
      %s2836 = sadd.s32 %s2835, %s2833
      %s2837 = smul.addr %s2836, 8
      %s2838 = scalar_lea.vmem %s6, %s2837
      // Predicated region
      $region41: #{res_conv_block.3} parent=39 // pred_check
        %p2839 = pneg %p192
      $region42: #{res_conv_block.3} parent=39 // pred_check_branch
        %2841 = sbr.rel (%p2839) target = $region44
      $region43: #{res_conv_block.3} parent=39 // pred_region
        %s2842 = smul.u32 16, %s23
      $region44: #{res_conv_block.3} parent=39 // pred_fallthru
        _
      // Predicated region
      $region45: #{res_conv_block.3} parent=39 // pred_check
        %p2843 = pneg %p220
      $region46: #{res_conv_block.3} parent=39 // pred_check_branch
        %2845 = sbr.rel (%p2843) target = $region48
      $region47: #{res_conv_block.3} parent=39 // pred_region
        _
      $region48: #{res_conv_block.3} parent=39 // pred_fallthru
        _
    $region40: #{res_conv_block.3} parent=5 // pred_fallthru
      _
    %p2846 = scmp.le.s32.totalorder 2, %s13
    // Predicated region
    $region49: #{res_conv_block.3} parent=5 // pred_check
      %p2847 = pneg %p2846
    $region50: #{res_conv_block.3} parent=5 // pred_check_branch
      %2849 = sbr.rel (%p2847) target = $region52
    $region51: #{res_conv_block.3} parent=5 // pred_region
      %s2850 = ssub.s32 %s13, 2
      // Predicated region
      $region53: #{res_conv_block.3} parent=51 // pred_check
        %p2851 = pneg %p198
      $region54: #{res_conv_block.3} parent=51 // pred_check_branch
        %2853 = sbr.rel (%p2851) target = $region56
      $region55: #{res_conv_block.3} parent=51 // pred_region
        %s2854 = smul.u32 16, %s25
        %p2855 = scmp.lt.s32.totalorder %s24, 1
        %s2856 = scalar_select %p2855, %s24, 1
        %p2857 = scmp.lt.s32.totalorder %s2854, 15
        %s2858 = scalar_select %p2857, %s2854, 15
        %s2859 = smul.addr %s2858, 2
        %s2860 = smul.addr %s2856, 32
        %s2861 = sadd.s32 %s2859, %s2860
        %s2862 = smul.addr %s2861, 8
        %s2863 = scalar_lea.vmem %s5, %s2862
      $region56: #{res_conv_block.3} parent=51 // pred_fallthru
        _
      // Predicated region
      $region57: #{res_conv_block.3} parent=51 // pred_check
        %p2864 = pneg %p226
      $region58: #{res_conv_block.3} parent=51 // pred_check_branch
        %2866 = sbr.rel (%p2864) target = $region60
      $region59: #{res_conv_block.3} parent=51 // pred_region
        %p2867 = scmp.lt.s32.totalorder %s24, 1
        %s2868 = scalar_select %p2867, %s24, 1
        %p2869 = scmp.lt.s32.totalorder %s25, 0
        %s2870 = scalar_select %p2869, %s25, 0
        %s2871 = sadd.s32 %s2870, %s2868
        %s2872 = smul.addr %s2871, 8
        %s2873 = scalar_lea.vmem %s6, %s2872
      $region60: #{res_conv_block.3} parent=51 // pred_fallthru
        _
    $region52: #{res_conv_block.3} parent=5 // pred_fallthru
      _
  $region6: #{res_conv_block.3} parent=0 // loop_footer
    %s17 = sadd.s32 1, %s13
  $region7: #{res_conv_block.3} parent=0 // loop_footer_branch
    %12 = sbr.rel target = $region3
  $region8: #{res_conv_block.3} parent=0 // loop_exit
    _

// kernel: res_conv_block.4
$region0: #{res_conv_block.4}
  #allocation0 [shape = 'u32[]', space=smem, size = 0x4, offset = 0x4, fixed_abs, tag = 'smem constant byte address 0x4 - core index']
  #allocation1 [shape = 'u32[144,128]{1,0:T(1,128)}', space=vmem, size = 0x12000, scoped, tag = 'internal scratch']
  %s0 = inlined_call_operand.vmem [shape: f32[2,16,16,128], index: 0, kind: input, shape index: {}, may-alias: {0,1,2}]
  %s1 = inlined_call_operand.vmem [shape: f32[2,16,16,128], index: 1, kind: input, shape index: {}, may-alias: {0,1,2}]
  %s2 = inlined_call_operand.vmem [shape: f32[2,16,16,128], index: 2, kind: input, shape index: {}, may-alias: {0,1,2}]
  %s3 = inlined_call_operand.vmem [shape: bf16[3,384,128], index: 3, kind: input, shape index: {}]
  %s4 = inlined_call_operand.vmem [shape: f32[1,128], index: 4, kind: input, shape index: {}]
  %s5 = inlined_call_operand.vmem [shape: f32[1,128], index: 5, kind: input, shape index: {}]
  %s6 = inlined_call_operand.vmem [shape: f32[1,128], index: 6, kind: input, shape index: {}]
  %s7 = inlined_call_operand.vmem [shape: f32[2,16,16,128], index: 7, kind: output, shape index: {0}]
  %s8 = inlined_call_operand.vmem [shape: f32[2,1,8,128], index: 8, kind: output, shape index: {1}]
  %9 = xla_tuple %s7, %s8
  %s10 = sld [smem:[#allocation0]]
  $region69: #{res_conv_block.4} parent=0
    _
  %s12 = ssub.s32 1, %s10
  %s13 = scalar_select 0, %s12, %s10
  loop: start=0, step=1, limit=4
  $region2: #{res_conv_block.4} parent=0 // loop_pre_header
    _
  $region3: #{res_conv_block.4} parent=0 // loop_header
    %s15 = sphi 0, %s19
    %p16 = scmp.ge.s32.totalorder %s15, 4
    %s22 = sphi 0, %s34
    %s23 = sphi 0, %s30
    %s24 = sphi 0, %s22
    %s25 = sphi 0, %s23
    %s26 = sphi 0, %s24
    %s27 = sphi 0, %s25
    %s39 = sphi 0, %s41
    %s42 = sphi 0, %s39
    %s43 = sphi 0, %s42
    %s59 = sphi 0, %s43
    %s75 = sphi 0, %s77
    %s78 = sphi 0, %s75
    %s79 = sphi 0, %s78
    %s95 = sphi 0, %s79
    %s111 = sphi 0, %s113
    %s114 = sphi 0, %s111
    %s115 = sphi 0, %s114
    %s131 = sphi 0, %s115
    %s135 = sphi 0, %s135
    %s137 = sphi 0, %s135
    %s138 = sphi 0, %s137
    %s152 = sphi 0, %s138
    %s156 = sphi 0, %s156
    %s158 = sphi 0, %s156
    %s159 = sphi 0, %s158
    %s173 = sphi 0, %s159
    %s177 = sphi 0, %s177
    %s179 = sphi 0, %s177
    %s180 = sphi 0, %s179
    %s194 = sphi 0, %s180
    %s198 = sphi 0, %s198
    %s200 = sphi 0, %s198
    %s201 = sphi 0, %s200
    %s215 = sphi 0, %s201
    %s223 = sphi 0, %s225
    %s226 = sphi 0, %s223
    %s227 = sphi 0, %s226
    %s243 = sphi 0, %s227
    %s251 = sphi 0, %s253
    %s254 = sphi 0, %s251
    %s255 = sphi 0, %s254
    %s271 = sphi 0, %s255
  $region4: #{res_conv_block.4} parent=0 // loop_header_branch
    %18 = sbr.rel (%p16) target = $region8
  $region5: #{res_conv_block.4} parent=0 // loop_body
    %s20 = ssub.s32 %s15, 1
    %s21 = ssub.s32 %s15, 2
    %s28 = sadd.s32 1, %s23
    %p29 = scmp.ge.s32.totalorder %s28, 1
    %s30 = scalar_select %p29, 0, %s28
    %s31 = sadd.s32 1, %s22
    %s32 = scalar_select %p29, %s31, %s22
    %p33 = scmp.ge.s32.totalorder %s32, 2
    %s34 = scalar_select %p33, 0, %s32
    %s35 = ssub.s32 %s22, %s34
    %s36 = ssub.s32 %s23, %s30
    %s37 = sor.u32 %s35, %s36
    %p38 = scmp.eq.s32.totalorder %s37, 0
    %s40 = sadd.s32 %s39, 1
    %s41 = scalar_select %p38, %s39, %s40
    %p44 = pneg %p38
    %p45 = scmp.eq.s32.totalorder %s15, 1
    %p46 = por %p44, %p45
    %p47 = scmp.ne.s32.totalorder %s39, %s42
    %p48 = scmp.eq.s32.totalorder %s15, 0
    %p49 = por %p47, %p48
    %p50 = scmp.ne.s32.totalorder %s39, %s42
    %p51 = scmp.eq.s32.totalorder %s20, 1
    %p52 = por %p50, %p51
    %p53 = scmp.ne.s32.totalorder %s42, %s43
    %p54 = scmp.eq.s32.totalorder %s20, 0
    %p55 = por %p53, %p54
    %p56 = scmp.ne.s32.totalorder %s42, %s43
    %p57 = scmp.eq.s32.totalorder %s21, 1
    %p58 = por %p56, %p57
    %p60 = scmp.ne.s32.totalorder %s43, %s59
    %p61 = scmp.eq.s32.totalorder %s21, 0
    %p62 = por %p60, %p61
    %s63 = smul.u32 %s23, 16
    %s64 = ssub.s32 %s63, 1
    %p65 = scmp.gt.s32.totalorder %s64, 0
    %s66 = scalar_select %p65, %s64, 0
    %s67 = smul.u32 %s30, 16
    %s68 = ssub.s32 %s67, 1
    %p69 = scmp.gt.s32.totalorder %s68, 0
    %s70 = scalar_select %p69, %s68, 0
    %s71 = ssub.s32 %s22, %s34
    %s72 = ssub.s32 %s66, %s70
    %s73 = sor.u32 %s71, %s72
    %p74 = scmp.eq.s32.totalorder %s73, 0
    %s76 = sadd.s32 %s75, 1
    %s77 = scalar_select %p74, %s75, %s76
    %p80 = pneg %p74
    %p81 = scmp.eq.s32.totalorder %s15, 1
    %p82 = por %p80, %p81
    %p83 = scmp.ne.s32.totalorder %s75, %s78
    %p84 = scmp.eq.s32.totalorder %s15, 0
    %p85 = por %p83, %p84
    %p86 = scmp.ne.s32.totalorder %s75, %s78
    %p87 = scmp.eq.s32.totalorder %s20, 1
    %p88 = por %p86, %p87
    %p89 = scmp.ne.s32.totalorder %s78, %s79
    %p90 = scmp.eq.s32.totalorder %s20, 0
    %p91 = por %p89, %p90
    %p92 = scmp.ne.s32.totalorder %s78, %s79
    %p93 = scmp.eq.s32.totalorder %s21, 1
    %p94 = por %p92, %p93
    %p96 = scmp.ne.s32.totalorder %s79, %s95
    %p97 = scmp.eq.s32.totalorder %s21, 0
    %p98 = por %p96, %p97
    %s99 = smul.u32 %s23, 16
    %s100 = sadd.s32 %s99, 16
    %p101 = scmp.lt.s32.totalorder %s100, 15
    %s102 = scalar_select %p101, %s100, 15
    %s103 = smul.u32 %s30, 16
    %s104 = sadd.s32 %s103, 16
    %p105 = scmp.lt.s32.totalorder %s104, 15
    %s106 = scalar_select %p105, %s104, 15
    %s107 = ssub.s32 %s22, %s34
    %s108 = ssub.s32 %s102, %s106
    %s109 = sor.u32 %s107, %s108
    %p110 = scmp.eq.s32.totalorder %s109, 0
    %s112 = sadd.s32 %s111, 1
    %s113 = scalar_select %p110, %s111, %s112
    %p116 = pneg %p110
    %p117 = scmp.eq.s32.totalorder %s15, 1
    %p118 = por %p116, %p117
    %p119 = scmp.ne.s32.totalorder %s111, %s114
    %p120 = scmp.eq.s32.totalorder %s15, 0
    %p121 = por %p119, %p120
    %p122 = scmp.ne.s32.totalorder %s111, %s114
    %p123 = scmp.eq.s32.totalorder %s20, 1
    %p124 = por %p122, %p123
    %p125 = scmp.ne.s32.totalorder %s114, %s115
    %p126 = scmp.eq.s32.totalorder %s20, 0
    %p127 = por %p125, %p126
    %p128 = scmp.ne.s32.totalorder %s114, %s115
    %p129 = scmp.eq.s32.totalorder %s21, 1
    %p130 = por %p128, %p129
    %p132 = scmp.ne.s32.totalorder %s115, %s131
    %p133 = scmp.eq.s32.totalorder %s21, 0
    %p134 = por %p132, %p133
    %s136 = sadd.s32 %s135, 1
    %p139 = scmp.eq.s32.totalorder %s15, 1
    %p140 = scmp.ne.s32.totalorder %s135, %s137
    %p141 = scmp.eq.s32.totalorder %s15, 0
    %p142 = por %p140, %p141
    %p143 = scmp.ne.s32.totalorder %s135, %s137
    %p144 = scmp.eq.s32.totalorder %s20, 1
    %p145 = por %p143, %p144
    %p146 = scmp.ne.s32.totalorder %s137, %s138
    %p147 = scmp.eq.s32.totalorder %s20, 0
    %p148 = por %p146, %p147
    %p149 = scmp.ne.s32.totalorder %s137, %s138
    %p150 = scmp.eq.s32.totalorder %s21, 1
    %p151 = por %p149, %p150
    %p153 = scmp.ne.s32.totalorder %s138, %s152
    %p154 = scmp.eq.s32.totalorder %s21, 0
    %p155 = por %p153, %p154
    %s157 = sadd.s32 %s156, 1
    %p160 = scmp.eq.s32.totalorder %s15, 1
    %p161 = scmp.ne.s32.totalorder %s156, %s158
    %p162 = scmp.eq.s32.totalorder %s15, 0
    %p163 = por %p161, %p162
    %p164 = scmp.ne.s32.totalorder %s156, %s158
    %p165 = scmp.eq.s32.totalorder %s20, 1
    %p166 = por %p164, %p165
    %p167 = scmp.ne.s32.totalorder %s158, %s159
    %p168 = scmp.eq.s32.totalorder %s20, 0
    %p169 = por %p167, %p168
    %p170 = scmp.ne.s32.totalorder %s158, %s159
    %p171 = scmp.eq.s32.totalorder %s21, 1
    %p172 = por %p170, %p171
    %p174 = scmp.ne.s32.totalorder %s159, %s173
    %p175 = scmp.eq.s32.totalorder %s21, 0
    %p176 = por %p174, %p175
    %s178 = sadd.s32 %s177, 1
    %p181 = scmp.eq.s32.totalorder %s15, 1
    %p182 = scmp.ne.s32.totalorder %s177, %s179
    %p183 = scmp.eq.s32.totalorder %s15, 0
    %p184 = por %p182, %p183
    %p185 = scmp.ne.s32.totalorder %s177, %s179
    %p186 = scmp.eq.s32.totalorder %s20, 1
    %p187 = por %p185, %p186
    %p188 = scmp.ne.s32.totalorder %s179, %s180
    %p189 = scmp.eq.s32.totalorder %s20, 0
    %p190 = por %p188, %p189
    %p191 = scmp.ne.s32.totalorder %s179, %s180
    %p192 = scmp.eq.s32.totalorder %s21, 1
    %p193 = por %p191, %p192
    %p195 = scmp.ne.s32.totalorder %s180, %s194
    %p196 = scmp.eq.s32.totalorder %s21, 0
    %p197 = por %p195, %p196
    %s199 = sadd.s32 %s198, 1
    %p202 = scmp.eq.s32.totalorder %s15, 1
    %p203 = scmp.ne.s32.totalorder %s198, %s200
    %p204 = scmp.eq.s32.totalorder %s15, 0
    %p205 = por %p203, %p204
    %p206 = scmp.ne.s32.totalorder %s198, %s200
    %p207 = scmp.eq.s32.totalorder %s20, 1
    %p208 = por %p206, %p207
    %p209 = scmp.ne.s32.totalorder %s200, %s201
    %p210 = scmp.eq.s32.totalorder %s20, 0
    %p211 = por %p209, %p210
    %p212 = scmp.ne.s32.totalorder %s200, %s201
    %p213 = scmp.eq.s32.totalorder %s21, 1
    %p214 = por %p212, %p213
    %p216 = scmp.ne.s32.totalorder %s201, %s215
    %p217 = scmp.eq.s32.totalorder %s21, 0
    %p218 = por %p216, %p217
    %s219 = ssub.s32 %s22, %s34
    %s220 = ssub.s32 %s23, %s30
    %s221 = sor.u32 %s219, %s220
    %p222 = scmp.eq.s32.totalorder %s221, 0
    %s224 = sadd.s32 %s223, 1
    %s225 = scalar_select %p222, %s223, %s224
    %p228 = pneg %p222
    %p229 = scmp.eq.s32.totalorder %s15, 1
    %p230 = por %p228, %p229
    %p231 = scmp.ne.s32.totalorder %s223, %s226
    %p232 = scmp.eq.s32.totalorder %s15, 0
    %p233 = por %p231, %p232
    %p234 = scmp.ne.s32.totalorder %s223, %s226
    %p235 = scmp.eq.s32.totalorder %s20, 1
    %p236 = por %p234, %p235
    %p237 = scmp.ne.s32.totalorder %s226, %s227
    %p238 = scmp.eq.s32.totalorder %s20, 0
    %p239 = por %p237, %p238
    %p240 = scmp.ne.s32.totalorder %s226, %s227
    %p241 = scmp.eq.s32.totalorder %s21, 1
    %p242 = por %p240, %p241
    %p244 = scmp.ne.s32.totalorder %s227, %s243
    %p245 = scmp.eq.s32.totalorder %s21, 0
    %p246 = por %p244, %p245
    %s247 = ssub.s32 %s22, %s34
    %s248 = ssub.s32 %s23, %s30
    %s249 = sor.u32 %s247, %s248
    %p250 = scmp.eq.s32.totalorder %s249, 0
    %s252 = sadd.s32 %s251, 1
    %s253 = scalar_select %p250, %s251, %s252
    %p256 = pneg %p250
    %p257 = scmp.eq.s32.totalorder %s15, 1
    %p258 = por %p256, %p257
    %p259 = scmp.ne.s32.totalorder %s251, %s254
    %p260 = scmp.eq.s32.totalorder %s15, 0
    %p261 = por %p259, %p260
    %p262 = scmp.ne.s32.totalorder %s251, %s254
    %p263 = scmp.eq.s32.totalorder %s20, 1
    %p264 = por %p262, %p263
    %p265 = scmp.ne.s32.totalorder %s254, %s255
    %p266 = scmp.eq.s32.totalorder %s20, 0
    %p267 = por %p265, %p266
    %p268 = scmp.ne.s32.totalorder %s254, %s255
    %p269 = scmp.eq.s32.totalorder %s21, 1
    %p270 = por %p268, %p269
    %p272 = scmp.ne.s32.totalorder %s255, %s271
    %p273 = scmp.eq.s32.totalorder %s21, 0
    %p274 = por %p272, %p273
    %p275 = scmp.le.s32.totalorder 1, %s15
    %p276 = scmp.lt.s32.totalorder %s15, 3
    %p277 = pnand %p275, %p276
    %p278 = pneg %p277
    // Predicated region
    $region9: #{res_conv_block.4} parent=5 // pred_check
      _
    $region10: #{res_conv_block.4} parent=5 // pred_check_branch
      %280 = sbr.rel (%p277) target = $region12
    $region11: #{res_conv_block.4} parent=5 // pred_region
      %s281 = ssub.s32 %s15, 1
      // Predicated region
      $region13: #{res_conv_block.4} parent=11 // pred_check
        %p282 = pneg %p148
      $region14: #{res_conv_block.4} parent=11 // pred_check_branch
        %284 = sbr.rel (%p282) target = $region16
      $region15: #{res_conv_block.4} parent=11 // pred_region
        _
      $region16: #{res_conv_block.4} parent=11 // pred_fallthru
        _
      // Predicated region
      $region17: #{res_conv_block.4} parent=11 // pred_check
        %p285 = pneg %p169
      $region18: #{res_conv_block.4} parent=11 // pred_check_branch
        %287 = sbr.rel (%p285) target = $region20
      $region19: #{res_conv_block.4} parent=11 // pred_region
        _
      $region20: #{res_conv_block.4} parent=11 // pred_fallthru
        _
      // Predicated region
      $region21: #{res_conv_block.4} parent=11 // pred_check
        %p288 = pneg %p190
      $region22: #{res_conv_block.4} parent=11 // pred_check_branch
        %290 = sbr.rel (%p288) target = $region24
      $region23: #{res_conv_block.4} parent=11 // pred_region
        _
      $region24: #{res_conv_block.4} parent=11 // pred_fallthru
        _
      // Predicated region
      $region25: #{res_conv_block.4} parent=11 // pred_check
        %p291 = pneg %p211
      $region26: #{res_conv_block.4} parent=11 // pred_check_branch
        %293 = sbr.rel (%p291) target = $region28
      $region27: #{res_conv_block.4} parent=11 // pred_region
        _
      $region28: #{res_conv_block.4} parent=11 // pred_fallthru
        _
    $region12: #{res_conv_block.4} parent=5 // pred_fallthru
      _
    %p294 = scmp.lt.s32.totalorder %s15, 2
    // Predicated region
    $region29: #{res_conv_block.4} parent=5 // pred_check
      %p295 = pneg %p294
    $region30: #{res_conv_block.4} parent=5 // pred_check_branch
      %297 = sbr.rel (%p295) target = $region32
    $region31: #{res_conv_block.4} parent=5 // pred_region
      // Predicated region
      $region33: #{res_conv_block.4} parent=31 // pred_check
        %p298 = pneg %p49
      $region34: #{res_conv_block.4} parent=31 // pred_check_branch
        %300 = sbr.rel (%p298) target = $region36
      $region35: #{res_conv_block.4} parent=31 // pred_region
        %s301 = smul.u32 16, %s23
        %p302 = scmp.lt.s32.totalorder %s22, 1
        %s303 = scalar_select %p302, %s22, 1
        %p304 = scmp.lt.s32.totalorder %s301, 15
        %s305 = scalar_select %p304, %s301, 15
        %s306 = smul.addr %s305, 2
        %s307 = smul.addr %s303, 32
        %s308 = sadd.s32 %s306, %s307
        %s309 = smul.addr %s308, 8
        %s310 = scalar_lea.vmem %s0, %s309
        %s311 = smul.u32 16, %s23
      $region36: #{res_conv_block.4} parent=31 // pred_fallthru
        _
      // Predicated region
      $region37: #{res_conv_block.4} parent=31 // pred_check
        %p312 = pneg %p85
      $region38: #{res_conv_block.4} parent=31 // pred_check_branch
        %314 = sbr.rel (%p312) target = $region40
      $region39: #{res_conv_block.4} parent=31 // pred_region
        %s315 = smul.u32 %s23, 16
        %s316 = ssub.s32 %s315, 1
        %p317 = scmp.gt.s32.totalorder %s316, 0
        %s318 = scalar_select %p317, %s316, 0
        %p319 = scmp.lt.s32.totalorder %s22, 1
        %s320 = scalar_select %p319, %s22, 1
        %p321 = scmp.lt.s32.totalorder %s318, 15
        %s322 = scalar_select %p321, %s318, 15
        %s323 = smul.addr %s322, 2
        %s324 = smul.addr %s320, 32
        %s325 = sadd.s32 %s323, %s324
        %s326 = smul.addr %s325, 8
        %s327 = scalar_lea.vmem %s1, %s326
        %s328 = smul.u32 %s23, 16
        %s329 = ssub.s32 %s328, 1
        %p330 = scmp.gt.s32.totalorder %s329, 0
        %s331 = scalar_select %p330, %s329, 0
      $region40: #{res_conv_block.4} parent=31 // pred_fallthru
        _
      // Predicated region
      $region41: #{res_conv_block.4} parent=31 // pred_check
        %p332 = pneg %p121
      $region42: #{res_conv_block.4} parent=31 // pred_check_branch
        %334 = sbr.rel (%p332) target = $region44
      $region43: #{res_conv_block.4} parent=31 // pred_region
        %s335 = smul.u32 %s23, 16
        %s336 = sadd.s32 %s335, 16
        %p337 = scmp.lt.s32.totalorder %s336, 15
        %s338 = scalar_select %p337, %s336, 15
        %p339 = scmp.lt.s32.totalorder %s22, 1
        %s340 = scalar_select %p339, %s22, 1
        %p341 = scmp.lt.s32.totalorder %s338, 15
        %s342 = scalar_select %p341, %s338, 15
        %s343 = smul.addr %s342, 2
        %s344 = smul.addr %s340, 32
        %s345 = sadd.s32 %s343, %s344
        %s346 = smul.addr %s345, 8
        %s347 = scalar_lea.vmem %s2, %s346
        %s348 = smul.u32 %s23, 16
        %s349 = sadd.s32 %s348, 16
        %p350 = scmp.lt.s32.totalorder %s349, 15
        %s351 = scalar_select %p350, %s349, 15
      $region44: #{res_conv_block.4} parent=31 // pred_fallthru
        _
    $region32: #{res_conv_block.4} parent=5 // pred_fallthru
      _
    %p352 = scmp.le.s32.totalorder 1, %s15
    %p353 = scmp.lt.s32.totalorder %s15, 3
    %p354 = pnand %p352, %p353
    %p355 = pneg %p354
    // Predicated region
    $region45: #{res_conv_block.4} parent=5 // pred_check
      _
    $region46: #{res_conv_block.4} parent=5 // pred_check_branch
      %357 = sbr.rel (%p354) target = $region48
    $region47: #{res_conv_block.4} parent=5 // pred_region
      %s358 = ssub.s32 %s15, 1
      %s359 = smul.u32 16, %s25
      %p360 = scmp.lt.s32.totalorder %s24, 1
      %s361 = scalar_select %p360, %s24, 1
      %p362 = scmp.lt.s32.totalorder %s359, 15
      %s363 = scalar_select %p362, %s359, 15
      %s364 = smul.addr %s363, 2
      %s365 = smul.addr %s361, 32
      %s366 = sadd.s32 %s364, %s365
      %s367 = smul.addr %s366, 8
      %s368 = scalar_lea.vmem %s0, %s367
      %p369 = pneg %p55
      %p370 = pneg %p52
      %s371 = smul.u32 %s25, 16
      %s372 = ssub.s32 %s371, 1
      %p373 = scmp.gt.s32.totalorder %s372, 0
      %s374 = scalar_select %p373, %s372, 0
      %p375 = scmp.lt.s32.totalorder %s24, 1
      %s376 = scalar_select %p375, %s24, 1
      %p377 = scmp.lt.s32.totalorder %s374, 15
      %s378 = scalar_select %p377, %s374, 15
      %s379 = smul.addr %s378, 2
      %s380 = smul.addr %s376, 32
      %s381 = sadd.s32 %s379, %s380
      %s382 = smul.addr %s381, 8
      %s383 = scalar_lea.vmem %s1, %s382
      %p384 = pneg %p91
      %p385 = pneg %p88
      %s386 = smul.u32 %s25, 16
      %s387 = sadd.s32 %s386, 16
      %p388 = scmp.lt.s32.totalorder %s387, 15
      %s389 = scalar_select %p388, %s387, 15
      %p390 = scmp.lt.s32.totalorder %s24, 1
      %s391 = scalar_select %p390, %s24, 1
      %p392 = scmp.lt.s32.totalorder %s389, 15
      %s393 = scalar_select %p392, %s389, 15
      %s394 = smul.addr %s393, 2
      %s395 = smul.addr %s391, 32
      %s396 = sadd.s32 %s394, %s395
      %s397 = smul.addr %s396, 8
      %s398 = scalar_lea.vmem %s2, %s397
      %p399 = pneg %p127
      %p400 = pneg %p124
      %p401 = pneg %p148
      %p402 = pneg %p145
      %p403 = pneg %p169
      %p404 = pneg %p166
      %p405 = pneg %p190
      %p406 = pneg %p187
      %p407 = pneg %p211
      %p408 = pneg %p208
      %p409 = pneg %p239
      %p410 = pneg %p236
      %s411 = smul.u32 16, %s25
      %p412 = scmp.lt.s32.totalorder %s24, 1
      %s413 = scalar_select %p412, %s24, 1
      %p414 = scmp.lt.s32.totalorder %s411, 15
      %s415 = scalar_select %p414, %s411, 15
      %s416 = smul.addr %s415, 2
      %s417 = smul.addr %s413, 32
      %s418 = sadd.s32 %s416, %s417
      %s419 = smul.addr %s418, 8
      %s420 = scalar_lea.vmem %s7, %s419
      %p421 = pneg %p267
      %p422 = pneg %p264
      %p423 = scmp.lt.s32.totalorder %s24, 1
      %s424 = scalar_select %p423, %s24, 1
      %p425 = scmp.lt.s32.totalorder %s25, 0
      %s426 = scalar_select %p425, %s25, 0
      %s427 = sadd.s32 %s426, %s424
      %s428 = smul.addr %s427, 8
      %s429 = scalar_lea.vmem %s8, %s428
      %s430 = smul.u32 16, %s25
      %p431 = scmp.lt.s32.totalorder %s24, 1
      %s432 = scalar_select %p431, %s24, 1
      %p433 = scmp.lt.s32.totalorder %s430, 15
      %s434 = scalar_select %p433, %s430, 15
      %s435 = smul.addr %s434, 2
      %s436 = smul.addr %s432, 32
      %s437 = sadd.s32 %s435, %s436
      %s438 = smul.addr %s437, 8
      %s439 = scalar_lea.vmem %s0, %s438
      %s440 = smul.u32 16, %s25
      %s441 = smul.u32 %s25, 16
      %s442 = ssub.s32 %s441, 1
      %p443 = scmp.gt.s32.totalorder %s442, 0
      %s444 = scalar_select %p443, %s442, 0
      %p445 = scmp.lt.s32.totalorder %s24, 1
      %s446 = scalar_select %p445, %s24, 1
      %p447 = scmp.lt.s32.totalorder %s444, 15
      %s448 = scalar_select %p447, %s444, 15
      %s449 = smul.addr %s448, 2
      %s450 = smul.addr %s446, 32
      %s451 = sadd.s32 %s449, %s450
      %s452 = smul.addr %s451, 8
      %s453 = scalar_lea.vmem %s1, %s452
      %s454 = smul.u32 %s25, 16
      %s455 = ssub.s32 %s454, 1
      %p456 = scmp.gt.s32.totalorder %s455, 0
      %s457 = scalar_select %p456, %s455, 0
      %s458 = smul.u32 %s25, 16
      %s459 = sadd.s32 %s458, 16
      %p460 = scmp.lt.s32.totalorder %s459, 15
      %s461 = scalar_select %p460, %s459, 15
      %p462 = scmp.lt.s32.totalorder %s24, 1
      %s463 = scalar_select %p462, %s24, 1
      %p464 = scmp.lt.s32.totalorder %s461, 15
      %s465 = scalar_select %p464, %s461, 15
      %s466 = smul.addr %s465, 2
      %s467 = smul.addr %s463, 32
      %s468 = sadd.s32 %s466, %s467
      %s469 = smul.addr %s468, 8
      %s470 = scalar_lea.vmem %s2, %s469
      %s471 = smul.u32 %s25, 16
      %s472 = sadd.s32 %s471, 16
      %p473 = scmp.lt.s32.totalorder %s472, 15
      %s474 = scalar_select %p473, %s472, 15
      %s475 = smul.u32 16, %s25
      %p476 = scmp.lt.s32.totalorder %s24, 1
      %s477 = scalar_select %p476, %s24, 1
      %p478 = scmp.lt.s32.totalorder %s475, 15
      %s479 = scalar_select %p478, %s475, 15
      %s480 = smul.addr %s479, 2
      %s481 = smul.addr %s477, 32
      %s482 = sadd.s32 %s480, %s481
      %s483 = smul.addr %s482, 8
      %s484 = scalar_lea.vmem %s7, %s483
      %s485 = smul.u32 16, %s25
      %p486 = scmp.lt.s32.totalorder %s24, 1
      %s487 = scalar_select %p486, %s24, 1
      %p488 = scmp.lt.s32.totalorder %s25, 0
      %s489 = scalar_select %p488, %s25, 0
      %s490 = sadd.s32 %s489, %s487
      %s491 = smul.addr %s490, 8
      %s492 = scalar_lea.vmem %s8, %s491
      %v494 = vld [vmem:[%s453] sm:$0xff]
      %v495 = vld [vmem:[%s453 + $0x8] sm:$0xff]
      %v496 = vld [vmem:[%s439] sm:$0xff]
      %v497 = vld [vmem:[%s439 + $0x8] sm:$0xff]
      %v498 = vld [vmem:[%s439 + $0x10] sm:$0xff]
      %v499 = vld [vmem:[%s439 + $0x18] sm:$0xff]
      %v500 = vld [vmem:[%s439 + $0x20] sm:$0xff]
      %v501 = vld [vmem:[%s439 + $0x28] sm:$0xff]
      %v502 = vld [vmem:[%s439 + $0x30] sm:$0xff]
      %v503 = vld [vmem:[%s439 + $0x38] sm:$0xff]
      %v504 = vld [vmem:[%s439 + $0x40] sm:$0xff]
      %v505 = vld [vmem:[%s439 + $0x48] sm:$0xff]
      %v506 = vld [vmem:[%s439 + $0x50] sm:$0xff]
      %v507 = vld [vmem:[%s439 + $0x58] sm:$0xff]
      %v508 = vld [vmem:[%s439 + $0x60] sm:$0xff]
      %v509 = vld [vmem:[%s439 + $0x68] sm:$0xff]
      %v510 = vld [vmem:[%s439 + $0x70] sm:$0xff]
      %v511 = vld [vmem:[%s439 + $0x78] sm:$0xff]
      %v512 = vld [vmem:[%s439 + $0x80] sm:$0xff]
      %v513 = vld [vmem:[%s439 + $0x88] sm:$0xff]
      %v514 = vld [vmem:[%s439 + $0x90] sm:$0xff]
      %v515 = vld [vmem:[%s439 + $0x98] sm:$0xff]
      %v516 = vld [vmem:[%s439 + $0xa0] sm:$0xff]
      %v517 = vld [vmem:[%s439 + $0xa8] sm:$0xff]
      %v518 = vld [vmem:[%s439 + $0xb0] sm:$0xff]
      %v519 = vld [vmem:[%s439 + $0xb8] sm:$0xff]
      %v520 = vld [vmem:[%s439 + $0xc0] sm:$0xff]
      %v521 = vld [vmem:[%s439 + $0xc8] sm:$0xff]
      %v522 = vld [vmem:[%s439 + $0xd0] sm:$0xff]
      %v523 = vld [vmem:[%s439 + $0xd8] sm:$0xff]
      %v524 = vld [vmem:[%s439 + $0xe0] sm:$0xff]
      %v525 = vld [vmem:[%s439 + $0xe8] sm:$0xff]
      %v526 = vld [vmem:[%s439 + $0xf0] sm:$0xff]
      %v527 = vld [vmem:[%s439 + $0xf8] sm:$0xff]
      %v528 = vld [vmem:[%s470] sm:$0xff]
      %v529 = vld [vmem:[%s470 + $0x8] sm:$0xff]
      %v530 = vld [vmem:[%s5] sm:$0x1]
      %v531 = vld [vmem:[%s6] sm:$0x1]
      %v533 = vlaneseq
      %v534 = vshrl.u32 %v533, 7
      %v535 = vsub.s32 0, %v534
      %v536 = vrot.slane %v530, %v535
      %v538 = vmul.f32 %v494, %v536
      %v539 = vmul.f32 %v495, %v536
      %v541 = vlaneseq
      %v542 = vshrl.u32 %v541, 7
      %v543 = vsub.s32 0, %v542
      %v544 = vrot.slane %v531, %v543
      %v546 = vadd.f32 %v538, %v544
      %v547 = vadd.f32 %v539, %v544
      %v548 = vmax.f32 %v546, 0.0
      %v549 = vmax.f32 %v547, 0.0
      %v550 = vmul.f32 %v496, %v536
      %v551 = vmul.f32 %v497, %v536
      %v552 = vmul.f32 %v498, %v536
      %v553 = vmul.f32 %v499, %v536
      %v554 = vmul.f32 %v500, %v536
      %v555 = vmul.f32 %v501, %v536
      %v556 = vmul.f32 %v502, %v536
      %v557 = vmul.f32 %v503, %v536
      %v558 = vmul.f32 %v504, %v536
      %v559 = vmul.f32 %v505, %v536
      %v560 = vmul.f32 %v506, %v536
      %v561 = vmul.f32 %v507, %v536
      %v562 = vmul.f32 %v508, %v536
      %v563 = vmul.f32 %v509, %v536
      %v564 = vmul.f32 %v510, %v536
      %v565 = vmul.f32 %v511, %v536
      %v566 = vmul.f32 %v512, %v536
      %v567 = vmul.f32 %v513, %v536
      %v568 = vmul.f32 %v514, %v536
      %v569 = vmul.f32 %v515, %v536
      %v570 = vmul.f32 %v516, %v536
      %v571 = vmul.f32 %v517, %v536
      %v572 = vmul.f32 %v518, %v536
      %v573 = vmul.f32 %v519, %v536
      %v574 = vmul.f32 %v520, %v536
      %v575 = vmul.f32 %v521, %v536
      %v576 = vmul.f32 %v522, %v536
      %v577 = vmul.f32 %v523, %v536
      %v578 = vmul.f32 %v524, %v536
      %v579 = vmul.f32 %v525, %v536
      %v580 = vmul.f32 %v526, %v536
      %v581 = vmul.f32 %v527, %v536
      %v582 = vadd.f32 %v550, %v544
      %v583 = vadd.f32 %v551, %v544
      %v584 = vadd.f32 %v552, %v544
      %v585 = vadd.f32 %v553, %v544
      %v586 = vadd.f32 %v554, %v544
      %v587 = vadd.f32 %v555, %v544
      %v588 = vadd.f32 %v556, %v544
      %v589 = vadd.f32 %v557, %v544
      %v590 = vadd.f32 %v558, %v544
      %v591 = vadd.f32 %v559, %v544
      %v592 = vadd.f32 %v560, %v544
      %v593 = vadd.f32 %v561, %v544
      %v594 = vadd.f32 %v562, %v544
      %v595 = vadd.f32 %v563, %v544
      %v596 = vadd.f32 %v564, %v544
      %v597 = vadd.f32 %v565, %v544
      %v598 = vadd.f32 %v566, %v544
      %v599 = vadd.f32 %v567, %v544
      %v600 = vadd.f32 %v568, %v544
      %v601 = vadd.f32 %v569, %v544
      %v602 = vadd.f32 %v570, %v544
      %v603 = vadd.f32 %v571, %v544
      %v604 = vadd.f32 %v572, %v544
      %v605 = vadd.f32 %v573, %v544
      %v606 = vadd.f32 %v574, %v544
      %v607 = vadd.f32 %v575, %v544
      %v608 = vadd.f32 %v576, %v544
      %v609 = vadd.f32 %v577, %v544
      %v610 = vadd.f32 %v578, %v544
      %v611 = vadd.f32 %v579, %v544
      %v612 = vadd.f32 %v580, %v544
      %v613 = vadd.f32 %v581, %v544
      %v614 = vmax.f32 %v582, 0.0
      %v615 = vmax.f32 %v583, 0.0
      %v616 = vmax.f32 %v584, 0.0
      %v617 = vmax.f32 %v585, 0.0
      %v618 = vmax.f32 %v586, 0.0
      %v619 = vmax.f32 %v587, 0.0
      %v620 = vmax.f32 %v588, 0.0
      %v621 = vmax.f32 %v589, 0.0
      %v622 = vmax.f32 %v590, 0.0
      %v623 = vmax.f32 %v591, 0.0
      %v624 = vmax.f32 %v592, 0.0
      %v625 = vmax.f32 %v593, 0.0
      %v626 = vmax.f32 %v594, 0.0
      %v627 = vmax.f32 %v595, 0.0
      %v628 = vmax.f32 %v596, 0.0
      %v629 = vmax.f32 %v597, 0.0
      %v630 = vmax.f32 %v598, 0.0
      %v631 = vmax.f32 %v599, 0.0
      %v632 = vmax.f32 %v600, 0.0
      %v633 = vmax.f32 %v601, 0.0
      %v634 = vmax.f32 %v602, 0.0
      %v635 = vmax.f32 %v603, 0.0
      %v636 = vmax.f32 %v604, 0.0
      %v637 = vmax.f32 %v605, 0.0
      %v638 = vmax.f32 %v606, 0.0
      %v639 = vmax.f32 %v607, 0.0
      %v640 = vmax.f32 %v608, 0.0
      %v641 = vmax.f32 %v609, 0.0
      %v642 = vmax.f32 %v610, 0.0
      %v643 = vmax.f32 %v611, 0.0
      %v644 = vmax.f32 %v612, 0.0
      %v645 = vmax.f32 %v613, 0.0
      %v646 = vmul.f32 %v528, %v536
      %v647 = vmul.f32 %v529, %v536
      %v648 = vadd.f32 %v646, %v544
      %v649 = vadd.f32 %v647, %v544
      %v650 = vmax.f32 %v648, 0.0
      %v651 = vmax.f32 %v649, 0.0
      %p652 = scmp.eq.s32.totalorder %s25, 0
      %s653 = scalar_select %p652, 0.0, 1.0
      %v654 = vstv %s653
      %v655 = vmul.f32 %v548, %v654
      %v656 = vmul.f32 %v549, %v654
      %v657 = vmul.f32 %v650, %v654
      %v658 = vmul.f32 %v651, %v654
      %vm691 = vcmask 1046528
      %v692 = vrot.slane %v655, 1
      %v693 = vrot.slane %v656, 1
      %v694 = vsel %vm691, %v692, %v693
      %v695 = vrot.slane %v614, 1
      %v696 = vrot.slane %v615, 1
      %v697 = vsel %vm691, %v695, %v696
      %v698 = vrot.slane %v616, 1
      %v699 = vrot.slane %v617, 1
      %v700 = vsel %vm691, %v698, %v699
      %v701 = vrot.slane %v618, 1
      %v702 = vrot.slane %v619, 1
      %v703 = vsel %vm691, %v701, %v702
      %v704 = vrot.slane %v620, 1
      %v705 = vrot.slane %v621, 1
      %v706 = vsel %vm691, %v704, %v705
      %v707 = vrot.slane %v622, 1
      %v708 = vrot.slane %v623, 1
      %v709 = vsel %vm691, %v707, %v708
      %v710 = vrot.slane %v624, 1
      %v711 = vrot.slane %v625, 1
      %v712 = vsel %vm691, %v710, %v711
      %v713 = vrot.slane %v626, 1
      %v714 = vrot.slane %v627, 1
      %v715 = vsel %vm691, %v713, %v714
      %v716 = vrot.slane %v628, 1
      %v717 = vrot.slane %v629, 1
      %v718 = vsel %vm691, %v716, %v717
      %v719 = vrot.slane %v630, 1
      %v720 = vrot.slane %v631, 1
      %v721 = vsel %vm691, %v719, %v720
      %v722 = vrot.slane %v632, 1
      %v723 = vrot.slane %v633, 1
      %v724 = vsel %vm691, %v722, %v723
      %v725 = vrot.slane %v634, 1
      %v726 = vrot.slane %v635, 1
      %v727 = vsel %vm691, %v725, %v726
      %v728 = vrot.slane %v636, 1
      %v729 = vrot.slane %v637, 1
      %v730 = vsel %vm691, %v728, %v729
      %v731 = vrot.slane %v638, 1
      %v732 = vrot.slane %v639, 1
      %v733 = vsel %vm691, %v731, %v732
      %v734 = vrot.slane %v640, 1
      %v735 = vrot.slane %v641, 1
      %v736 = vsel %vm691, %v734, %v735
      %v737 = vrot.slane %v642, 1
      %v738 = vrot.slane %v643, 1
      %v739 = vsel %vm691, %v737, %v738
      %vm741 = vcmask 1045504
      %v742 = vrot.slane %v655, 2
      %v743 = vrot.slane %v656, 2
      %v744 = vsel %vm741, %v742, %v743
      %v745 = vrot.slane 0.0, 2
      %v746 = vsel %vm741, %v743, %v745
      %v747 = vrot.slane %v614, 2
      %v748 = vrot.slane %v615, 2
      %v749 = vsel %vm741, %v747, %v748
      %v750 = vsel %vm741, %v748, %v745
      %v751 = vrot.slane %v616, 2
      %v752 = vrot.slane %v617, 2
      %v753 = vsel %vm741, %v751, %v752
      %v754 = vsel %vm741, %v752, %v745
      %v755 = vrot.slane %v618, 2
      %v756 = vrot.slane %v619, 2
      %v757 = vsel %vm741, %v755, %v756
      %v758 = vsel %vm741, %v756, %v745
      %v759 = vrot.slane %v620, 2
      %v760 = vrot.slane %v621, 2
      %v761 = vsel %vm741, %v759, %v760
      %v762 = vsel %vm741, %v760, %v745
      %v763 = vrot.slane %v622, 2
      %v764 = vrot.slane %v623, 2
      %v765 = vsel %vm741, %v763, %v764
      %v766 = vsel %vm741, %v764, %v745
      %v767 = vrot.slane %v624, 2
      %v768 = vrot.slane %v625, 2
      %v769 = vsel %vm741, %v767, %v768
      %v770 = vsel %vm741, %v768, %v745
      %v771 = vrot.slane %v626, 2
      %v772 = vrot.slane %v627, 2
      %v773 = vsel %vm741, %v771, %v772
      %v774 = vsel %vm741, %v772, %v745
      %v775 = vrot.slane %v628, 2
      %v776 = vrot.slane %v629, 2
      %v777 = vsel %vm741, %v775, %v776
      %v778 = vsel %vm741, %v776, %v745
      %v779 = vrot.slane %v630, 2
      %v780 = vrot.slane %v631, 2
      %v781 = vsel %vm741, %v779, %v780
      %v782 = vsel %vm741, %v780, %v745
      %v783 = vrot.slane %v632, 2
      %v784 = vrot.slane %v633, 2
      %v785 = vsel %vm741, %v783, %v784
      %v786 = vsel %vm741, %v784, %v745
      %v787 = vrot.slane %v634, 2
      %v788 = vrot.slane %v635, 2
      %v789 = vsel %vm741, %v787, %v788
      %v790 = vsel %vm741, %v788, %v745
      %v791 = vrot.slane %v636, 2
      %v792 = vrot.slane %v637, 2
      %v793 = vsel %vm741, %v791, %v792
      %v794 = vsel %vm741, %v792, %v745
      %v795 = vrot.slane %v638, 2
      %v796 = vrot.slane %v639, 2
      %v797 = vsel %vm741, %v795, %v796
      %v798 = vsel %vm741, %v796, %v745
      %v799 = vrot.slane %v640, 2
      %v800 = vrot.slane %v641, 2
      %v801 = vsel %vm741, %v799, %v800
      %v802 = vsel %vm741, %v800, %v745
      %v803 = vrot.slane %v642, 2
      %v804 = vrot.slane %v643, 2
      %v805 = vsel %vm741, %v803, %v804
      %v806 = vsel %vm741, %v804, %v745
      %vm807 = vcmask 1040384
      %v808 = vrot.slane 0.0, 7
      %v809 = vrot.slane %v655, 7
      %v810 = vsel %vm807, %v808, %v809
      %v811 = vrot.slane %v692, 7
      %v812 = vrot.slane %v694, 7
      %v813 = vsel %vm807, %v811, %v812
      %v814 = vrot.slane %v742, 7
      %v815 = vrot.slane %v744, 7
      %v816 = vsel %vm807, %v814, %v815
      %v817 = vrot.slane %v656, 7
      %v818 = vsel %vm807, %v809, %v817
      %v819 = vrot.slane %v693, 7
      %v820 = vsel %vm807, %v812, %v819
      %v821 = vrot.slane %v746, 7
      %v822 = vsel %vm807, %v815, %v821
      %v823 = vrot.slane %v614, 7
      %v824 = vsel %vm807, %v808, %v823
      %v825 = vrot.slane %v695, 7
      %v826 = vrot.slane %v697, 7
      %v827 = vsel %vm807, %v825, %v826
      %v828 = vrot.slane %v747, 7
      %v829 = vrot.slane %v749, 7
      %v830 = vsel %vm807, %v828, %v829
      %v831 = vrot.slane %v615, 7
      %v832 = vsel %vm807, %v823, %v831
      %v833 = vrot.slane %v696, 7
      %v834 = vsel %vm807, %v826, %v833
      %v835 = vrot.slane %v750, 7
      %v836 = vsel %vm807, %v829, %v835
      %v837 = vrot.slane %v616, 7
      %v838 = vsel %vm807, %v808, %v837
      %v839 = vrot.slane %v698, 7
      %v840 = vrot.slane %v700, 7
      %v841 = vsel %vm807, %v839, %v840
      %v842 = vrot.slane %v751, 7
      %v843 = vrot.slane %v753, 7
      %v844 = vsel %vm807, %v842, %v843
      %v845 = vrot.slane %v617, 7
      %v846 = vsel %vm807, %v837, %v845
      %v847 = vrot.slane %v699, 7
      %v848 = vsel %vm807, %v840, %v847
      %v849 = vrot.slane %v754, 7
      %v850 = vsel %vm807, %v843, %v849
      %v851 = vrot.slane %v618, 7
      %v852 = vsel %vm807, %v808, %v851
      %v853 = vrot.slane %v701, 7
      %v854 = vrot.slane %v703, 7
      %v855 = vsel %vm807, %v853, %v854
      %v856 = vrot.slane %v755, 7
      %v857 = vrot.slane %v757, 7
      %v858 = vsel %vm807, %v856, %v857
      %v859 = vrot.slane %v619, 7
      %v860 = vsel %vm807, %v851, %v859
      %v861 = vrot.slane %v702, 7
      %v862 = vsel %vm807, %v854, %v861
      %v863 = vrot.slane %v758, 7
      %v864 = vsel %vm807, %v857, %v863
      %v865 = vrot.slane %v620, 7
      %v866 = vsel %vm807, %v808, %v865
      %v867 = vrot.slane %v704, 7
      %v868 = vrot.slane %v706, 7
      %v869 = vsel %vm807, %v867, %v868
      %v870 = vrot.slane %v759, 7
      %v871 = vrot.slane %v761, 7
      %v872 = vsel %vm807, %v870, %v871
      %v873 = vrot.slane %v621, 7
      %v874 = vsel %vm807, %v865, %v873
      %v875 = vrot.slane %v705, 7
      %v876 = vsel %vm807, %v868, %v875
      %v877 = vrot.slane %v762, 7
      %v878 = vsel %vm807, %v871, %v877
      %v879 = vrot.slane %v622, 7
      %v880 = vsel %vm807, %v808, %v879
      %v881 = vrot.slane %v707, 7
      %v882 = vrot.slane %v709, 7
      %v883 = vsel %vm807, %v881, %v882
      %v884 = vrot.slane %v763, 7
      %v885 = vrot.slane %v765, 7
      %v886 = vsel %vm807, %v884, %v885
      %v887 = vrot.slane %v623, 7
      %v888 = vsel %vm807, %v879, %v887
      %v889 = vrot.slane %v708, 7
      %v890 = vsel %vm807, %v882, %v889
      %v891 = vrot.slane %v766, 7
      %v892 = vsel %vm807, %v885, %v891
      %v893 = vrot.slane %v624, 7
      %v894 = vsel %vm807, %v808, %v893
      %v895 = vrot.slane %v710, 7
      %v896 = vrot.slane %v712, 7
      %v897 = vsel %vm807, %v895, %v896
      %v898 = vrot.slane %v767, 7
      %v899 = vrot.slane %v769, 7
      %v900 = vsel %vm807, %v898, %v899
      %v901 = vrot.slane %v625, 7
      %v902 = vsel %vm807, %v893, %v901
      %v903 = vrot.slane %v711, 7
      %v904 = vsel %vm807, %v896, %v903
      %v905 = vrot.slane %v770, 7
      %v906 = vsel %vm807, %v899, %v905
      %v907 = vrot.slane %v626, 7
      %v908 = vsel %vm807, %v808, %v907
      %v909 = vrot.slane %v713, 7
      %v910 = vrot.slane %v715, 7
      %v911 = vsel %vm807, %v909, %v910
      %v912 = vrot.slane %v771, 7
      %v913 = vrot.slane %v773, 7
      %v914 = vsel %vm807, %v912, %v913
      %v915 = vrot.slane %v627, 7
      %v916 = vsel %vm807, %v907, %v915
      %v917 = vrot.slane %v714, 7
      %v918 = vsel %vm807, %v910, %v917
      %v919 = vrot.slane %v774, 7
      %v920 = vsel %vm807, %v913, %v919
      %v921 = vrot.slane %v628, 7
      %v922 = vsel %vm807, %v808, %v921
      %v923 = vrot.slane %v716, 7
      %v924 = vrot.slane %v718, 7
      %v925 = vsel %vm807, %v923, %v924
      %v926 = vrot.slane %v775, 7
      %v927 = vrot.slane %v777, 7
      %v928 = vsel %vm807, %v926, %v927
      %v929 = vrot.slane %v629, 7
      %v930 = vsel %vm807, %v921, %v929
      %v931 = vrot.slane %v717, 7
      %v932 = vsel %vm807, %v924, %v931
      %v933 = vrot.slane %v778, 7
      %v934 = vsel %vm807, %v927, %v933
      %v935 = vrot.slane %v630, 7
      %v936 = vsel %vm807, %v808, %v935
      %v937 = vrot.slane %v719, 7
      %v938 = vrot.slane %v721, 7
      %v939 = vsel %vm807, %v937, %v938
      %v940 = vrot.slane %v779, 7
      %v941 = vrot.slane %v781, 7
      %v942 = vsel %vm807, %v940, %v941
      %v943 = vrot.slane %v631, 7
      %v944 = vsel %vm807, %v935, %v943
      %v945 = vrot.slane %v720, 7
      %v946 = vsel %vm807, %v938, %v945
      %v947 = vrot.slane %v782, 7
      %v948 = vsel %vm807, %v941, %v947
      %v949 = vrot.slane %v632, 7
      %v950 = vsel %vm807, %v808, %v949
      %v951 = vrot.slane %v722, 7
      %v952 = vrot.slane %v724, 7
      %v953 = vsel %vm807, %v951, %v952
      %v954 = vrot.slane %v783, 7
      %v955 = vrot.slane %v785, 7
      %v956 = vsel %vm807, %v954, %v955
      %v957 = vrot.slane %v633, 7
      %v958 = vsel %vm807, %v949, %v957
      %v959 = vrot.slane %v723, 7
      %v960 = vsel %vm807, %v952, %v959
      %v961 = vrot.slane %v786, 7
      %v962 = vsel %vm807, %v955, %v961
      %v963 = vrot.slane %v634, 7
      %v964 = vsel %vm807, %v808, %v963
      %v965 = vrot.slane %v725, 7
      %v966 = vrot.slane %v727, 7
      %v967 = vsel %vm807, %v965, %v966
      %v968 = vrot.slane %v787, 7
      %v969 = vrot.slane %v789, 7
      %v970 = vsel %vm807, %v968, %v969
      %v971 = vrot.slane %v635, 7
      %v972 = vsel %vm807, %v963, %v971
      %v973 = vrot.slane %v726, 7
      %v974 = vsel %vm807, %v966, %v973
      %v975 = vrot.slane %v790, 7
      %v976 = vsel %vm807, %v969, %v975
      %v977 = vrot.slane %v636, 7
      %v978 = vsel %vm807, %v808, %v977
      %v979 = vrot.slane %v728, 7
      %v980 = vrot.slane %v730, 7
      %v981 = vsel %vm807, %v979, %v980
      %v982 = vrot.slane %v791, 7
      %v983 = vrot.slane %v793, 7
      %v984 = vsel %vm807, %v982, %v983
      %v985 = vrot.slane %v637, 7
      %v986 = vsel %vm807, %v977, %v985
      %v987 = vrot.slane %v729, 7
      %v988 = vsel %vm807, %v980, %v987
      %v989 = vrot.slane %v794, 7
      %v990 = vsel %vm807, %v983, %v989
      %v991 = vrot.slane %v638, 7
      %v992 = vsel %vm807, %v808, %v991
      %v993 = vrot.slane %v731, 7
      %v994 = vrot.slane %v733, 7
      %v995 = vsel %vm807, %v993, %v994
      %v996 = vrot.slane %v795, 7
      %v997 = vrot.slane %v797, 7
      %v998 = vsel %vm807, %v996, %v997
      %v999 = vrot.slane %v639, 7
      %v1000 = vsel %vm807, %v991, %v999
      %v1001 = vrot.slane %v732, 7
      %v1002 = vsel %vm807, %v994, %v1001
      %v1003 = vrot.slane %v798, 7
      %v1004 = vsel %vm807, %v997, %v1003
      %v1005 = vrot.slane %v640, 7
      %v1006 = vsel %vm807, %v808, %v1005
      %v1007 = vrot.slane %v734, 7
      %v1008 = vrot.slane %v736, 7
      %v1009 = vsel %vm807, %v1007, %v1008
      %v1010 = vrot.slane %v799, 7
      %v1011 = vrot.slane %v801, 7
      %v1012 = vsel %vm807, %v1010, %v1011
      %v1013 = vrot.slane %v641, 7
      %v1014 = vsel %vm807, %v1005, %v1013
      %v1015 = vrot.slane %v735, 7
      %v1016 = vsel %vm807, %v1008, %v1015
      %v1017 = vrot.slane %v802, 7
      %v1018 = vsel %vm807, %v1011, %v1017
      %v1019 = vrot.slane %v642, 7
      %v1020 = vsel %vm807, %v808, %v1019
      %v1021 = vrot.slane %v737, 7
      %v1022 = vrot.slane %v739, 7
      %v1023 = vsel %vm807, %v1021, %v1022
      %v1024 = vrot.slane %v803, 7
      %v1025 = vrot.slane %v805, 7
      %v1026 = vsel %vm807, %v1024, %v1025
      %v1027 = vrot.slane %v643, 7
      %v1028 = vsel %vm807, %v1019, %v1027
      %v1029 = vrot.slane %v738, 7
      %v1030 = vsel %vm807, %v1022, %v1029
      %v1031 = vrot.slane %v806, 7
      %v1032 = vsel %vm807, %v1025, %v1031
      %v1129 = vpack.c.bf16 %v818, %v810
      %v1130 = vpack.c.bf16 %v820, %v813
      %v1131 = vpack.c.bf16 %v822, %v816
      %v1132 = vpack.c.bf16 %v832, %v824
      %v1133 = vpack.c.bf16 %v834, %v827
      %v1134 = vpack.c.bf16 %v836, %v830
      %v1135 = vpack.c.bf16 %v846, %v838
      %v1136 = vpack.c.bf16 %v848, %v841
      %v1137 = vpack.c.bf16 %v850, %v844
      %v1138 = vpack.c.bf16 %v860, %v852
      %v1139 = vpack.c.bf16 %v862, %v855
      %v1140 = vpack.c.bf16 %v864, %v858
      %v1141 = vpack.c.bf16 %v874, %v866
      %v1142 = vpack.c.bf16 %v876, %v869
      %v1143 = vpack.c.bf16 %v878, %v872
      %v1144 = vpack.c.bf16 %v888, %v880
      %v1145 = vpack.c.bf16 %v890, %v883
      %v1146 = vpack.c.bf16 %v892, %v886
      %v1147 = vpack.c.bf16 %v902, %v894
      %v1148 = vpack.c.bf16 %v904, %v897
      %v1149 = vpack.c.bf16 %v906, %v900
      %v1150 = vpack.c.bf16 %v916, %v908
      %v1151 = vpack.c.bf16 %v918, %v911
      %v1152 = vpack.c.bf16 %v920, %v914
      %v1153 = vpack.c.bf16 %v930, %v922
      %v1154 = vpack.c.bf16 %v932, %v925
      %v1155 = vpack.c.bf16 %v934, %v928
      %v1156 = vpack.c.bf16 %v944, %v936
      %v1157 = vpack.c.bf16 %v946, %v939
      %v1158 = vpack.c.bf16 %v948, %v942
      %v1159 = vpack.c.bf16 %v958, %v950
      %v1160 = vpack.c.bf16 %v960, %v953
      %v1161 = vpack.c.bf16 %v962, %v956
      %v1162 = vpack.c.bf16 %v972, %v964
      %v1163 = vpack.c.bf16 %v974, %v967
      %v1164 = vpack.c.bf16 %v976, %v970
      %v1165 = vpack.c.bf16 %v986, %v978
      %v1166 = vpack.c.bf16 %v988, %v981
      %v1167 = vpack.c.bf16 %v990, %v984
      %v1168 = vpack.c.bf16 %v1000, %v992
      %v1169 = vpack.c.bf16 %v1002, %v995
      %v1170 = vpack.c.bf16 %v1004, %v998
      %v1171 = vpack.c.bf16 %v1014, %v1006
      %v1172 = vpack.c.bf16 %v1016, %v1009
      %v1173 = vpack.c.bf16 %v1018, %v1012
      %v1174 = vpack.c.bf16 %v1028, %v1020
      %v1175 = vpack.c.bf16 %v1030, %v1023
      %v1176 = vpack.c.bf16 %v1032, %v1026
      %v1177 = vld [vmem:[%s3] sm:$0xf]
      %v1178 = vld [vmem:[%s3 + $0x4] sm:$0xf]
      %v1179 = vld [vmem:[%s3 + $0x8] sm:$0xf]
      %v1180 = vld [vmem:[%s3 + $0xc] sm:$0xf]
      %v1181 = vld [vmem:[%s3 + $0x10] sm:$0xf]
      %v1182 = vld [vmem:[%s3 + $0x14] sm:$0xf]
      %v1183 = vld [vmem:[%s3 + $0x18] sm:$0xf]
      %v1184 = vld [vmem:[%s3 + $0x1c] sm:$0xf]
      %v1185 = vld [vmem:[%s3 + $0x20] sm:$0xf]
      %v1186 = vld [vmem:[%s3 + $0x24] sm:$0xf]
      %v1187 = vld [vmem:[%s3 + $0x28] sm:$0xf]
      %v1188 = vld [vmem:[%s3 + $0x2c] sm:$0xf]
      %v1189 = vld [vmem:[%s3 + $0x30] sm:$0xf]
      %v1190 = vld [vmem:[%s3 + $0x34] sm:$0xf]
      %v1191 = vld [vmem:[%s3 + $0x38] sm:$0xf]
      %v1192 = vld [vmem:[%s3 + $0x3c] sm:$0xf]
      %v1193 = vld [vmem:[%s3 + $0x40] sm:$0xf]
      %v1194 = vld [vmem:[%s3 + $0x44] sm:$0xf]
      %v1195 = vld [vmem:[%s3 + $0x48] sm:$0xf]
      %v1196 = vld [vmem:[%s3 + $0x4c] sm:$0xf]
      %v1197 = vld [vmem:[%s3 + $0x50] sm:$0xf]
      %v1198 = vld [vmem:[%s3 + $0x54] sm:$0xf]
      %v1199 = vld [vmem:[%s3 + $0x58] sm:$0xf]
      %v1200 = vld [vmem:[%s3 + $0x5c] sm:$0xf]
      %v1201 = vld [vmem:[%s3 + $0x60] sm:$0xf]
      %v1202 = vld [vmem:[%s3 + $0x64] sm:$0xf]
      %v1203 = vld [vmem:[%s3 + $0x68] sm:$0xf]
      %v1204 = vld [vmem:[%s3 + $0x6c] sm:$0xf]
      %v1205 = vld [vmem:[%s3 + $0x70] sm:$0xf]
      %v1206 = vld [vmem:[%s3 + $0x74] sm:$0xf]
      %v1207 = vld [vmem:[%s3 + $0x78] sm:$0xf]
      %v1208 = vld [vmem:[%s3 + $0x7c] sm:$0xf]
      %v1209 = vld [vmem:[%s3 + $0x80] sm:$0xf]
      %v1210 = vld [vmem:[%s3 + $0x84] sm:$0xf]
      %v1211 = vld [vmem:[%s3 + $0x88] sm:$0xf]
      %v1212 = vld [vmem:[%s3 + $0x8c] sm:$0xf]
      %v1213 = vld [vmem:[%s3 + $0x90] sm:$0xf]
      %v1214 = vld [vmem:[%s3 + $0x94] sm:$0xf]
      %v1215 = vld [vmem:[%s3 + $0x98] sm:$0xf]
      %v1216 = vld [vmem:[%s3 + $0x9c] sm:$0xf]
      %v1217 = vld [vmem:[%s3 + $0xa0] sm:$0xf]
      %v1218 = vld [vmem:[%s3 + $0xa4] sm:$0xf]
      %v1219 = vld [vmem:[%s3 + $0xa8] sm:$0xf]
      %v1220 = vld [vmem:[%s3 + $0xac] sm:$0xf]
      %v1221 = vld [vmem:[%s3 + $0xb0] sm:$0xf]
      %v1222 = vld [vmem:[%s3 + $0xb4] sm:$0xf]
      %v1223 = vld [vmem:[%s3 + $0xb8] sm:$0xf]
      %v1224 = vld [vmem:[%s3 + $0xbc] sm:$0xf]
      %v1227 = vrot.slane %v644, 1
      %v1228 = vrot.slane %v645, 1
      %v1229 = vsel %vm691, %v1227, %v1228
      %v1230 = vrot.slane %v644, 2
      %v1231 = vrot.slane %v645, 2
      %v1232 = vsel %vm741, %v1230, %v1231
      %v1233 = vsel %vm741, %v1231, %v745
      %v1234 = vrot.slane %v644, 7
      %v1235 = vsel %vm807, %v808, %v1234
      %v1236 = vrot.slane %v1227, 7
      %v1237 = vrot.slane %v1229, 7
      %v1238 = vsel %vm807, %v1236, %v1237
      %v1239 = vrot.slane %v1230, 7
      %v1240 = vrot.slane %v1232, 7
      %v1241 = vsel %vm807, %v1239, %v1240
      %v1242 = vrot.slane %v645, 7
      %v1243 = vsel %vm807, %v1234, %v1242
      %v1244 = vrot.slane %v1228, 7
      %v1245 = vsel %vm807, %v1237, %v1244
      %v1246 = vrot.slane %v1233, 7
      %v1247 = vsel %vm807, %v1240, %v1246
      %v1254 = vpack.c.bf16 %v1243, %v1235
      %v1255 = vpack.c.bf16 %v1245, %v1238
      %v1256 = vpack.c.bf16 %v1247, %v1241
      %s1257 = scalar_lea.vmem %s3, 192
      %v1258 = vld [vmem:[%s1257] sm:$0xf]
      %v1259 = vld [vmem:[%s1257 + $0x4] sm:$0xf]
      %v1260 = vld [vmem:[%s1257 + $0x8] sm:$0xf]
      %v1261 = vld [vmem:[%s1257 + $0xc] sm:$0xf]
      %v1262 = vld [vmem:[%s1257 + $0x10] sm:$0xf]
      %v1263 = vld [vmem:[%s1257 + $0x14] sm:$0xf]
      %v1264 = vld [vmem:[%s1257 + $0x18] sm:$0xf]
      %v1265 = vld [vmem:[%s1257 + $0x1c] sm:$0xf]
      %v1266 = vld [vmem:[%s1257 + $0x20] sm:$0xf]
      %v1267 = vld [vmem:[%s1257 + $0x24] sm:$0xf]
      %v1268 = vld [vmem:[%s1257 + $0x28] sm:$0xf]
      %v1269 = vld [vmem:[%s1257 + $0x2c] sm:$0xf]
      %v1270 = vld [vmem:[%s1257 + $0x30] sm:$0xf]
      %v1271 = vld [vmem:[%s1257 + $0x34] sm:$0xf]
      %v1272 = vld [vmem:[%s1257 + $0x38] sm:$0xf]
      %v1273 = vld [vmem:[%s1257 + $0x3c] sm:$0xf]
      %v1274 = vld [vmem:[%s1257 + $0x40] sm:$0xf]
      %v1275 = vld [vmem:[%s1257 + $0x44] sm:$0xf]
      %v1276 = vld [vmem:[%s1257 + $0x48] sm:$0xf]
      %v1277 = vld [vmem:[%s1257 + $0x4c] sm:$0xf]
      %v1278 = vld [vmem:[%s1257 + $0x50] sm:$0xf]
      %v1279 = vld [vmem:[%s1257 + $0x54] sm:$0xf]
      %v1280 = vld [vmem:[%s1257 + $0x58] sm:$0xf]
      %v1281 = vld [vmem:[%s1257 + $0x5c] sm:$0xf]
      %v1282 = vld [vmem:[%s1257 + $0x60] sm:$0xf]
      %v1283 = vld [vmem:[%s1257 + $0x64] sm:$0xf]
      %v1284 = vld [vmem:[%s1257 + $0x68] sm:$0xf]
      %v1285 = vld [vmem:[%s1257 + $0x6c] sm:$0xf]
      %v1286 = vld [vmem:[%s1257 + $0x70] sm:$0xf]
      %v1287 = vld [vmem:[%s1257 + $0x74] sm:$0xf]
      %v1288 = vld [vmem:[%s1257 + $0x78] sm:$0xf]
      %v1289 = vld [vmem:[%s1257 + $0x7c] sm:$0xf]
      %v1290 = vld [vmem:[%s1257 + $0x80] sm:$0xf]
      %v1291 = vld [vmem:[%s1257 + $0x84] sm:$0xf]
      %v1292 = vld [vmem:[%s1257 + $0x88] sm:$0xf]
      %v1293 = vld [vmem:[%s1257 + $0x8c] sm:$0xf]
      %v1294 = vld [vmem:[%s1257 + $0x90] sm:$0xf]
      %v1295 = vld [vmem:[%s1257 + $0x94] sm:$0xf]
      %v1296 = vld [vmem:[%s1257 + $0x98] sm:$0xf]
      %v1297 = vld [vmem:[%s1257 + $0x9c] sm:$0xf]
      %v1298 = vld [vmem:[%s1257 + $0xa0] sm:$0xf]
      %v1299 = vld [vmem:[%s1257 + $0xa4] sm:$0xf]
      %v1300 = vld [vmem:[%s1257 + $0xa8] sm:$0xf]
      %v1301 = vld [vmem:[%s1257 + $0xac] sm:$0xf]
      %v1302 = vld [vmem:[%s1257 + $0xb0] sm:$0xf]
      %v1303 = vld [vmem:[%s1257 + $0xb4] sm:$0xf]
      %v1304 = vld [vmem:[%s1257 + $0xb8] sm:$0xf]
      %v1305 = vld [vmem:[%s1257 + $0xbc] sm:$0xf]
      %v1354 = vunpack.c.l.b16 %v1258
      %v1355 = vunpack.c.l.b16 %v1259
      %v1356 = vunpack.c.l.b16 %v1260
      %v1357 = vunpack.c.l.b16 %v1261
      %v1358 = vunpack.c.l.b16 %v1262
      %v1359 = vunpack.c.l.b16 %v1263
      %v1360 = vunpack.c.l.b16 %v1264
      %v1361 = vunpack.c.l.b16 %v1265
      %v1362 = vunpack.c.l.b16 %v1266
      %v1363 = vunpack.c.l.b16 %v1267
      %v1364 = vunpack.c.l.b16 %v1268
      %v1365 = vunpack.c.l.b16 %v1269
      %v1366 = vunpack.c.l.b16 %v1270
      %v1367 = vunpack.c.l.b16 %v1271
      %v1368 = vunpack.c.l.b16 %v1272
      %v1369 = vunpack.c.l.b16 %v1273
      %v1370 = vunpack.c.l.b16 %v1274
      %v1371 = vunpack.c.l.b16 %v1275
      %v1372 = vunpack.c.l.b16 %v1276
      %v1373 = vunpack.c.l.b16 %v1277
      %v1374 = vunpack.c.l.b16 %v1278
      %v1375 = vunpack.c.l.b16 %v1279
      %v1376 = vunpack.c.l.b16 %v1280
      %v1377 = vunpack.c.l.b16 %v1281
      %v1378 = vunpack.c.l.b16 %v1282
      %v1379 = vunpack.c.l.b16 %v1283
      %v1380 = vunpack.c.l.b16 %v1284
      %v1381 = vunpack.c.l.b16 %v1285
      %v1382 = vunpack.c.l.b16 %v1286
      %v1383 = vunpack.c.l.b16 %v1287
      %v1384 = vunpack.c.l.b16 %v1288
      %v1385 = vunpack.c.l.b16 %v1289
      %v1386 = vunpack.c.l.b16 %v1290
      %v1387 = vunpack.c.l.b16 %v1291
      %v1388 = vunpack.c.l.b16 %v1292
      %v1389 = vunpack.c.l.b16 %v1293
      %v1390 = vunpack.c.l.b16 %v1294
      %v1391 = vunpack.c.l.b16 %v1295
      %v1392 = vunpack.c.l.b16 %v1296
      %v1393 = vunpack.c.l.b16 %v1297
      %v1394 = vunpack.c.l.b16 %v1298
      %v1395 = vunpack.c.l.b16 %v1299
      %v1396 = vunpack.c.l.b16 %v1300
      %v1397 = vunpack.c.l.b16 %v1301
      %v1398 = vunpack.c.l.b16 %v1302
      %v1399 = vunpack.c.l.b16 %v1303
      %v1400 = vunpack.c.l.b16 %v1304
      %v1401 = vunpack.c.l.b16 %v1305
      %v1402 = vpack.c.b16 %v1355, %v1354
      %v1403 = vpack.c.b16 %v1357, %v1356
      %v1404 = vpack.c.b16 %v1359, %v1358
      %v1405 = vpack.c.b16 %v1361, %v1360
      %v1406 = vpack.c.b16 %v1363, %v1362
      %v1407 = vpack.c.b16 %v1365, %v1364
      %v1408 = vpack.c.b16 %v1367, %v1366
      %v1409 = vpack.c.b16 %v1369, %v1368
      %v1410 = vpack.c.b16 %v1371, %v1370
      %v1411 = vpack.c.b16 %v1373, %v1372
      %v1412 = vpack.c.b16 %v1375, %v1374
      %v1413 = vpack.c.b16 %v1377, %v1376
      %v1414 = vpack.c.b16 %v1379, %v1378
      %v1415 = vpack.c.b16 %v1381, %v1380
      %v1416 = vpack.c.b16 %v1383, %v1382
      %v1417 = vpack.c.b16 %v1385, %v1384
      %v1418 = vpack.c.b16 %v1387, %v1386
      %v1419 = vpack.c.b16 %v1389, %v1388
      %v1420 = vpack.c.b16 %v1391, %v1390
      %v1421 = vpack.c.b16 %v1393, %v1392
      %v1422 = vpack.c.b16 %v1395, %v1394
      %v1423 = vpack.c.b16 %v1397, %v1396
      %v1424 = vpack.c.b16 %v1399, %v1398
      %v1425 = vpack.c.b16 %v1401, %v1400
      %1450 = vmatprep.subr.bf16.mxu0 0
      %1451 = vmatpush1.bf16.msra.mxu0 %v1402
      %1452 = vmatprep.subr.bf16.mxu0 0
      %1453 = vmatpush1.bf16.msra.mxu0 %v1403
      %1454 = vmatprep.subr.bf16.mxu0 0
      %1455 = vmatpush1.bf16.msra.mxu0 %v1404
      %1456 = vmatprep.subr.bf16.mxu0 0
      %1457 = vmatpush1.bf16.msra.mxu0 %v1405
      %1458 = vmatprep.subr.bf16.mxu0 0
      %1459 = vmatpush1.bf16.msra.mxu0 %v1406
      %1460 = vmatprep.subr.bf16.mxu0 0
      %1461 = vmatpush1.bf16.msra.mxu0 %v1407
      %1462 = vmatprep.subr.bf16.mxu0 0
      %1463 = vmatpush1.bf16.msra.mxu0 %v1408
      %1464 = vmatprep.subr.bf16.mxu0 0
      %1465 = vmatpush1.bf16.msra.mxu0 %v1409
      %1466 = vmatprep.subr.bf16.mxu0 0
      %1467 = vmatpush1.bf16.msra.mxu0 %v1410
      %1468 = vmatprep.subr.bf16.mxu0 0
      %1469 = vmatpush1.bf16.msra.mxu0 %v1411
      %1470 = vmatprep.subr.bf16.mxu0 0
      %1471 = vmatpush1.bf16.msra.mxu0 %v1412
      %1472 = vmatprep.subr.bf16.mxu0 0
      %1473 = vmatpush1.bf16.msra.mxu0 %v1413
      %1474 = vmatprep.subr.bf16.mxu0 0
      %1475 = vmatpush1.bf16.msra.mxu0 %v1414
      %1476 = vmatprep.subr.bf16.mxu0 0
      %1477 = vmatpush1.bf16.msra.mxu0 %v1415
      %1478 = vmatprep.subr.bf16.mxu0 0
      %1479 = vmatpush1.bf16.msra.mxu0 %v1416
      %1480 = vmatprep.subr.bf16.mxu0 0
      %1481 = vmatpush1.bf16.msra.mxu0 %v1417
      %1482 = vmatprep.mubr.bf16.mxu0 %v1133
      %1483 = vmatmul.mubr.bf16.gmra.mrb[0].mxu0 %v1132
      %v1484 = vpop.f32.mrb[0].mxu0
      %v1485 = vadd.f32 0.0, %v1484
      %v1486 = vpop.f32.mrb[0].mxu0
      %v1487 = vpop.f32.mrb[0].mxu0
      %v1488 = vadd.f32 0.0, %v1487
      %v1489 = vpop.f32.mrb[0].mxu0
      %1490 = vmatprep.mubr.bf16.mxu0 %v1136
      %1491 = vmatmul.mubr.bf16.gmra.mrb[0].mxu0 %v1135
      %v1492 = vpop.f32.mrb[0].mxu0
      %v1493 = vadd.f32 0.0, %v1492
      %v1494 = vpop.f32.mrb[0].mxu0
      %v1495 = vpop.f32.mrb[0].mxu0
      %v1496 = vadd.f32 0.0, %v1495
      %v1497 = vpop.f32.mrb[0].mxu0
      %1498 = vmatprep.mubr.bf16.mxu0 %v1139
      %1499 = vmatmul.mubr.bf16.gmra.mrb[0].mxu0 %v1138
      %v1500 = vpop.f32.mrb[0].mxu0
      %v1501 = vadd.f32 0.0, %v1500
      %v1502 = vpop.f32.mrb[0].mxu0
      %v1503 = vpop.f32.mrb[0].mxu0
      %v1504 = vadd.f32 0.0, %v1503
      %v1505 = vpop.f32.mrb[0].mxu0
      %1506 = vmatprep.mubr.bf16.mxu0 %v1142
      %1507 = vmatmul.mubr.bf16.gmra.mrb[0].mxu0 %v1141
      %v1508 = vpop.f32.mrb[0].mxu0
      %v1509 = vadd.f32 0.0, %v1508
      %v1510 = vpop.f32.mrb[0].mxu0
      %v1511 = vpop.f32.mrb[0].mxu0
      %v1512 = vadd.f32 0.0, %v1511
      %v1513 = vpop.f32.mrb[0].mxu0
      %1514 = vmatprep.mubr.bf16.mxu0 %v1145
      %1515 = vmatmul.mubr.bf16.gmra.mrb[0].mxu0 %v1144
      %v1516 = vpop.f32.mrb[0].mxu0
      %v1517 = vadd.f32 0.0, %v1516
      %v1518 = vpop.f32.mrb[0].mxu0
      %v1519 = vpop.f32.mrb[0].mxu0
      %v1520 = vadd.f32 0.0, %v1519
      %v1521 = vpop.f32.mrb[0].mxu0
      %1522 = vmatprep.mubr.bf16.mxu0 %v1148
      %1523 = vmatmul.mubr.bf16.gmra.mrb[0].mxu0 %v1147
      %v1524 = vpop.f32.mrb[0].mxu0
      %v1525 = vadd.f32 0.0, %v1524
      %v1526 = vpop.f32.mrb[0].mxu0
      %v1527 = vpop.f32.mrb[0].mxu0
      %v1528 = vadd.f32 0.0, %v1527
      %v1529 = vpop.f32.mrb[0].mxu0
      %1530 = vmatprep.mubr.bf16.mxu0 %v1151
      %1531 = vmatmul.mubr.bf16.gmra.mrb[0].mxu0 %v1150
      %v1532 = vpop.f32.mrb[0].mxu0
      %v1533 = vadd.f32 0.0, %v1532
      %v1534 = vpop.f32.mrb[0].mxu0
      %v1535 = vpop.f32.mrb[0].mxu0
      %v1536 = vadd.f32 0.0, %v1535
      %v1537 = vpop.f32.mrb[0].mxu0
      %1538 = vmatprep.mubr.bf16.mxu0 %v1154
      %1539 = vmatmul.mubr.bf16.gmra.mrb[0].mxu0 %v1153
      %v1540 = vpop.f32.mrb[0].mxu0
      %v1541 = vadd.f32 0.0, %v1540
      %v1542 = vpop.f32.mrb[0].mxu0
      %v1543 = vpop.f32.mrb[0].mxu0
      %v1544 = vadd.f32 0.0, %v1543
      %v1545 = vpop.f32.mrb[0].mxu0
      %1546 = vmatprep.mubr.bf16.mxu0 %v1157
      %1547 = vmatmul.mubr.bf16.gmra.mrb[0].mxu0 %v1156
      %v1548 = vpop.f32.mrb[0].mxu0
      %v1549 = vadd.f32 0.0, %v1548
      %v1550 = vpop.f32.mrb[0].mxu0
      %v1551 = vpop.f32.mrb[0].mxu0
      %v1552 = vadd.f32 0.0, %v1551
      %v1553 = vpop.f32.mrb[0].mxu0
      %1554 = vmatprep.mubr.bf16.mxu0 %v1160
      %1555 = vmatmul.mubr.bf16.gmra.mrb[0].mxu0 %v1159
      %v1556 = vpop.f32.mrb[0].mxu0
      %v1557 = vadd.f32 0.0, %v1556
      %v1558 = vpop.f32.mrb[0].mxu0
      %v1559 = vpop.f32.mrb[0].mxu0
      %v1560 = vadd.f32 0.0, %v1559
      %v1561 = vpop.f32.mrb[0].mxu0
      %1562 = vmatprep.mubr.bf16.mxu0 %v1163
      %1563 = vmatmul.mubr.bf16.gmra.mrb[0].mxu0 %v1162
      %v1564 = vpop.f32.mrb[0].mxu0
      %v1565 = vadd.f32 0.0, %v1564
      %v1566 = vpop.f32.mrb[0].mxu0
      %v1567 = vpop.f32.mrb[0].mxu0
      %v1568 = vadd.f32 0.0, %v1567
      %v1569 = vpop.f32.mrb[0].mxu0
      %1570 = vmatprep.mubr.bf16.mxu0 %v1166
      %1571 = vmatmul.mubr.bf16.gmra.mrb[0].mxu0 %v1165
      %v1572 = vpop.f32.mrb[0].mxu0
      %v1573 = vadd.f32 0.0, %v1572
      %v1574 = vpop.f32.mrb[0].mxu0
      %v1575 = vpop.f32.mrb[0].mxu0
      %v1576 = vadd.f32 0.0, %v1575
      %v1577 = vpop.f32.mrb[0].mxu0
      %1578 = vmatprep.mubr.bf16.mxu0 %v1169
      %1579 = vmatmul.mubr.bf16.gmra.mrb[0].mxu0 %v1168
      %v1580 = vpop.f32.mrb[0].mxu0
      %v1581 = vadd.f32 0.0, %v1580
      %v1582 = vpop.f32.mrb[0].mxu0
      %v1583 = vpop.f32.mrb[0].mxu0
      %v1584 = vadd.f32 0.0, %v1583
      %v1585 = vpop.f32.mrb[0].mxu0
      %1586 = vmatprep.mubr.bf16.mxu0 %v1172
      %1587 = vmatmul.mubr.bf16.gmra.mrb[0].mxu0 %v1171
      %v1588 = vpop.f32.mrb[0].mxu0
      %v1589 = vadd.f32 0.0, %v1588
      %v1590 = vpop.f32.mrb[0].mxu0
      %v1591 = vpop.f32.mrb[0].mxu0
      %v1592 = vadd.f32 0.0, %v1591
      %v1593 = vpop.f32.mrb[0].mxu0
      %1594 = vmatprep.mubr.bf16.mxu0 %v1175
      %1595 = vmatmul.mubr.bf16.gmra.mrb[0].mxu0 %v1174
      %v1596 = vpop.f32.mrb[0].mxu0
      %v1597 = vadd.f32 0.0, %v1596
      %v1598 = vpop.f32.mrb[0].mxu0
      %v1599 = vpop.f32.mrb[0].mxu0
      %v1600 = vadd.f32 0.0, %v1599
      %v1601 = vpop.f32.mrb[0].mxu0
      %1602 = vmatprep.mubr.bf16.mxu0 %v1255
      %1603 = vmatmul.mubr.bf16.gmra.mrb[0].mxu0 %v1254
      %v1604 = vpop.f32.mrb[0].mxu0
      %v1605 = vadd.f32 0.0, %v1604
      %v1606 = vpop.f32.mrb[0].mxu0
      %v1607 = vpop.f32.mrb[0].mxu0
      %v1608 = vadd.f32 0.0, %v1607
      %v1609 = vpop.f32.mrb[0].mxu0
      %1610 = vdwg.mxu0
      %1611 = vmatprep.subr.bf16.mxu0 0
      %1612 = vmatpush1.bf16.msra.mxu0 %v1418
      %1613 = vmatprep.subr.bf16.mxu0 0
      %1614 = vmatpush1.bf16.msra.mxu0 %v1419
      %1615 = vmatprep.subr.bf16.mxu0 0
      %1616 = vmatpush1.bf16.msra.mxu0 %v1420
      %1617 = vmatprep.subr.bf16.mxu0 0
      %1618 = vmatpush1.bf16.msra.mxu0 %v1421
      %1619 = vmatprep.subr.bf16.mxu0 0
      %1620 = vmatpush1.bf16.msra.mxu0 %v1422
      %1621 = vmatprep.subr.bf16.mxu0 0
      %1622 = vmatpush1.bf16.msra.mxu0 %v1423
      %1623 = vmatprep.subr.bf16.mxu0 0
      %1624 = vmatpush1.bf16.msra.mxu0 %v1424
      %1625 = vmatprep.subr.bf16.mxu0 0
      %1626 = vmatpush1.bf16.msra.mxu0 %v1425
      %1627 = vmatprep.subr.bf16.mxu0 0
      %1628 = vmatpush1.bf16.msra.mxu0 0
      %1629 = vmatprep.subr.bf16.mxu0 0
      %1630 = vmatpush1.bf16.msra.mxu0 0
      %1631 = vmatprep.subr.bf16.mxu0 0
      %1632 = vmatpush1.bf16.msra.mxu0 0
      %1633 = vmatprep.subr.bf16.mxu0 0
      %1634 = vmatpush1.bf16.msra.mxu0 0
      %1635 = vmatprep.subr.bf16.mxu0 0
      %1636 = vmatpush1.bf16.msra.mxu0 0
      %1637 = vmatprep.subr.bf16.mxu0 0
      %1638 = vmatpush1.bf16.msra.mxu0 0
      %1639 = vmatprep.subr.bf16.mxu0 0
      %1640 = vmatpush1.bf16.msra.mxu0 0
      %1641 = vmatprep.subr.bf16.mxu0 0
      %1642 = vmatpush1.bf16.msra.mxu0 0
      %1643 = vmatprep.mubr.bf16.mxu0 0
      %1644 = vmatmul.mubr.bf16.gmra.mrb[0].mxu0 %v1134
      %v1645 = vpop.f32.mrb[0].mxu0
      %v1646 = vadd.f32 %v1485, %v1645
      %v1647 = vpop.f32.mrb[0].mxu0
      %v1648 = vpop.f32.mrb[0].mxu0
      %v1649 = vadd.f32 %v1488, %v1648
      %v1650 = vpop.f32.mrb[0].mxu0
      %1651 = vmatprep.mubr.bf16.mxu0 0
      %1652 = vmatmul.mubr.bf16.gmra.mrb[0].mxu0 %v1137
      %v1653 = vpop.f32.mrb[0].mxu0
      %v1654 = vadd.f32 %v1493, %v1653
      %v1655 = vpop.f32.mrb[0].mxu0
      %v1656 = vpop.f32.mrb[0].mxu0
      %v1657 = vadd.f32 %v1496, %v1656
      %v1658 = vpop.f32.mrb[0].mxu0
      %1659 = vmatprep.mubr.bf16.mxu0 0
      %1660 = vmatmul.mubr.bf16.gmra.mrb[0].mxu0 %v1140
      %v1661 = vpop.f32.mrb[0].mxu0
      %v1662 = vadd.f32 %v1501, %v1661
      %v1663 = vpop.f32.mrb[0].mxu0
      %v1664 = vpop.f32.mrb[0].mxu0
      %v1665 = vadd.f32 %v1504, %v1664
      %v1666 = vpop.f32.mrb[0].mxu0
      %1667 = vmatprep.mubr.bf16.mxu0 0
      %1668 = vmatmul.mubr.bf16.gmra.mrb[0].mxu0 %v1143
      %v1669 = vpop.f32.mrb[0].mxu0
      %v1670 = vadd.f32 %v1509, %v1669
      %v1671 = vpop.f32.mrb[0].mxu0
      %v1672 = vpop.f32.mrb[0].mxu0
      %v1673 = vadd.f32 %v1512, %v1672
      %v1674 = vpop.f32.mrb[0].mxu0
      %1675 = vmatprep.mubr.bf16.mxu0 0
      %1676 = vmatmul.mubr.bf16.gmra.mrb[0].mxu0 %v1146
      %v1677 = vpop.f32.mrb[0].mxu0
      %v1678 = vadd.f32 %v1517, %v1677
      %v1679 = vpop.f32.mrb[0].mxu0
      %v1680 = vpop.f32.mrb[0].mxu0
      %v1681 = vadd.f32 %v1520, %v1680
      %v1682 = vpop.f32.mrb[0].mxu0
      %1683 = vmatprep.mubr.bf16.mxu0 0
      %1684 = vmatmul.mubr.bf16.gmra.mrb[0].mxu0 %v1149
      %v1685 = vpop.f32.mrb[0].mxu0
      %v1686 = vadd.f32 %v1525, %v1685
      %v1687 = vpop.f32.mrb[0].mxu0
      %v1688 = vpop.f32.mrb[0].mxu0
      %v1689 = vadd.f32 %v1528, %v1688
      %v1690 = vpop.f32.mrb[0].mxu0
      %1691 = vmatprep.mubr.bf16.mxu0 0
      %1692 = vmatmul.mubr.bf16.gmra.mrb[0].mxu0 %v1152
      %v1693 = vpop.f32.mrb[0].mxu0
      %v1694 = vadd.f32 %v1533, %v1693
      %v1695 = vpop.f32.mrb[0].mxu0
      %v1696 = vpop.f32.mrb[0].mxu0
      %v1697 = vadd.f32 %v1536, %v1696
      %v1698 = vpop.f32.mrb[0].mxu0
      %1699 = vmatprep.mubr.bf16.mxu0 0
      %1700 = vmatmul.mubr.bf16.gmra.mrb[0].mxu0 %v1155
      %v1701 = vpop.f32.mrb[0].mxu0
      %v1702 = vadd.f32 %v1541, %v1701
      %v1703 = vpop.f32.mrb[0].mxu0
      %v1704 = vpop.f32.mrb[0].mxu0
      %v1705 = vadd.f32 %v1544, %v1704
      %v1706 = vpop.f32.mrb[0].mxu0
      %1707 = vmatprep.mubr.bf16.mxu0 0
      %1708 = vmatmul.mubr.bf16.gmra.mrb[0].mxu0 %v1158
      %v1709 = vpop.f32.mrb[0].mxu0
      %v1710 = vadd.f32 %v1549, %v1709
      %v1711 = vpop.f32.mrb[0].mxu0
      %v1712 = vpop.f32.mrb[0].mxu0
      %v1713 = vadd.f32 %v1552, %v1712
      %v1714 = vpop.f32.mrb[0].mxu0
      %1715 = vmatprep.mubr.bf16.mxu0 0
      %1716 = vmatmul.mubr.bf16.gmra.mrb[0].mxu0 %v1161
      %v1717 = vpop.f32.mrb[0].mxu0
      %v1718 = vadd.f32 %v1557, %v1717
      %v1719 = vpop.f32.mrb[0].mxu0
      %v1720 = vpop.f32.mrb[0].mxu0
      %v1721 = vadd.f32 %v1560, %v1720
      %v1722 = vpop.f32.mrb[0].mxu0
      %1723 = vmatprep.mubr.bf16.mxu0 0
      %1724 = vmatmul.mubr.bf16.gmra.mrb[0].mxu0 %v1164
      %v1725 = vpop.f32.mrb[0].mxu0
      %v1726 = vadd.f32 %v1565, %v1725
      %v1727 = vpop.f32.mrb[0].mxu0
      %v1728 = vpop.f32.mrb[0].mxu0
      %v1729 = vadd.f32 %v1568, %v1728
      %v1730 = vpop.f32.mrb[0].mxu0
      %1731 = vmatprep.mubr.bf16.mxu0 0
      %1732 = vmatmul.mubr.bf16.gmra.mrb[0].mxu0 %v1167
      %v1733 = vpop.f32.mrb[0].mxu0
      %v1734 = vadd.f32 %v1573, %v1733
      %v1735 = vpop.f32.mrb[0].mxu0
      %v1736 = vpop.f32.mrb[0].mxu0
      %v1737 = vadd.f32 %v1576, %v1736
      %v1738 = vpop.f32.mrb[0].mxu0
      %1739 = vmatprep.mubr.bf16.mxu0 0
      %1740 = vmatmul.mubr.bf16.gmra.mrb[0].mxu0 %v1170
      %v1741 = vpop.f32.mrb[0].mxu0
      %v1742 = vadd.f32 %v1581, %v1741
      %v1743 = vpop.f32.mrb[0].mxu0
      %v1744 = vpop.f32.mrb[0].mxu0
      %v1745 = vadd.f32 %v1584, %v1744
      %v1746 = vpop.f32.mrb[0].mxu0
      %1747 = vmatprep.mubr.bf16.mxu0 0
      %1748 = vmatmul.mubr.bf16.gmra.mrb[0].mxu0 %v1173
      %v1749 = vpop.f32.mrb[0].mxu0
      %v1750 = vadd.f32 %v1589, %v1749
      %v1751 = vpop.f32.mrb[0].mxu0
      %v1752 = vpop.f32.mrb[0].mxu0
      %v1753 = vadd.f32 %v1592, %v1752
      %v1754 = vpop.f32.mrb[0].mxu0
      %1755 = vmatprep.mubr.bf16.mxu0 0
      %1756 = vmatmul.mubr.bf16.gmra.mrb[0].mxu0 %v1176
      %v1757 = vpop.f32.mrb[0].mxu0
      %v1758 = vadd.f32 %v1597, %v1757
      %v1759 = vpop.f32.mrb[0].mxu0
      %v1760 = vpop.f32.mrb[0].mxu0
      %v1761 = vadd.f32 %v1600, %v1760
      %v1762 = vpop.f32.mrb[0].mxu0
      %1763 = vmatprep.mubr.bf16.mxu0 0
      %1764 = vmatmul.mubr.bf16.gmra.mrb[0].mxu0 %v1256
      %v1765 = vpop.f32.mrb[0].mxu0
      %v1766 = vadd.f32 %v1605, %v1765
      %v1767 = vpop.f32.mrb[0].mxu0
      %v1768 = vpop.f32.mrb[0].mxu0
      %v1769 = vadd.f32 %v1608, %v1768
      %v1770 = vpop.f32.mrb[0].mxu0
      %1771 = vdwg.mxu0
      %v1820 = vunpack.c.l.b16 %v1177
      %v1821 = vunpack.c.l.b16 %v1178
      %v1822 = vunpack.c.l.b16 %v1179
      %v1823 = vunpack.c.l.b16 %v1180
      %v1824 = vunpack.c.l.b16 %v1181
      %v1825 = vunpack.c.l.b16 %v1182
      %v1826 = vunpack.c.l.b16 %v1183
      %v1827 = vunpack.c.l.b16 %v1184
      %v1828 = vunpack.c.l.b16 %v1185
      %v1829 = vunpack.c.l.b16 %v1186
      %v1830 = vunpack.c.l.b16 %v1187
      %v1831 = vunpack.c.l.b16 %v1188
      %v1832 = vunpack.c.l.b16 %v1189
      %v1833 = vunpack.c.l.b16 %v1190
      %v1834 = vunpack.c.l.b16 %v1191
      %v1835 = vunpack.c.l.b16 %v1192
      %v1836 = vunpack.c.l.b16 %v1193
      %v1837 = vunpack.c.l.b16 %v1194
      %v1838 = vunpack.c.l.b16 %v1195
      %v1839 = vunpack.c.l.b16 %v1196
      %v1840 = vunpack.c.l.b16 %v1197
      %v1841 = vunpack.c.l.b16 %v1198
      %v1842 = vunpack.c.l.b16 %v1199
      %v1843 = vunpack.c.l.b16 %v1200
      %v1844 = vunpack.c.l.b16 %v1201
      %v1845 = vunpack.c.l.b16 %v1202
      %v1846 = vunpack.c.l.b16 %v1203
      %v1847 = vunpack.c.l.b16 %v1204
      %v1848 = vunpack.c.l.b16 %v1205
      %v1849 = vunpack.c.l.b16 %v1206
      %v1850 = vunpack.c.l.b16 %v1207
      %v1851 = vunpack.c.l.b16 %v1208
      %v1852 = vunpack.c.l.b16 %v1209
      %v1853 = vunpack.c.l.b16 %v1210
      %v1854 = vunpack.c.l.b16 %v1211
      %v1855 = vunpack.c.l.b16 %v1212
      %v1856 = vunpack.c.l.b16 %v1213
      %v1857 = vunpack.c.l.b16 %v1214
      %v1858 = vunpack.c.l.b16 %v1215
      %v1859 = vunpack.c.l.b16 %v1216
      %v1860 = vunpack.c.l.b16 %v1217
      %v1861 = vunpack.c.l.b16 %v1218
      %v1862 = vunpack.c.l.b16 %v1219
      %v1863 = vunpack.c.l.b16 %v1220
      %v1864 = vunpack.c.l.b16 %v1221
      %v1865 = vunpack.c.l.b16 %v1222
      %v1866 = vunpack.c.l.b16 %v1223
      %v1867 = vunpack.c.l.b16 %v1224
      %v1868 = vpack.c.b16 %v1821, %v1820
      %v1869 = vpack.c.b16 %v1823, %v1822
      %v1870 = vpack.c.b16 %v1825, %v1824
      %v1871 = vpack.c.b16 %v1827, %v1826
      %v1872 = vpack.c.b16 %v1829, %v1828
      %v1873 = vpack.c.b16 %v1831, %v1830
      %v1874 = vpack.c.b16 %v1833, %v1832
      %v1875 = vpack.c.b16 %v1835, %v1834
      %v1876 = vpack.c.b16 %v1837, %v1836
      %v1877 = vpack.c.b16 %v1839, %v1838
      %v1878 = vpack.c.b16 %v1841, %v1840
      %v1879 = vpack.c.b16 %v1843, %v1842
      %v1880 = vpack.c.b16 %v1845, %v1844
      %v1881 = vpack.c.b16 %v1847, %v1846
      %v1882 = vpack.c.b16 %v1849, %v1848
      %v1883 = vpack.c.b16 %v1851, %v1850
      %v1884 = vpack.c.b16 %v1853, %v1852
      %v1885 = vpack.c.b16 %v1855, %v1854
      %v1886 = vpack.c.b16 %v1857, %v1856
      %v1887 = vpack.c.b16 %v1859, %v1858
      %v1888 = vpack.c.b16 %v1861, %v1860
      %v1889 = vpack.c.b16 %v1863, %v1862
      %v1890 = vpack.c.b16 %v1865, %v1864
      %v1891 = vpack.c.b16 %v1867, %v1866
      %1916 = vmatprep.subr.bf16.mxu0 0
      %1917 = vmatpush1.bf16.msra.mxu0 %v1868
      %1918 = vmatprep.subr.bf16.mxu0 0
      %1919 = vmatpush1.bf16.msra.mxu0 %v1869
      %1920 = vmatprep.subr.bf16.mxu0 0
      %1921 = vmatpush1.bf16.msra.mxu0 %v1870
      %1922 = vmatprep.subr.bf16.mxu0 0
      %1923 = vmatpush1.bf16.msra.mxu0 %v1871
      %1924 = vmatprep.subr.bf16.mxu0 0
      %1925 = vmatpush1.bf16.msra.mxu0 %v1872
      %1926 = vmatprep.subr.bf16.mxu0 0
      %1927 = vmatpush1.bf16.msra.mxu0 %v1873
      %1928 = vmatprep.subr.bf16.mxu0 0
      %1929 = vmatpush1.bf16.msra.mxu0 %v1874
      %1930 = vmatprep.subr.bf16.mxu0 0
      %1931 = vmatpush1.bf16.msra.mxu0 %v1875
      %1932 = vmatprep.subr.bf16.mxu0 0
      %1933 = vmatpush1.bf16.msra.mxu0 %v1876
      %1934 = vmatprep.subr.bf16.mxu0 0
      %1935 = vmatpush1.bf16.msra.mxu0 %v1877
      %1936 = vmatprep.subr.bf16.mxu0 0
      %1937 = vmatpush1.bf16.msra.mxu0 %v1878
      %1938 = vmatprep.subr.bf16.mxu0 0
      %1939 = vmatpush1.bf16.msra.mxu0 %v1879
      %1940 = vmatprep.subr.bf16.mxu0 0
      %1941 = vmatpush1.bf16.msra.mxu0 %v1880
      %1942 = vmatprep.subr.bf16.mxu0 0
      %1943 = vmatpush1.bf16.msra.mxu0 %v1881
      %1944 = vmatprep.subr.bf16.mxu0 0
      %1945 = vmatpush1.bf16.msra.mxu0 %v1882
      %1946 = vmatprep.subr.bf16.mxu0 0
      %1947 = vmatpush1.bf16.msra.mxu0 %v1883
      %1948 = vmatprep.mubr.bf16.mxu0 %v1130
      %1949 = vmatmul.mubr.bf16.gmra.mrb[0].mxu0 %v1129
      %v1950 = vpop.f32.mrb[0].mxu0
      %v1951 = vadd.f32 %v1646, %v1950
      %v1952 = vpop.f32.mrb[0].mxu0
      %v1953 = vpop.f32.mrb[0].mxu0
      %v1954 = vadd.f32 %v1649, %v1953
      %v1955 = vpop.f32.mrb[0].mxu0
      %1956 = vmatprep.mubr.bf16.mxu0 %v1133
      %1957 = vmatmul.mubr.bf16.gmra.mrb[0].mxu0 %v1132
      %v1958 = vpop.f32.mrb[0].mxu0
      %v1959 = vadd.f32 %v1654, %v1958
      %v1960 = vpop.f32.mrb[0].mxu0
      %v1961 = vpop.f32.mrb[0].mxu0
      %v1962 = vadd.f32 %v1657, %v1961
      %v1963 = vpop.f32.mrb[0].mxu0
      %1964 = vmatprep.mubr.bf16.mxu0 %v1136
      %1965 = vmatmul.mubr.bf16.gmra.mrb[0].mxu0 %v1135
      %v1966 = vpop.f32.mrb[0].mxu0
      %v1967 = vadd.f32 %v1662, %v1966
      %v1968 = vpop.f32.mrb[0].mxu0
      %v1969 = vpop.f32.mrb[0].mxu0
      %v1970 = vadd.f32 %v1665, %v1969
      %v1971 = vpop.f32.mrb[0].mxu0
      %1972 = vmatprep.mubr.bf16.mxu0 %v1139
      %1973 = vmatmul.mubr.bf16.gmra.mrb[0].mxu0 %v1138
      %v1974 = vpop.f32.mrb[0].mxu0
      %v1975 = vadd.f32 %v1670, %v1974
      %v1976 = vpop.f32.mrb[0].mxu0
      %v1977 = vpop.f32.mrb[0].mxu0
      %v1978 = vadd.f32 %v1673, %v1977
      %v1979 = vpop.f32.mrb[0].mxu0
      %1980 = vmatprep.mubr.bf16.mxu0 %v1142
      %1981 = vmatmul.mubr.bf16.gmra.mrb[0].mxu0 %v1141
      %v1982 = vpop.f32.mrb[0].mxu0
      %v1983 = vadd.f32 %v1678, %v1982
      %v1984 = vpop.f32.mrb[0].mxu0
      %v1985 = vpop.f32.mrb[0].mxu0
      %v1986 = vadd.f32 %v1681, %v1985
      %v1987 = vpop.f32.mrb[0].mxu0
      %1988 = vmatprep.mubr.bf16.mxu0 %v1145
      %1989 = vmatmul.mubr.bf16.gmra.mrb[0].mxu0 %v1144
      %v1990 = vpop.f32.mrb[0].mxu0
      %v1991 = vadd.f32 %v1686, %v1990
      %v1992 = vpop.f32.mrb[0].mxu0
      %v1993 = vpop.f32.mrb[0].mxu0
      %v1994 = vadd.f32 %v1689, %v1993
      %v1995 = vpop.f32.mrb[0].mxu0
      %1996 = vmatprep.mubr.bf16.mxu0 %v1148
      %1997 = vmatmul.mubr.bf16.gmra.mrb[0].mxu0 %v1147
      %v1998 = vpop.f32.mrb[0].mxu0
      %v1999 = vadd.f32 %v1694, %v1998
      %v2000 = vpop.f32.mrb[0].mxu0
      %v2001 = vpop.f32.mrb[0].mxu0
      %v2002 = vadd.f32 %v1697, %v2001
      %v2003 = vpop.f32.mrb[0].mxu0
      %2004 = vmatprep.mubr.bf16.mxu0 %v1151
      %2005 = vmatmul.mubr.bf16.gmra.mrb[0].mxu0 %v1150
      %v2006 = vpop.f32.mrb[0].mxu0
      %v2007 = vadd.f32 %v1702, %v2006
      %v2008 = vpop.f32.mrb[0].mxu0
      %v2009 = vpop.f32.mrb[0].mxu0
      %v2010 = vadd.f32 %v1705, %v2009
      %v2011 = vpop.f32.mrb[0].mxu0
      %2012 = vmatprep.mubr.bf16.mxu0 %v1154
      %2013 = vmatmul.mubr.bf16.gmra.mrb[0].mxu0 %v1153
      %v2014 = vpop.f32.mrb[0].mxu0
      %v2015 = vadd.f32 %v1710, %v2014
      %v2016 = vpop.f32.mrb[0].mxu0
      %v2017 = vpop.f32.mrb[0].mxu0
      %v2018 = vadd.f32 %v1713, %v2017
      %v2019 = vpop.f32.mrb[0].mxu0
      %2020 = vmatprep.mubr.bf16.mxu0 %v1157
      %2021 = vmatmul.mubr.bf16.gmra.mrb[0].mxu0 %v1156
      %v2022 = vpop.f32.mrb[0].mxu0
      %v2023 = vadd.f32 %v1718, %v2022
      %v2024 = vpop.f32.mrb[0].mxu0
      %v2025 = vpop.f32.mrb[0].mxu0
      %v2026 = vadd.f32 %v1721, %v2025
      %v2027 = vpop.f32.mrb[0].mxu0
      %2028 = vmatprep.mubr.bf16.mxu0 %v1160
      %2029 = vmatmul.mubr.bf16.gmra.mrb[0].mxu0 %v1159
      %v2030 = vpop.f32.mrb[0].mxu0
      %v2031 = vadd.f32 %v1726, %v2030
      %v2032 = vpop.f32.mrb[0].mxu0
      %v2033 = vpop.f32.mrb[0].mxu0
      %v2034 = vadd.f32 %v1729, %v2033
      %v2035 = vpop.f32.mrb[0].mxu0
      %2036 = vmatprep.mubr.bf16.mxu0 %v1163
      %2037 = vmatmul.mubr.bf16.gmra.mrb[0].mxu0 %v1162
      %v2038 = vpop.f32.mrb[0].mxu0
      %v2039 = vadd.f32 %v1734, %v2038
      %v2040 = vpop.f32.mrb[0].mxu0
      %v2041 = vpop.f32.mrb[0].mxu0
      %v2042 = vadd.f32 %v1737, %v2041
      %v2043 = vpop.f32.mrb[0].mxu0
      %2044 = vmatprep.mubr.bf16.mxu0 %v1166
      %2045 = vmatmul.mubr.bf16.gmra.mrb[0].mxu0 %v1165
      %v2046 = vpop.f32.mrb[0].mxu0
      %v2047 = vadd.f32 %v1742, %v2046
      %v2048 = vpop.f32.mrb[0].mxu0
      %v2049 = vpop.f32.mrb[0].mxu0
      %v2050 = vadd.f32 %v1745, %v2049
      %v2051 = vpop.f32.mrb[0].mxu0
      %2052 = vmatprep.mubr.bf16.mxu0 %v1169
      %2053 = vmatmul.mubr.bf16.gmra.mrb[0].mxu0 %v1168
      %v2054 = vpop.f32.mrb[0].mxu0
      %v2055 = vadd.f32 %v1750, %v2054
      %v2056 = vpop.f32.mrb[0].mxu0
      %v2057 = vpop.f32.mrb[0].mxu0
      %v2058 = vadd.f32 %v1753, %v2057
      %v2059 = vpop.f32.mrb[0].mxu0
      %2060 = vmatprep.mubr.bf16.mxu0 %v1172
      %2061 = vmatmul.mubr.bf16.gmra.mrb[0].mxu0 %v1171
      %v2062 = vpop.f32.mrb[0].mxu0
      %v2063 = vadd.f32 %v1758, %v2062
      %v2064 = vpop.f32.mrb[0].mxu0
      %v2065 = vpop.f32.mrb[0].mxu0
      %v2066 = vadd.f32 %v1761, %v2065
      %v2067 = vpop.f32.mrb[0].mxu0
      %2068 = vmatprep.mubr.bf16.mxu0 %v1175
      %2069 = vmatmul.mubr.bf16.gmra.mrb[0].mxu0 %v1174
      %v2070 = vpop.f32.mrb[0].mxu0
      %v2071 = vadd.f32 %v1766, %v2070
      %v2072 = vpop.f32.mrb[0].mxu0
      %v2073 = vpop.f32.mrb[0].mxu0
      %v2074 = vadd.f32 %v1769, %v2073
      %v2075 = vpop.f32.mrb[0].mxu0
      %2076 = vdwg.mxu0
      %2077 = vmatprep.subr.bf16.mxu0 0
      %2078 = vmatpush1.bf16.msra.mxu0 %v1884
      %2079 = vmatprep.subr.bf16.mxu0 0
      %2080 = vmatpush1.bf16.msra.mxu0 %v1885
      %2081 = vmatprep.subr.bf16.mxu0 0
      %2082 = vmatpush1.bf16.msra.mxu0 %v1886
      %2083 = vmatprep.subr.bf16.mxu0 0
      %2084 = vmatpush1.bf16.msra.mxu0 %v1887
      %2085 = vmatprep.subr.bf16.mxu0 0
      %2086 = vmatpush1.bf16.msra.mxu0 %v1888
      %2087 = vmatprep.subr.bf16.mxu0 0
      %2088 = vmatpush1.bf16.msra.mxu0 %v1889
      %2089 = vmatprep.subr.bf16.mxu0 0
      %2090 = vmatpush1.bf16.msra.mxu0 %v1890
      %2091 = vmatprep.subr.bf16.mxu0 0
      %2092 = vmatpush1.bf16.msra.mxu0 %v1891
      %2093 = vmatprep.subr.bf16.mxu0 0
      %2094 = vmatpush1.bf16.msra.mxu0 0
      %2095 = vmatprep.subr.bf16.mxu0 0
      %2096 = vmatpush1.bf16.msra.mxu0 0
      %2097 = vmatprep.subr.bf16.mxu0 0
      %2098 = vmatpush1.bf16.msra.mxu0 0
      %2099 = vmatprep.subr.bf16.mxu0 0
      %2100 = vmatpush1.bf16.msra.mxu0 0
      %2101 = vmatprep.subr.bf16.mxu0 0
      %2102 = vmatpush1.bf16.msra.mxu0 0
      %2103 = vmatprep.subr.bf16.mxu0 0
      %2104 = vmatpush1.bf16.msra.mxu0 0
      %2105 = vmatprep.subr.bf16.mxu0 0
      %2106 = vmatpush1.bf16.msra.mxu0 0
      %2107 = vmatprep.subr.bf16.mxu0 0
      %2108 = vmatpush1.bf16.msra.mxu0 0
      %2109 = vmatprep.mubr.bf16.mxu0 0
      %2110 = vmatmul.mubr.bf16.gmra.mrb[0].mxu0 %v1131
      %v2111 = vpop.f32.mrb[0].mxu0
      %v2112 = vadd.f32 %v1951, %v2111
      %v2113 = vpop.f32.mrb[0].mxu0
      %v2114 = vpop.f32.mrb[0].mxu0
      %v2115 = vadd.f32 %v1954, %v2114
      %v2116 = vpop.f32.mrb[0].mxu0
      %2117 = vmatprep.mubr.bf16.mxu0 0
      %2118 = vmatmul.mubr.bf16.gmra.mrb[0].mxu0 %v1134
      %v2119 = vpop.f32.mrb[0].mxu0
      %v2120 = vadd.f32 %v1959, %v2119
      %v2121 = vpop.f32.mrb[0].mxu0
      %v2122 = vpop.f32.mrb[0].mxu0
      %v2123 = vadd.f32 %v1962, %v2122
      %v2124 = vpop.f32.mrb[0].mxu0
      %2125 = vmatprep.mubr.bf16.mxu0 0
      %2126 = vmatmul.mubr.bf16.gmra.mrb[0].mxu0 %v1137
      %v2127 = vpop.f32.mrb[0].mxu0
      %v2128 = vadd.f32 %v1967, %v2127
      %v2129 = vpop.f32.mrb[0].mxu0
      %v2130 = vpop.f32.mrb[0].mxu0
      %v2131 = vadd.f32 %v1970, %v2130
      %v2132 = vpop.f32.mrb[0].mxu0
      %2133 = vmatprep.mubr.bf16.mxu0 0
      %2134 = vmatmul.mubr.bf16.gmra.mrb[0].mxu0 %v1140
      %v2135 = vpop.f32.mrb[0].mxu0
      %v2136 = vadd.f32 %v1975, %v2135
      %v2137 = vpop.f32.mrb[0].mxu0
      %v2138 = vpop.f32.mrb[0].mxu0
      %v2139 = vadd.f32 %v1978, %v2138
      %v2140 = vpop.f32.mrb[0].mxu0
      %2141 = vmatprep.mubr.bf16.mxu0 0
      %2142 = vmatmul.mubr.bf16.gmra.mrb[0].mxu0 %v1143
      %v2143 = vpop.f32.mrb[0].mxu0
      %v2144 = vadd.f32 %v1983, %v2143
      %v2145 = vpop.f32.mrb[0].mxu0
      %v2146 = vpop.f32.mrb[0].mxu0
      %v2147 = vadd.f32 %v1986, %v2146
      %v2148 = vpop.f32.mrb[0].mxu0
      %2149 = vmatprep.mubr.bf16.mxu0 0
      %2150 = vmatmul.mubr.bf16.gmra.mrb[0].mxu0 %v1146
      %v2151 = vpop.f32.mrb[0].mxu0
      %v2152 = vadd.f32 %v1991, %v2151
      %v2153 = vpop.f32.mrb[0].mxu0
      %v2154 = vpop.f32.mrb[0].mxu0
      %v2155 = vadd.f32 %v1994, %v2154
      %v2156 = vpop.f32.mrb[0].mxu0
      %2157 = vmatprep.mubr.bf16.mxu0 0
      %2158 = vmatmul.mubr.bf16.gmra.mrb[0].mxu0 %v1149
      %v2159 = vpop.f32.mrb[0].mxu0
      %v2160 = vadd.f32 %v1999, %v2159
      %v2161 = vpop.f32.mrb[0].mxu0
      %v2162 = vpop.f32.mrb[0].mxu0
      %v2163 = vadd.f32 %v2002, %v2162
      %v2164 = vpop.f32.mrb[0].mxu0
      %2165 = vmatprep.mubr.bf16.mxu0 0
      %2166 = vmatmul.mubr.bf16.gmra.mrb[0].mxu0 %v1152
      %v2167 = vpop.f32.mrb[0].mxu0
      %v2168 = vadd.f32 %v2007, %v2167
      %v2169 = vpop.f32.mrb[0].mxu0
      %v2170 = vpop.f32.mrb[0].mxu0
      %v2171 = vadd.f32 %v2010, %v2170
      %v2172 = vpop.f32.mrb[0].mxu0
      %2173 = vmatprep.mubr.bf16.mxu0 0
      %2174 = vmatmul.mubr.bf16.gmra.mrb[0].mxu0 %v1155
      %v2175 = vpop.f32.mrb[0].mxu0
      %v2176 = vadd.f32 %v2015, %v2175
      %v2177 = vpop.f32.mrb[0].mxu0
      %v2178 = vpop.f32.mrb[0].mxu0
      %v2179 = vadd.f32 %v2018, %v2178
      %v2180 = vpop.f32.mrb[0].mxu0
      %2181 = vmatprep.mubr.bf16.mxu0 0
      %2182 = vmatmul.mubr.bf16.gmra.mrb[0].mxu0 %v1158
      %v2183 = vpop.f32.mrb[0].mxu0
      %v2184 = vadd.f32 %v2023, %v2183
      %v2185 = vpop.f32.mrb[0].mxu0
      %v2186 = vpop.f32.mrb[0].mxu0
      %v2187 = vadd.f32 %v2026, %v2186
      %v2188 = vpop.f32.mrb[0].mxu0
      %2189 = vmatprep.mubr.bf16.mxu0 0
      %2190 = vmatmul.mubr.bf16.gmra.mrb[0].mxu0 %v1161
      %v2191 = vpop.f32.mrb[0].mxu0
      %v2192 = vadd.f32 %v2031, %v2191
      %v2193 = vpop.f32.mrb[0].mxu0
      %v2194 = vpop.f32.mrb[0].mxu0
      %v2195 = vadd.f32 %v2034, %v2194
      %v2196 = vpop.f32.mrb[0].mxu0
      %2197 = vmatprep.mubr.bf16.mxu0 0
      %2198 = vmatmul.mubr.bf16.gmra.mrb[0].mxu0 %v1164
      %v2199 = vpop.f32.mrb[0].mxu0
      %v2200 = vadd.f32 %v2039, %v2199
      %v2201 = vpop.f32.mrb[0].mxu0
      %v2202 = vpop.f32.mrb[0].mxu0
      %v2203 = vadd.f32 %v2042, %v2202
      %v2204 = vpop.f32.mrb[0].mxu0
      %2205 = vmatprep.mubr.bf16.mxu0 0
      %2206 = vmatmul.mubr.bf16.gmra.mrb[0].mxu0 %v1167
      %v2207 = vpop.f32.mrb[0].mxu0
      %v2208 = vadd.f32 %v2047, %v2207
      %v2209 = vpop.f32.mrb[0].mxu0
      %v2210 = vpop.f32.mrb[0].mxu0
      %v2211 = vadd.f32 %v2050, %v2210
      %v2212 = vpop.f32.mrb[0].mxu0
      %2213 = vmatprep.mubr.bf16.mxu0 0
      %2214 = vmatmul.mubr.bf16.gmra.mrb[0].mxu0 %v1170
      %v2215 = vpop.f32.mrb[0].mxu0
      %v2216 = vadd.f32 %v2055, %v2215
      %v2217 = vpop.f32.mrb[0].mxu0
      %v2218 = vpop.f32.mrb[0].mxu0
      %v2219 = vadd.f32 %v2058, %v2218
      %v2220 = vpop.f32.mrb[0].mxu0
      %2221 = vmatprep.mubr.bf16.mxu0 0
      %2222 = vmatmul.mubr.bf16.gmra.mrb[0].mxu0 %v1173
      %v2223 = vpop.f32.mrb[0].mxu0
      %v2224 = vadd.f32 %v2063, %v2223
      %v2225 = vpop.f32.mrb[0].mxu0
      %v2226 = vpop.f32.mrb[0].mxu0
      %v2227 = vadd.f32 %v2066, %v2226
      %v2228 = vpop.f32.mrb[0].mxu0
      %2229 = vmatprep.mubr.bf16.mxu0 0
      %2230 = vmatmul.mubr.bf16.gmra.mrb[0].mxu0 %v1176
      %v2231 = vpop.f32.mrb[0].mxu0
      %v2232 = vadd.f32 %v2071, %v2231
      %v2233 = vpop.f32.mrb[0].mxu0
      %v2234 = vpop.f32.mrb[0].mxu0
      %v2235 = vadd.f32 %v2074, %v2234
      %v2236 = vpop.f32.mrb[0].mxu0
      %2237 = vdwg.mxu0
      %v2240 = vrot.slane %v657, 1
      %v2241 = vrot.slane %v658, 1
      %v2242 = vsel %vm691, %v2240, %v2241
      %v2243 = vrot.slane %v657, 2
      %v2244 = vrot.slane %v658, 2
      %v2245 = vsel %vm741, %v2243, %v2244
      %v2246 = vsel %vm741, %v2244, %v745
      %v2247 = vrot.slane %v657, 7
      %v2248 = vsel %vm807, %v808, %v2247
      %v2249 = vrot.slane %v2240, 7
      %v2250 = vrot.slane %v2242, 7
      %v2251 = vsel %vm807, %v2249, %v2250
      %v2252 = vrot.slane %v2243, 7
      %v2253 = vrot.slane %v2245, 7
      %v2254 = vsel %vm807, %v2252, %v2253
      %v2255 = vrot.slane %v658, 7
      %v2256 = vsel %vm807, %v2247, %v2255
      %v2257 = vrot.slane %v2241, 7
      %v2258 = vsel %vm807, %v2250, %v2257
      %v2259 = vrot.slane %v2246, 7
      %v2260 = vsel %vm807, %v2253, %v2259
      %v2267 = vpack.c.bf16 %v2256, %v2248
      %v2268 = vpack.c.bf16 %v2258, %v2251
      %v2269 = vpack.c.bf16 %v2260, %v2254
      %s2270 = scalar_lea.vmem %s3, 384
      %v2271 = vld [vmem:[%s2270] sm:$0xf]
      %v2272 = vld [vmem:[%s2270 + $0x4] sm:$0xf]
      %v2273 = vld [vmem:[%s2270 + $0x8] sm:$0xf]
      %v2274 = vld [vmem:[%s2270 + $0xc] sm:$0xf]
      %v2275 = vld [vmem:[%s2270 + $0x10] sm:$0xf]
      %v2276 = vld [vmem:[%s2270 + $0x14] sm:$0xf]
      %v2277 = vld [vmem:[%s2270 + $0x18] sm:$0xf]
      %v2278 = vld [vmem:[%s2270 + $0x1c] sm:$0xf]
      %v2279 = vld [vmem:[%s2270 + $0x20] sm:$0xf]
      %v2280 = vld [vmem:[%s2270 + $0x24] sm:$0xf]
      %v2281 = vld [vmem:[%s2270 + $0x28] sm:$0xf]
      %v2282 = vld [vmem:[%s2270 + $0x2c] sm:$0xf]
      %v2283 = vld [vmem:[%s2270 + $0x30] sm:$0xf]
      %v2284 = vld [vmem:[%s2270 + $0x34] sm:$0xf]
      %v2285 = vld [vmem:[%s2270 + $0x38] sm:$0xf]
      %v2286 = vld [vmem:[%s2270 + $0x3c] sm:$0xf]
      %v2287 = vld [vmem:[%s2270 + $0x40] sm:$0xf]
      %v2288 = vld [vmem:[%s2270 + $0x44] sm:$0xf]
      %v2289 = vld [vmem:[%s2270 + $0x48] sm:$0xf]
      %v2290 = vld [vmem:[%s2270 + $0x4c] sm:$0xf]
      %v2291 = vld [vmem:[%s2270 + $0x50] sm:$0xf]
      %v2292 = vld [vmem:[%s2270 + $0x54] sm:$0xf]
      %v2293 = vld [vmem:[%s2270 + $0x58] sm:$0xf]
      %v2294 = vld [vmem:[%s2270 + $0x5c] sm:$0xf]
      %v2295 = vld [vmem:[%s2270 + $0x60] sm:$0xf]
      %v2296 = vld [vmem:[%s2270 + $0x64] sm:$0xf]
      %v2297 = vld [vmem:[%s2270 + $0x68] sm:$0xf]
      %v2298 = vld [vmem:[%s2270 + $0x6c] sm:$0xf]
      %v2299 = vld [vmem:[%s2270 + $0x70] sm:$0xf]
      %v2300 = vld [vmem:[%s2270 + $0x74] sm:$0xf]
      %v2301 = vld [vmem:[%s2270 + $0x78] sm:$0xf]
      %v2302 = vld [vmem:[%s2270 + $0x7c] sm:$0xf]
      %v2303 = vld [vmem:[%s2270 + $0x80] sm:$0xf]
      %v2304 = vld [vmem:[%s2270 + $0x84] sm:$0xf]
      %v2305 = vld [vmem:[%s2270 + $0x88] sm:$0xf]
      %v2306 = vld [vmem:[%s2270 + $0x8c] sm:$0xf]
      %v2307 = vld [vmem:[%s2270 + $0x90] sm:$0xf]
      %v2308 = vld [vmem:[%s2270 + $0x94] sm:$0xf]
      %v2309 = vld [vmem:[%s2270 + $0x98] sm:$0xf]
      %v2310 = vld [vmem:[%s2270 + $0x9c] sm:$0xf]
      %v2311 = vld [vmem:[%s2270 + $0xa0] sm:$0xf]
      %v2312 = vld [vmem:[%s2270 + $0xa4] sm:$0xf]
      %v2313 = vld [vmem:[%s2270 + $0xa8] sm:$0xf]
      %v2314 = vld [vmem:[%s2270 + $0xac] sm:$0xf]
      %v2315 = vld [vmem:[%s2270 + $0xb0] sm:$0xf]
      %v2316 = vld [vmem:[%s2270 + $0xb4] sm:$0xf]
      %v2317 = vld [vmem:[%s2270 + $0xb8] sm:$0xf]
      %v2318 = vld [vmem:[%s2270 + $0xbc] sm:$0xf]
      %v2367 = vunpack.c.l.b16 %v2271
      %v2368 = vunpack.c.l.b16 %v2272
      %v2369 = vunpack.c.l.b16 %v2273
      %v2370 = vunpack.c.l.b16 %v2274
      %v2371 = vunpack.c.l.b16 %v2275
      %v2372 = vunpack.c.l.b16 %v2276
      %v2373 = vunpack.c.l.b16 %v2277
      %v2374 = vunpack.c.l.b16 %v2278
      %v2375 = vunpack.c.l.b16 %v2279
      %v2376 = vunpack.c.l.b16 %v2280
      %v2377 = vunpack.c.l.b16 %v2281
      %v2378 = vunpack.c.l.b16 %v2282
      %v2379 = vunpack.c.l.b16 %v2283
      %v2380 = vunpack.c.l.b16 %v2284
      %v2381 = vunpack.c.l.b16 %v2285
      %v2382 = vunpack.c.l.b16 %v2286
      %v2383 = vunpack.c.l.b16 %v2287
      %v2384 = vunpack.c.l.b16 %v2288
      %v2385 = vunpack.c.l.b16 %v2289
      %v2386 = vunpack.c.l.b16 %v2290
      %v2387 = vunpack.c.l.b16 %v2291
      %v2388 = vunpack.c.l.b16 %v2292
      %v2389 = vunpack.c.l.b16 %v2293
      %v2390 = vunpack.c.l.b16 %v2294
      %v2391 = vunpack.c.l.b16 %v2295
      %v2392 = vunpack.c.l.b16 %v2296
      %v2393 = vunpack.c.l.b16 %v2297
      %v2394 = vunpack.c.l.b16 %v2298
      %v2395 = vunpack.c.l.b16 %v2299
      %v2396 = vunpack.c.l.b16 %v2300
      %v2397 = vunpack.c.l.b16 %v2301
      %v2398 = vunpack.c.l.b16 %v2302
      %v2399 = vunpack.c.l.b16 %v2303
      %v2400 = vunpack.c.l.b16 %v2304
      %v2401 = vunpack.c.l.b16 %v2305
      %v2402 = vunpack.c.l.b16 %v2306
      %v2403 = vunpack.c.l.b16 %v2307
      %v2404 = vunpack.c.l.b16 %v2308
      %v2405 = vunpack.c.l.b16 %v2309
      %v2406 = vunpack.c.l.b16 %v2310
      %v2407 = vunpack.c.l.b16 %v2311
      %v2408 = vunpack.c.l.b16 %v2312
      %v2409 = vunpack.c.l.b16 %v2313
      %v2410 = vunpack.c.l.b16 %v2314
      %v2411 = vunpack.c.l.b16 %v2315
      %v2412 = vunpack.c.l.b16 %v2316
      %v2413 = vunpack.c.l.b16 %v2317
      %v2414 = vunpack.c.l.b16 %v2318
      %v2415 = vpack.c.b16 %v2368, %v2367
      %v2416 = vpack.c.b16 %v2370, %v2369
      %v2417 = vpack.c.b16 %v2372, %v2371
      %v2418 = vpack.c.b16 %v2374, %v2373
      %v2419 = vpack.c.b16 %v2376, %v2375
      %v2420 = vpack.c.b16 %v2378, %v2377
      %v2421 = vpack.c.b16 %v2380, %v2379
      %v2422 = vpack.c.b16 %v2382, %v2381
      %v2423 = vpack.c.b16 %v2384, %v2383
      %v2424 = vpack.c.b16 %v2386, %v2385
      %v2425 = vpack.c.b16 %v2388, %v2387
      %v2426 = vpack.c.b16 %v2390, %v2389
      %v2427 = vpack.c.b16 %v2392, %v2391
      %v2428 = vpack.c.b16 %v2394, %v2393
      %v2429 = vpack.c.b16 %v2396, %v2395
      %v2430 = vpack.c.b16 %v2398, %v2397
      %v2431 = vpack.c.b16 %v2400, %v2399
      %v2432 = vpack.c.b16 %v2402, %v2401
      %v2433 = vpack.c.b16 %v2404, %v2403
      %v2434 = vpack.c.b16 %v2406, %v2405
      %v2435 = vpack.c.b16 %v2408, %v2407
      %v2436 = vpack.c.b16 %v2410, %v2409
      %v2437 = vpack.c.b16 %v2412, %v2411
      %v2438 = vpack.c.b16 %v2414, %v2413
      %2463 = vmatprep.subr.bf16.mxu0 0
      %2464 = vmatpush1.bf16.msra.mxu0 %v2415
      %2465 = vmatprep.subr.bf16.mxu0 0
      %2466 = vmatpush1.bf16.msra.mxu0 %v2416
      %2467 = vmatprep.subr.bf16.mxu0 0
      %2468 = vmatpush1.bf16.msra.mxu0 %v2417
      %2469 = vmatprep.subr.bf16.mxu0 0
      %2470 = vmatpush1.bf16.msra.mxu0 %v2418
      %2471 = vmatprep.subr.bf16.mxu0 0
      %2472 = vmatpush1.bf16.msra.mxu0 %v2419
      %2473 = vmatprep.subr.bf16.mxu0 0
      %2474 = vmatpush1.bf16.msra.mxu0 %v2420
      %2475 = vmatprep.subr.bf16.mxu0 0
      %2476 = vmatpush1.bf16.msra.mxu0 %v2421
      %2477 = vmatprep.subr.bf16.mxu0 0
      %2478 = vmatpush1.bf16.msra.mxu0 %v2422
      %2479 = vmatprep.subr.bf16.mxu0 0
      %2480 = vmatpush1.bf16.msra.mxu0 %v2423
      %2481 = vmatprep.subr.bf16.mxu0 0
      %2482 = vmatpush1.bf16.msra.mxu0 %v2424
      %2483 = vmatprep.subr.bf16.mxu0 0
      %2484 = vmatpush1.bf16.msra.mxu0 %v2425
      %2485 = vmatprep.subr.bf16.mxu0 0
      %2486 = vmatpush1.bf16.msra.mxu0 %v2426
      %2487 = vmatprep.subr.bf16.mxu0 0
      %2488 = vmatpush1.bf16.msra.mxu0 %v2427
      %2489 = vmatprep.subr.bf16.mxu0 0
      %2490 = vmatpush1.bf16.msra.mxu0 %v2428
      %2491 = vmatprep.subr.bf16.mxu0 0
      %2492 = vmatpush1.bf16.msra.mxu0 %v2429
      %2493 = vmatprep.subr.bf16.mxu0 0
      %2494 = vmatpush1.bf16.msra.mxu0 %v2430
      %2495 = vmatprep.mubr.bf16.mxu0 %v1136
      %2496 = vmatmul.mubr.bf16.gmra.mrb[0].mxu0 %v1135
      %v2497 = vpop.f32.mrb[0].mxu0
      %v2498 = vadd.f32 0.0, %v2497
      %v2499 = vpop.f32.mrb[0].mxu0
      %v2500 = vpop.f32.mrb[0].mxu0
      %v2501 = vadd.f32 0.0, %v2500
      %v2502 = vpop.f32.mrb[0].mxu0
      %2503 = vmatprep.mubr.bf16.mxu0 %v1139
      %2504 = vmatmul.mubr.bf16.gmra.mrb[0].mxu0 %v1138
      %v2505 = vpop.f32.mrb[0].mxu0
      %v2506 = vadd.f32 0.0, %v2505
      %v2507 = vpop.f32.mrb[0].mxu0
      %v2508 = vpop.f32.mrb[0].mxu0
      %v2509 = vadd.f32 0.0, %v2508
      %v2510 = vpop.f32.mrb[0].mxu0
      %2511 = vmatprep.mubr.bf16.mxu0 %v1142
      %2512 = vmatmul.mubr.bf16.gmra.mrb[0].mxu0 %v1141
      %v2513 = vpop.f32.mrb[0].mxu0
      %v2514 = vadd.f32 0.0, %v2513
      %v2515 = vpop.f32.mrb[0].mxu0
      %v2516 = vpop.f32.mrb[0].mxu0
      %v2517 = vadd.f32 0.0, %v2516
      %v2518 = vpop.f32.mrb[0].mxu0
      %2519 = vmatprep.mubr.bf16.mxu0 %v1145
      %2520 = vmatmul.mubr.bf16.gmra.mrb[0].mxu0 %v1144
      %v2521 = vpop.f32.mrb[0].mxu0
      %v2522 = vadd.f32 0.0, %v2521
      %v2523 = vpop.f32.mrb[0].mxu0
      %v2524 = vpop.f32.mrb[0].mxu0
      %v2525 = vadd.f32 0.0, %v2524
      %v2526 = vpop.f32.mrb[0].mxu0
      %2527 = vmatprep.mubr.bf16.mxu0 %v1148
      %2528 = vmatmul.mubr.bf16.gmra.mrb[0].mxu0 %v1147
      %v2529 = vpop.f32.mrb[0].mxu0
      %v2530 = vadd.f32 0.0, %v2529
      %v2531 = vpop.f32.mrb[0].mxu0
      %v2532 = vpop.f32.mrb[0].mxu0
      %v2533 = vadd.f32 0.0, %v2532
      %v2534 = vpop.f32.mrb[0].mxu0
      %2535 = vmatprep.mubr.bf16.mxu0 %v1151
      %2536 = vmatmul.mubr.bf16.gmra.mrb[0].mxu0 %v1150
      %v2537 = vpop.f32.mrb[0].mxu0
      %v2538 = vadd.f32 0.0, %v2537
      %v2539 = vpop.f32.mrb[0].mxu0
      %v2540 = vpop.f32.mrb[0].mxu0
      %v2541 = vadd.f32 0.0, %v2540
      %v2542 = vpop.f32.mrb[0].mxu0
      %2543 = vmatprep.mubr.bf16.mxu0 %v1154
      %2544 = vmatmul.mubr.bf16.gmra.mrb[0].mxu0 %v1153
      %v2545 = vpop.f32.mrb[0].mxu0
      %v2546 = vadd.f32 0.0, %v2545
      %v2547 = vpop.f32.mrb[0].mxu0
      %v2548 = vpop.f32.mrb[0].mxu0
      %v2549 = vadd.f32 0.0, %v2548
      %v2550 = vpop.f32.mrb[0].mxu0
      %2551 = vmatprep.mubr.bf16.mxu0 %v1157
      %2552 = vmatmul.mubr.bf16.gmra.mrb[0].mxu0 %v1156
      %v2553 = vpop.f32.mrb[0].mxu0
      %v2554 = vadd.f32 0.0, %v2553
      %v2555 = vpop.f32.mrb[0].mxu0
      %v2556 = vpop.f32.mrb[0].mxu0
      %v2557 = vadd.f32 0.0, %v2556
      %v2558 = vpop.f32.mrb[0].mxu0
      %2559 = vmatprep.mubr.bf16.mxu0 %v1160
      %2560 = vmatmul.mubr.bf16.gmra.mrb[0].mxu0 %v1159
      %v2561 = vpop.f32.mrb[0].mxu0
      %v2562 = vadd.f32 0.0, %v2561
      %v2563 = vpop.f32.mrb[0].mxu0
      %v2564 = vpop.f32.mrb[0].mxu0
      %v2565 = vadd.f32 0.0, %v2564
      %v2566 = vpop.f32.mrb[0].mxu0
      %2567 = vmatprep.mubr.bf16.mxu0 %v1163
      %2568 = vmatmul.mubr.bf16.gmra.mrb[0].mxu0 %v1162
      %v2569 = vpop.f32.mrb[0].mxu0
      %v2570 = vadd.f32 0.0, %v2569
      %v2571 = vpop.f32.mrb[0].mxu0
      %v2572 = vpop.f32.mrb[0].mxu0
      %v2573 = vadd.f32 0.0, %v2572
      %v2574 = vpop.f32.mrb[0].mxu0
      %2575 = vmatprep.mubr.bf16.mxu0 %v1166
      %2576 = vmatmul.mubr.bf16.gmra.mrb[0].mxu0 %v1165
      %v2577 = vpop.f32.mrb[0].mxu0
      %v2578 = vadd.f32 0.0, %v2577
      %v2579 = vpop.f32.mrb[0].mxu0
      %v2580 = vpop.f32.mrb[0].mxu0
      %v2581 = vadd.f32 0.0, %v2580
      %v2582 = vpop.f32.mrb[0].mxu0
      %2583 = vmatprep.mubr.bf16.mxu0 %v1169
      %2584 = vmatmul.mubr.bf16.gmra.mrb[0].mxu0 %v1168
      %v2585 = vpop.f32.mrb[0].mxu0
      %v2586 = vadd.f32 0.0, %v2585
      %v2587 = vpop.f32.mrb[0].mxu0
      %v2588 = vpop.f32.mrb[0].mxu0
      %v2589 = vadd.f32 0.0, %v2588
      %v2590 = vpop.f32.mrb[0].mxu0
      %2591 = vmatprep.mubr.bf16.mxu0 %v1172
      %2592 = vmatmul.mubr.bf16.gmra.mrb[0].mxu0 %v1171
      %v2593 = vpop.f32.mrb[0].mxu0
      %v2594 = vadd.f32 0.0, %v2593
      %v2595 = vpop.f32.mrb[0].mxu0
      %v2596 = vpop.f32.mrb[0].mxu0
      %v2597 = vadd.f32 0.0, %v2596
      %v2598 = vpop.f32.mrb[0].mxu0
      %2599 = vmatprep.mubr.bf16.mxu0 %v1175
      %2600 = vmatmul.mubr.bf16.gmra.mrb[0].mxu0 %v1174
      %v2601 = vpop.f32.mrb[0].mxu0
      %v2602 = vadd.f32 0.0, %v2601
      %v2603 = vpop.f32.mrb[0].mxu0
      %v2604 = vpop.f32.mrb[0].mxu0
      %v2605 = vadd.f32 0.0, %v2604
      %v2606 = vpop.f32.mrb[0].mxu0
      %2607 = vmatprep.mubr.bf16.mxu0 %v1255
      %2608 = vmatmul.mubr.bf16.gmra.mrb[0].mxu0 %v1254
      %v2609 = vpop.f32.mrb[0].mxu0
      %v2610 = vadd.f32 0.0, %v2609
      %v2611 = vpop.f32.mrb[0].mxu0
      %v2612 = vpop.f32.mrb[0].mxu0
      %v2613 = vadd.f32 0.0, %v2612
      %v2614 = vpop.f32.mrb[0].mxu0
      %2615 = vmatprep.mubr.bf16.mxu0 %v2268
      %2616 = vmatmul.mubr.bf16.gmra.mrb[0].mxu0 %v2267
      %v2617 = vpop.f32.mrb[0].mxu0
      %v2618 = vadd.f32 0.0, %v2617
      %v2619 = vpop.f32.mrb[0].mxu0
      %v2620 = vpop.f32.mrb[0].mxu0
      %v2621 = vadd.f32 0.0, %v2620
      %v2622 = vpop.f32.mrb[0].mxu0
      %2623 = vdwg.mxu0
      %2624 = vmatprep.subr.bf16.mxu0 0
      %2625 = vmatpush1.bf16.msra.mxu0 %v2431
      %2626 = vmatprep.subr.bf16.mxu0 0
      %2627 = vmatpush1.bf16.msra.mxu0 %v2432
      %2628 = vmatprep.subr.bf16.mxu0 0
      %2629 = vmatpush1.bf16.msra.mxu0 %v2433
      %2630 = vmatprep.subr.bf16.mxu0 0
      %2631 = vmatpush1.bf16.msra.mxu0 %v2434
      %2632 = vmatprep.subr.bf16.mxu0 0
      %2633 = vmatpush1.bf16.msra.mxu0 %v2435
      %2634 = vmatprep.subr.bf16.mxu0 0
      %2635 = vmatpush1.bf16.msra.mxu0 %v2436
      %2636 = vmatprep.subr.bf16.mxu0 0
      %2637 = vmatpush1.bf16.msra.mxu0 %v2437
      %2638 = vmatprep.subr.bf16.mxu0 0
      %2639 = vmatpush1.bf16.msra.mxu0 %v2438
      %2640 = vmatprep.subr.bf16.mxu0 0
      %2641 = vmatpush1.bf16.msra.mxu0 0
      %2642 = vmatprep.subr.bf16.mxu0 0
      %2643 = vmatpush1.bf16.msra.mxu0 0
      %2644 = vmatprep.subr.bf16.mxu0 0
      %2645 = vmatpush1.bf16.msra.mxu0 0
      %2646 = vmatprep.subr.bf16.mxu0 0
      %2647 = vmatpush1.bf16.msra.mxu0 0
      %2648 = vmatprep.subr.bf16.mxu0 0
      %2649 = vmatpush1.bf16.msra.mxu0 0
      %2650 = vmatprep.subr.bf16.mxu0 0
      %2651 = vmatpush1.bf16.msra.mxu0 0
      %2652 = vmatprep.subr.bf16.mxu0 0
      %2653 = vmatpush1.bf16.msra.mxu0 0
      %2654 = vmatprep.subr.bf16.mxu0 0
      %2655 = vmatpush1.bf16.msra.mxu0 0
      %2656 = vmatprep.mubr.bf16.mxu0 0
      %2657 = vmatmul.mubr.bf16.gmra.mrb[0].mxu0 %v1137
      %v2658 = vpop.f32.mrb[0].mxu0
      %v2659 = vadd.f32 %v2498, %v2658
      %v2660 = vpop.f32.mrb[0].mxu0
      %v2661 = vpop.f32.mrb[0].mxu0
      %v2662 = vadd.f32 %v2501, %v2661
      %v2663 = vpop.f32.mrb[0].mxu0
      %2664 = vmatprep.mubr.bf16.mxu0 0
      %2665 = vmatmul.mubr.bf16.gmra.mrb[0].mxu0 %v1140
      %v2666 = vpop.f32.mrb[0].mxu0
      %v2667 = vadd.f32 %v2506, %v2666
      %v2668 = vpop.f32.mrb[0].mxu0
      %v2669 = vpop.f32.mrb[0].mxu0
      %v2670 = vadd.f32 %v2509, %v2669
      %v2671 = vpop.f32.mrb[0].mxu0
      %2672 = vmatprep.mubr.bf16.mxu0 0
      %2673 = vmatmul.mubr.bf16.gmra.mrb[0].mxu0 %v1143
      %v2674 = vpop.f32.mrb[0].mxu0
      %v2675 = vadd.f32 %v2514, %v2674
      %v2676 = vpop.f32.mrb[0].mxu0
      %v2677 = vpop.f32.mrb[0].mxu0
      %v2678 = vadd.f32 %v2517, %v2677
      %v2679 = vpop.f32.mrb[0].mxu0
      %2680 = vmatprep.mubr.bf16.mxu0 0
      %2681 = vmatmul.mubr.bf16.gmra.mrb[0].mxu0 %v1146
      %v2682 = vpop.f32.mrb[0].mxu0
      %v2683 = vadd.f32 %v2522, %v2682
      %v2684 = vpop.f32.mrb[0].mxu0
      %v2685 = vpop.f32.mrb[0].mxu0
      %v2686 = vadd.f32 %v2525, %v2685
      %v2687 = vpop.f32.mrb[0].mxu0
      %2688 = vmatprep.mubr.bf16.mxu0 0
      %2689 = vmatmul.mubr.bf16.gmra.mrb[0].mxu0 %v1149
      %v2690 = vpop.f32.mrb[0].mxu0
      %v2691 = vadd.f32 %v2530, %v2690
      %v2692 = vpop.f32.mrb[0].mxu0
      %v2693 = vpop.f32.mrb[0].mxu0
      %v2694 = vadd.f32 %v2533, %v2693
      %v2695 = vpop.f32.mrb[0].mxu0
      %2696 = vmatprep.mubr.bf16.mxu0 0
      %2697 = vmatmul.mubr.bf16.gmra.mrb[0].mxu0 %v1152
      %v2698 = vpop.f32.mrb[0].mxu0
      %v2699 = vadd.f32 %v2538, %v2698
      %v2700 = vpop.f32.mrb[0].mxu0
      %v2701 = vpop.f32.mrb[0].mxu0
      %v2702 = vadd.f32 %v2541, %v2701
      %v2703 = vpop.f32.mrb[0].mxu0
      %2704 = vmatprep.mubr.bf16.mxu0 0
      %2705 = vmatmul.mubr.bf16.gmra.mrb[0].mxu0 %v1155
      %v2706 = vpop.f32.mrb[0].mxu0
      %v2707 = vadd.f32 %v2546, %v2706
      %v2708 = vpop.f32.mrb[0].mxu0
      %v2709 = vpop.f32.mrb[0].mxu0
      %v2710 = vadd.f32 %v2549, %v2709
      %v2711 = vpop.f32.mrb[0].mxu0
      %2712 = vmatprep.mubr.bf16.mxu0 0
      %2713 = vmatmul.mubr.bf16.gmra.mrb[0].mxu0 %v1158
      %v2714 = vpop.f32.mrb[0].mxu0
      %v2715 = vadd.f32 %v2554, %v2714
      %v2716 = vpop.f32.mrb[0].mxu0
      %v2717 = vpop.f32.mrb[0].mxu0
      %v2718 = vadd.f32 %v2557, %v2717
      %v2719 = vpop.f32.mrb[0].mxu0
      %2720 = vmatprep.mubr.bf16.mxu0 0
      %2721 = vmatmul.mubr.bf16.gmra.mrb[0].mxu0 %v1161
      %v2722 = vpop.f32.mrb[0].mxu0
      %v2723 = vadd.f32 %v2562, %v2722
      %v2724 = vpop.f32.mrb[0].mxu0
      %v2725 = vpop.f32.mrb[0].mxu0
      %v2726 = vadd.f32 %v2565, %v2725
      %v2727 = vpop.f32.mrb[0].mxu0
      %2728 = vmatprep.mubr.bf16.mxu0 0
      %2729 = vmatmul.mubr.bf16.gmra.mrb[0].mxu0 %v1164
      %v2730 = vpop.f32.mrb[0].mxu0
      %v2731 = vadd.f32 %v2570, %v2730
      %v2732 = vpop.f32.mrb[0].mxu0
      %v2733 = vpop.f32.mrb[0].mxu0
      %v2734 = vadd.f32 %v2573, %v2733
      %v2735 = vpop.f32.mrb[0].mxu0
      %2736 = vmatprep.mubr.bf16.mxu0 0
      %2737 = vmatmul.mubr.bf16.gmra.mrb[0].mxu0 %v1167
      %v2738 = vpop.f32.mrb[0].mxu0
      %v2739 = vadd.f32 %v2578, %v2738
      %v2740 = vpop.f32.mrb[0].mxu0
      %v2741 = vpop.f32.mrb[0].mxu0
      %v2742 = vadd.f32 %v2581, %v2741
      %v2743 = vpop.f32.mrb[0].mxu0
      %2744 = vmatprep.mubr.bf16.mxu0 0
      %2745 = vmatmul.mubr.bf16.gmra.mrb[0].mxu0 %v1170
      %v2746 = vpop.f32.mrb[0].mxu0
      %v2747 = vadd.f32 %v2586, %v2746
      %v2748 = vpop.f32.mrb[0].mxu0
      %v2749 = vpop.f32.mrb[0].mxu0
      %v2750 = vadd.f32 %v2589, %v2749
      %v2751 = vpop.f32.mrb[0].mxu0
      %2752 = vmatprep.mubr.bf16.mxu0 0
      %2753 = vmatmul.mubr.bf16.gmra.mrb[0].mxu0 %v1173
      %v2754 = vpop.f32.mrb[0].mxu0
      %v2755 = vadd.f32 %v2594, %v2754
      %v2756 = vpop.f32.mrb[0].mxu0
      %v2757 = vpop.f32.mrb[0].mxu0
      %v2758 = vadd.f32 %v2597, %v2757
      %v2759 = vpop.f32.mrb[0].mxu0
      %2760 = vmatprep.mubr.bf16.mxu0 0
      %2761 = vmatmul.mubr.bf16.gmra.mrb[0].mxu0 %v1176
      %v2762 = vpop.f32.mrb[0].mxu0
      %v2763 = vadd.f32 %v2602, %v2762
      %v2764 = vpop.f32.mrb[0].mxu0
      %v2765 = vpop.f32.mrb[0].mxu0
      %v2766 = vadd.f32 %v2605, %v2765
      %v2767 = vpop.f32.mrb[0].mxu0
      %2768 = vmatprep.mubr.bf16.mxu0 0
      %2769 = vmatmul.mubr.bf16.gmra.mrb[0].mxu0 %v1256
      %v2770 = vpop.f32.mrb[0].mxu0
      %v2771 = vadd.f32 %v2610, %v2770
      %v2772 = vpop.f32.mrb[0].mxu0
      %v2773 = vpop.f32.mrb[0].mxu0
      %v2774 = vadd.f32 %v2613, %v2773
      %v2775 = vpop.f32.mrb[0].mxu0
      %2776 = vmatprep.mubr.bf16.mxu0 0
      %2777 = vmatmul.mubr.bf16.gmra.mrb[0].mxu0 %v2269
      %v2778 = vpop.f32.mrb[0].mxu0
      %v2779 = vadd.f32 %v2618, %v2778
      %v2780 = vpop.f32.mrb[0].mxu0
      %v2781 = vpop.f32.mrb[0].mxu0
      %v2782 = vadd.f32 %v2621, %v2781
      %v2783 = vpop.f32.mrb[0].mxu0
      %2784 = vdwg.mxu0
      %v2785 = vadd.f32 %v2112, %v2659
      %v2786 = vadd.f32 %v2115, %v2662
      %v2787 = vadd.f32 %v2120, %v2667
      %v2788 = vadd.f32 %v2123, %v2670
      %v2789 = vadd.f32 %v2128, %v2675
      %v2790 = vadd.f32 %v2131, %v2678
      %v2791 = vadd.f32 %v2136, %v2683
      %v2792 = vadd.f32 %v2139, %v2686
      %v2793 = vadd.f32 %v2144, %v2691
      %v2794 = vadd.f32 %v2147, %v2694
      %v2795 = vadd.f32 %v2152, %v2699
      %v2796 = vadd.f32 %v2155, %v2702
      %v2797 = vadd.f32 %v2160, %v2707
      %v2798 = vadd.f32 %v2163, %v2710
      %v2799 = vadd.f32 %v2168, %v2715
      %v2800 = vadd.f32 %v2171, %v2718
      %v2801 = vadd.f32 %v2176, %v2723
      %v2802 = vadd.f32 %v2179, %v2726
      %v2803 = vadd.f32 %v2184, %v2731
      %v2804 = vadd.f32 %v2187, %v2734
      %v2805 = vadd.f32 %v2192, %v2739
      %v2806 = vadd.f32 %v2195, %v2742
      %v2807 = vadd.f32 %v2200, %v2747
      %v2808 = vadd.f32 %v2203, %v2750
      %v2809 = vadd.f32 %v2208, %v2755
      %v2810 = vadd.f32 %v2211, %v2758
      %v2811 = vadd.f32 %v2216, %v2763
      %v2812 = vadd.f32 %v2219, %v2766
      %v2813 = vadd.f32 %v2224, %v2771
      %v2814 = vadd.f32 %v2227, %v2774
      %v2815 = vadd.f32 %v2232, %v2779
      %v2816 = vadd.f32 %v2235, %v2782
      %v2817 = vld [vmem:[%s4] sm:$0x1]
      %v2819 = vlaneseq
      %v2820 = vshrl.u32 %v2819, 7
      %v2821 = vsub.s32 0, %v2820
      %v2822 = vrot.slane %v2817, %v2821
      %v2824 = vadd.f32 %v2785, %v2822
      %v2825 = vadd.f32 %v2786, %v2822
      %v2826 = vadd.f32 %v2787, %v2822
      %v2827 = vadd.f32 %v2788, %v2822
      %v2828 = vadd.f32 %v2789, %v2822
      %v2829 = vadd.f32 %v2790, %v2822
      %v2830 = vadd.f32 %v2791, %v2822
      %v2831 = vadd.f32 %v2792, %v2822
      %v2832 = vadd.f32 %v2793, %v2822
      %v2833 = vadd.f32 %v2794, %v2822
      %v2834 = vadd.f32 %v2795, %v2822
      %v2835 = vadd.f32 %v2796, %v2822
      %v2836 = vadd.f32 %v2797, %v2822
      %v2837 = vadd.f32 %v2798, %v2822
      %v2838 = vadd.f32 %v2799, %v2822
      %v2839 = vadd.f32 %v2800, %v2822
      %v2840 = vadd.f32 %v2801, %v2822
      %v2841 = vadd.f32 %v2802, %v2822
      %v2842 = vadd.f32 %v2803, %v2822
      %v2843 = vadd.f32 %v2804, %v2822
      %v2844 = vadd.f32 %v2805, %v2822
      %v2845 = vadd.f32 %v2806, %v2822
      %v2846 = vadd.f32 %v2807, %v2822
      %v2847 = vadd.f32 %v2808, %v2822
      %v2848 = vadd.f32 %v2809, %v2822
      %v2849 = vadd.f32 %v2810, %v2822
      %v2850 = vadd.f32 %v2811, %v2822
      %v2851 = vadd.f32 %v2812, %v2822
      %v2852 = vadd.f32 %v2813, %v2822
      %v2853 = vadd.f32 %v2814, %v2822
      %v2854 = vadd.f32 %v2815, %v2822
      %v2855 = vadd.f32 %v2816, %v2822
      %2856 = vst [vmem:[%s484] sm:$0xff] %v2824
      %2857 = vst [vmem:[%s484 + $0x8] sm:$0xff] %v2825
      %2858 = vst [vmem:[%s484 + $0x10] sm:$0xff] %v2826
      %2859 = vst [vmem:[%s484 + $0x18] sm:$0xff] %v2827
      %2860 = vst [vmem:[%s484 + $0x20] sm:$0xff] %v2828
      %2861 = vst [vmem:[%s484 + $0x28] sm:$0xff] %v2829
      %2862 = vst [vmem:[%s484 + $0x30] sm:$0xff] %v2830
      %2863 = vst [vmem:[%s484 + $0x38] sm:$0xff] %v2831
      %2864 = vst [vmem:[%s484 + $0x40] sm:$0xff] %v2832
      %2865 = vst [vmem:[%s484 + $0x48] sm:$0xff] %v2833
      %2866 = vst [vmem:[%s484 + $0x50] sm:$0xff] %v2834
      %2867 = vst [vmem:[%s484 + $0x58] sm:$0xff] %v2835
      %2868 = vst [vmem:[%s484 + $0x60] sm:$0xff] %v2836
      %2869 = vst [vmem:[%s484 + $0x68] sm:$0xff] %v2837
      %2870 = vst [vmem:[%s484 + $0x70] sm:$0xff] %v2838
      %2871 = vst [vmem:[%s484 + $0x78] sm:$0xff] %v2839
      %2872 = vst [vmem:[%s484 + $0x80] sm:$0xff] %v2840
      %2873 = vst [vmem:[%s484 + $0x88] sm:$0xff] %v2841
      %2874 = vst [vmem:[%s484 + $0x90] sm:$0xff] %v2842
      %2875 = vst [vmem:[%s484 + $0x98] sm:$0xff] %v2843
      %2876 = vst [vmem:[%s484 + $0xa0] sm:$0xff] %v2844
      %2877 = vst [vmem:[%s484 + $0xa8] sm:$0xff] %v2845
      %2878 = vst [vmem:[%s484 + $0xb0] sm:$0xff] %v2846
      %2879 = vst [vmem:[%s484 + $0xb8] sm:$0xff] %v2847
      %2880 = vst [vmem:[%s484 + $0xc0] sm:$0xff] %v2848
      %2881 = vst [vmem:[%s484 + $0xc8] sm:$0xff] %v2849
      %2882 = vst [vmem:[%s484 + $0xd0] sm:$0xff] %v2850
      %2883 = vst [vmem:[%s484 + $0xd8] sm:$0xff] %v2851
      %2884 = vst [vmem:[%s484 + $0xe0] sm:$0xff] %v2852
      %2885 = vst [vmem:[%s484 + $0xe8] sm:$0xff] %v2853
      %2886 = vst [vmem:[%s484 + $0xf0] sm:$0xff] %v2854
      %2887 = vst [vmem:[%s484 + $0xf8] sm:$0xff] %v2855
      %v2888 = vadd.f32 %v2824, %v2825
      %v2889 = vadd.f32 %v2888, %v2826
      %v2890 = vadd.f32 %v2889, %v2827
      %v2891 = vadd.f32 %v2890, %v2828
      %v2892 = vadd.f32 %v2891, %v2829
      %v2893 = vadd.f32 %v2892, %v2830
      %v2894 = vadd.f32 %v2893, %v2831
      %v2895 = vadd.f32 %v2894, %v2832
      %v2896 = vadd.f32 %v2895, %v2833
      %v2897 = vadd.f32 %v2896, %v2834
      %v2898 = vadd.f32 %v2897, %v2835
      %v2899 = vadd.f32 %v2898, %v2836
      %v2900 = vadd.f32 %v2899, %v2837
      %v2901 = vadd.f32 %v2900, %v2838
      %v2902 = vadd.f32 %v2901, %v2839
      %v2903 = vadd.f32 %v2902, %v2840
      %v2904 = vadd.f32 %v2903, %v2841
      %v2905 = vadd.f32 %v2904, %v2842
      %v2906 = vadd.f32 %v2905, %v2843
      %v2907 = vadd.f32 %v2906, %v2844
      %v2908 = vadd.f32 %v2907, %v2845
      %v2909 = vadd.f32 %v2908, %v2846
      %v2910 = vadd.f32 %v2909, %v2847
      %v2911 = vadd.f32 %v2910, %v2848
      %v2912 = vadd.f32 %v2911, %v2849
      %v2913 = vadd.f32 %v2912, %v2850
      %v2914 = vadd.f32 %v2913, %v2851
      %v2915 = vadd.f32 %v2914, %v2852
      %v2916 = vadd.f32 %v2915, %v2853
      %v2917 = vadd.f32 %v2916, %v2854
      %v2918 = vadd.f32 %v2917, %v2855
      %v2919 = vrot.slane %v2918, 4
      %v2920 = vadd.f32 %v2918, %v2919
      %v2921 = vrot.slane %v2920, 2
      %v2922 = vadd.f32 %v2920, %v2921
      %v2923 = vrot.slane %v2922, 1
      %v2924 = vadd.f32 %v2922, %v2923
      %v2925 = vmul.f32 %v2824, %v2824
      %v2926 = vmul.f32 %v2825, %v2825
      %v2927 = vmul.f32 %v2826, %v2826
      %v2928 = vmul.f32 %v2827, %v2827
      %v2929 = vmul.f32 %v2828, %v2828
      %v2930 = vmul.f32 %v2829, %v2829
      %v2931 = vmul.f32 %v2830, %v2830
      %v2932 = vmul.f32 %v2831, %v2831
      %v2933 = vmul.f32 %v2832, %v2832
      %v2934 = vmul.f32 %v2833, %v2833
      %v2935 = vmul.f32 %v2834, %v2834
      %v2936 = vmul.f32 %v2835, %v2835
      %v2937 = vmul.f32 %v2836, %v2836
      %v2938 = vmul.f32 %v2837, %v2837
      %v2939 = vmul.f32 %v2838, %v2838
      %v2940 = vmul.f32 %v2839, %v2839
      %v2941 = vmul.f32 %v2840, %v2840
      %v2942 = vmul.f32 %v2841, %v2841
      %v2943 = vmul.f32 %v2842, %v2842
      %v2944 = vmul.f32 %v2843, %v2843
      %v2945 = vmul.f32 %v2844, %v2844
      %v2946 = vmul.f32 %v2845, %v2845
      %v2947 = vmul.f32 %v2846, %v2846
      %v2948 = vmul.f32 %v2847, %v2847
      %v2949 = vmul.f32 %v2848, %v2848
      %v2950 = vmul.f32 %v2849, %v2849
      %v2951 = vmul.f32 %v2850, %v2850
      %v2952 = vmul.f32 %v2851, %v2851
      %v2953 = vmul.f32 %v2852, %v2852
      %v2954 = vmul.f32 %v2853, %v2853
      %v2955 = vmul.f32 %v2854, %v2854
      %v2956 = vmul.f32 %v2855, %v2855
      %v2957 = vadd.f32 %v2925, %v2926
      %v2958 = vadd.f32 %v2957, %v2927
      %v2959 = vadd.f32 %v2958, %v2928
      %v2960 = vadd.f32 %v2959, %v2929
      %v2961 = vadd.f32 %v2960, %v2930
      %v2962 = vadd.f32 %v2961, %v2931
      %v2963 = vadd.f32 %v2962, %v2932
      %v2964 = vadd.f32 %v2963, %v2933
      %v2965 = vadd.f32 %v2964, %v2934
      %v2966 = vadd.f32 %v2965, %v2935
      %v2967 = vadd.f32 %v2966, %v2936
      %v2968 = vadd.f32 %v2967, %v2937
      %v2969 = vadd.f32 %v2968, %v2938
      %v2970 = vadd.f32 %v2969, %v2939
      %v2971 = vadd.f32 %v2970, %v2940
      %v2972 = vadd.f32 %v2971, %v2941
      %v2973 = vadd.f32 %v2972, %v2942
      %v2974 = vadd.f32 %v2973, %v2943
      %v2975 = vadd.f32 %v2974, %v2944
      %v2976 = vadd.f32 %v2975, %v2945
      %v2977 = vadd.f32 %v2976, %v2946
      %v2978 = vadd.f32 %v2977, %v2947
      %v2979 = vadd.f32 %v2978, %v2948
      %v2980 = vadd.f32 %v2979, %v2949
      %v2981 = vadd.f32 %v2980, %v2950
      %v2982 = vadd.f32 %v2981, %v2951
      %v2983 = vadd.f32 %v2982, %v2952
      %v2984 = vadd.f32 %v2983, %v2953
      %v2985 = vadd.f32 %v2984, %v2954
      %v2986 = vadd.f32 %v2985, %v2955
      %v2987 = vadd.f32 %v2986, %v2956
      %v2988 = vrot.slane %v2987, 4
      %v2989 = vadd.f32 %v2987, %v2988
      %v2990 = vrot.slane %v2989, 2
      %v2991 = vadd.f32 %v2989, %v2990
      %v2992 = vrot.slane %v2991, 1
      %v2993 = vadd.f32 %v2991, %v2992
      %v2994 = vsel %vm807, %v2924, %v2993
      %vm2995 = vcmask 1041408
      %v2996 = vsel %vm2995, %v2994, 0.0
      %2997 = vst [vmem:[%s492] sm:$0xff] %v2996
      %s2998 = smul.u32 16, %s25
      %p2999 = scmp.lt.s32.totalorder %s24, 1
      %s3000 = scalar_select %p2999, %s24, 1
      %p3001 = scmp.lt.s32.totalorder %s2998, 15
      %s3002 = scalar_select %p3001, %s2998, 15
      %s3003 = smul.addr %s3002, 2
      %s3004 = smul.addr %s3000, 32
      %s3005 = sadd.s32 %s3003, %s3004
      %s3006 = smul.addr %s3005, 8
      %s3007 = scalar_lea.vmem %s7, %s3006
      %p3008 = scmp.lt.s32.totalorder %s24, 1
      %s3009 = scalar_select %p3008, %s24, 1
      %p3010 = scmp.lt.s32.totalorder %s25, 0
      %s3011 = scalar_select %p3010, %s25, 0
      %s3012 = sadd.s32 %s3011, %s3009
      %s3013 = smul.addr %s3012, 8
      %s3014 = scalar_lea.vmem %s8, %s3013
      // Predicated region
      $region49: #{res_conv_block.4} parent=47 // pred_check
        %p3015 = pneg %p236
      $region50: #{res_conv_block.4} parent=47 // pred_check_branch
        %3017 = sbr.rel (%p3015) target = $region52
      $region51: #{res_conv_block.4} parent=47 // pred_region
        %s3018 = smul.u32 16, %s25
      $region52: #{res_conv_block.4} parent=47 // pred_fallthru
        _
      // Predicated region
      $region53: #{res_conv_block.4} parent=47 // pred_check
        %p3019 = pneg %p264
      $region54: #{res_conv_block.4} parent=47 // pred_check_branch
        %3021 = sbr.rel (%p3019) target = $region56
      $region55: #{res_conv_block.4} parent=47 // pred_region
        _
      $region56: #{res_conv_block.4} parent=47 // pred_fallthru
        _
    $region48: #{res_conv_block.4} parent=5 // pred_fallthru
      _
    %p3022 = scmp.le.s32.totalorder 2, %s15
    // Predicated region
    $region57: #{res_conv_block.4} parent=5 // pred_check
      %p3023 = pneg %p3022
    $region58: #{res_conv_block.4} parent=5 // pred_check_branch
      %3025 = sbr.rel (%p3023) target = $region60
    $region59: #{res_conv_block.4} parent=5 // pred_region
      %s3026 = ssub.s32 %s15, 2
      // Predicated region
      $region61: #{res_conv_block.4} parent=59 // pred_check
        %p3027 = pneg %p242
      $region62: #{res_conv_block.4} parent=59 // pred_check_branch
        %3029 = sbr.rel (%p3027) target = $region64
      $region63: #{res_conv_block.4} parent=59 // pred_region
        %s3030 = smul.u32 16, %s27
        %p3031 = scmp.lt.s32.totalorder %s26, 1
        %s3032 = scalar_select %p3031, %s26, 1
        %p3033 = scmp.lt.s32.totalorder %s3030, 15
        %s3034 = scalar_select %p3033, %s3030, 15
        %s3035 = smul.addr %s3034, 2
        %s3036 = smul.addr %s3032, 32
        %s3037 = sadd.s32 %s3035, %s3036
        %s3038 = smul.addr %s3037, 8
        %s3039 = scalar_lea.vmem %s7, %s3038
      $region64: #{res_conv_block.4} parent=59 // pred_fallthru
        _
      // Predicated region
      $region65: #{res_conv_block.4} parent=59 // pred_check
        %p3040 = pneg %p270
      $region66: #{res_conv_block.4} parent=59 // pred_check_branch
        %3042 = sbr.rel (%p3040) target = $region68
      $region67: #{res_conv_block.4} parent=59 // pred_region
        %p3043 = scmp.lt.s32.totalorder %s26, 1
        %s3044 = scalar_select %p3043, %s26, 1
        %p3045 = scmp.lt.s32.totalorder %s27, 0
        %s3046 = scalar_select %p3045, %s27, 0
        %s3047 = sadd.s32 %s3046, %s3044
        %s3048 = smul.addr %s3047, 8
        %s3049 = scalar_lea.vmem %s8, %s3048
      $region68: #{res_conv_block.4} parent=59 // pred_fallthru
        _
    $region60: #{res_conv_block.4} parent=5 // pred_fallthru
      _
  $region6: #{res_conv_block.4} parent=0 // loop_footer
    %s19 = sadd.s32 1, %s15
  $region7: #{res_conv_block.4} parent=0 // loop_footer_branch
    %14 = sbr.rel target = $region3
  $region8: #{res_conv_block.4} parent=0 // loop_exit
    _

</llo_original>
